<compile_context>
chip_gen: v7x
topology: tpu7x:2x2x1
jax: 0.10.0
libtpu: 0.0.40
codegen_flags: <defaults>
</compile_context>

<pallas_src>
import jax
import jax.numpy as jnp
from jax.experimental import pallas as pl
from jax.experimental.pallas import tpu as pltpu

# ---------------------------------------------------------------------------
# Synthetic adapter config (small, TPU-tile-friendly sizes).
# ---------------------------------------------------------------------------
BATCH = 2
SEQ = 128
PROJECT_HIDDEN = 256          # adapter_config.project_hidden_size
ADAPTER_SIZE = 128            # adapter_config.adapter_size == encoder hidden
N_HEADS = 4
HEAD_DIM = ADAPTER_SIZE // N_HEADS
INTERMEDIATE = 512
N_LAYERS = 2
LN_EPS = 1e-12                # BertConfig.layer_norm_eps
INIT_RANGE = 0.02             # adapter_initializer_range / encoder init std

PARAM_DTYPE = jnp.bfloat16    # bf16 data, f32 accumulation


# ---------------------------------------------------------------------------
# In-kernel helpers (f32 math).
# ---------------------------------------------------------------------------
def _layer_norm_f32(y, g, b):
    mu = jnp.mean(y, axis=-1, keepdims=True)
    d = y - mu
    var = jnp.mean(d * d, axis=-1, keepdims=True)
    return d * jax.lax.rsqrt(var + LN_EPS) * g + b


def _gelu_f32(y):
    # TODO(synk): HF BERT uses exact erf-GELU; tanh approximation used here
    # (EUP-friendly, ~1e-3 deviation from the exact reference).
    c = 0.7978845608028654  # sqrt(2/pi)
    return 0.5 * y * (1.0 + jnp.tanh(c * (y + 0.044715 * y * y * y)))


# ---------------------------------------------------------------------------
# Single fused kernel: one batch element per grid step, all weights resident.
# ---------------------------------------------------------------------------
def _adapter_kernel(x_ref,
                    down_w_ref, down_b_ref,
                    qkv_w_ref, qkv_b_ref,
                    o_w_ref, o_b_ref,
                    attn_g_ref, attn_b_ref,
                    fc1_w_ref, fc1_b_ref,
                    fc2_w_ref, fc2_b_ref,
                    out_g_ref, out_b_ref,
                    up_w_ref, up_b_ref,
                    o_ref,
                    ctx_ref):
    H = ADAPTER_SIZE
    f32 = jnp.float32
    x = x_ref[0]                                             # (S, P) bf16

    # down_project (single MXU pass, f32 accumulation, no scratch accumulator)
    h32 = (jnp.dot(x, down_w_ref[...], preferred_element_type=f32)
           + down_b_ref[...].astype(f32))                    # (S, A) f32
    h = h32.astype(x.dtype)

    scale = 1.0 / float(HEAD_DIM) ** 0.5

    for l in range(N_LAYERS):
        # --- self-attention -------------------------------------------------
        qkv = (jnp.dot(h, qkv_w_ref[l], preferred_element_type=f32)
               + qkv_b_ref[l].astype(f32)).astype(h.dtype)   # (S, 3A) bf16
        for hd in range(N_HEADS):
            lo = hd * HEAD_DIM
            hi = lo + HEAD_DIM
            q = qkv[:, lo:hi] * scale          # fold 1/sqrt(d) into q (Sx32)
            k = qkv[:, H + lo:H + hi]
            v = qkv[:, 2 * H + lo:2 * H + hi]
            # Contract last axes of q and k directly (no explicit k.T).
            s = jax.lax.dot_general(q, k, (((1,), (1,)), ((), ())),
                                    preferred_element_type=f32)
            s = s - jnp.max(s, axis=-1, keepdims=True)
            p = jnp.exp(s)
            p = p * pl.reciprocal(jnp.sum(p, axis=-1, keepdims=True),
                                  approx=True)
            # Write each head's context straight into its lane slice of the
            # VMEM scratch (no jnp.concatenate relayout).
            ctx_ref[:, lo:hi] = jnp.dot(
                p.astype(h.dtype), v,
                preferred_element_type=f32).astype(ctx_ref.dtype)

        # attention output proj + bias + residual + LayerNorm (fused, f32)
        x1 = (jnp.dot(ctx_ref[...], o_w_ref[l], preferred_element_type=f32)
              + o_b_ref[l].astype(f32) + h32)
        x1 = _layer_norm_f32(x1, attn_g_ref[l].astype(f32),
                             attn_b_ref[l].astype(f32))
        x1_bf = x1.astype(h.dtype)

        # --- feed-forward ---------------------------------------------------
        ffn = (jnp.dot(x1_bf, fc1_w_ref[l], preferred_element_type=f32)
               + fc1_b_ref[l].astype(f32))
        ffn = _gelu_f32(ffn).astype(h.dtype)
        x2 = (jnp.dot(ffn, fc2_w_ref[l], preferred_element_type=f32)
              + fc2_b_ref[l].astype(f32) + x1)
        h32 = _layer_norm_f32(x2, out_g_ref[l].astype(f32),
                              out_b_ref[l].astype(f32))
        h = h32.astype(x.dtype)

    # up_project fused with the adapter's outer residual (hidden_states + up)
    up = (jnp.dot(h, up_w_ref[...], preferred_element_type=f32)
          + up_b_ref[...].astype(f32)
          + x.astype(f32))
    o_ref[0] = up.astype(o_ref.dtype)


def _whole_array_spec(a):
    nd = a.ndim
    return pl.BlockSpec(a.shape, lambda b, _nd=nd: (0,) * _nd)


def adapter_forward(params, hidden_states):
    b, s, ph = hidden_states.shape
    weights = [
        params["down_w"], params["down_b"],
        params["qkv_w"], params["qkv_b"],
        params["o_w"], params["o_b"],
        params["attn_ln_g"], params["attn_ln_b"],
        params["fc1_w"], params["fc1_b"],
        params["fc2_w"], params["fc2_b"],
        params["out_ln_g"], params["out_ln_b"],
        params["up_w"], params["up_b"],
    ]
    in_specs = [pl.BlockSpec((1, s, ph), lambda i: (i, 0, 0))]
    in_specs += [_whole_array_spec(w) for w in weights]

    return pl.pallas_call(
        _adapter_kernel,
        out_shape=jax.ShapeDtypeStruct((b, s, ph), hidden_states.dtype),
        grid_spec=pltpu.PrefetchScalarGridSpec(
            num_scalar_prefetch=0,
            grid=(b,),
            in_specs=in_specs,
            out_specs=pl.BlockSpec((1, s, ph), lambda i: (i, 0, 0)),
            scratch_shapes=[pltpu.VMEM((s, ADAPTER_SIZE), PARAM_DTYPE)],
        ),
        compiler_params=pltpu.CompilerParams(
            dimension_semantics=("parallel",)),
    )(hidden_states, *weights)


# ---------------------------------------------------------------------------
# Deterministic parameter construction (mirrors Adapter.init_weights: normal
# init for projections with zero biases; encoder weights small normals).
# Per-layer weights are stacked on a leading axis so the whole encoder is a
# fixed set of arrays resident in VMEM.
# ---------------------------------------------------------------------------
def _init(key, shape, scale=INIT_RANGE):
    return (scale * jax.random.normal(key, shape, jnp.float32)).astype(PARAM_DTYPE)


def _zeros(shape):
    return jnp.zeros(shape, PARAM_DTYPE)


def _ones(shape):
    return jnp.ones(shape, PARAM_DTYPE)


def make_params(key):
    keys = iter(jax.random.split(key, 2 + 4 * N_LAYERS))
    down_w = _init(next(keys), (PROJECT_HIDDEN, ADAPTER_SIZE))
    up_w = _init(next(keys), (ADAPTER_SIZE, PROJECT_HIDDEN))
    qkv_w, o_w, fc1_w, fc2_w = [], [], [], []
    for _ in range(N_LAYERS):
        # q/k/v fused into one (A, 3A) weight -> one MXU matmul per layer.
        qkv_w.append(_init(next(keys), (ADAPTER_SIZE, 3 * ADAPTER_SIZE)))
        o_w.append(_init(next(keys), (ADAPTER_SIZE, ADAPTER_SIZE)))
        fc1_w.append(_init(next(keys), (ADAPTER_SIZE, INTERMEDIATE)))
        fc2_w.append(_init(next(keys), (INTERMEDIATE, ADAPTER_SIZE)))
    return {
        "down_w": down_w, "down_b": _zeros((1, ADAPTER_SIZE)),
        "up_w": up_w, "up_b": _zeros((1, PROJECT_HIDDEN)),
        "qkv_w": jnp.stack(qkv_w),
        "qkv_b": _zeros((N_LAYERS, 1, 3 * ADAPTER_SIZE)),
        "o_w": jnp.stack(o_w),
        "o_b": _zeros((N_LAYERS, 1, ADAPTER_SIZE)),
        "attn_ln_g": _ones((N_LAYERS, 1, ADAPTER_SIZE)),
        "attn_ln_b": _zeros((N_LAYERS, 1, ADAPTER_SIZE)),
        "fc1_w": jnp.stack(fc1_w),
        "fc1_b": _zeros((N_LAYERS, 1, INTERMEDIATE)),
        "fc2_w": jnp.stack(fc2_w),
        "fc2_b": _zeros((N_LAYERS, 1, ADAPTER_SIZE)),
        "out_ln_g": _ones((N_LAYERS, 1, ADAPTER_SIZE)),
        "out_ln_b": _zeros((N_LAYERS, 1, ADAPTER_SIZE)),
    }


# ---------------------------------------------------------------------------
# Pure-JAX reference (same numerics: bf16 matmul inputs, f32 accumulation,
# f32 softmax/LN, tanh GELU) for a correctness cross-check.
# ---------------------------------------------------------------------------
def adapter_reference(params, hidden_states):
    f32 = jnp.float32
    x = hidden_states                                        # (B, S, P) bf16

    def ln(y, g, bb):
        mu = jnp.mean(y, -1, keepdims=True)
        var = jnp.mean((y - mu) ** 2, -1, keepdims=True)
        return (y - mu) * jax.lax.rsqrt(var + LN_EPS) * g.astype(f32) + bb.astype(f32)

    h32 = (jnp.einsum("bsp,pa->bsa", x, params["down_w"],
                      preferred_element_type=f32)
           + params["down_b"].astype(f32))
    h = h32.astype(PARAM_DTYPE)
    scale = 1.0 / float(HEAD_DIM) ** 0.5
    for l in range(N_LAYERS):
        qkv = (jnp.einsum("bsa,ac->bsc", h, params["qkv_w"][l],
                          preferred_element_type=f32)
               + params["qkv_b"][l].astype(f32)).astype(PARAM_DTYPE)
        q, k, v = jnp.split(qkv, 3, axis=-1)
        bsz, seq = q.shape[0], q.shape[1]
        q = (q * scale).reshape(bsz, seq, N_HEADS, HEAD_DIM)
        k = k.reshape(bsz, seq, N_HEADS, HEAD_DIM)
        v = v.reshape(bsz, seq, N_HEADS, HEAD_DIM)
        s_ = jnp.einsum("bqhd,bkhd->bhqk", q, k, preferred_element_type=f32)
        s_ = s_ - jnp.max(s_, -1, keepdims=True)
        p = jnp.exp(s_)
        p = p / jnp.sum(p, -1, keepdims=True)
        ctx = jnp.einsum("bhqk,bkhd->bqhd", p.astype(PARAM_DTYPE), v,
                         preferred_element_type=f32)
        ctx = ctx.reshape(bsz, seq, ADAPTER_SIZE).astype(PARAM_DTYPE)
        x1 = ln(jnp.einsum("bsa,ao->bso", ctx, params["o_w"][l],
                           preferred_element_type=f32)
                + params["o_b"][l].astype(f32) + h32,
                params["attn_ln_g"][l], params["attn_ln_b"][l])
        x1_bf = x1.astype(PARAM_DTYPE)
        ffn = (jnp.einsum("bsa,ai->bsi", x1_bf, params["fc1_w"][l],
                          preferred_element_type=f32)
               + params["fc1_b"][l].astype(f32))
        ffn = _gelu_f32(ffn).astype(PARAM_DTYPE)
        h32 = ln(jnp.einsum("bsi,ia->bsa", ffn, params["fc2_w"][l],
                            preferred_element_type=f32)
                 + params["fc2_b"][l].astype(f32) + x1,
                 params["out_ln_g"][l], params["out_ln_b"][l])
        h = h32.astype(PARAM_DTYPE)
    up = (jnp.einsum("bsa,ap->bsp", h, params["up_w"],
                     preferred_element_type=f32)
          + params["up_b"].astype(f32)
          + x.astype(f32))
    return up.astype(hidden_states.dtype)


# ---------------------------------------------------------------------------
# Demo
# ---------------------------------------------------------------------------
if __name__ == "__main__":
    key = jax.random.PRNGKey(0)
    pkey, hkey = jax.random.split(key)

    params = make_params(pkey)
    hidden_states = jax.random.normal(
        hkey, (BATCH, SEQ, PROJECT_HIDDEN), jnp.float32).astype(PARAM_DTYPE)

    out = jax.jit(adapter_forward)(params, hidden_states)
    jax.block_until_ready(out)

    ref = adapter_reference(params, hidden_states)
    err = float(jnp.max(jnp.abs(out.astype(jnp.float32) - ref.astype(jnp.float32))))

    assert out.shape == (BATCH, SEQ, PROJECT_HIDDEN)
    assert bool(jnp.isfinite(out.astype(jnp.float32)).all())
    assert err < 5e-2, f"max |kernel - reference| = {err}"
    print("KERNEL_OK")
</pallas_src>

<mosaic_0001>
module attributes {stable_mosaic.version = 11 : i64} {
  func.func @_adapter_kernel(%arg0: i32, %arg1: memref<1x128x256xbf16, #tpu.memory_space<vmem>>, %arg2: memref<256x128xbf16, #tpu.memory_space<vmem>>, %arg3: memref<1x128xbf16, #tpu.memory_space<vmem>>, %arg4: memref<2x128x384xbf16, #tpu.memory_space<vmem>>, %arg5: memref<2x1x384xbf16, #tpu.memory_space<vmem>>, %arg6: memref<2x128x128xbf16, #tpu.memory_space<vmem>>, %arg7: memref<2x1x128xbf16, #tpu.memory_space<vmem>>, %arg8: memref<2x1x128xbf16, #tpu.memory_space<vmem>>, %arg9: memref<2x1x128xbf16, #tpu.memory_space<vmem>>, %arg10: memref<2x128x512xbf16, #tpu.memory_space<vmem>>, %arg11: memref<2x1x512xbf16, #tpu.memory_space<vmem>>, %arg12: memref<2x512x128xbf16, #tpu.memory_space<vmem>>, %arg13: memref<2x1x128xbf16, #tpu.memory_space<vmem>>, %arg14: memref<2x1x128xbf16, #tpu.memory_space<vmem>>, %arg15: memref<2x1x128xbf16, #tpu.memory_space<vmem>>, %arg16: memref<128x256xbf16, #tpu.memory_space<vmem>>, %arg17: memref<1x256xbf16, #tpu.memory_space<vmem>>, %arg18: memref<1x128x256xbf16, #tpu.memory_space<vmem>>, %arg19: memref<128x128xbf16, #tpu.memory_space<vmem>>) attributes {dimension_semantics = [#tpu.dimension_semantics<parallel>], iteration_bounds = array<i64: 2>, scalar_prefetch = 0 : i64, scratch_operands = 1 : i64, tpu.core_type = #tpu.core_type<tc>, window_params = [{transform_indices = @transform_0, window_bounds = array<i64: 1, 128, 256>}, {pipeline_mode = #tpu.pipeline_mode<synchronous>, transform_indices = @transform_1, window_bounds = array<i64: 256, 128>}, {pipeline_mode = #tpu.pipeline_mode<synchronous>, transform_indices = @transform_2, window_bounds = array<i64: 1, 128>}, {pipeline_mode = #tpu.pipeline_mode<synchronous>, transform_indices = @transform_3, window_bounds = array<i64: 2, 128, 384>}, {pipeline_mode = #tpu.pipeline_mode<synchronous>, transform_indices = @transform_4, window_bounds = array<i64: 2, 1, 384>}, {pipeline_mode = #tpu.pipeline_mode<synchronous>, transform_indices = @transform_5, window_bounds = array<i64: 2, 128, 128>}, {pipeline_mode = #tpu.pipeline_mode<synchronous>, transform_indices = @transform_6, window_bounds = array<i64: 2, 1, 128>}, {pipeline_mode = #tpu.pipeline_mode<synchronous>, transform_indices = @transform_7, window_bounds = array<i64: 2, 1, 128>}, {pipeline_mode = #tpu.pipeline_mode<synchronous>, transform_indices = @transform_8, window_bounds = array<i64: 2, 1, 128>}, {pipeline_mode = #tpu.pipeline_mode<synchronous>, transform_indices = @transform_9, window_bounds = array<i64: 2, 128, 512>}, {pipeline_mode = #tpu.pipeline_mode<synchronous>, transform_indices = @transform_10, window_bounds = array<i64: 2, 1, 512>}, {pipeline_mode = #tpu.pipeline_mode<synchronous>, transform_indices = @transform_11, window_bounds = array<i64: 2, 512, 128>}, {pipeline_mode = #tpu.pipeline_mode<synchronous>, transform_indices = @transform_12, window_bounds = array<i64: 2, 1, 128>}, {pipeline_mode = #tpu.pipeline_mode<synchronous>, transform_indices = @transform_13, window_bounds = array<i64: 2, 1, 128>}, {pipeline_mode = #tpu.pipeline_mode<synchronous>, transform_indices = @transform_14, window_bounds = array<i64: 2, 1, 128>}, {pipeline_mode = #tpu.pipeline_mode<synchronous>, transform_indices = @transform_15, window_bounds = array<i64: 128, 256>}, {pipeline_mode = #tpu.pipeline_mode<synchronous>, transform_indices = @transform_16, window_bounds = array<i64: 1, 256>}, {transform_indices = @transform_17, window_bounds = array<i64: 1, 128, 256>}]} {
    %c0 = arith.constant 0 : index
    %c0_0 = arith.constant 0 : index
    %c0_1 = arith.constant 0 : index
    %0 = vector.load %arg1[%c0, %c0_0, %c0_1] : memref<1x128x256xbf16, #tpu.memory_space<vmem>>, vector<1x128x256xbf16>
    %1 = vector.shape_cast %0 : vector<1x128x256xbf16> to vector<128x256xbf16>
    %c0_2 = arith.constant 0 : index
    %c0_3 = arith.constant 0 : index
    %2 = vector.load %arg2[%c0_2, %c0_3] : memref<256x128xbf16, #tpu.memory_space<vmem>>, vector<256x128xbf16>
    %cst = arith.constant dense<0.000000e+00> : vector<128x128xf32>
    %3 = tpu.matmul %1, %2, %cst {dimension_numbers = #tpu.dot_dimension_numbers<[1], [0], [0], [1], [0, 0, 1, 1], [], []>} : vector<128x256xbf16>, vector<256x128xbf16>, vector<128x128xf32> -> vector<128x128xf32>
    %c0_4 = arith.constant 0 : index
    %c0_5 = arith.constant 0 : index
    %4 = vector.load %arg3[%c0_4, %c0_5] : memref<1x128xbf16, #tpu.memory_space<vmem>>, vector<1x128xbf16>
    %5 = arith.extf %4 : vector<1x128xbf16> to vector<1x128xf32>
    %6 = vector.broadcast %5 : vector<1x128xf32> to vector<128x128xf32>
    %7 = arith.addf %3, %6 : vector<128x128xf32>
    %8 = arith.truncf %7 : vector<128x128xf32> to vector<128x128xbf16>
    %c0_6 = arith.constant 0 : index
    %c0_7 = arith.constant 0 : index
    %c0_8 = arith.constant 0 : index
    %9 = vector.load %arg4[%c0_6, %c0_7, %c0_8] : memref<2x128x384xbf16, #tpu.memory_space<vmem>>, vector<1x128x384xbf16>
    %10 = vector.shape_cast %9 : vector<1x128x384xbf16> to vector<128x384xbf16>
    %cst_9 = arith.constant dense<0.000000e+00> : vector<128x384xf32>
    %11 = tpu.matmul %8, %10, %cst_9 {dimension_numbers = #tpu.dot_dimension_numbers<[1], [0], [0], [1], [0, 0, 1, 1], [], []>} : vector<128x128xbf16>, vector<128x384xbf16>, vector<128x384xf32> -> vector<128x384xf32>
    %c0_10 = arith.constant 0 : index
    %c0_11 = arith.constant 0 : index
    %c0_12 = arith.constant 0 : index
    %12 = vector.load %arg5[%c0_10, %c0_11, %c0_12] : memref<2x1x384xbf16, #tpu.memory_space<vmem>>, vector<1x1x384xbf16>
    %13 = vector.shape_cast %12 : vector<1x1x384xbf16> to vector<1x384xbf16>
    %14 = arith.extf %13 : vector<1x384xbf16> to vector<1x384xf32>
    %15 = vector.broadcast %14 : vector<1x384xf32> to vector<128x384xf32>
    %16 = arith.addf %11, %15 : vector<128x384xf32>
    %17 = arith.truncf %16 : vector<128x384xf32> to vector<128x384xbf16>
    %18 = vector.extract_strided_slice %17 {offsets = [0, 0], sizes = [128, 32], strides = [1, 1]} : vector<128x384xbf16> to vector<128x32xbf16>
    %cst_13 = arith.constant 1.767580e-01 : bf16
    %19 = vector.broadcast %cst_13 : bf16 to vector<128x32xbf16>
    %20 = arith.mulf %18, %19 : vector<128x32xbf16>
    %21 = vector.extract_strided_slice %17 {offsets = [0, 128], sizes = [128, 32], strides = [1, 1]} : vector<128x384xbf16> to vector<128x32xbf16>
    %22 = vector.extract_strided_slice %17 {offsets = [0, 256], sizes = [128, 32], strides = [1, 1]} : vector<128x384xbf16> to vector<128x32xbf16>
    %cst_14 = arith.constant dense<0.000000e+00> : vector<128x128xf32>
    %23 = tpu.matmul %20, %21, %cst_14 {dimension_numbers = #tpu.dot_dimension_numbers<[1], [1], [0], [0], [0, 0, 1, 0], [], []>} : vector<128x32xbf16>, vector<128x32xbf16>, vector<128x128xf32> -> vector<128x128xf32>
    %cst_15 = arith.constant dense<0xFF800000> : vector<128xf32>
    %24 = vector.multi_reduction <maximumf>, %23, %cst_15 [1] : vector<128x128xf32> to vector<128xf32>
    %25 = vector.shape_cast %24 : vector<128xf32> to vector<128x1xf32>
    %26 = vector.broadcast %25 : vector<128x1xf32> to vector<128x128xf32>
    %27 = arith.subf %23, %26 : vector<128x128xf32>
    %28 = math.exp %27 : vector<128x128xf32>
    %cst_16 = arith.constant dense<0.000000e+00> : vector<128xf32>
    %29 = vector.multi_reduction <add>, %28, %cst_16 [1] : vector<128x128xf32> to vector<128xf32>
    %30 = vector.shape_cast %29 : vector<128xf32> to vector<128x1xf32>
    %31 = tpu.reciprocal %30 {approx = true} : vector<128x1xf32> -> vector<128x1xf32>
    %32 = vector.broadcast %31 : vector<128x1xf32> to vector<128x128xf32>
    %33 = arith.mulf %28, %32 : vector<128x128xf32>
    %34 = arith.truncf %33 : vector<128x128xf32> to vector<128x128xbf16>
    %cst_17 = arith.constant dense<0.000000e+00> : vector<128x32xf32>
    %35 = tpu.matmul %34, %22, %cst_17 {dimension_numbers = #tpu.dot_dimension_numbers<[1], [0], [0], [1], [0, 0, 1, 1], [], []>} : vector<128x128xbf16>, vector<128x32xbf16>, vector<128x32xf32> -> vector<128x32xf32>
    %36 = arith.truncf %35 : vector<128x32xf32> to vector<128x32xbf16>
    %c0_18 = arith.constant 0 : index
    %c0_19 = arith.constant 0 : index
    %37 = vector.load %arg19[%c0_18, %c0_19] : memref<128x128xbf16, #tpu.memory_space<vmem>>, vector<128x32xbf16>
    tpu.vector_store %arg19[%c0_18, %c0_19], %36 {strides = array<i32>} : memref<128x128xbf16, #tpu.memory_space<vmem>>, vector<128x32xbf16>,
    %38 = vector.extract_strided_slice %17 {offsets = [0, 32], sizes = [128, 32], strides = [1, 1]} : vector<128x384xbf16> to vector<128x32xbf16>
    %cst_20 = arith.constant 1.767580e-01 : bf16
    %39 = vector.broadcast %cst_20 : bf16 to vector<128x32xbf16>
    %40 = arith.mulf %38, %39 : vector<128x32xbf16>
    %41 = vector.extract_strided_slice %17 {offsets = [0, 160], sizes = [128, 32], strides = [1, 1]} : vector<128x384xbf16> to vector<128x32xbf16>
    %42 = vector.extract_strided_slice %17 {offsets = [0, 288], sizes = [128, 32], strides = [1, 1]} : vector<128x384xbf16> to vector<128x32xbf16>
    %cst_21 = arith.constant dense<0.000000e+00> : vector<128x128xf32>
    %43 = tpu.matmul %40, %41, %cst_21 {dimension_numbers = #tpu.dot_dimension_numbers<[1], [1], [0], [0], [0, 0, 1, 0], [], []>} : vector<128x32xbf16>, vector<128x32xbf16>, vector<128x128xf32> -> vector<128x128xf32>
    %cst_22 = arith.constant dense<0xFF800000> : vector<128xf32>
    %44 = vector.multi_reduction <maximumf>, %43, %cst_22 [1] : vector<128x128xf32> to vector<128xf32>
    %45 = vector.shape_cast %44 : vector<128xf32> to vector<128x1xf32>
    %46 = vector.broadcast %45 : vector<128x1xf32> to vector<128x128xf32>
    %47 = arith.subf %43, %46 : vector<128x128xf32>
    %48 = math.exp %47 : vector<128x128xf32>
    %cst_23 = arith.constant dense<0.000000e+00> : vector<128xf32>
    %49 = vector.multi_reduction <add>, %48, %cst_23 [1] : vector<128x128xf32> to vector<128xf32>
    %50 = vector.shape_cast %49 : vector<128xf32> to vector<128x1xf32>
    %51 = tpu.reciprocal %50 {approx = true} : vector<128x1xf32> -> vector<128x1xf32>
    %52 = vector.broadcast %51 : vector<128x1xf32> to vector<128x128xf32>
    %53 = arith.mulf %48, %52 : vector<128x128xf32>
    %54 = arith.truncf %53 : vector<128x128xf32> to vector<128x128xbf16>
    %cst_24 = arith.constant dense<0.000000e+00> : vector<128x32xf32>
    %55 = tpu.matmul %54, %42, %cst_24 {dimension_numbers = #tpu.dot_dimension_numbers<[1], [0], [0], [1], [0, 0, 1, 1], [], []>} : vector<128x128xbf16>, vector<128x32xbf16>, vector<128x32xf32> -> vector<128x32xf32>
    %56 = arith.truncf %55 : vector<128x32xf32> to vector<128x32xbf16>
    %c0_25 = arith.constant 0 : index
    %c32 = arith.constant 32 : index
    %57 = vector.load %arg19[%c0_25, %c32] : memref<128x128xbf16, #tpu.memory_space<vmem>>, vector<128x32xbf16>
    tpu.vector_store %arg19[%c0_25, %c32], %56 {strides = array<i32>} : memref<128x128xbf16, #tpu.memory_space<vmem>>, vector<128x32xbf16>,
    %58 = vector.extract_strided_slice %17 {offsets = [0, 64], sizes = [128, 32], strides = [1, 1]} : vector<128x384xbf16> to vector<128x32xbf16>
    %cst_26 = arith.constant 1.767580e-01 : bf16
    %59 = vector.broadcast %cst_26 : bf16 to vector<128x32xbf16>
    %60 = arith.mulf %58, %59 : vector<128x32xbf16>
    %61 = vector.extract_strided_slice %17 {offsets = [0, 192], sizes = [128, 32], strides = [1, 1]} : vector<128x384xbf16> to vector<128x32xbf16>
    %62 = vector.extract_strided_slice %17 {offsets = [0, 320], sizes = [128, 32], strides = [1, 1]} : vector<128x384xbf16> to vector<128x32xbf16>
    %cst_27 = arith.constant dense<0.000000e+00> : vector<128x128xf32>
    %63 = tpu.matmul %60, %61, %cst_27 {dimension_numbers = #tpu.dot_dimension_numbers<[1], [1], [0], [0], [0, 0, 1, 0], [], []>} : vector<128x32xbf16>, vector<128x32xbf16>, vector<128x128xf32> -> vector<128x128xf32>
    %cst_28 = arith.constant dense<0xFF800000> : vector<128xf32>
    %64 = vector.multi_reduction <maximumf>, %63, %cst_28 [1] : vector<128x128xf32> to vector<128xf32>
    %65 = vector.shape_cast %64 : vector<128xf32> to vector<128x1xf32>
    %66 = vector.broadcast %65 : vector<128x1xf32> to vector<128x128xf32>
    %67 = arith.subf %63, %66 : vector<128x128xf32>
    %68 = math.exp %67 : vector<128x128xf32>
    %cst_29 = arith.constant dense<0.000000e+00> : vector<128xf32>
    %69 = vector.multi_reduction <add>, %68, %cst_29 [1] : vector<128x128xf32> to vector<128xf32>
    %70 = vector.shape_cast %69 : vector<128xf32> to vector<128x1xf32>
    %71 = tpu.reciprocal %70 {approx = true} : vector<128x1xf32> -> vector<128x1xf32>
    %72 = vector.broadcast %71 : vector<128x1xf32> to vector<128x128xf32>
    %73 = arith.mulf %68, %72 : vector<128x128xf32>
    %74 = arith.truncf %73 : vector<128x128xf32> to vector<128x128xbf16>
    %cst_30 = arith.constant dense<0.000000e+00> : vector<128x32xf32>
    %75 = tpu.matmul %74, %62, %cst_30 {dimension_numbers = #tpu.dot_dimension_numbers<[1], [0], [0], [1], [0, 0, 1, 1], [], []>} : vector<128x128xbf16>, vector<128x32xbf16>, vector<128x32xf32> -> vector<128x32xf32>
    %76 = arith.truncf %75 : vector<128x32xf32> to vector<128x32xbf16>
    %c0_31 = arith.constant 0 : index
    %c64 = arith.constant 64 : index
    %77 = vector.load %arg19[%c0_31, %c64] : memref<128x128xbf16, #tpu.memory_space<vmem>>, vector<128x32xbf16>
    tpu.vector_store %arg19[%c0_31, %c64], %76 {strides = array<i32>} : memref<128x128xbf16, #tpu.memory_space<vmem>>, vector<128x32xbf16>,
    %78 = vector.extract_strided_slice %17 {offsets = [0, 96], sizes = [128, 32], strides = [1, 1]} : vector<128x384xbf16> to vector<128x32xbf16>
    %cst_32 = arith.constant 1.767580e-01 : bf16
    %79 = vector.broadcast %cst_32 : bf16 to vector<128x32xbf16>
    %80 = arith.mulf %78, %79 : vector<128x32xbf16>
    %81 = vector.extract_strided_slice %17 {offsets = [0, 224], sizes = [128, 32], strides = [1, 1]} : vector<128x384xbf16> to vector<128x32xbf16>
    %82 = vector.extract_strided_slice %17 {offsets = [0, 352], sizes = [128, 32], strides = [1, 1]} : vector<128x384xbf16> to vector<128x32xbf16>
    %cst_33 = arith.constant dense<0.000000e+00> : vector<128x128xf32>
    %83 = tpu.matmul %80, %81, %cst_33 {dimension_numbers = #tpu.dot_dimension_numbers<[1], [1], [0], [0], [0, 0, 1, 0], [], []>} : vector<128x32xbf16>, vector<128x32xbf16>, vector<128x128xf32> -> vector<128x128xf32>
    %cst_34 = arith.constant dense<0xFF800000> : vector<128xf32>
    %84 = vector.multi_reduction <maximumf>, %83, %cst_34 [1] : vector<128x128xf32> to vector<128xf32>
    %85 = vector.shape_cast %84 : vector<128xf32> to vector<128x1xf32>
    %86 = vector.broadcast %85 : vector<128x1xf32> to vector<128x128xf32>
    %87 = arith.subf %83, %86 : vector<128x128xf32>
    %88 = math.exp %87 : vector<128x128xf32>
    %cst_35 = arith.constant dense<0.000000e+00> : vector<128xf32>
    %89 = vector.multi_reduction <add>, %88, %cst_35 [1] : vector<128x128xf32> to vector<128xf32>
    %90 = vector.shape_cast %89 : vector<128xf32> to vector<128x1xf32>
    %91 = tpu.reciprocal %90 {approx = true} : vector<128x1xf32> -> vector<128x1xf32>
    %92 = vector.broadcast %91 : vector<128x1xf32> to vector<128x128xf32>
    %93 = arith.mulf %88, %92 : vector<128x128xf32>
    %94 = arith.truncf %93 : vector<128x128xf32> to vector<128x128xbf16>
    %cst_36 = arith.constant dense<0.000000e+00> : vector<128x32xf32>
    %95 = tpu.matmul %94, %82, %cst_36 {dimension_numbers = #tpu.dot_dimension_numbers<[1], [0], [0], [1], [0, 0, 1, 1], [], []>} : vector<128x128xbf16>, vector<128x32xbf16>, vector<128x32xf32> -> vector<128x32xf32>
    %96 = arith.truncf %95 : vector<128x32xf32> to vector<128x32xbf16>
    %c0_37 = arith.constant 0 : index
    %c96 = arith.constant 96 : index
    %97 = vector.load %arg19[%c0_37, %c96] : memref<128x128xbf16, #tpu.memory_space<vmem>>, vector<128x32xbf16>
    tpu.vector_store %arg19[%c0_37, %c96], %96 {strides = array<i32>} : memref<128x128xbf16, #tpu.memory_space<vmem>>, vector<128x32xbf16>,
    %c0_38 = arith.constant 0 : index
    %c0_39 = arith.constant 0 : index
    %98 = vector.load %arg19[%c0_38, %c0_39] : memref<128x128xbf16, #tpu.memory_space<vmem>>, vector<128x128xbf16>
    %c0_40 = arith.constant 0 : index
    %c0_41 = arith.constant 0 : index
    %c0_42 = arith.constant 0 : index
    %99 = vector.load %arg6[%c0_40, %c0_41, %c0_42] : memref<2x128x128xbf16, #tpu.memory_space<vmem>>, vector<1x128x128xbf16>
    %100 = vector.shape_cast %99 : vector<1x128x128xbf16> to vector<128x128xbf16>
    %cst_43 = arith.constant dense<0.000000e+00> : vector<128x128xf32>
    %101 = tpu.matmul %98, %100, %cst_43 {dimension_numbers = #tpu.dot_dimension_numbers<[1], [0], [0], [1], [0, 0, 1, 1], [], []>} : vector<128x128xbf16>, vector<128x128xbf16>, vector<128x128xf32> -> vector<128x128xf32>
    %c0_44 = arith.constant 0 : index
    %c0_45 = arith.constant 0 : index
    %c0_46 = arith.constant 0 : index
    %102 = vector.load %arg7[%c0_44, %c0_45, %c0_46] : memref<2x1x128xbf16, #tpu.memory_space<vmem>>, vector<1x1x128xbf16>
    %103 = vector.shape_cast %102 : vector<1x1x128xbf16> to vector<1x128xbf16>
    %104 = arith.extf %103 : vector<1x128xbf16> to vector<1x128xf32>
    %105 = vector.broadcast %104 : vector<1x128xf32> to vector<128x128xf32>
    %106 = arith.addf %101, %105 : vector<128x128xf32>
    %107 = arith.addf %106, %7 : vector<128x128xf32>
    %c0_47 = arith.constant 0 : index
    %c0_48 = arith.constant 0 : index
    %c0_49 = arith.constant 0 : index
    %108 = vector.load %arg8[%c0_47, %c0_48, %c0_49] : memref<2x1x128xbf16, #tpu.memory_space<vmem>>, vector<1x1x128xbf16>
    %109 = vector.shape_cast %108 : vector<1x1x128xbf16> to vector<1x128xbf16>
    %110 = arith.extf %109 : vector<1x128xbf16> to vector<1x128xf32>
    %c0_50 = arith.constant 0 : index
    %c0_51 = arith.constant 0 : index
    %c0_52 = arith.constant 0 : index
    %111 = vector.load %arg9[%c0_50, %c0_51, %c0_52] : memref<2x1x128xbf16, #tpu.memory_space<vmem>>, vector<1x1x128xbf16>
    %112 = vector.shape_cast %111 : vector<1x1x128xbf16> to vector<1x128xbf16>
    %113 = arith.extf %112 : vector<1x128xbf16> to vector<1x128xf32>
    %cst_53 = arith.constant dense<0.000000e+00> : vector<128xf32>
    %114 = vector.multi_reduction <add>, %107, %cst_53 [1] : vector<128x128xf32> to vector<128xf32>
    %115 = vector.shape_cast %114 : vector<128xf32> to vector<128x1xf32>
    %cst_54 = arith.constant 1.280000e+02 : f32
    %116 = vector.broadcast %cst_54 : f32 to vector<128x1xf32>
    %117 = arith.divf %115, %116 : vector<128x1xf32>
    %118 = vector.broadcast %117 : vector<128x1xf32> to vector<128x128xf32>
    %119 = arith.subf %107, %118 : vector<128x128xf32>
    %120 = arith.mulf %119, %119 : vector<128x128xf32>
    %cst_55 = arith.constant dense<0.000000e+00> : vector<128xf32>
    %121 = vector.multi_reduction <add>, %120, %cst_55 [1] : vector<128x128xf32> to vector<128xf32>
    %122 = vector.shape_cast %121 : vector<128xf32> to vector<128x1xf32>
    %cst_56 = arith.constant 1.280000e+02 : f32
    %123 = vector.broadcast %cst_56 : f32 to vector<128x1xf32>
    %124 = arith.divf %122, %123 : vector<128x1xf32>
    %cst_57 = arith.constant 9.99999996E-13 : f32
    %125 = vector.broadcast %cst_57 : f32 to vector<128x1xf32>
    %126 = arith.addf %124, %125 : vector<128x1xf32>
    %127 = math.rsqrt %126 : vector<128x1xf32>
    %128 = vector.broadcast %127 : vector<128x1xf32> to vector<128x128xf32>
    %129 = arith.mulf %119, %128 : vector<128x128xf32>
    %130 = vector.broadcast %110 : vector<1x128xf32> to vector<128x128xf32>
    %131 = arith.mulf %129, %130 : vector<128x128xf32>
    %132 = vector.broadcast %113 : vector<1x128xf32> to vector<128x128xf32>
    %133 = arith.addf %131, %132 : vector<128x128xf32>
    %134 = arith.truncf %133 : vector<128x128xf32> to vector<128x128xbf16>
    %c0_58 = arith.constant 0 : index
    %c0_59 = arith.constant 0 : index
    %c0_60 = arith.constant 0 : index
    %135 = vector.load %arg10[%c0_58, %c0_59, %c0_60] : memref<2x128x512xbf16, #tpu.memory_space<vmem>>, vector<1x128x512xbf16>
    %136 = vector.shape_cast %135 : vector<1x128x512xbf16> to vector<128x512xbf16>
    %cst_61 = arith.constant dense<0.000000e+00> : vector<128x512xf32>
    %137 = tpu.matmul %134, %136, %cst_61 {dimension_numbers = #tpu.dot_dimension_numbers<[1], [0], [0], [1], [0, 0, 1, 1], [], []>} : vector<128x128xbf16>, vector<128x512xbf16>, vector<128x512xf32> -> vector<128x512xf32>
    %c0_62 = arith.constant 0 : index
    %c0_63 = arith.constant 0 : index
    %c0_64 = arith.constant 0 : index
    %138 = vector.load %arg11[%c0_62, %c0_63, %c0_64] : memref<2x1x512xbf16, #tpu.memory_space<vmem>>, vector<1x1x512xbf16>
    %139 = vector.shape_cast %138 : vector<1x1x512xbf16> to vector<1x512xbf16>
    %140 = arith.extf %139 : vector<1x512xbf16> to vector<1x512xf32>
    %141 = vector.broadcast %140 : vector<1x512xf32> to vector<128x512xf32>
    %142 = arith.addf %137, %141 : vector<128x512xf32>
    %cst_65 = arith.constant 5.000000e-01 : f32
    %143 = vector.broadcast %cst_65 : f32 to vector<128x512xf32>
    %144 = arith.mulf %143, %142 : vector<128x512xf32>
    %cst_66 = arith.constant 4.471500e-02 : f32
    %145 = vector.broadcast %cst_66 : f32 to vector<128x512xf32>
    %146 = arith.mulf %145, %142 : vector<128x512xf32>
    %147 = arith.mulf %146, %142 : vector<128x512xf32>
    %148 = arith.mulf %147, %142 : vector<128x512xf32>
    %149 = arith.addf %142, %148 : vector<128x512xf32>
    %cst_67 = arith.constant 0.797884583 : f32
    %150 = vector.broadcast %cst_67 : f32 to vector<128x512xf32>
    %151 = arith.mulf %150, %149 : vector<128x512xf32>
    %152 = math.tanh %151 : vector<128x512xf32>
    %cst_68 = arith.constant 1.000000e+00 : f32
    %153 = vector.broadcast %cst_68 : f32 to vector<128x512xf32>
    %154 = arith.addf %153, %152 : vector<128x512xf32>
    %155 = arith.mulf %144, %154 : vector<128x512xf32>
    %156 = arith.truncf %155 : vector<128x512xf32> to vector<128x512xbf16>
    %c0_69 = arith.constant 0 : index
    %c0_70 = arith.constant 0 : index
    %c0_71 = arith.constant 0 : index
    %157 = vector.load %arg12[%c0_69, %c0_70, %c0_71] : memref<2x512x128xbf16, #tpu.memory_space<vmem>>, vector<1x512x128xbf16>
    %158 = vector.shape_cast %157 : vector<1x512x128xbf16> to vector<512x128xbf16>
    %cst_72 = arith.constant dense<0.000000e+00> : vector<128x128xf32>
    %159 = tpu.matmul %156, %158, %cst_72 {dimension_numbers = #tpu.dot_dimension_numbers<[1], [0], [0], [1], [0, 0, 1, 1], [], []>} : vector<128x512xbf16>, vector<512x128xbf16>, vector<128x128xf32> -> vector<128x128xf32>
    %c0_73 = arith.constant 0 : index
    %c0_74 = arith.constant 0 : index
    %c0_75 = arith.constant 0 : index
    %160 = vector.load %arg13[%c0_73, %c0_74, %c0_75] : memref<2x1x128xbf16, #tpu.memory_space<vmem>>, vector<1x1x128xbf16>
    %161 = vector.shape_cast %160 : vector<1x1x128xbf16> to vector<1x128xbf16>
    %162 = arith.extf %161 : vector<1x128xbf16> to vector<1x128xf32>
    %163 = vector.broadcast %162 : vector<1x128xf32> to vector<128x128xf32>
    %164 = arith.addf %159, %163 : vector<128x128xf32>
    %165 = arith.addf %164, %133 : vector<128x128xf32>
    %c0_76 = arith.constant 0 : index
    %c0_77 = arith.constant 0 : index
    %c0_78 = arith.constant 0 : index
    %166 = vector.load %arg14[%c0_76, %c0_77, %c0_78] : memref<2x1x128xbf16, #tpu.memory_space<vmem>>, vector<1x1x128xbf16>
    %167 = vector.shape_cast %166 : vector<1x1x128xbf16> to vector<1x128xbf16>
    %168 = arith.extf %167 : vector<1x128xbf16> to vector<1x128xf32>
    %c0_79 = arith.constant 0 : index
    %c0_80 = arith.constant 0 : index
    %c0_81 = arith.constant 0 : index
    %169 = vector.load %arg15[%c0_79, %c0_80, %c0_81] : memref<2x1x128xbf16, #tpu.memory_space<vmem>>, vector<1x1x128xbf16>
    %170 = vector.shape_cast %169 : vector<1x1x128xbf16> to vector<1x128xbf16>
    %171 = arith.extf %170 : vector<1x128xbf16> to vector<1x128xf32>
    %cst_82 = arith.constant dense<0.000000e+00> : vector<128xf32>
    %172 = vector.multi_reduction <add>, %165, %cst_82 [1] : vector<128x128xf32> to vector<128xf32>
    %173 = vector.shape_cast %172 : vector<128xf32> to vector<128x1xf32>
    %cst_83 = arith.constant 1.280000e+02 : f32
    %174 = vector.broadcast %cst_83 : f32 to vector<128x1xf32>
    %175 = arith.divf %173, %174 : vector<128x1xf32>
    %176 = vector.broadcast %175 : vector<128x1xf32> to vector<128x128xf32>
    %177 = arith.subf %165, %176 : vector<128x128xf32>
    %178 = arith.mulf %177, %177 : vector<128x128xf32>
    %cst_84 = arith.constant dense<0.000000e+00> : vector<128xf32>
    %179 = vector.multi_reduction <add>, %178, %cst_84 [1] : vector<128x128xf32> to vector<128xf32>
    %180 = vector.shape_cast %179 : vector<128xf32> to vector<128x1xf32>
    %cst_85 = arith.constant 1.280000e+02 : f32
    %181 = vector.broadcast %cst_85 : f32 to vector<128x1xf32>
    %182 = arith.divf %180, %181 : vector<128x1xf32>
    %cst_86 = arith.constant 9.99999996E-13 : f32
    %183 = vector.broadcast %cst_86 : f32 to vector<128x1xf32>
    %184 = arith.addf %182, %183 : vector<128x1xf32>
    %185 = math.rsqrt %184 : vector<128x1xf32>
    %186 = vector.broadcast %185 : vector<128x1xf32> to vector<128x128xf32>
    %187 = arith.mulf %177, %186 : vector<128x128xf32>
    %188 = vector.broadcast %168 : vector<1x128xf32> to vector<128x128xf32>
    %189 = arith.mulf %187, %188 : vector<128x128xf32>
    %190 = vector.broadcast %171 : vector<1x128xf32> to vector<128x128xf32>
    %191 = arith.addf %189, %190 : vector<128x128xf32>
    %192 = arith.truncf %191 : vector<128x128xf32> to vector<128x128xbf16>
    %c1 = arith.constant 1 : index
    %c0_87 = arith.constant 0 : index
    %c0_88 = arith.constant 0 : index
    %193 = vector.load %arg4[%c1, %c0_87, %c0_88] : memref<2x128x384xbf16, #tpu.memory_space<vmem>>, vector<1x128x384xbf16>
    %194 = vector.shape_cast %193 : vector<1x128x384xbf16> to vector<128x384xbf16>
    %cst_89 = arith.constant dense<0.000000e+00> : vector<128x384xf32>
    %195 = tpu.matmul %192, %194, %cst_89 {dimension_numbers = #tpu.dot_dimension_numbers<[1], [0], [0], [1], [0, 0, 1, 1], [], []>} : vector<128x128xbf16>, vector<128x384xbf16>, vector<128x384xf32> -> vector<128x384xf32>
    %c1_90 = arith.constant 1 : index
    %c0_91 = arith.constant 0 : index
    %c0_92 = arith.constant 0 : index
    %196 = vector.load %arg5[%c1_90, %c0_91, %c0_92] : memref<2x1x384xbf16, #tpu.memory_space<vmem>>, vector<1x1x384xbf16>
    %197 = vector.shape_cast %196 : vector<1x1x384xbf16> to vector<1x384xbf16>
    %198 = arith.extf %197 : vector<1x384xbf16> to vector<1x384xf32>
    %199 = vector.broadcast %198 : vector<1x384xf32> to vector<128x384xf32>
    %200 = arith.addf %195, %199 : vector<128x384xf32>
    %201 = arith.truncf %200 : vector<128x384xf32> to vector<128x384xbf16>
    %202 = vector.extract_strided_slice %201 {offsets = [0, 0], sizes = [128, 32], strides = [1, 1]} : vector<128x384xbf16> to vector<128x32xbf16>
    %cst_93 = arith.constant 1.767580e-01 : bf16
    %203 = vector.broadcast %cst_93 : bf16 to vector<128x32xbf16>
    %204 = arith.mulf %202, %203 : vector<128x32xbf16>
    %205 = vector.extract_strided_slice %201 {offsets = [0, 128], sizes = [128, 32], strides = [1, 1]} : vector<128x384xbf16> to vector<128x32xbf16>
    %206 = vector.extract_strided_slice %201 {offsets = [0, 256], sizes = [128, 32], strides = [1, 1]} : vector<128x384xbf16> to vector<128x32xbf16>
    %cst_94 = arith.constant dense<0.000000e+00> : vector<128x128xf32>
    %207 = tpu.matmul %204, %205, %cst_94 {dimension_numbers = #tpu.dot_dimension_numbers<[1], [1], [0], [0], [0, 0, 1, 0], [], []>} : vector<128x32xbf16>, vector<128x32xbf16>, vector<128x128xf32> -> vector<128x128xf32>
    %cst_95 = arith.constant dense<0xFF800000> : vector<128xf32>
    %208 = vector.multi_reduction <maximumf>, %207, %cst_95 [1] : vector<128x128xf32> to vector<128xf32>
    %209 = vector.shape_cast %208 : vector<128xf32> to vector<128x1xf32>
    %210 = vector.broadcast %209 : vector<128x1xf32> to vector<128x128xf32>
    %211 = arith.subf %207, %210 : vector<128x128xf32>
    %212 = math.exp %211 : vector<128x128xf32>
    %cst_96 = arith.constant dense<0.000000e+00> : vector<128xf32>
    %213 = vector.multi_reduction <add>, %212, %cst_96 [1] : vector<128x128xf32> to vector<128xf32>
    %214 = vector.shape_cast %213 : vector<128xf32> to vector<128x1xf32>
    %215 = tpu.reciprocal %214 {approx = true} : vector<128x1xf32> -> vector<128x1xf32>
    %216 = vector.broadcast %215 : vector<128x1xf32> to vector<128x128xf32>
    %217 = arith.mulf %212, %216 : vector<128x128xf32>
    %218 = arith.truncf %217 : vector<128x128xf32> to vector<128x128xbf16>
    %cst_97 = arith.constant dense<0.000000e+00> : vector<128x32xf32>
    %219 = tpu.matmul %218, %206, %cst_97 {dimension_numbers = #tpu.dot_dimension_numbers<[1], [0], [0], [1], [0, 0, 1, 1], [], []>} : vector<128x128xbf16>, vector<128x32xbf16>, vector<128x32xf32> -> vector<128x32xf32>
    %220 = arith.truncf %219 : vector<128x32xf32> to vector<128x32xbf16>
    %c0_98 = arith.constant 0 : index
    %c0_99 = arith.constant 0 : index
    %221 = vector.load %arg19[%c0_98, %c0_99] : memref<128x128xbf16, #tpu.memory_space<vmem>>, vector<128x32xbf16>
    tpu.vector_store %arg19[%c0_98, %c0_99], %220 {strides = array<i32>} : memref<128x128xbf16, #tpu.memory_space<vmem>>, vector<128x32xbf16>,
    %222 = vector.extract_strided_slice %201 {offsets = [0, 32], sizes = [128, 32], strides = [1, 1]} : vector<128x384xbf16> to vector<128x32xbf16>
    %cst_100 = arith.constant 1.767580e-01 : bf16
    %223 = vector.broadcast %cst_100 : bf16 to vector<128x32xbf16>
    %224 = arith.mulf %222, %223 : vector<128x32xbf16>
    %225 = vector.extract_strided_slice %201 {offsets = [0, 160], sizes = [128, 32], strides = [1, 1]} : vector<128x384xbf16> to vector<128x32xbf16>
    %226 = vector.extract_strided_slice %201 {offsets = [0, 288], sizes = [128, 32], strides = [1, 1]} : vector<128x384xbf16> to vector<128x32xbf16>
    %cst_101 = arith.constant dense<0.000000e+00> : vector<128x128xf32>
    %227 = tpu.matmul %224, %225, %cst_101 {dimension_numbers = #tpu.dot_dimension_numbers<[1], [1], [0], [0], [0, 0, 1, 0], [], []>} : vector<128x32xbf16>, vector<128x32xbf16>, vector<128x128xf32> -> vector<128x128xf32>
    %cst_102 = arith.constant dense<0xFF800000> : vector<128xf32>
    %228 = vector.multi_reduction <maximumf>, %227, %cst_102 [1] : vector<128x128xf32> to vector<128xf32>
    %229 = vector.shape_cast %228 : vector<128xf32> to vector<128x1xf32>
    %230 = vector.broadcast %229 : vector<128x1xf32> to vector<128x128xf32>
    %231 = arith.subf %227, %230 : vector<128x128xf32>
    %232 = math.exp %231 : vector<128x128xf32>
    %cst_103 = arith.constant dense<0.000000e+00> : vector<128xf32>
    %233 = vector.multi_reduction <add>, %232, %cst_103 [1] : vector<128x128xf32> to vector<128xf32>
    %234 = vector.shape_cast %233 : vector<128xf32> to vector<128x1xf32>
    %235 = tpu.reciprocal %234 {approx = true} : vector<128x1xf32> -> vector<128x1xf32>
    %236 = vector.broadcast %235 : vector<128x1xf32> to vector<128x128xf32>
    %237 = arith.mulf %232, %236 : vector<128x128xf32>
    %238 = arith.truncf %237 : vector<128x128xf32> to vector<128x128xbf16>
    %cst_104 = arith.constant dense<0.000000e+00> : vector<128x32xf32>
    %239 = tpu.matmul %238, %226, %cst_104 {dimension_numbers = #tpu.dot_dimension_numbers<[1], [0], [0], [1], [0, 0, 1, 1], [], []>} : vector<128x128xbf16>, vector<128x32xbf16>, vector<128x32xf32> -> vector<128x32xf32>
    %240 = arith.truncf %239 : vector<128x32xf32> to vector<128x32xbf16>
    %c0_105 = arith.constant 0 : index
    %c32_106 = arith.constant 32 : index
    %241 = vector.load %arg19[%c0_105, %c32_106] : memref<128x128xbf16, #tpu.memory_space<vmem>>, vector<128x32xbf16>
    tpu.vector_store %arg19[%c0_105, %c32_106], %240 {strides = array<i32>} : memref<128x128xbf16, #tpu.memory_space<vmem>>, vector<128x32xbf16>,
    %242 = vector.extract_strided_slice %201 {offsets = [0, 64], sizes = [128, 32], strides = [1, 1]} : vector<128x384xbf16> to vector<128x32xbf16>
    %cst_107 = arith.constant 1.767580e-01 : bf16
    %243 = vector.broadcast %cst_107 : bf16 to vector<128x32xbf16>
    %244 = arith.mulf %242, %243 : vector<128x32xbf16>
    %245 = vector.extract_strided_slice %201 {offsets = [0, 192], sizes = [128, 32], strides = [1, 1]} : vector<128x384xbf16> to vector<128x32xbf16>
    %246 = vector.extract_strided_slice %201 {offsets = [0, 320], sizes = [128, 32], strides = [1, 1]} : vector<128x384xbf16> to vector<128x32xbf16>
    %cst_108 = arith.constant dense<0.000000e+00> : vector<128x128xf32>
    %247 = tpu.matmul %244, %245, %cst_108 {dimension_numbers = #tpu.dot_dimension_numbers<[1], [1], [0], [0], [0, 0, 1, 0], [], []>} : vector<128x32xbf16>, vector<128x32xbf16>, vector<128x128xf32> -> vector<128x128xf32>
    %cst_109 = arith.constant dense<0xFF800000> : vector<128xf32>
    %248 = vector.multi_reduction <maximumf>, %247, %cst_109 [1] : vector<128x128xf32> to vector<128xf32>
    %249 = vector.shape_cast %248 : vector<128xf32> to vector<128x1xf32>
    %250 = vector.broadcast %249 : vector<128x1xf32> to vector<128x128xf32>
    %251 = arith.subf %247, %250 : vector<128x128xf32>
    %252 = math.exp %251 : vector<128x128xf32>
    %cst_110 = arith.constant dense<0.000000e+00> : vector<128xf32>
    %253 = vector.multi_reduction <add>, %252, %cst_110 [1] : vector<128x128xf32> to vector<128xf32>
    %254 = vector.shape_cast %253 : vector<128xf32> to vector<128x1xf32>
    %255 = tpu.reciprocal %254 {approx = true} : vector<128x1xf32> -> vector<128x1xf32>
    %256 = vector.broadcast %255 : vector<128x1xf32> to vector<128x128xf32>
    %257 = arith.mulf %252, %256 : vector<128x128xf32>
    %258 = arith.truncf %257 : vector<128x128xf32> to vector<128x128xbf16>
    %cst_111 = arith.constant dense<0.000000e+00> : vector<128x32xf32>
    %259 = tpu.matmul %258, %246, %cst_111 {dimension_numbers = #tpu.dot_dimension_numbers<[1], [0], [0], [1], [0, 0, 1, 1], [], []>} : vector<128x128xbf16>, vector<128x32xbf16>, vector<128x32xf32> -> vector<128x32xf32>
    %260 = arith.truncf %259 : vector<128x32xf32> to vector<128x32xbf16>
    %c0_112 = arith.constant 0 : index
    %c64_113 = arith.constant 64 : index
    %261 = vector.load %arg19[%c0_112, %c64_113] : memref<128x128xbf16, #tpu.memory_space<vmem>>, vector<128x32xbf16>
    tpu.vector_store %arg19[%c0_112, %c64_113], %260 {strides = array<i32>} : memref<128x128xbf16, #tpu.memory_space<vmem>>, vector<128x32xbf16>,
    %262 = vector.extract_strided_slice %201 {offsets = [0, 96], sizes = [128, 32], strides = [1, 1]} : vector<128x384xbf16> to vector<128x32xbf16>
    %cst_114 = arith.constant 1.767580e-01 : bf16
    %263 = vector.broadcast %cst_114 : bf16 to vector<128x32xbf16>
    %264 = arith.mulf %262, %263 : vector<128x32xbf16>
    %265 = vector.extract_strided_slice %201 {offsets = [0, 224], sizes = [128, 32], strides = [1, 1]} : vector<128x384xbf16> to vector<128x32xbf16>
    %266 = vector.extract_strided_slice %201 {offsets = [0, 352], sizes = [128, 32], strides = [1, 1]} : vector<128x384xbf16> to vector<128x32xbf16>
    %cst_115 = arith.constant dense<0.000000e+00> : vector<128x128xf32>
    %267 = tpu.matmul %264, %265, %cst_115 {dimension_numbers = #tpu.dot_dimension_numbers<[1], [1], [0], [0], [0, 0, 1, 0], [], []>} : vector<128x32xbf16>, vector<128x32xbf16>, vector<128x128xf32> -> vector<128x128xf32>
    %cst_116 = arith.constant dense<0xFF800000> : vector<128xf32>
    %268 = vector.multi_reduction <maximumf>, %267, %cst_116 [1] : vector<128x128xf32> to vector<128xf32>
    %269 = vector.shape_cast %268 : vector<128xf32> to vector<128x1xf32>
    %270 = vector.broadcast %269 : vector<128x1xf32> to vector<128x128xf32>
    %271 = arith.subf %267, %270 : vector<128x128xf32>
    %272 = math.exp %271 : vector<128x128xf32>
    %cst_117 = arith.constant dense<0.000000e+00> : vector<128xf32>
    %273 = vector.multi_reduction <add>, %272, %cst_117 [1] : vector<128x128xf32> to vector<128xf32>
    %274 = vector.shape_cast %273 : vector<128xf32> to vector<128x1xf32>
    %275 = tpu.reciprocal %274 {approx = true} : vector<128x1xf32> -> vector<128x1xf32>
    %276 = vector.broadcast %275 : vector<128x1xf32> to vector<128x128xf32>
    %277 = arith.mulf %272, %276 : vector<128x128xf32>
    %278 = arith.truncf %277 : vector<128x128xf32> to vector<128x128xbf16>
    %cst_118 = arith.constant dense<0.000000e+00> : vector<128x32xf32>
    %279 = tpu.matmul %278, %266, %cst_118 {dimension_numbers = #tpu.dot_dimension_numbers<[1], [0], [0], [1], [0, 0, 1, 1], [], []>} : vector<128x128xbf16>, vector<128x32xbf16>, vector<128x32xf32> -> vector<128x32xf32>
    %280 = arith.truncf %279 : vector<128x32xf32> to vector<128x32xbf16>
    %c0_119 = arith.constant 0 : index
    %c96_120 = arith.constant 96 : index
    %281 = vector.load %arg19[%c0_119, %c96_120] : memref<128x128xbf16, #tpu.memory_space<vmem>>, vector<128x32xbf16>
    tpu.vector_store %arg19[%c0_119, %c96_120], %280 {strides = array<i32>} : memref<128x128xbf16, #tpu.memory_space<vmem>>, vector<128x32xbf16>,
    %c0_121 = arith.constant 0 : index
    %c0_122 = arith.constant 0 : index
    %282 = vector.load %arg19[%c0_121, %c0_122] : memref<128x128xbf16, #tpu.memory_space<vmem>>, vector<128x128xbf16>
    %c1_123 = arith.constant 1 : index
    %c0_124 = arith.constant 0 : index
    %c0_125 = arith.constant 0 : index
    %283 = vector.load %arg6[%c1_123, %c0_124, %c0_125] : memref<2x128x128xbf16, #tpu.memory_space<vmem>>, vector<1x128x128xbf16>
    %284 = vector.shape_cast %283 : vector<1x128x128xbf16> to vector<128x128xbf16>
    %cst_126 = arith.constant dense<0.000000e+00> : vector<128x128xf32>
    %285 = tpu.matmul %282, %284, %cst_126 {dimension_numbers = #tpu.dot_dimension_numbers<[1], [0], [0], [1], [0, 0, 1, 1], [], []>} : vector<128x128xbf16>, vector<128x128xbf16>, vector<128x128xf32> -> vector<128x128xf32>
    %c1_127 = arith.constant 1 : index
    %c0_128 = arith.constant 0 : index
    %c0_129 = arith.constant 0 : index
    %286 = vector.load %arg7[%c1_127, %c0_128, %c0_129] : memref<2x1x128xbf16, #tpu.memory_space<vmem>>, vector<1x1x128xbf16>
    %287 = vector.shape_cast %286 : vector<1x1x128xbf16> to vector<1x128xbf16>
    %288 = arith.extf %287 : vector<1x128xbf16> to vector<1x128xf32>
    %289 = vector.broadcast %288 : vector<1x128xf32> to vector<128x128xf32>
    %290 = arith.addf %285, %289 : vector<128x128xf32>
    %291 = arith.addf %290, %191 : vector<128x128xf32>
    %c1_130 = arith.constant 1 : index
    %c0_131 = arith.constant 0 : index
    %c0_132 = arith.constant 0 : index
    %292 = vector.load %arg8[%c1_130, %c0_131, %c0_132] : memref<2x1x128xbf16, #tpu.memory_space<vmem>>, vector<1x1x128xbf16>
    %293 = vector.shape_cast %292 : vector<1x1x128xbf16> to vector<1x128xbf16>
    %294 = arith.extf %293 : vector<1x128xbf16> to vector<1x128xf32>
    %c1_133 = arith.constant 1 : index
    %c0_134 = arith.constant 0 : index
    %c0_135 = arith.constant 0 : index
    %295 = vector.load %arg9[%c1_133, %c0_134, %c0_135] : memref<2x1x128xbf16, #tpu.memory_space<vmem>>, vector<1x1x128xbf16>
    %296 = vector.shape_cast %295 : vector<1x1x128xbf16> to vector<1x128xbf16>
    %297 = arith.extf %296 : vector<1x128xbf16> to vector<1x128xf32>
    %cst_136 = arith.constant dense<0.000000e+00> : vector<128xf32>
    %298 = vector.multi_reduction <add>, %291, %cst_136 [1] : vector<128x128xf32> to vector<128xf32>
    %299 = vector.shape_cast %298 : vector<128xf32> to vector<128x1xf32>
    %cst_137 = arith.constant 1.280000e+02 : f32
    %300 = vector.broadcast %cst_137 : f32 to vector<128x1xf32>
    %301 = arith.divf %299, %300 : vector<128x1xf32>
    %302 = vector.broadcast %301 : vector<128x1xf32> to vector<128x128xf32>
    %303 = arith.subf %291, %302 : vector<128x128xf32>
    %304 = arith.mulf %303, %303 : vector<128x128xf32>
    %cst_138 = arith.constant dense<0.000000e+00> : vector<128xf32>
    %305 = vector.multi_reduction <add>, %304, %cst_138 [1] : vector<128x128xf32> to vector<128xf32>
    %306 = vector.shape_cast %305 : vector<128xf32> to vector<128x1xf32>
    %cst_139 = arith.constant 1.280000e+02 : f32
    %307 = vector.broadcast %cst_139 : f32 to vector<128x1xf32>
    %308 = arith.divf %306, %307 : vector<128x1xf32>
    %cst_140 = arith.constant 9.99999996E-13 : f32
    %309 = vector.broadcast %cst_140 : f32 to vector<128x1xf32>
    %310 = arith.addf %308, %309 : vector<128x1xf32>
    %311 = math.rsqrt %310 : vector<128x1xf32>
    %312 = vector.broadcast %311 : vector<128x1xf32> to vector<128x128xf32>
    %313 = arith.mulf %303, %312 : vector<128x128xf32>
    %314 = vector.broadcast %294 : vector<1x128xf32> to vector<128x128xf32>
    %315 = arith.mulf %313, %314 : vector<128x128xf32>
    %316 = vector.broadcast %297 : vector<1x128xf32> to vector<128x128xf32>
    %317 = arith.addf %315, %316 : vector<128x128xf32>
    %318 = arith.truncf %317 : vector<128x128xf32> to vector<128x128xbf16>
    %c1_141 = arith.constant 1 : index
    %c0_142 = arith.constant 0 : index
    %c0_143 = arith.constant 0 : index
    %319 = vector.load %arg10[%c1_141, %c0_142, %c0_143] : memref<2x128x512xbf16, #tpu.memory_space<vmem>>, vector<1x128x512xbf16>
    %320 = vector.shape_cast %319 : vector<1x128x512xbf16> to vector<128x512xbf16>
    %cst_144 = arith.constant dense<0.000000e+00> : vector<128x512xf32>
    %321 = tpu.matmul %318, %320, %cst_144 {dimension_numbers = #tpu.dot_dimension_numbers<[1], [0], [0], [1], [0, 0, 1, 1], [], []>} : vector<128x128xbf16>, vector<128x512xbf16>, vector<128x512xf32> -> vector<128x512xf32>
    %c1_145 = arith.constant 1 : index
    %c0_146 = arith.constant 0 : index
    %c0_147 = arith.constant 0 : index
    %322 = vector.load %arg11[%c1_145, %c0_146, %c0_147] : memref<2x1x512xbf16, #tpu.memory_space<vmem>>, vector<1x1x512xbf16>
    %323 = vector.shape_cast %322 : vector<1x1x512xbf16> to vector<1x512xbf16>
    %324 = arith.extf %323 : vector<1x512xbf16> to vector<1x512xf32>
    %325 = vector.broadcast %324 : vector<1x512xf32> to vector<128x512xf32>
    %326 = arith.addf %321, %325 : vector<128x512xf32>
    %cst_148 = arith.constant 5.000000e-01 : f32
    %327 = vector.broadcast %cst_148 : f32 to vector<128x512xf32>
    %328 = arith.mulf %327, %326 : vector<128x512xf32>
    %cst_149 = arith.constant 4.471500e-02 : f32
    %329 = vector.broadcast %cst_149 : f32 to vector<128x512xf32>
    %330 = arith.mulf %329, %326 : vector<128x512xf32>
    %331 = arith.mulf %330, %326 : vector<128x512xf32>
    %332 = arith.mulf %331, %326 : vector<128x512xf32>
    %333 = arith.addf %326, %332 : vector<128x512xf32>
    %cst_150 = arith.constant 0.797884583 : f32
    %334 = vector.broadcast %cst_150 : f32 to vector<128x512xf32>
    %335 = arith.mulf %334, %333 : vector<128x512xf32>
    %336 = math.tanh %335 : vector<128x512xf32>
    %cst_151 = arith.constant 1.000000e+00 : f32
    %337 = vector.broadcast %cst_151 : f32 to vector<128x512xf32>
    %338 = arith.addf %337, %336 : vector<128x512xf32>
    %339 = arith.mulf %328, %338 : vector<128x512xf32>
    %340 = arith.truncf %339 : vector<128x512xf32> to vector<128x512xbf16>
    %c1_152 = arith.constant 1 : index
    %c0_153 = arith.constant 0 : index
    %c0_154 = arith.constant 0 : index
    %341 = vector.load %arg12[%c1_152, %c0_153, %c0_154] : memref<2x512x128xbf16, #tpu.memory_space<vmem>>, vector<1x512x128xbf16>
    %342 = vector.shape_cast %341 : vector<1x512x128xbf16> to vector<512x128xbf16>
    %cst_155 = arith.constant dense<0.000000e+00> : vector<128x128xf32>
    %343 = tpu.matmul %340, %342, %cst_155 {dimension_numbers = #tpu.dot_dimension_numbers<[1], [0], [0], [1], [0, 0, 1, 1], [], []>} : vector<128x512xbf16>, vector<512x128xbf16>, vector<128x128xf32> -> vector<128x128xf32>
    %c1_156 = arith.constant 1 : index
    %c0_157 = arith.constant 0 : index
    %c0_158 = arith.constant 0 : index
    %344 = vector.load %arg13[%c1_156, %c0_157, %c0_158] : memref<2x1x128xbf16, #tpu.memory_space<vmem>>, vector<1x1x128xbf16>
    %345 = vector.shape_cast %344 : vector<1x1x128xbf16> to vector<1x128xbf16>
    %346 = arith.extf %345 : vector<1x128xbf16> to vector<1x128xf32>
    %347 = vector.broadcast %346 : vector<1x128xf32> to vector<128x128xf32>
    %348 = arith.addf %343, %347 : vector<128x128xf32>
    %349 = arith.addf %348, %317 : vector<128x128xf32>
    %c1_159 = arith.constant 1 : index
    %c0_160 = arith.constant 0 : index
    %c0_161 = arith.constant 0 : index
    %350 = vector.load %arg14[%c1_159, %c0_160, %c0_161] : memref<2x1x128xbf16, #tpu.memory_space<vmem>>, vector<1x1x128xbf16>
    %351 = vector.shape_cast %350 : vector<1x1x128xbf16> to vector<1x128xbf16>
    %352 = arith.extf %351 : vector<1x128xbf16> to vector<1x128xf32>
    %c1_162 = arith.constant 1 : index
    %c0_163 = arith.constant 0 : index
    %c0_164 = arith.constant 0 : index
    %353 = vector.load %arg15[%c1_162, %c0_163, %c0_164] : memref<2x1x128xbf16, #tpu.memory_space<vmem>>, vector<1x1x128xbf16>
    %354 = vector.shape_cast %353 : vector<1x1x128xbf16> to vector<1x128xbf16>
    %355 = arith.extf %354 : vector<1x128xbf16> to vector<1x128xf32>
    %cst_165 = arith.constant dense<0.000000e+00> : vector<128xf32>
    %356 = vector.multi_reduction <add>, %349, %cst_165 [1] : vector<128x128xf32> to vector<128xf32>
    %357 = vector.shape_cast %356 : vector<128xf32> to vector<128x1xf32>
    %cst_166 = arith.constant 1.280000e+02 : f32
    %358 = vector.broadcast %cst_166 : f32 to vector<128x1xf32>
    %359 = arith.divf %357, %358 : vector<128x1xf32>
    %360 = vector.broadcast %359 : vector<128x1xf32> to vector<128x128xf32>
    %361 = arith.subf %349, %360 : vector<128x128xf32>
    %362 = arith.mulf %361, %361 : vector<128x128xf32>
    %cst_167 = arith.constant dense<0.000000e+00> : vector<128xf32>
    %363 = vector.multi_reduction <add>, %362, %cst_167 [1] : vector<128x128xf32> to vector<128xf32>
    %364 = vector.shape_cast %363 : vector<128xf32> to vector<128x1xf32>
    %cst_168 = arith.constant 1.280000e+02 : f32
    %365 = vector.broadcast %cst_168 : f32 to vector<128x1xf32>
    %366 = arith.divf %364, %365 : vector<128x1xf32>
    %cst_169 = arith.constant 9.99999996E-13 : f32
    %367 = vector.broadcast %cst_169 : f32 to vector<128x1xf32>
    %368 = arith.addf %366, %367 : vector<128x1xf32>
    %369 = math.rsqrt %368 : vector<128x1xf32>
    %370 = vector.broadcast %369 : vector<128x1xf32> to vector<128x128xf32>
    %371 = arith.mulf %361, %370 : vector<128x128xf32>
    %372 = vector.broadcast %352 : vector<1x128xf32> to vector<128x128xf32>
    %373 = arith.mulf %371, %372 : vector<128x128xf32>
    %374 = vector.broadcast %355 : vector<1x128xf32> to vector<128x128xf32>
    %375 = arith.addf %373, %374 : vector<128x128xf32>
    %376 = arith.truncf %375 : vector<128x128xf32> to vector<128x128xbf16>
    %c0_170 = arith.constant 0 : index
    %c0_171 = arith.constant 0 : index
    %377 = vector.load %arg16[%c0_170, %c0_171] : memref<128x256xbf16, #tpu.memory_space<vmem>>, vector<128x256xbf16>
    %cst_172 = arith.constant dense<0.000000e+00> : vector<128x256xf32>
    %378 = tpu.matmul %376, %377, %cst_172 {dimension_numbers = #tpu.dot_dimension_numbers<[1], [0], [0], [1], [0, 0, 1, 1], [], []>} : vector<128x128xbf16>, vector<128x256xbf16>, vector<128x256xf32> -> vector<128x256xf32>
    %c0_173 = arith.constant 0 : index
    %c0_174 = arith.constant 0 : index
    %379 = vector.load %arg17[%c0_173, %c0_174] : memref<1x256xbf16, #tpu.memory_space<vmem>>, vector<1x256xbf16>
    %380 = arith.extf %379 : vector<1x256xbf16> to vector<1x256xf32>
    %381 = vector.broadcast %380 : vector<1x256xf32> to vector<128x256xf32>
    %382 = arith.addf %378, %381 : vector<128x256xf32>
    %383 = arith.extf %1 : vector<128x256xbf16> to vector<128x256xf32>
    %384 = arith.addf %382, %383 : vector<128x256xf32>
    %385 = arith.truncf %384 : vector<128x256xf32> to vector<128x256xbf16>
    %c0_175 = arith.constant 0 : index
    %c0_176 = arith.constant 0 : index
    %c0_177 = arith.constant 0 : index
    %386 = vector.load %arg18[%c0_175, %c0_176, %c0_177] : memref<1x128x256xbf16, #tpu.memory_space<vmem>>, vector<1x128x256xbf16>
    %387 = vector.shape_cast %386 : vector<1x128x256xbf16> to vector<128x256xbf16>
    %388 = vector.shape_cast %385 : vector<128x256xbf16> to vector<1x128x256xbf16>
    tpu.vector_store %arg18[%c0_175, %c0_176, %c0_177], %388 {strides = array<i32>} : memref<1x128x256xbf16, #tpu.memory_space<vmem>>, vector<1x128x256xbf16>,
    return
  }
  func.func @transform_0(%arg0: i32) -> (i32, i32, i32) {
    %c0_i32 = arith.constant 0 : i32
    %c0_i32_0 = arith.constant 0 : i32
    %c0_i32_1 = arith.constant 0 : i32
    return %arg0, %c0_i32, %c0_i32_0 : i32, i32, i32
  }
  func.func @transform_1(%arg0: i32) -> (i32, i32) {
    %c0_i32 = arith.constant 0 : i32
    %c0_i32_0 = arith.constant 0 : i32
    %c0_i32_1 = arith.constant 0 : i32
    return %c0_i32, %c0_i32_0 : i32, i32
  }
  func.func @transform_2(%arg0: i32) -> (i32, i32) {
    %c0_i32 = arith.constant 0 : i32
    %c0_i32_0 = arith.constant 0 : i32
    %c0_i32_1 = arith.constant 0 : i32
    return %c0_i32, %c0_i32_0 : i32, i32
  }
  func.func @transform_3(%arg0: i32) -> (i32, i32, i32) {
    %c0_i32 = arith.constant 0 : i32
    %c0_i32_0 = arith.constant 0 : i32
    %c0_i32_1 = arith.constant 0 : i32
    %c0_i32_2 = arith.constant 0 : i32
    return %c0_i32, %c0_i32_0, %c0_i32_1 : i32, i32, i32
  }
  func.func @transform_4(%arg0: i32) -> (i32, i32, i32) {
    %c0_i32 = arith.constant 0 : i32
    %c0_i32_0 = arith.constant 0 : i32
    %c0_i32_1 = arith.constant 0 : i32
    %c0_i32_2 = arith.constant 0 : i32
    return %c0_i32, %c0_i32_0, %c0_i32_1 : i32, i32, i32
  }
  func.func @transform_5(%arg0: i32) -> (i32, i32, i32) {
    %c0_i32 = arith.constant 0 : i32
    %c0_i32_0 = arith.constant 0 : i32
    %c0_i32_1 = arith.constant 0 : i32
    %c0_i32_2 = arith.constant 0 : i32
    return %c0_i32, %c0_i32_0, %c0_i32_1 : i32, i32, i32
  }
  func.func @transform_6(%arg0: i32) -> (i32, i32, i32) {
    %c0_i32 = arith.constant 0 : i32
    %c0_i32_0 = arith.constant 0 : i32
    %c0_i32_1 = arith.constant 0 : i32
    %c0_i32_2 = arith.constant 0 : i32
    return %c0_i32, %c0_i32_0, %c0_i32_1 : i32, i32, i32
  }
  func.func @transform_7(%arg0: i32) -> (i32, i32, i32) {
    %c0_i32 = arith.constant 0 : i32
    %c0_i32_0 = arith.constant 0 : i32
    %c0_i32_1 = arith.constant 0 : i32
    %c0_i32_2 = arith.constant 0 : i32
    return %c0_i32, %c0_i32_0, %c0_i32_1 : i32, i32, i32
  }
  func.func @transform_8(%arg0: i32) -> (i32, i32, i32) {
    %c0_i32 = arith.constant 0 : i32
    %c0_i32_0 = arith.constant 0 : i32
    %c0_i32_1 = arith.constant 0 : i32
    %c0_i32_2 = arith.constant 0 : i32
    return %c0_i32, %c0_i32_0, %c0_i32_1 : i32, i32, i32
  }
  func.func @transform_9(%arg0: i32) -> (i32, i32, i32) {
    %c0_i32 = arith.constant 0 : i32
    %c0_i32_0 = arith.constant 0 : i32
    %c0_i32_1 = arith.constant 0 : i32
    %c0_i32_2 = arith.constant 0 : i32
    return %c0_i32, %c0_i32_0, %c0_i32_1 : i32, i32, i32
  }
  func.func @transform_10(%arg0: i32) -> (i32, i32, i32) {
    %c0_i32 = arith.constant 0 : i32
    %c0_i32_0 = arith.constant 0 : i32
    %c0_i32_1 = arith.constant 0 : i32
    %c0_i32_2 = arith.constant 0 : i32
    return %c0_i32, %c0_i32_0, %c0_i32_1 : i32, i32, i32
  }
  func.func @transform_11(%arg0: i32) -> (i32, i32, i32) {
    %c0_i32 = arith.constant 0 : i32
    %c0_i32_0 = arith.constant 0 : i32
    %c0_i32_1 = arith.constant 0 : i32
    %c0_i32_2 = arith.constant 0 : i32
    return %c0_i32, %c0_i32_0, %c0_i32_1 : i32, i32, i32
  }
  func.func @transform_12(%arg0: i32) -> (i32, i32, i32) {
    %c0_i32 = arith.constant 0 : i32
    %c0_i32_0 = arith.constant 0 : i32
    %c0_i32_1 = arith.constant 0 : i32
    %c0_i32_2 = arith.constant 0 : i32
    return %c0_i32, %c0_i32_0, %c0_i32_1 : i32, i32, i32
  }
  func.func @transform_13(%arg0: i32) -> (i32, i32, i32) {
    %c0_i32 = arith.constant 0 : i32
    %c0_i32_0 = arith.constant 0 : i32
    %c0_i32_1 = arith.constant 0 : i32
    %c0_i32_2 = arith.constant 0 : i32
    return %c0_i32, %c0_i32_0, %c0_i32_1 : i32, i32, i32
  }
  func.func @transform_14(%arg0: i32) -> (i32, i32, i32) {
    %c0_i32 = arith.constant 0 : i32
    %c0_i32_0 = arith.constant 0 : i32
    %c0_i32_1 = arith.constant 0 : i32
    %c0_i32_2 = arith.constant 0 : i32
    return %c0_i32, %c0_i32_0, %c0_i32_1 : i32, i32, i32
  }
  func.func @transform_15(%arg0: i32) -> (i32, i32) {
    %c0_i32 = arith.constant 0 : i32
    %c0_i32_0 = arith.constant 0 : i32
    %c0_i32_1 = arith.constant 0 : i32
    return %c0_i32, %c0_i32_0 : i32, i32
  }
  func.func @transform_16(%arg0: i32) -> (i32, i32) {
    %c0_i32 = arith.constant 0 : i32
    %c0_i32_0 = arith.constant 0 : i32
    %c0_i32_1 = arith.constant 0 : i32
    return %c0_i32, %c0_i32_0 : i32, i32
  }
  func.func @transform_17(%arg0: i32) -> (i32, i32, i32) {
    %c0_i32 = arith.constant 0 : i32
    %c0_i32_0 = arith.constant 0 : i32
    %c0_i32_1 = arith.constant 0 : i32
    return %arg0, %c0_i32, %c0_i32_0 : i32, i32, i32
  }
}

</mosaic_0001>

<llo_original>
// kernel: adapter_forward.1
$region0: #{adapter_forward.1}
  #allocation0 [shape = 'u32[]', space=smem, size = 0x4, offset = 0x4, fixed_abs, tag = 'smem constant byte address 0x4 - core index']
  #allocation1 [shape = 'u32[144,128]{1,0:T(1,128)}', space=vmem, size = 0x12000, scoped, tag = 'internal scratch']
  #allocation2 [shape = 'bf16[128,128]{1,0:T(16,128)(2,1)}', space=vmem, size = 0x8000, scoped, tag = 'scratch operand']
  %s0 = inlined_call_operand.hbm [shape: bf16[2,128,256], index: 0, kind: input, shape index: {}]
  %s1 = inlined_call_operand.hbm [shape: bf16[256,128], index: 1, kind: input, shape index: {}]
  %s2 = inlined_call_operand.vmem [shape: bf16[1,128], index: 2, kind: input, shape index: {}]
  %s3 = inlined_call_operand.hbm [shape: bf16[2,128,384], index: 3, kind: input, shape index: {}]
  %s4 = inlined_call_operand.vmem [shape: bf16[2,1,384], index: 4, kind: input, shape index: {}]
  %s5 = inlined_call_operand.hbm [shape: bf16[2,128,128], index: 5, kind: input, shape index: {}]
  %s6 = inlined_call_operand.vmem [shape: bf16[2,1,128], index: 6, kind: input, shape index: {}]
  %s7 = inlined_call_operand.vmem [shape: bf16[2,1,128], index: 7, kind: input, shape index: {}]
  %s8 = inlined_call_operand.vmem [shape: bf16[2,1,128], index: 8, kind: input, shape index: {}]
  %s9 = inlined_call_operand.hbm [shape: bf16[2,128,512], index: 9, kind: input, shape index: {}]
  %s10 = inlined_call_operand.vmem [shape: bf16[2,1,512], index: 10, kind: input, shape index: {}]
  %s11 = inlined_call_operand.hbm [shape: bf16[2,512,128], index: 11, kind: input, shape index: {}]
  %s12 = inlined_call_operand.vmem [shape: bf16[2,1,128], index: 12, kind: input, shape index: {}]
  %s13 = inlined_call_operand.vmem [shape: bf16[2,1,128], index: 13, kind: input, shape index: {}]
  %s14 = inlined_call_operand.vmem [shape: bf16[2,1,128], index: 14, kind: input, shape index: {}]
  %s15 = inlined_call_operand.hbm [shape: bf16[128,256], index: 15, kind: input, shape index: {}]
  %s16 = inlined_call_operand.vmem [shape: bf16[1,256], index: 16, kind: input, shape index: {}]
  %s17 = inlined_call_operand.hbm [shape: bf16[2,128,256], index: 17, kind: output, shape index: {}]
  %s18 = sld [smem:[#allocation0]]
  $region129: #{adapter_forward.1} parent=0
    _
  %s20 = ssub.s32 1, %s18
  %s21 = scalar_select 0, %s20, %s18
  $region1: #{adapter_forward.1} parent=0
    #allocation3 [shape = 'u8[131072]{0}', space=vmem, size = 0x20000, scoped, tag = 'input window, operand 0']
    #allocation4 [shape = 's32[2]{0}', space=sflag, size = 0x8, scoped, tag = 'scoped memory for adapter_forward.1']
    #allocation5 [shape = 's32[2]{0}', space=sflag, size = 0x8, scoped, tag = 'scoped memory for adapter_forward.1']
    #allocation6 [shape = 'u8[65536]{0}', space=vmem, size = 0x10000, scoped, tag = 'input window, operand 1, single buffered']
    #allocation7 [shape = 's32[1]{0}', space=sflag, size = 0x4, scoped, tag = 'scoped memory for adapter_forward.1']
    #allocation8 [shape = 'u8[196608]{0}', space=vmem, size = 0x30000, scoped, tag = 'input window, operand 3, single buffered']
    #allocation9 [shape = 'u8[65536]{0}', space=vmem, size = 0x10000, scoped, tag = 'input window, operand 5, single buffered']
    #allocation10 [shape = 's32[1]{0}', space=sflag, size = 0x4, scoped, tag = 'scoped memory for adapter_forward.1']
    #allocation11 [shape = 'u8[262144]{0}', space=vmem, size = 0x40000, scoped, tag = 'input window, operand 9, single buffered']
    #allocation12 [shape = 'u8[262144]{0}', space=vmem, size = 0x40000, scoped, tag = 'input window, operand 11, single buffered']
    #allocation13 [shape = 's32[1]{0}', space=sflag, size = 0x4, scoped, tag = 'scoped memory for adapter_forward.1']
    #allocation14 [shape = 'u8[65536]{0}', space=vmem, size = 0x10000, scoped, tag = 'input window, operand 15, single buffered']
    #allocation15 [shape = 'u8[131072]{0}', space=vmem, size = 0x20000, scoped, tag = 'output window, operand 0']
    %22 = vsyncpa [#allocation4], 0
    %s23 = scalar_lea.sflag [#allocation4], 1
    %24 = vsyncpa %s23, 0
    %25 = vsyncpa [#allocation7], 0
    %26 = vsyncpa [#allocation10], 0
    %27 = vsyncpa [#allocation13], 0
    %28 = vsyncpa [#allocation5], 0
    %s29 = scalar_lea.sflag [#allocation5], 1
    %30 = vsyncpa %s29, 0
    loop: start=0, step=1, limit=4
    $region2: #{adapter_forward.1} parent=1 // loop_pre_header
      _
    $region3: #{adapter_forward.1} parent=1 // loop_header
      %s32 = sphi 0, %s36
      %p33 = scmp.ge.s32.totalorder %s32, 4
      %s42 = sphi 0, %s44
      %s45 = sphi 0, %s42
      %s46 = sphi 0, %s45
      %s62 = sphi 0, %s46
      %s66 = sphi 0, %s66
      %s68 = sphi 0, %s66
      %s69 = sphi 0, %s68
      %s83 = sphi 0, %s69
      %s87 = sphi 0, %s87
      %s89 = sphi 0, %s87
      %s90 = sphi 0, %s89
      %s104 = sphi 0, %s90
      %s108 = sphi 0, %s108
      %s110 = sphi 0, %s108
      %s111 = sphi 0, %s110
      %s125 = sphi 0, %s111
      %s129 = sphi 0, %s129
      %s131 = sphi 0, %s129
      %s132 = sphi 0, %s131
      %s146 = sphi 0, %s132
      %s150 = sphi 0, %s150
      %s152 = sphi 0, %s150
      %s153 = sphi 0, %s152
      %s167 = sphi 0, %s153
      %s171 = sphi 0, %s171
      %s173 = sphi 0, %s171
      %s174 = sphi 0, %s173
      %s188 = sphi 0, %s174
      %s192 = sphi 0, %s192
      %s194 = sphi 0, %s192
      %s195 = sphi 0, %s194
      %s209 = sphi 0, %s195
      %s213 = sphi 0, %s213
      %s215 = sphi 0, %s213
      %s216 = sphi 0, %s215
      %s230 = sphi 0, %s216
      %s234 = sphi 0, %s234
      %s236 = sphi 0, %s234
      %s237 = sphi 0, %s236
      %s251 = sphi 0, %s237
      %s255 = sphi 0, %s255
      %s257 = sphi 0, %s255
      %s258 = sphi 0, %s257
      %s272 = sphi 0, %s258
      %s276 = sphi 0, %s276
      %s278 = sphi 0, %s276
      %s279 = sphi 0, %s278
      %s293 = sphi 0, %s279
      %s297 = sphi 0, %s297
      %s299 = sphi 0, %s297
      %s300 = sphi 0, %s299
      %s314 = sphi 0, %s300
      %s318 = sphi 0, %s318
      %s320 = sphi 0, %s318
      %s321 = sphi 0, %s320
      %s335 = sphi 0, %s321
      %s339 = sphi 0, %s339
      %s341 = sphi 0, %s339
      %s342 = sphi 0, %s341
      %s356 = sphi 0, %s342
      %s360 = sphi 0, %s360
      %s362 = sphi 0, %s360
      %s363 = sphi 0, %s362
      %s377 = sphi 0, %s363
      %s381 = sphi 0, %s381
      %s383 = sphi 0, %s381
      %s384 = sphi 0, %s383
      %s398 = sphi 0, %s384
      %s404 = sphi 0, %s406
      %s407 = sphi 0, %s404
      %s408 = sphi 0, %s407
      %s424 = sphi 0, %s408
    $region4: #{adapter_forward.1} parent=1 // loop_header_branch
      %35 = sbr.rel (%p33) target = $region8
    $region5: #{adapter_forward.1} parent=1 // loop_body
      %s37 = ssub.s32 %s32, 1
      %s38 = ssub.s32 %s32, 2
      %s39 = sadd.s32 %s32, 1
      %s40 = ssub.s32 %s32, %s39
      %p41 = scmp.eq.s32.totalorder %s40, 0
      %s43 = sadd.s32 %s42, 1
      %s44 = scalar_select %p41, %s42, %s43
      %p47 = pneg %p41
      %p48 = scmp.eq.s32.totalorder %s32, 1
      %p49 = por %p47, %p48
      %p50 = scmp.ne.s32.totalorder %s42, %s45
      %p51 = scmp.eq.s32.totalorder %s32, 0
      %p52 = por %p50, %p51
      %p53 = scmp.ne.s32.totalorder %s42, %s45
      %p54 = scmp.eq.s32.totalorder %s37, 1
      %p55 = por %p53, %p54
      %p56 = scmp.ne.s32.totalorder %s45, %s46
      %p57 = scmp.eq.s32.totalorder %s37, 0
      %p58 = por %p56, %p57
      %p59 = scmp.ne.s32.totalorder %s45, %s46
      %p60 = scmp.eq.s32.totalorder %s38, 1
      %p61 = por %p59, %p60
      %p63 = scmp.ne.s32.totalorder %s46, %s62
      %p64 = scmp.eq.s32.totalorder %s38, 0
      %p65 = por %p63, %p64
      %s67 = sadd.s32 %s66, 1
      %p70 = scmp.eq.s32.totalorder %s32, 1
      %p71 = scmp.ne.s32.totalorder %s66, %s68
      %p72 = scmp.eq.s32.totalorder %s32, 0
      %p73 = por %p71, %p72
      %p74 = scmp.ne.s32.totalorder %s66, %s68
      %p75 = scmp.eq.s32.totalorder %s37, 1
      %p76 = por %p74, %p75
      %p77 = scmp.ne.s32.totalorder %s68, %s69
      %p78 = scmp.eq.s32.totalorder %s37, 0
      %p79 = por %p77, %p78
      %p80 = scmp.ne.s32.totalorder %s68, %s69
      %p81 = scmp.eq.s32.totalorder %s38, 1
      %p82 = por %p80, %p81
      %p84 = scmp.ne.s32.totalorder %s69, %s83
      %p85 = scmp.eq.s32.totalorder %s38, 0
      %p86 = por %p84, %p85
      %s88 = sadd.s32 %s87, 1
      %p91 = scmp.eq.s32.totalorder %s32, 1
      %p92 = scmp.ne.s32.totalorder %s87, %s89
      %p93 = scmp.eq.s32.totalorder %s32, 0
      %p94 = por %p92, %p93
      %p95 = scmp.ne.s32.totalorder %s87, %s89
      %p96 = scmp.eq.s32.totalorder %s37, 1
      %p97 = por %p95, %p96
      %p98 = scmp.ne.s32.totalorder %s89, %s90
      %p99 = scmp.eq.s32.totalorder %s37, 0
      %p100 = por %p98, %p99
      %p101 = scmp.ne.s32.totalorder %s89, %s90
      %p102 = scmp.eq.s32.totalorder %s38, 1
      %p103 = por %p101, %p102
      %p105 = scmp.ne.s32.totalorder %s90, %s104
      %p106 = scmp.eq.s32.totalorder %s38, 0
      %p107 = por %p105, %p106
      %s109 = sadd.s32 %s108, 1
      %p112 = scmp.eq.s32.totalorder %s32, 1
      %p113 = scmp.ne.s32.totalorder %s108, %s110
      %p114 = scmp.eq.s32.totalorder %s32, 0
      %p115 = por %p113, %p114
      %p116 = scmp.ne.s32.totalorder %s108, %s110
      %p117 = scmp.eq.s32.totalorder %s37, 1
      %p118 = por %p116, %p117
      %p119 = scmp.ne.s32.totalorder %s110, %s111
      %p120 = scmp.eq.s32.totalorder %s37, 0
      %p121 = por %p119, %p120
      %p122 = scmp.ne.s32.totalorder %s110, %s111
      %p123 = scmp.eq.s32.totalorder %s38, 1
      %p124 = por %p122, %p123
      %p126 = scmp.ne.s32.totalorder %s111, %s125
      %p127 = scmp.eq.s32.totalorder %s38, 0
      %p128 = por %p126, %p127
      %s130 = sadd.s32 %s129, 1
      %p133 = scmp.eq.s32.totalorder %s32, 1
      %p134 = scmp.ne.s32.totalorder %s129, %s131
      %p135 = scmp.eq.s32.totalorder %s32, 0
      %p136 = por %p134, %p135
      %p137 = scmp.ne.s32.totalorder %s129, %s131
      %p138 = scmp.eq.s32.totalorder %s37, 1
      %p139 = por %p137, %p138
      %p140 = scmp.ne.s32.totalorder %s131, %s132
      %p141 = scmp.eq.s32.totalorder %s37, 0
      %p142 = por %p140, %p141
      %p143 = scmp.ne.s32.totalorder %s131, %s132
      %p144 = scmp.eq.s32.totalorder %s38, 1
      %p145 = por %p143, %p144
      %p147 = scmp.ne.s32.totalorder %s132, %s146
      %p148 = scmp.eq.s32.totalorder %s38, 0
      %p149 = por %p147, %p148
      %s151 = sadd.s32 %s150, 1
      %p154 = scmp.eq.s32.totalorder %s32, 1
      %p155 = scmp.ne.s32.totalorder %s150, %s152
      %p156 = scmp.eq.s32.totalorder %s32, 0
      %p157 = por %p155, %p156
      %p158 = scmp.ne.s32.totalorder %s150, %s152
      %p159 = scmp.eq.s32.totalorder %s37, 1
      %p160 = por %p158, %p159
      %p161 = scmp.ne.s32.totalorder %s152, %s153
      %p162 = scmp.eq.s32.totalorder %s37, 0
      %p163 = por %p161, %p162
      %p164 = scmp.ne.s32.totalorder %s152, %s153
      %p165 = scmp.eq.s32.totalorder %s38, 1
      %p166 = por %p164, %p165
      %p168 = scmp.ne.s32.totalorder %s153, %s167
      %p169 = scmp.eq.s32.totalorder %s38, 0
      %p170 = por %p168, %p169
      %s172 = sadd.s32 %s171, 1
      %p175 = scmp.eq.s32.totalorder %s32, 1
      %p176 = scmp.ne.s32.totalorder %s171, %s173
      %p177 = scmp.eq.s32.totalorder %s32, 0
      %p178 = por %p176, %p177
      %p179 = scmp.ne.s32.totalorder %s171, %s173
      %p180 = scmp.eq.s32.totalorder %s37, 1
      %p181 = por %p179, %p180
      %p182 = scmp.ne.s32.totalorder %s173, %s174
      %p183 = scmp.eq.s32.totalorder %s37, 0
      %p184 = por %p182, %p183
      %p185 = scmp.ne.s32.totalorder %s173, %s174
      %p186 = scmp.eq.s32.totalorder %s38, 1
      %p187 = por %p185, %p186
      %p189 = scmp.ne.s32.totalorder %s174, %s188
      %p190 = scmp.eq.s32.totalorder %s38, 0
      %p191 = por %p189, %p190
      %s193 = sadd.s32 %s192, 1
      %p196 = scmp.eq.s32.totalorder %s32, 1
      %p197 = scmp.ne.s32.totalorder %s192, %s194
      %p198 = scmp.eq.s32.totalorder %s32, 0
      %p199 = por %p197, %p198
      %p200 = scmp.ne.s32.totalorder %s192, %s194
      %p201 = scmp.eq.s32.totalorder %s37, 1
      %p202 = por %p200, %p201
      %p203 = scmp.ne.s32.totalorder %s194, %s195
      %p204 = scmp.eq.s32.totalorder %s37, 0
      %p205 = por %p203, %p204
      %p206 = scmp.ne.s32.totalorder %s194, %s195
      %p207 = scmp.eq.s32.totalorder %s38, 1
      %p208 = por %p206, %p207
      %p210 = scmp.ne.s32.totalorder %s195, %s209
      %p211 = scmp.eq.s32.totalorder %s38, 0
      %p212 = por %p210, %p211
      %s214 = sadd.s32 %s213, 1
      %p217 = scmp.eq.s32.totalorder %s32, 1
      %p218 = scmp.ne.s32.totalorder %s213, %s215
      %p219 = scmp.eq.s32.totalorder %s32, 0
      %p220 = por %p218, %p219
      %p221 = scmp.ne.s32.totalorder %s213, %s215
      %p222 = scmp.eq.s32.totalorder %s37, 1
      %p223 = por %p221, %p222
      %p224 = scmp.ne.s32.totalorder %s215, %s216
      %p225 = scmp.eq.s32.totalorder %s37, 0
      %p226 = por %p224, %p225
      %p227 = scmp.ne.s32.totalorder %s215, %s216
      %p228 = scmp.eq.s32.totalorder %s38, 1
      %p229 = por %p227, %p228
      %p231 = scmp.ne.s32.totalorder %s216, %s230
      %p232 = scmp.eq.s32.totalorder %s38, 0
      %p233 = por %p231, %p232
      %s235 = sadd.s32 %s234, 1
      %p238 = scmp.eq.s32.totalorder %s32, 1
      %p239 = scmp.ne.s32.totalorder %s234, %s236
      %p240 = scmp.eq.s32.totalorder %s32, 0
      %p241 = por %p239, %p240
      %p242 = scmp.ne.s32.totalorder %s234, %s236
      %p243 = scmp.eq.s32.totalorder %s37, 1
      %p244 = por %p242, %p243
      %p245 = scmp.ne.s32.totalorder %s236, %s237
      %p246 = scmp.eq.s32.totalorder %s37, 0
      %p247 = por %p245, %p246
      %p248 = scmp.ne.s32.totalorder %s236, %s237
      %p249 = scmp.eq.s32.totalorder %s38, 1
      %p250 = por %p248, %p249
      %p252 = scmp.ne.s32.totalorder %s237, %s251
      %p253 = scmp.eq.s32.totalorder %s38, 0
      %p254 = por %p252, %p253
      %s256 = sadd.s32 %s255, 1
      %p259 = scmp.eq.s32.totalorder %s32, 1
      %p260 = scmp.ne.s32.totalorder %s255, %s257
      %p261 = scmp.eq.s32.totalorder %s32, 0
      %p262 = por %p260, %p261
      %p263 = scmp.ne.s32.totalorder %s255, %s257
      %p264 = scmp.eq.s32.totalorder %s37, 1
      %p265 = por %p263, %p264
      %p266 = scmp.ne.s32.totalorder %s257, %s258
      %p267 = scmp.eq.s32.totalorder %s37, 0
      %p268 = por %p266, %p267
      %p269 = scmp.ne.s32.totalorder %s257, %s258
      %p270 = scmp.eq.s32.totalorder %s38, 1
      %p271 = por %p269, %p270
      %p273 = scmp.ne.s32.totalorder %s258, %s272
      %p274 = scmp.eq.s32.totalorder %s38, 0
      %p275 = por %p273, %p274
      %s277 = sadd.s32 %s276, 1
      %p280 = scmp.eq.s32.totalorder %s32, 1
      %p281 = scmp.ne.s32.totalorder %s276, %s278
      %p282 = scmp.eq.s32.totalorder %s32, 0
      %p283 = por %p281, %p282
      %p284 = scmp.ne.s32.totalorder %s276, %s278
      %p285 = scmp.eq.s32.totalorder %s37, 1
      %p286 = por %p284, %p285
      %p287 = scmp.ne.s32.totalorder %s278, %s279
      %p288 = scmp.eq.s32.totalorder %s37, 0
      %p289 = por %p287, %p288
      %p290 = scmp.ne.s32.totalorder %s278, %s279
      %p291 = scmp.eq.s32.totalorder %s38, 1
      %p292 = por %p290, %p291
      %p294 = scmp.ne.s32.totalorder %s279, %s293
      %p295 = scmp.eq.s32.totalorder %s38, 0
      %p296 = por %p294, %p295
      %s298 = sadd.s32 %s297, 1
      %p301 = scmp.eq.s32.totalorder %s32, 1
      %p302 = scmp.ne.s32.totalorder %s297, %s299
      %p303 = scmp.eq.s32.totalorder %s32, 0
      %p304 = por %p302, %p303
      %p305 = scmp.ne.s32.totalorder %s297, %s299
      %p306 = scmp.eq.s32.totalorder %s37, 1
      %p307 = por %p305, %p306
      %p308 = scmp.ne.s32.totalorder %s299, %s300
      %p309 = scmp.eq.s32.totalorder %s37, 0
      %p310 = por %p308, %p309
      %p311 = scmp.ne.s32.totalorder %s299, %s300
      %p312 = scmp.eq.s32.totalorder %s38, 1
      %p313 = por %p311, %p312
      %p315 = scmp.ne.s32.totalorder %s300, %s314
      %p316 = scmp.eq.s32.totalorder %s38, 0
      %p317 = por %p315, %p316
      %s319 = sadd.s32 %s318, 1
      %p322 = scmp.eq.s32.totalorder %s32, 1
      %p323 = scmp.ne.s32.totalorder %s318, %s320
      %p324 = scmp.eq.s32.totalorder %s32, 0
      %p325 = por %p323, %p324
      %p326 = scmp.ne.s32.totalorder %s318, %s320
      %p327 = scmp.eq.s32.totalorder %s37, 1
      %p328 = por %p326, %p327
      %p329 = scmp.ne.s32.totalorder %s320, %s321
      %p330 = scmp.eq.s32.totalorder %s37, 0
      %p331 = por %p329, %p330
      %p332 = scmp.ne.s32.totalorder %s320, %s321
      %p333 = scmp.eq.s32.totalorder %s38, 1
      %p334 = por %p332, %p333
      %p336 = scmp.ne.s32.totalorder %s321, %s335
      %p337 = scmp.eq.s32.totalorder %s38, 0
      %p338 = por %p336, %p337
      %s340 = sadd.s32 %s339, 1
      %p343 = scmp.eq.s32.totalorder %s32, 1
      %p344 = scmp.ne.s32.totalorder %s339, %s341
      %p345 = scmp.eq.s32.totalorder %s32, 0
      %p346 = por %p344, %p345
      %p347 = scmp.ne.s32.totalorder %s339, %s341
      %p348 = scmp.eq.s32.totalorder %s37, 1
      %p349 = por %p347, %p348
      %p350 = scmp.ne.s32.totalorder %s341, %s342
      %p351 = scmp.eq.s32.totalorder %s37, 0
      %p352 = por %p350, %p351
      %p353 = scmp.ne.s32.totalorder %s341, %s342
      %p354 = scmp.eq.s32.totalorder %s38, 1
      %p355 = por %p353, %p354
      %p357 = scmp.ne.s32.totalorder %s342, %s356
      %p358 = scmp.eq.s32.totalorder %s38, 0
      %p359 = por %p357, %p358
      %s361 = sadd.s32 %s360, 1
      %p364 = scmp.eq.s32.totalorder %s32, 1
      %p365 = scmp.ne.s32.totalorder %s360, %s362
      %p366 = scmp.eq.s32.totalorder %s32, 0
      %p367 = por %p365, %p366
      %p368 = scmp.ne.s32.totalorder %s360, %s362
      %p369 = scmp.eq.s32.totalorder %s37, 1
      %p370 = por %p368, %p369
      %p371 = scmp.ne.s32.totalorder %s362, %s363
      %p372 = scmp.eq.s32.totalorder %s37, 0
      %p373 = por %p371, %p372
      %p374 = scmp.ne.s32.totalorder %s362, %s363
      %p375 = scmp.eq.s32.totalorder %s38, 1
      %p376 = por %p374, %p375
      %p378 = scmp.ne.s32.totalorder %s363, %s377
      %p379 = scmp.eq.s32.totalorder %s38, 0
      %p380 = por %p378, %p379
      %s382 = sadd.s32 %s381, 1
      %p385 = scmp.eq.s32.totalorder %s32, 1
      %p386 = scmp.ne.s32.totalorder %s381, %s383
      %p387 = scmp.eq.s32.totalorder %s32, 0
      %p388 = por %p386, %p387
      %p389 = scmp.ne.s32.totalorder %s381, %s383
      %p390 = scmp.eq.s32.totalorder %s37, 1
      %p391 = por %p389, %p390
      %p392 = scmp.ne.s32.totalorder %s383, %s384
      %p393 = scmp.eq.s32.totalorder %s37, 0
      %p394 = por %p392, %p393
      %p395 = scmp.ne.s32.totalorder %s383, %s384
      %p396 = scmp.eq.s32.totalorder %s38, 1
      %p397 = por %p395, %p396
      %p399 = scmp.ne.s32.totalorder %s384, %s398
      %p400 = scmp.eq.s32.totalorder %s38, 0
      %p401 = por %p399, %p400
      %s402 = ssub.s32 %s32, %s39
      %p403 = scmp.eq.s32.totalorder %s402, 0
      %s405 = sadd.s32 %s404, 1
      %s406 = scalar_select %p403, %s404, %s405
      %p409 = pneg %p403
      %p410 = scmp.eq.s32.totalorder %s32, 1
      %p411 = por %p409, %p410
      %p412 = scmp.ne.s32.totalorder %s404, %s407
      %p413 = scmp.eq.s32.totalorder %s32, 0
      %p414 = por %p412, %p413
      %p415 = scmp.ne.s32.totalorder %s404, %s407
      %p416 = scmp.eq.s32.totalorder %s37, 1
      %p417 = por %p415, %p416
      %p418 = scmp.ne.s32.totalorder %s407, %s408
      %p419 = scmp.eq.s32.totalorder %s37, 0
      %p420 = por %p418, %p419
      %p421 = scmp.ne.s32.totalorder %s407, %s408
      %p422 = scmp.eq.s32.totalorder %s38, 1
      %p423 = por %p421, %p422
      %p425 = scmp.ne.s32.totalorder %s408, %s424
      %p426 = scmp.eq.s32.totalorder %s38, 0
      %p427 = por %p425, %p426
      %p428 = scmp.le.s32.totalorder 1, %s32
      %p429 = scmp.lt.s32.totalorder %s32, 3
      %p430 = pnand %p428, %p429
      %p431 = pneg %p430
      // Predicated region
      $region9: #{adapter_forward.1} parent=5 // pred_check
        _
      $region10: #{adapter_forward.1} parent=5 // pred_check_branch
        %433 = sbr.rel (%p430) target = $region12
      $region11: #{adapter_forward.1} parent=5 // pred_region
        %s434 = ssub.s32 %s32, 1
        // Predicated region
        $region13: #{adapter_forward.1} parent=11 // pred_check
          %p435 = pneg %p79
        $region14: #{adapter_forward.1} parent=11 // pred_check_branch
          %437 = sbr.rel (%p435) target = $region16
        $region15: #{adapter_forward.1} parent=11 // pred_region
          %s439 = ssub.s32 2048, 2048
          %440 = vsyncadd [#allocation7], %s439
          %s441 = sshll.u32 [#allocation6], 4
          %s442 = int_to_ptr.vmem [resolvable:$true] %s441
          %447 = dma.hbm_to_vmem [thread:$0]  %s1, 2048, %s442, [#allocation7], 64, 64, 4
        $region16: #{adapter_forward.1} parent=11 // pred_fallthru
          _
        // Predicated region
        $region17: #{adapter_forward.1} parent=11 // pred_check
          %p448 = pneg %p100
        $region18: #{adapter_forward.1} parent=11 // pred_check_branch
          %450 = sbr.rel (%p448) target = $region20
        $region19: #{adapter_forward.1} parent=11 // pred_region
          _
        $region20: #{adapter_forward.1} parent=11 // pred_fallthru
          _
        // Predicated region
        $region21: #{adapter_forward.1} parent=11 // pred_check
          %p451 = pneg %p121
        $region22: #{adapter_forward.1} parent=11 // pred_check_branch
          %453 = sbr.rel (%p451) target = $region24
        $region23: #{adapter_forward.1} parent=11 // pred_region
          %s455 = ssub.s32 6144, 6144
          %456 = vsyncadd [#allocation7], %s455
          %s457 = sshll.u32 [#allocation8], 4
          %s458 = int_to_ptr.vmem [resolvable:$true] %s457
          %463 = dma.hbm_to_vmem [thread:$0]  %s3, 6144, %s458, [#allocation7], 192, 192, 12
        $region24: #{adapter_forward.1} parent=11 // pred_fallthru
          _
        // Predicated region
        $region25: #{adapter_forward.1} parent=11 // pred_check
          %p464 = pneg %p142
        $region26: #{adapter_forward.1} parent=11 // pred_check_branch
          %466 = sbr.rel (%p464) target = $region28
        $region27: #{adapter_forward.1} parent=11 // pred_region
          _
        $region28: #{adapter_forward.1} parent=11 // pred_fallthru
          _
        // Predicated region
        $region29: #{adapter_forward.1} parent=11 // pred_check
          %p467 = pneg %p163
        $region30: #{adapter_forward.1} parent=11 // pred_check_branch
          %469 = sbr.rel (%p467) target = $region32
        $region31: #{adapter_forward.1} parent=11 // pred_region
          %s471 = ssub.s32 2048, 2048
          %472 = vsyncadd [#allocation10], %s471
          %s473 = sshll.u32 [#allocation9], 4
          %s474 = int_to_ptr.vmem [resolvable:$true] %s473
          %479 = dma.hbm_to_vmem [thread:$0]  %s5, 2048, %s474, [#allocation10], 64, 64, 4
        $region32: #{adapter_forward.1} parent=11 // pred_fallthru
          _
        // Predicated region
        $region33: #{adapter_forward.1} parent=11 // pred_check
          %p480 = pneg %p184
        $region34: #{adapter_forward.1} parent=11 // pred_check_branch
          %482 = sbr.rel (%p480) target = $region36
        $region35: #{adapter_forward.1} parent=11 // pred_region
          _
        $region36: #{adapter_forward.1} parent=11 // pred_fallthru
          _
        // Predicated region
        $region37: #{adapter_forward.1} parent=11 // pred_check
          %p483 = pneg %p205
        $region38: #{adapter_forward.1} parent=11 // pred_check_branch
          %485 = sbr.rel (%p483) target = $region40
        $region39: #{adapter_forward.1} parent=11 // pred_region
          _
        $region40: #{adapter_forward.1} parent=11 // pred_fallthru
          _
        // Predicated region
        $region41: #{adapter_forward.1} parent=11 // pred_check
          %p486 = pneg %p226
        $region42: #{adapter_forward.1} parent=11 // pred_check_branch
          %488 = sbr.rel (%p486) target = $region44
        $region43: #{adapter_forward.1} parent=11 // pred_region
          _
        $region44: #{adapter_forward.1} parent=11 // pred_fallthru
          _
        // Predicated region
        $region45: #{adapter_forward.1} parent=11 // pred_check
          %p489 = pneg %p247
        $region46: #{adapter_forward.1} parent=11 // pred_check_branch
          %491 = sbr.rel (%p489) target = $region48
        $region47: #{adapter_forward.1} parent=11 // pred_region
          %s493 = ssub.s32 8192, 8192
          %494 = vsyncadd [#allocation10], %s493
          %s495 = sshll.u32 [#allocation11], 4
          %s496 = int_to_ptr.vmem [resolvable:$true] %s495
          %501 = dma.hbm_to_vmem [thread:$0]  %s9, 8192, %s496, [#allocation10], 256, 256, 16
        $region48: #{adapter_forward.1} parent=11 // pred_fallthru
          _
        // Predicated region
        $region49: #{adapter_forward.1} parent=11 // pred_check
          %p502 = pneg %p268
        $region50: #{adapter_forward.1} parent=11 // pred_check_branch
          %504 = sbr.rel (%p502) target = $region52
        $region51: #{adapter_forward.1} parent=11 // pred_region
          _
        $region52: #{adapter_forward.1} parent=11 // pred_fallthru
          _
        // Predicated region
        $region53: #{adapter_forward.1} parent=11 // pred_check
          %p505 = pneg %p289
        $region54: #{adapter_forward.1} parent=11 // pred_check_branch
          %507 = sbr.rel (%p505) target = $region56
        $region55: #{adapter_forward.1} parent=11 // pred_region
          %s509 = ssub.s32 8192, 8192
          %510 = vsyncadd [#allocation13], %s509
          %s511 = sshll.u32 [#allocation12], 4
          %s512 = int_to_ptr.vmem [resolvable:$true] %s511
          %517 = dma.hbm_to_vmem [thread:$0]  %s11, 8192, %s512, [#allocation13], 64, 64, 4
        $region56: #{adapter_forward.1} parent=11 // pred_fallthru
          _
        // Predicated region
        $region57: #{adapter_forward.1} parent=11 // pred_check
          %p518 = pneg %p310
        $region58: #{adapter_forward.1} parent=11 // pred_check_branch
          %520 = sbr.rel (%p518) target = $region60
        $region59: #{adapter_forward.1} parent=11 // pred_region
          _
        $region60: #{adapter_forward.1} parent=11 // pred_fallthru
          _
        // Predicated region
        $region61: #{adapter_forward.1} parent=11 // pred_check
          %p521 = pneg %p331
        $region62: #{adapter_forward.1} parent=11 // pred_check_branch
          %523 = sbr.rel (%p521) target = $region64
        $region63: #{adapter_forward.1} parent=11 // pred_region
          _
        $region64: #{adapter_forward.1} parent=11 // pred_fallthru
          _
        // Predicated region
        $region65: #{adapter_forward.1} parent=11 // pred_check
          %p524 = pneg %p352
        $region66: #{adapter_forward.1} parent=11 // pred_check_branch
          %526 = sbr.rel (%p524) target = $region68
        $region67: #{adapter_forward.1} parent=11 // pred_region
          _
        $region68: #{adapter_forward.1} parent=11 // pred_fallthru
          _
        // Predicated region
        $region69: #{adapter_forward.1} parent=11 // pred_check
          %p527 = pneg %p373
        $region70: #{adapter_forward.1} parent=11 // pred_check_branch
          %529 = sbr.rel (%p527) target = $region72
        $region71: #{adapter_forward.1} parent=11 // pred_region
          %s531 = ssub.s32 2048, 2048
          %532 = vsyncadd [#allocation13], %s531
          %s533 = sshll.u32 [#allocation14], 4
          %s534 = int_to_ptr.vmem [resolvable:$true] %s533
          %539 = dma.hbm_to_vmem [thread:$0]  %s15, 2048, %s534, [#allocation13], 128, 128, 8
        $region72: #{adapter_forward.1} parent=11 // pred_fallthru
          _
        // Predicated region
        $region73: #{adapter_forward.1} parent=11 // pred_check
          %p540 = pneg %p394
        $region74: #{adapter_forward.1} parent=11 // pred_check_branch
          %542 = sbr.rel (%p540) target = $region76
        $region75: #{adapter_forward.1} parent=11 // pred_region
          _
        $region76: #{adapter_forward.1} parent=11 // pred_fallthru
          _
      $region12: #{adapter_forward.1} parent=5 // pred_fallthru
        _
      %p543 = scmp.lt.s32.totalorder %s32, 2
      // Predicated region
      $region77: #{adapter_forward.1} parent=5 // pred_check
        %p544 = pneg %p543
      $region78: #{adapter_forward.1} parent=5 // pred_check_branch
        %546 = sbr.rel (%p544) target = $region80
      $region79: #{adapter_forward.1} parent=5 // pred_region
        // Predicated region
        $region81: #{adapter_forward.1} parent=79 // pred_check
          %p547 = pneg %p52
        $region82: #{adapter_forward.1} parent=79 // pred_check_branch
          %549 = sbr.rel (%p547) target = $region84
        $region83: #{adapter_forward.1} parent=79 // pred_region
          %s550 = sand.u32 %s42, 1
          %s551 = scalar_lea.sflag [#allocation4], %s550
          %s552 = sand.u32 %s42, 1
          %s553 = smul.addr %s552, 128
          %s554 = scalar_lea.vmem [#allocation3], %s553
          %s556 = ssub.s32 2048, 2048
          %557 = vsyncadd %s551, %s556
          %s558 = smul.addr %s32, 32
          %s559 = smul.addr %s558, 64
          %s560 = scalar_lea.hbm %s0, %s559
          %s561 = sshll.u32 %s554, 4
          %s562 = int_to_ptr.vmem [resolvable:$true] %s561
          %567 = dma.hbm_to_vmem [thread:$0]  %s560, 2048, %s562, %s551, 128, 128, 8
        $region84: #{adapter_forward.1} parent=79 // pred_fallthru
          _
      $region80: #{adapter_forward.1} parent=5 // pred_fallthru
        _
      %p568 = scmp.le.s32.totalorder 1, %s32
      %p569 = scmp.lt.s32.totalorder %s32, 3
      %p570 = pnand %p568, %p569
      %p571 = pneg %p570
      // Predicated region
      $region85: #{adapter_forward.1} parent=5 // pred_check
        _
      $region86: #{adapter_forward.1} parent=5 // pred_check_branch
        %573 = sbr.rel (%p570) target = $region88
      $region87: #{adapter_forward.1} parent=5 // pred_region
        %s574 = ssub.s32 %s32, 1
        %s575 = sand.u32 %s45, 1
        %s576 = scalar_lea.sflag [#allocation4], %s575
        %s577 = sand.u32 %s45, 1
        %s578 = smul.addr %s577, 128
        %s579 = scalar_lea.vmem [#allocation3], %s578
        // Predicated region
        $region89: #{adapter_forward.1} parent=87 // pred_check
          %p580 = pneg %p58
        $region90: #{adapter_forward.1} parent=87 // pred_check_branch
          %582 = sbr.rel (%p580) target = $region92
        $region91: #{adapter_forward.1} parent=87 // pred_region
          %583 = dma.done %s576, 2048
        $region92: #{adapter_forward.1} parent=87 // pred_fallthru
          _
        // Predicated region
        $region93: #{adapter_forward.1} parent=87 // pred_check
          %p584 = pneg %p79
        $region94: #{adapter_forward.1} parent=87 // pred_check_branch
          %586 = sbr.rel (%p584) target = $region96
        $region95: #{adapter_forward.1} parent=87 // pred_region
          %587 = dma.done [#allocation7], 2048
        $region96: #{adapter_forward.1} parent=87 // pred_fallthru
          _
        // Predicated region
        $region97: #{adapter_forward.1} parent=87 // pred_check
          %p588 = pneg %p121
        $region98: #{adapter_forward.1} parent=87 // pred_check_branch
          %590 = sbr.rel (%p588) target = $region100
        $region99: #{adapter_forward.1} parent=87 // pred_region
          %591 = dma.done [#allocation7], 6144
        $region100: #{adapter_forward.1} parent=87 // pred_fallthru
          _
        // Predicated region
        $region101: #{adapter_forward.1} parent=87 // pred_check
          %p592 = pneg %p163
        $region102: #{adapter_forward.1} parent=87 // pred_check_branch
          %594 = sbr.rel (%p592) target = $region104
        $region103: #{adapter_forward.1} parent=87 // pred_region
          %595 = dma.done [#allocation10], 2048
        $region104: #{adapter_forward.1} parent=87 // pred_fallthru
          _
        // Predicated region
        $region105: #{adapter_forward.1} parent=87 // pred_check
          %p596 = pneg %p247
        $region106: #{adapter_forward.1} parent=87 // pred_check_branch
          %598 = sbr.rel (%p596) target = $region108
        $region107: #{adapter_forward.1} parent=87 // pred_region
          %599 = dma.done [#allocation10], 8192
        $region108: #{adapter_forward.1} parent=87 // pred_fallthru
          _
        // Predicated region
        $region109: #{adapter_forward.1} parent=87 // pred_check
          %p600 = pneg %p289
        $region110: #{adapter_forward.1} parent=87 // pred_check_branch
          %602 = sbr.rel (%p600) target = $region112
        $region111: #{adapter_forward.1} parent=87 // pred_region
          %603 = dma.done [#allocation13], 8192
        $region112: #{adapter_forward.1} parent=87 // pred_fallthru
          _
        // Predicated region
        $region113: #{adapter_forward.1} parent=87 // pred_check
          %p604 = pneg %p373
        $region114: #{adapter_forward.1} parent=87 // pred_check_branch
          %606 = sbr.rel (%p604) target = $region116
        $region115: #{adapter_forward.1} parent=87 // pred_region
          %607 = dma.done [#allocation13], 2048
        $region116: #{adapter_forward.1} parent=87 // pred_fallthru
          _
        %s608 = sand.u32 %s45, 1
        %s609 = scalar_lea.sflag [#allocation4], %s608
        %s610 = sand.u32 %s45, 1
        %s611 = smul.addr %s610, 128
        %s612 = scalar_lea.vmem [#allocation3], %s611
        %p613 = pneg %p58
        %p614 = pneg %p55
        %p615 = pneg %p79
        %p616 = pneg %p76
        %p617 = pneg %p100
        %p618 = pneg %p97
        %p619 = pneg %p121
        %p620 = pneg %p118
        %p621 = pneg %p142
        %p622 = pneg %p139
        %p623 = pneg %p163
        %p624 = pneg %p160
        %p625 = pneg %p184
        %p626 = pneg %p181
        %p627 = pneg %p205
        %p628 = pneg %p202
        %p629 = pneg %p226
        %p630 = pneg %p223
        %p631 = pneg %p247
        %p632 = pneg %p244
        %p633 = pneg %p268
        %p634 = pneg %p265
        %p635 = pneg %p289
        %p636 = pneg %p286
        %p637 = pneg %p310
        %p638 = pneg %p307
        %p639 = pneg %p331
        %p640 = pneg %p328
        %p641 = pneg %p352
        %p642 = pneg %p349
        %p643 = pneg %p373
        %p644 = pneg %p370
        %p645 = pneg %p394
        %p646 = pneg %p391
        %p647 = pneg %p420
        %p648 = pneg %p417
        %s649 = sand.u32 %s407, 1
        %s650 = scalar_lea.sflag [#allocation5], %s649
        %s651 = sand.u32 %s407, 1
        %s652 = smul.addr %s651, 128
        %s653 = scalar_lea.vmem [#allocation15], %s652
        %v656 = vld [vmem:[%s579] sm:$0xff]
        %v657 = vld [vmem:[%s579 + $0x8] sm:$0xff]
        %v658 = vld [vmem:[%s579 + $0x10] sm:$0xff]
        %v659 = vld [vmem:[%s579 + $0x18] sm:$0xff]
        %v660 = vld [vmem:[%s579 + $0x20] sm:$0xff]
        %v661 = vld [vmem:[%s579 + $0x28] sm:$0xff]
        %v662 = vld [vmem:[%s579 + $0x30] sm:$0xff]
        %v663 = vld [vmem:[%s579 + $0x38] sm:$0xff]
        %v664 = vld [vmem:[%s579 + $0x40] sm:$0xff]
        %v665 = vld [vmem:[%s579 + $0x48] sm:$0xff]
        %v666 = vld [vmem:[%s579 + $0x50] sm:$0xff]
        %v667 = vld [vmem:[%s579 + $0x58] sm:$0xff]
        %v668 = vld [vmem:[%s579 + $0x60] sm:$0xff]
        %v669 = vld [vmem:[%s579 + $0x68] sm:$0xff]
        %v670 = vld [vmem:[%s579 + $0x70] sm:$0xff]
        %v671 = vld [vmem:[%s579 + $0x78] sm:$0xff]
        %v672 = vld [vmem:[#allocation6] sm:$0xf]
        %v673 = vld [vmem:[#allocation6 + $0x4] sm:$0xf]
        %v674 = vld [vmem:[#allocation6 + $0x8] sm:$0xf]
        %v675 = vld [vmem:[#allocation6 + $0xc] sm:$0xf]
        %v676 = vld [vmem:[#allocation6 + $0x10] sm:$0xf]
        %v677 = vld [vmem:[#allocation6 + $0x14] sm:$0xf]
        %v678 = vld [vmem:[#allocation6 + $0x18] sm:$0xf]
        %v679 = vld [vmem:[#allocation6 + $0x1c] sm:$0xf]
        %v680 = vld [vmem:[#allocation6 + $0x20] sm:$0xf]
        %v681 = vld [vmem:[#allocation6 + $0x24] sm:$0xf]
        %v682 = vld [vmem:[#allocation6 + $0x28] sm:$0xf]
        %v683 = vld [vmem:[#allocation6 + $0x2c] sm:$0xf]
        %v684 = vld [vmem:[#allocation6 + $0x30] sm:$0xf]
        %v685 = vld [vmem:[#allocation6 + $0x34] sm:$0xf]
        %v686 = vld [vmem:[#allocation6 + $0x38] sm:$0xf]
        %v687 = vld [vmem:[#allocation6 + $0x3c] sm:$0xf]
        %v688 = vld [vmem:[#allocation6 + $0x40] sm:$0xf]
        %v689 = vld [vmem:[#allocation6 + $0x44] sm:$0xf]
        %v690 = vld [vmem:[#allocation6 + $0x48] sm:$0xf]
        %v691 = vld [vmem:[#allocation6 + $0x4c] sm:$0xf]
        %v692 = vld [vmem:[#allocation6 + $0x50] sm:$0xf]
        %v693 = vld [vmem:[#allocation6 + $0x54] sm:$0xf]
        %v694 = vld [vmem:[#allocation6 + $0x58] sm:$0xf]
        %v695 = vld [vmem:[#allocation6 + $0x5c] sm:$0xf]
        %v696 = vld [vmem:[#allocation6 + $0x60] sm:$0xf]
        %v697 = vld [vmem:[#allocation6 + $0x64] sm:$0xf]
        %v698 = vld [vmem:[#allocation6 + $0x68] sm:$0xf]
        %v699 = vld [vmem:[#allocation6 + $0x6c] sm:$0xf]
        %v700 = vld [vmem:[#allocation6 + $0x70] sm:$0xf]
        %v701 = vld [vmem:[#allocation6 + $0x74] sm:$0xf]
        %v702 = vld [vmem:[#allocation6 + $0x78] sm:$0xf]
        %v703 = vld [vmem:[#allocation6 + $0x7c] sm:$0xf]
        %v704 = vld [vmem:[%s2] sm:$0x1]
        %v705 = vunpack.c.l.bf16 %v704
        %v706 = vlaneseq
        %v707 = vshrl.u32 %v706, 7
        %v708 = vsub.s32 0, %v707
        %v709 = vrot.slane %v705, %v708
        %v726 = vunpack.c.l.b16 %v656
        %v727 = vunpack.c.h.b16 %v656
        %v728 = vunpack.c.l.b16 %v657
        %v729 = vunpack.c.h.b16 %v657
        %v730 = vunpack.c.l.b16 %v658
        %v731 = vunpack.c.h.b16 %v658
        %v732 = vunpack.c.l.b16 %v659
        %v733 = vunpack.c.h.b16 %v659
        %v734 = vunpack.c.l.b16 %v660
        %v735 = vunpack.c.h.b16 %v660
        %v736 = vunpack.c.l.b16 %v661
        %v737 = vunpack.c.h.b16 %v661
        %v738 = vunpack.c.l.b16 %v662
        %v739 = vunpack.c.h.b16 %v662
        %v740 = vunpack.c.l.b16 %v663
        %v741 = vunpack.c.h.b16 %v663
        %v742 = vunpack.c.l.b16 %v664
        %v743 = vunpack.c.h.b16 %v664
        %v744 = vunpack.c.l.b16 %v665
        %v745 = vunpack.c.h.b16 %v665
        %v746 = vunpack.c.l.b16 %v666
        %v747 = vunpack.c.h.b16 %v666
        %v748 = vunpack.c.l.b16 %v667
        %v749 = vunpack.c.h.b16 %v667
        %v750 = vunpack.c.l.b16 %v668
        %v751 = vunpack.c.h.b16 %v668
        %v752 = vunpack.c.l.b16 %v669
        %v753 = vunpack.c.h.b16 %v669
        %v754 = vunpack.c.l.b16 %v670
        %v755 = vunpack.c.h.b16 %v670
        %v756 = vunpack.c.l.b16 %v671
        %v757 = vunpack.c.h.b16 %v671
        %v758 = vpack.c.b16 %v728, %v726
        %v759 = vpack.c.b16 %v729, %v727
        %v760 = vpack.c.b16 %v732, %v730
        %v761 = vpack.c.b16 %v733, %v731
        %v762 = vpack.c.b16 %v736, %v734
        %v763 = vpack.c.b16 %v737, %v735
        %v764 = vpack.c.b16 %v740, %v738
        %v765 = vpack.c.b16 %v741, %v739
        %v766 = vpack.c.b16 %v744, %v742
        %v767 = vpack.c.b16 %v745, %v743
        %v768 = vpack.c.b16 %v748, %v746
        %v769 = vpack.c.b16 %v749, %v747
        %v770 = vpack.c.b16 %v752, %v750
        %v771 = vpack.c.b16 %v753, %v751
        %v772 = vpack.c.b16 %v756, %v754
        %v773 = vpack.c.b16 %v757, %v755
        %v822 = vunpack.c.l.b16 %v672
        %v823 = vunpack.c.l.b16 %v673
        %v824 = vunpack.c.l.b16 %v674
        %v825 = vunpack.c.l.b16 %v675
        %v826 = vunpack.c.l.b16 %v676
        %v827 = vunpack.c.l.b16 %v677
        %v828 = vunpack.c.l.b16 %v678
        %v829 = vunpack.c.l.b16 %v679
        %v830 = vunpack.c.l.b16 %v680
        %v831 = vunpack.c.l.b16 %v681
        %v832 = vunpack.c.l.b16 %v682
        %v833 = vunpack.c.l.b16 %v683
        %v834 = vunpack.c.l.b16 %v684
        %v835 = vunpack.c.l.b16 %v685
        %v836 = vunpack.c.l.b16 %v686
        %v837 = vunpack.c.l.b16 %v687
        %v838 = vunpack.c.l.b16 %v688
        %v839 = vunpack.c.l.b16 %v689
        %v840 = vunpack.c.l.b16 %v690
        %v841 = vunpack.c.l.b16 %v691
        %v842 = vunpack.c.l.b16 %v692
        %v843 = vunpack.c.l.b16 %v693
        %v844 = vunpack.c.l.b16 %v694
        %v845 = vunpack.c.l.b16 %v695
        %v846 = vunpack.c.l.b16 %v696
        %v847 = vunpack.c.l.b16 %v697
        %v848 = vunpack.c.l.b16 %v698
        %v849 = vunpack.c.l.b16 %v699
        %v850 = vunpack.c.l.b16 %v700
        %v851 = vunpack.c.l.b16 %v701
        %v852 = vunpack.c.l.b16 %v702
        %v853 = vunpack.c.l.b16 %v703
        %v854 = vpack.c.b16 %v823, %v822
        %v855 = vpack.c.b16 %v825, %v824
        %v856 = vpack.c.b16 %v827, %v826
        %v857 = vpack.c.b16 %v829, %v828
        %v858 = vpack.c.b16 %v831, %v830
        %v859 = vpack.c.b16 %v833, %v832
        %v860 = vpack.c.b16 %v835, %v834
        %v861 = vpack.c.b16 %v837, %v836
        %v862 = vpack.c.b16 %v839, %v838
        %v863 = vpack.c.b16 %v841, %v840
        %v864 = vpack.c.b16 %v843, %v842
        %v865 = vpack.c.b16 %v845, %v844
        %v866 = vpack.c.b16 %v847, %v846
        %v867 = vpack.c.b16 %v849, %v848
        %v868 = vpack.c.b16 %v851, %v850
        %v869 = vpack.c.b16 %v853, %v852
        %886 = vmatprep.subr.bf16.mxu0 0
        %887 = vmatpush1.bf16.msra.mxu0 %v854
        %888 = vmatprep.subr.bf16.mxu0 0
        %889 = vmatpush1.bf16.msra.mxu0 %v855
        %890 = vmatprep.subr.bf16.mxu0 0
        %891 = vmatpush1.bf16.msra.mxu0 %v856
        %892 = vmatprep.subr.bf16.mxu0 0
        %893 = vmatpush1.bf16.msra.mxu0 %v857
        %894 = vmatprep.subr.bf16.mxu0 0
        %895 = vmatpush1.bf16.msra.mxu0 %v858
        %896 = vmatprep.subr.bf16.mxu0 0
        %897 = vmatpush1.bf16.msra.mxu0 %v859
        %898 = vmatprep.subr.bf16.mxu0 0
        %899 = vmatpush1.bf16.msra.mxu0 %v860
        %900 = vmatprep.subr.bf16.mxu0 0
        %901 = vmatpush1.bf16.msra.mxu0 %v861
        %902 = vmatprep.subr.bf16.mxu0 0
        %903 = vmatpush1.bf16.msra.mxu0 %v862
        %904 = vmatprep.subr.bf16.mxu0 0
        %905 = vmatpush1.bf16.msra.mxu0 %v863
        %906 = vmatprep.subr.bf16.mxu0 0
        %907 = vmatpush1.bf16.msra.mxu0 %v864
        %908 = vmatprep.subr.bf16.mxu0 0
        %909 = vmatpush1.bf16.msra.mxu0 %v865
        %910 = vmatprep.subr.bf16.mxu0 0
        %911 = vmatpush1.bf16.msra.mxu0 %v866
        %912 = vmatprep.subr.bf16.mxu0 0
        %913 = vmatpush1.bf16.msra.mxu0 %v867
        %914 = vmatprep.subr.bf16.mxu0 0
        %915 = vmatpush1.bf16.msra.mxu0 %v868
        %916 = vmatprep.subr.bf16.mxu0 0
        %917 = vmatpush1.bf16.msra.mxu0 %v869
        %918 = vmatprep.mubr.bf16.mxu0 %v759
        %919 = vmatmul.mubr.bf16.gmra.mrb[0].mxu0 %v758
        %v920 = vpop.f32.mrb[0].mxu0
        %v921 = vadd.f32 %v709, %v920
        %v922 = vpop.f32.mrb[0].mxu0
        %v923 = vpop.f32.mrb[0].mxu0
        %v924 = vadd.f32 %v709, %v923
        %v925 = vpop.f32.mrb[0].mxu0
        %926 = vmatprep.mubr.bf16.mxu0 %v761
        %927 = vmatmul.mubr.bf16.gmra.mrb[0].mxu0 %v760
        %v928 = vpop.f32.mrb[0].mxu0
        %v929 = vadd.f32 %v709, %v928
        %v930 = vpop.f32.mrb[0].mxu0
        %v931 = vpop.f32.mrb[0].mxu0
        %v932 = vadd.f32 %v709, %v931
        %v933 = vpop.f32.mrb[0].mxu0
        %934 = vmatprep.mubr.bf16.mxu0 %v763
        %935 = vmatmul.mubr.bf16.gmra.mrb[0].mxu0 %v762
        %v936 = vpop.f32.mrb[0].mxu0
        %v937 = vadd.f32 %v709, %v936
        %v938 = vpop.f32.mrb[0].mxu0
        %v939 = vpop.f32.mrb[0].mxu0
        %v940 = vadd.f32 %v709, %v939
        %v941 = vpop.f32.mrb[0].mxu0
        %942 = vmatprep.mubr.bf16.mxu0 %v765
        %943 = vmatmul.mubr.bf16.gmra.mrb[0].mxu0 %v764
        %v944 = vpop.f32.mrb[0].mxu0
        %v945 = vadd.f32 %v709, %v944
        %v946 = vpop.f32.mrb[0].mxu0
        %v947 = vpop.f32.mrb[0].mxu0
        %v948 = vadd.f32 %v709, %v947
        %v949 = vpop.f32.mrb[0].mxu0
        %950 = vmatprep.mubr.bf16.mxu0 %v767
        %951 = vmatmul.mubr.bf16.gmra.mrb[0].mxu0 %v766
        %v952 = vpop.f32.mrb[0].mxu0
        %v953 = vadd.f32 %v709, %v952
        %v954 = vpop.f32.mrb[0].mxu0
        %v955 = vpop.f32.mrb[0].mxu0
        %v956 = vadd.f32 %v709, %v955
        %v957 = vpop.f32.mrb[0].mxu0
        %958 = vmatprep.mubr.bf16.mxu0 %v769
        %959 = vmatmul.mubr.bf16.gmra.mrb[0].mxu0 %v768
        %v960 = vpop.f32.mrb[0].mxu0
        %v961 = vadd.f32 %v709, %v960
        %v962 = vpop.f32.mrb[0].mxu0
        %v963 = vpop.f32.mrb[0].mxu0
        %v964 = vadd.f32 %v709, %v963
        %v965 = vpop.f32.mrb[0].mxu0
        %966 = vmatprep.mubr.bf16.mxu0 %v771
        %967 = vmatmul.mubr.bf16.gmra.mrb[0].mxu0 %v770
        %v968 = vpop.f32.mrb[0].mxu0
        %v969 = vadd.f32 %v709, %v968
        %v970 = vpop.f32.mrb[0].mxu0
        %v971 = vpop.f32.mrb[0].mxu0
        %v972 = vadd.f32 %v709, %v971
        %v973 = vpop.f32.mrb[0].mxu0
        %974 = vmatprep.mubr.bf16.mxu0 %v773
        %975 = vmatmul.mubr.bf16.gmra.mrb[0].mxu0 %v772
        %v976 = vpop.f32.mrb[0].mxu0
        %v977 = vadd.f32 %v709, %v976
        %v978 = vpop.f32.mrb[0].mxu0
        %v979 = vpop.f32.mrb[0].mxu0
        %v980 = vadd.f32 %v709, %v979
        %v981 = vpop.f32.mrb[0].mxu0
        %982 = vdwg.mxu0
        %v983 = vpack.c.bf16 %v924, %v921
        %v984 = vpack.c.bf16 %v932, %v929
        %v985 = vpack.c.bf16 %v940, %v937
        %v986 = vpack.c.bf16 %v948, %v945
        %v987 = vpack.c.bf16 %v956, %v953
        %v988 = vpack.c.bf16 %v964, %v961
        %v989 = vpack.c.bf16 %v972, %v969
        %v990 = vpack.c.bf16 %v980, %v977
        %v991 = vld [vmem:[#allocation8] sm:$0xff]
        %v992 = vld [vmem:[#allocation8 + $0x8] sm:$0xf]
        %v993 = vld [vmem:[#allocation8 + $0xc] sm:$0xff]
        %v994 = vld [vmem:[#allocation8 + $0x14] sm:$0xf]
        %v995 = vld [vmem:[#allocation8 + $0x18] sm:$0xff]
        %v996 = vld [vmem:[#allocation8 + $0x20] sm:$0xf]
        %v997 = vld [vmem:[#allocation8 + $0x24] sm:$0xff]
        %v998 = vld [vmem:[#allocation8 + $0x2c] sm:$0xf]
        %v999 = vld [vmem:[#allocation8 + $0x30] sm:$0xff]
        %v1000 = vld [vmem:[#allocation8 + $0x38] sm:$0xf]
        %v1001 = vld [vmem:[#allocation8 + $0x3c] sm:$0xff]
        %v1002 = vld [vmem:[#allocation8 + $0x44] sm:$0xf]
        %v1003 = vld [vmem:[#allocation8 + $0x48] sm:$0xff]
        %v1004 = vld [vmem:[#allocation8 + $0x50] sm:$0xf]
        %v1005 = vld [vmem:[#allocation8 + $0x54] sm:$0xff]
        %v1006 = vld [vmem:[#allocation8 + $0x5c] sm:$0xf]
        %v1007 = vld [vmem:[#allocation8 + $0x60] sm:$0xff]
        %v1008 = vld [vmem:[#allocation8 + $0x68] sm:$0xf]
        %v1009 = vld [vmem:[#allocation8 + $0x6c] sm:$0xff]
        %v1010 = vld [vmem:[#allocation8 + $0x74] sm:$0xf]
        %v1011 = vld [vmem:[#allocation8 + $0x78] sm:$0xff]
        %v1012 = vld [vmem:[#allocation8 + $0x80] sm:$0xf]
        %v1013 = vld [vmem:[#allocation8 + $0x84] sm:$0xff]
        %v1014 = vld [vmem:[#allocation8 + $0x8c] sm:$0xf]
        %v1015 = vld [vmem:[#allocation8 + $0x90] sm:$0xff]
        %v1016 = vld [vmem:[#allocation8 + $0x98] sm:$0xf]
        %v1017 = vld [vmem:[#allocation8 + $0x9c] sm:$0xff]
        %v1018 = vld [vmem:[#allocation8 + $0xa4] sm:$0xf]
        %v1019 = vld [vmem:[#allocation8 + $0xa8] sm:$0xff]
        %v1020 = vld [vmem:[#allocation8 + $0xb0] sm:$0xf]
        %v1021 = vld [vmem:[#allocation8 + $0xb4] sm:$0xff]
        %v1022 = vld [vmem:[#allocation8 + $0xbc] sm:$0xf]
        %v1023 = vld [vmem:[%s4] sm:$0x7]
        %v1024 = vunpack.c.l.bf16 %v1023
        %v1026 = vlaneseq
        %v1027 = vshrl.u32 %v1026, 7
        %v1028 = vsub.s32 0, %v1027
        %v1029 = vrot.slane %v1024, %v1028
        %v1030 = vlaneseq
        %v1031 = vshrl.u32 %v1030, 7
        %v1032 = vsub.s32 2, %v1031
        %v1033 = vrot.slane %v1024, %v1032
        %v1034 = vlaneseq
        %v1035 = vshrl.u32 %v1034, 7
        %v1036 = vsub.s32 4, %v1035
        %v1037 = vrot.slane %v1024, %v1036
        %v1041 = vlaneseq
        %v1042 = vshrl.u32 %v1041, 7
        %v1043 = vsub.s32 0, %v1042
        %v1044 = vrot.slane %v1029, %v1043
        %v1045 = vlaneseq
        %v1046 = vshrl.u32 %v1045, 7
        %v1047 = vsub.s32 0, %v1046
        %v1048 = vrot.slane %v1033, %v1047
        %v1049 = vlaneseq
        %v1050 = vshrl.u32 %v1049, 7
        %v1051 = vsub.s32 0, %v1050
        %v1052 = vrot.slane %v1037, %v1051
        %v1085 = vunpack.c.l.b16 %v991
        %v1086 = vunpack.c.h.b16 %v991
        %v1087 = vunpack.c.l.b16 %v992
        %v1088 = vunpack.c.l.b16 %v993
        %v1089 = vunpack.c.h.b16 %v993
        %v1090 = vunpack.c.l.b16 %v994
        %v1091 = vunpack.c.l.b16 %v995
        %v1092 = vunpack.c.h.b16 %v995
        %v1093 = vunpack.c.l.b16 %v996
        %v1094 = vunpack.c.l.b16 %v997
        %v1095 = vunpack.c.h.b16 %v997
        %v1096 = vunpack.c.l.b16 %v998
        %v1097 = vunpack.c.l.b16 %v999
        %v1098 = vunpack.c.h.b16 %v999
        %v1099 = vunpack.c.l.b16 %v1000
        %v1100 = vunpack.c.l.b16 %v1001
        %v1101 = vunpack.c.h.b16 %v1001
        %v1102 = vunpack.c.l.b16 %v1002
        %v1103 = vunpack.c.l.b16 %v1003
        %v1104 = vunpack.c.h.b16 %v1003
        %v1105 = vunpack.c.l.b16 %v1004
        %v1106 = vunpack.c.l.b16 %v1005
        %v1107 = vunpack.c.h.b16 %v1005
        %v1108 = vunpack.c.l.b16 %v1006
        %v1109 = vunpack.c.l.b16 %v1007
        %v1110 = vunpack.c.h.b16 %v1007
        %v1111 = vunpack.c.l.b16 %v1008
        %v1112 = vunpack.c.l.b16 %v1009
        %v1113 = vunpack.c.h.b16 %v1009
        %v1114 = vunpack.c.l.b16 %v1010
        %v1115 = vunpack.c.l.b16 %v1011
        %v1116 = vunpack.c.h.b16 %v1011
        %v1117 = vunpack.c.l.b16 %v1012
        %v1118 = vunpack.c.l.b16 %v1013
        %v1119 = vunpack.c.h.b16 %v1013
        %v1120 = vunpack.c.l.b16 %v1014
        %v1121 = vunpack.c.l.b16 %v1015
        %v1122 = vunpack.c.h.b16 %v1015
        %v1123 = vunpack.c.l.b16 %v1016
        %v1124 = vunpack.c.l.b16 %v1017
        %v1125 = vunpack.c.h.b16 %v1017
        %v1126 = vunpack.c.l.b16 %v1018
        %v1127 = vunpack.c.l.b16 %v1019
        %v1128 = vunpack.c.h.b16 %v1019
        %v1129 = vunpack.c.l.b16 %v1020
        %v1130 = vunpack.c.l.b16 %v1021
        %v1131 = vunpack.c.h.b16 %v1021
        %v1132 = vunpack.c.l.b16 %v1022
        %v1133 = vpack.c.b16 %v1088, %v1085
        %v1134 = vpack.c.b16 %v1089, %v1086
        %v1135 = vpack.c.b16 %v1090, %v1087
        %v1136 = vpack.c.b16 %v1094, %v1091
        %v1137 = vpack.c.b16 %v1095, %v1092
        %v1138 = vpack.c.b16 %v1096, %v1093
        %v1139 = vpack.c.b16 %v1100, %v1097
        %v1140 = vpack.c.b16 %v1101, %v1098
        %v1141 = vpack.c.b16 %v1102, %v1099
        %v1142 = vpack.c.b16 %v1106, %v1103
        %v1143 = vpack.c.b16 %v1107, %v1104
        %v1144 = vpack.c.b16 %v1108, %v1105
        %v1145 = vpack.c.b16 %v1112, %v1109
        %v1146 = vpack.c.b16 %v1113, %v1110
        %v1147 = vpack.c.b16 %v1114, %v1111
        %v1148 = vpack.c.b16 %v1118, %v1115
        %v1149 = vpack.c.b16 %v1119, %v1116
        %v1150 = vpack.c.b16 %v1120, %v1117
        %v1151 = vpack.c.b16 %v1124, %v1121
        %v1152 = vpack.c.b16 %v1125, %v1122
        %v1153 = vpack.c.b16 %v1126, %v1123
        %v1154 = vpack.c.b16 %v1130, %v1127
        %v1155 = vpack.c.b16 %v1131, %v1128
        %v1156 = vpack.c.b16 %v1132, %v1129
        %1181 = vmatprep.subr.bf16.mxu0 %v1134
        %1182 = vmatpush1.bf16.msra.mxu0 %v1133
        %1183 = vmatprep.subr.bf16.mxu0 %v1137
        %1184 = vmatpush1.bf16.msra.mxu0 %v1136
        %1185 = vmatprep.subr.bf16.mxu0 %v1140
        %1186 = vmatpush1.bf16.msra.mxu0 %v1139
        %1187 = vmatprep.subr.bf16.mxu0 %v1143
        %1188 = vmatpush1.bf16.msra.mxu0 %v1142
        %1189 = vmatprep.subr.bf16.mxu0 %v1146
        %1190 = vmatpush1.bf16.msra.mxu0 %v1145
        %1191 = vmatprep.subr.bf16.mxu0 %v1149
        %1192 = vmatpush1.bf16.msra.mxu0 %v1148
        %1193 = vmatprep.subr.bf16.mxu0 %v1152
        %1194 = vmatpush1.bf16.msra.mxu0 %v1151
        %1195 = vmatprep.subr.bf16.mxu0 %v1155
        %1196 = vmatpush1.bf16.msra.mxu0 %v1154
        %1197 = vmatprep.subr.bf16.mxu0 0
        %1198 = vmatpush1.bf16.msra.mxu0 0
        %1199 = vmatprep.subr.bf16.mxu0 0
        %1200 = vmatpush1.bf16.msra.mxu0 0
        %1201 = vmatprep.subr.bf16.mxu0 0
        %1202 = vmatpush1.bf16.msra.mxu0 0
        %1203 = vmatprep.subr.bf16.mxu0 0
        %1204 = vmatpush1.bf16.msra.mxu0 0
        %1205 = vmatprep.subr.bf16.mxu0 0
        %1206 = vmatpush1.bf16.msra.mxu0 0
        %1207 = vmatprep.subr.bf16.mxu0 0
        %1208 = vmatpush1.bf16.msra.mxu0 0
        %1209 = vmatprep.subr.bf16.mxu0 0
        %1210 = vmatpush1.bf16.msra.mxu0 0
        %1211 = vmatprep.subr.bf16.mxu0 0
        %1212 = vmatpush1.bf16.msra.mxu0 0
        %1213 = vmatprep.mubr.bf16.mxu0 0
        %1214 = vmatmul.mubr.bf16.gmra.mrb[0].mxu0 %v983
        %v1215 = vpop.f32.mrb[0].mxu0
        %v1216 = vadd.f32 %v1044, %v1215
        %v1217 = vpop.f32.mrb[0].mxu0
        %v1218 = vadd.f32 %v1048, %v1217
        %v1219 = vpop.f32.mrb[0].mxu0
        %v1220 = vadd.f32 %v1044, %v1219
        %v1221 = vpop.f32.mrb[0].mxu0
        %v1222 = vadd.f32 %v1048, %v1221
        %1223 = vmatprep.mubr.bf16.mxu0 0
        %1224 = vmatmul.mubr.bf16.gmra.mrb[0].mxu0 %v984
        %v1225 = vpop.f32.mrb[0].mxu0
        %v1226 = vadd.f32 %v1044, %v1225
        %v1227 = vpop.f32.mrb[0].mxu0
        %v1228 = vadd.f32 %v1048, %v1227
        %v1229 = vpop.f32.mrb[0].mxu0
        %v1230 = vadd.f32 %v1044, %v1229
        %v1231 = vpop.f32.mrb[0].mxu0
        %v1232 = vadd.f32 %v1048, %v1231
        %1233 = vmatprep.mubr.bf16.mxu0 0
        %1234 = vmatmul.mubr.bf16.gmra.mrb[0].mxu0 %v985
        %v1235 = vpop.f32.mrb[0].mxu0
        %v1236 = vadd.f32 %v1044, %v1235
        %v1237 = vpop.f32.mrb[0].mxu0
        %v1238 = vadd.f32 %v1048, %v1237
        %v1239 = vpop.f32.mrb[0].mxu0
        %v1240 = vadd.f32 %v1044, %v1239
        %v1241 = vpop.f32.mrb[0].mxu0
        %v1242 = vadd.f32 %v1048, %v1241
        %1243 = vmatprep.mubr.bf16.mxu0 0
        %1244 = vmatmul.mubr.bf16.gmra.mrb[0].mxu0 %v986
        %v1245 = vpop.f32.mrb[0].mxu0
        %v1246 = vadd.f32 %v1044, %v1245
        %v1247 = vpop.f32.mrb[0].mxu0
        %v1248 = vadd.f32 %v1048, %v1247
        %v1249 = vpop.f32.mrb[0].mxu0
        %v1250 = vadd.f32 %v1044, %v1249
        %v1251 = vpop.f32.mrb[0].mxu0
        %v1252 = vadd.f32 %v1048, %v1251
        %1253 = vmatprep.mubr.bf16.mxu0 0
        %1254 = vmatmul.mubr.bf16.gmra.mrb[0].mxu0 %v987
        %v1255 = vpop.f32.mrb[0].mxu0
        %v1256 = vadd.f32 %v1044, %v1255
        %v1257 = vpop.f32.mrb[0].mxu0
        %v1258 = vadd.f32 %v1048, %v1257
        %v1259 = vpop.f32.mrb[0].mxu0
        %v1260 = vadd.f32 %v1044, %v1259
        %v1261 = vpop.f32.mrb[0].mxu0
        %v1262 = vadd.f32 %v1048, %v1261
        %1263 = vmatprep.mubr.bf16.mxu0 0
        %1264 = vmatmul.mubr.bf16.gmra.mrb[0].mxu0 %v988
        %v1265 = vpop.f32.mrb[0].mxu0
        %v1266 = vadd.f32 %v1044, %v1265
        %v1267 = vpop.f32.mrb[0].mxu0
        %v1268 = vadd.f32 %v1048, %v1267
        %v1269 = vpop.f32.mrb[0].mxu0
        %v1270 = vadd.f32 %v1044, %v1269
        %v1271 = vpop.f32.mrb[0].mxu0
        %v1272 = vadd.f32 %v1048, %v1271
        %1273 = vmatprep.mubr.bf16.mxu0 0
        %1274 = vmatmul.mubr.bf16.gmra.mrb[0].mxu0 %v989
        %v1275 = vpop.f32.mrb[0].mxu0
        %v1276 = vadd.f32 %v1044, %v1275
        %v1277 = vpop.f32.mrb[0].mxu0
        %v1278 = vadd.f32 %v1048, %v1277
        %v1279 = vpop.f32.mrb[0].mxu0
        %v1280 = vadd.f32 %v1044, %v1279
        %v1281 = vpop.f32.mrb[0].mxu0
        %v1282 = vadd.f32 %v1048, %v1281
        %1283 = vmatprep.mubr.bf16.mxu0 0
        %1284 = vmatmul.mubr.bf16.gmra.mrb[0].mxu0 %v990
        %v1285 = vpop.f32.mrb[0].mxu0
        %v1286 = vadd.f32 %v1044, %v1285
        %v1287 = vpop.f32.mrb[0].mxu0
        %v1288 = vadd.f32 %v1048, %v1287
        %v1289 = vpop.f32.mrb[0].mxu0
        %v1290 = vadd.f32 %v1044, %v1289
        %v1291 = vpop.f32.mrb[0].mxu0
        %v1292 = vadd.f32 %v1048, %v1291
        %1293 = vdwg.mxu0
        %1294 = vmatprep.subr.bf16.mxu0 0
        %1295 = vmatpush1.bf16.msra.mxu0 %v1135
        %1296 = vmatprep.subr.bf16.mxu0 0
        %1297 = vmatpush1.bf16.msra.mxu0 %v1138
        %1298 = vmatprep.subr.bf16.mxu0 0
        %1299 = vmatpush1.bf16.msra.mxu0 %v1141
        %1300 = vmatprep.subr.bf16.mxu0 0
        %1301 = vmatpush1.bf16.msra.mxu0 %v1144
        %1302 = vmatprep.subr.bf16.mxu0 0
        %1303 = vmatpush1.bf16.msra.mxu0 %v1147
        %1304 = vmatprep.subr.bf16.mxu0 0
        %1305 = vmatpush1.bf16.msra.mxu0 %v1150
        %1306 = vmatprep.subr.bf16.mxu0 0
        %1307 = vmatpush1.bf16.msra.mxu0 %v1153
        %1308 = vmatprep.subr.bf16.mxu0 0
        %1309 = vmatpush1.bf16.msra.mxu0 %v1156
        %1310 = vmatprep.subr.bf16.mxu0 0
        %1311 = vmatpush1.bf16.msra.mxu0 0
        %1312 = vmatprep.subr.bf16.mxu0 0
        %1313 = vmatpush1.bf16.msra.mxu0 0
        %1314 = vmatprep.subr.bf16.mxu0 0
        %1315 = vmatpush1.bf16.msra.mxu0 0
        %1316 = vmatprep.subr.bf16.mxu0 0
        %1317 = vmatpush1.bf16.msra.mxu0 0
        %1318 = vmatprep.subr.bf16.mxu0 0
        %1319 = vmatpush1.bf16.msra.mxu0 0
        %1320 = vmatprep.subr.bf16.mxu0 0
        %1321 = vmatpush1.bf16.msra.mxu0 0
        %1322 = vmatprep.subr.bf16.mxu0 0
        %1323 = vmatpush1.bf16.msra.mxu0 0
        %1324 = vmatprep.subr.bf16.mxu0 0
        %1325 = vmatpush1.bf16.msra.mxu0 0
        %1326 = vmatprep.mubr.bf16.mxu0 0
        %1327 = vmatmul.mubr.bf16.gmra.mrb[0].mxu0 %v983
        %v1328 = vpop.f32.mrb[0].mxu0
        %v1329 = vadd.f32 %v1052, %v1328
        %v1330 = vpop.f32.mrb[0].mxu0
        %v1331 = vpop.f32.mrb[0].mxu0
        %v1332 = vadd.f32 %v1052, %v1331
        %v1333 = vpop.f32.mrb[0].mxu0
        %1334 = vmatprep.mubr.bf16.mxu0 0
        %1335 = vmatmul.mubr.bf16.gmra.mrb[0].mxu0 %v984
        %v1336 = vpop.f32.mrb[0].mxu0
        %v1337 = vadd.f32 %v1052, %v1336
        %v1338 = vpop.f32.mrb[0].mxu0
        %v1339 = vpop.f32.mrb[0].mxu0
        %v1340 = vadd.f32 %v1052, %v1339
        %v1341 = vpop.f32.mrb[0].mxu0
        %1342 = vmatprep.mubr.bf16.mxu0 0
        %1343 = vmatmul.mubr.bf16.gmra.mrb[0].mxu0 %v985
        %v1344 = vpop.f32.mrb[0].mxu0
        %v1345 = vadd.f32 %v1052, %v1344
        %v1346 = vpop.f32.mrb[0].mxu0
        %v1347 = vpop.f32.mrb[0].mxu0
        %v1348 = vadd.f32 %v1052, %v1347
        %v1349 = vpop.f32.mrb[0].mxu0
        %1350 = vmatprep.mubr.bf16.mxu0 0
        %1351 = vmatmul.mubr.bf16.gmra.mrb[0].mxu0 %v986
        %v1352 = vpop.f32.mrb[0].mxu0
        %v1353 = vadd.f32 %v1052, %v1352
        %v1354 = vpop.f32.mrb[0].mxu0
        %v1355 = vpop.f32.mrb[0].mxu0
        %v1356 = vadd.f32 %v1052, %v1355
        %v1357 = vpop.f32.mrb[0].mxu0
        %1358 = vmatprep.mubr.bf16.mxu0 0
        %1359 = vmatmul.mubr.bf16.gmra.mrb[0].mxu0 %v987
        %v1360 = vpop.f32.mrb[0].mxu0
        %v1361 = vadd.f32 %v1052, %v1360
        %v1362 = vpop.f32.mrb[0].mxu0
        %v1363 = vpop.f32.mrb[0].mxu0
        %v1364 = vadd.f32 %v1052, %v1363
        %v1365 = vpop.f32.mrb[0].mxu0
        %1366 = vmatprep.mubr.bf16.mxu0 0
        %1367 = vmatmul.mubr.bf16.gmra.mrb[0].mxu0 %v988
        %v1368 = vpop.f32.mrb[0].mxu0
        %v1369 = vadd.f32 %v1052, %v1368
        %v1370 = vpop.f32.mrb[0].mxu0
        %v1371 = vpop.f32.mrb[0].mxu0
        %v1372 = vadd.f32 %v1052, %v1371
        %v1373 = vpop.f32.mrb[0].mxu0
        %1374 = vmatprep.mubr.bf16.mxu0 0
        %1375 = vmatmul.mubr.bf16.gmra.mrb[0].mxu0 %v989
        %v1376 = vpop.f32.mrb[0].mxu0
        %v1377 = vadd.f32 %v1052, %v1376
        %v1378 = vpop.f32.mrb[0].mxu0
        %v1379 = vpop.f32.mrb[0].mxu0
        %v1380 = vadd.f32 %v1052, %v1379
        %v1381 = vpop.f32.mrb[0].mxu0
        %1382 = vmatprep.mubr.bf16.mxu0 0
        %1383 = vmatmul.mubr.bf16.gmra.mrb[0].mxu0 %v990
        %v1384 = vpop.f32.mrb[0].mxu0
        %v1385 = vadd.f32 %v1052, %v1384
        %v1386 = vpop.f32.mrb[0].mxu0
        %v1387 = vpop.f32.mrb[0].mxu0
        %v1388 = vadd.f32 %v1052, %v1387
        %v1389 = vpop.f32.mrb[0].mxu0
        %1390 = vdwg.mxu0
        %v1391 = vpack.c.bf16 %v1220, %v1216
        %v1392 = vpack.c.bf16 %v1222, %v1218
        %v1393 = vpack.c.bf16 %v1332, %v1329
        %v1394 = vpack.c.bf16 %v1230, %v1226
        %v1395 = vpack.c.bf16 %v1232, %v1228
        %v1396 = vpack.c.bf16 %v1340, %v1337
        %v1397 = vpack.c.bf16 %v1240, %v1236
        %v1398 = vpack.c.bf16 %v1242, %v1238
        %v1399 = vpack.c.bf16 %v1348, %v1345
        %v1400 = vpack.c.bf16 %v1250, %v1246
        %v1401 = vpack.c.bf16 %v1252, %v1248
        %v1402 = vpack.c.bf16 %v1356, %v1353
        %v1403 = vpack.c.bf16 %v1260, %v1256
        %v1404 = vpack.c.bf16 %v1262, %v1258
        %v1405 = vpack.c.bf16 %v1364, %v1361
        %v1406 = vpack.c.bf16 %v1270, %v1266
        %v1407 = vpack.c.bf16 %v1272, %v1268
        %v1408 = vpack.c.bf16 %v1372, %v1369
        %v1409 = vpack.c.bf16 %v1280, %v1276
        %v1410 = vpack.c.bf16 %v1282, %v1278
        %v1411 = vpack.c.bf16 %v1380, %v1377
        %v1412 = vpack.c.bf16 %v1290, %v1286
        %v1413 = vpack.c.bf16 %v1292, %v1288
        %v1414 = vpack.c.bf16 %v1388, %v1385
        %v1415 = vmul.bf16 %v1391, 1043676725
        %v1416 = vmul.bf16 %v1394, 1043676725
        %v1417 = vmul.bf16 %v1397, 1043676725
        %v1418 = vmul.bf16 %v1400, 1043676725
        %v1419 = vmul.bf16 %v1403, 1043676725
        %v1420 = vmul.bf16 %v1406, 1043676725
        %v1421 = vmul.bf16 %v1409, 1043676725
        %v1422 = vmul.bf16 %v1412, 1043676725
        %vm1423 = vcmask 261120
        %v1425 = vsel %vm1423, %v1415, 0
        %v1428 = vsel %vm1423, %v1416, 0
        %v1431 = vsel %vm1423, %v1417, 0
        %v1434 = vsel %vm1423, %v1418, 0
        %v1437 = vsel %vm1423, %v1419, 0
        %v1440 = vsel %vm1423, %v1420, 0
        %v1443 = vsel %vm1423, %v1421, 0
        %v1446 = vsel %vm1423, %v1422, 0
        %v1449 = vsel %vm1423, %v1392, 0
        %v1452 = vsel %vm1423, %v1395, 0
        %v1455 = vsel %vm1423, %v1398, 0
        %v1458 = vsel %vm1423, %v1401, 0
        %v1461 = vsel %vm1423, %v1404, 0
        %v1464 = vsel %vm1423, %v1407, 0
        %v1467 = vsel %vm1423, %v1410, 0
        %v1470 = vsel %vm1423, %v1413, 0
        %1472 = vmatprep.subr.bf16.mxu0 0
        %1473 = vmatpush1.bf16.xpose.msra.mxu0 %v1449
        %1474 = vmatprep.subr.bf16.mxu0 0
        %1475 = vmatpush1.bf16.xpose.msra.mxu0 %v1452
        %1476 = vmatprep.subr.bf16.mxu0 0
        %1477 = vmatpush1.bf16.xpose.msra.mxu0 %v1455
        %1478 = vmatprep.subr.bf16.mxu0 0
        %1479 = vmatpush1.bf16.xpose.msra.mxu0 %v1458
        %1480 = vmatprep.subr.bf16.mxu0 0
        %1481 = vmatpush1.bf16.xpose.msra.mxu0 %v1461
        %1482 = vmatprep.subr.bf16.mxu0 0
        %1483 = vmatpush1.bf16.xpose.msra.mxu0 %v1464
        %1484 = vmatprep.subr.bf16.mxu0 0
        %1485 = vmatpush1.bf16.xpose.msra.mxu0 %v1467
        %1486 = vmatprep.subr.bf16.mxu0 0
        %1487 = vmatpush1.bf16.xpose.msra.mxu0 %v1470
        %1488 = vmatprep.subr.bf16.mxu0 0
        %1489 = vmatpush1.bf16.xpose.msra.mxu0 0
        %1490 = vmatprep.subr.bf16.mxu0 0
        %1491 = vmatpush1.bf16.xpose.msra.mxu0 0
        %1492 = vmatprep.subr.bf16.mxu0 0
        %1493 = vmatpush1.bf16.xpose.msra.mxu0 0
        %1494 = vmatprep.subr.bf16.mxu0 0
        %1495 = vmatpush1.bf16.xpose.msra.mxu0 0
        %1496 = vmatprep.subr.bf16.mxu0 0
        %1497 = vmatpush1.bf16.xpose.msra.mxu0 0
        %1498 = vmatprep.subr.bf16.mxu0 0
        %1499 = vmatpush1.bf16.xpose.msra.mxu0 0
        %1500 = vmatprep.subr.bf16.mxu0 0
        %1501 = vmatpush1.bf16.xpose.msra.mxu0 0
        %1502 = vmatprep.subr.bf16.mxu0 0
        %1503 = vmatpush1.bf16.xpose.msra.mxu0 0
        %1504 = vmatprep.mubr.bf16.mxu0 0
        %1505 = vmatmul.mubr.bf16.gmra.mrb[0].mxu0 %v1425
        %v1506 = vpop.f32.mrb[0].mxu0
        %v1507 = vadd.f32 0.0, %v1506
        %v1508 = vpop.f32.mrb[0].mxu0
        %v1509 = vpop.f32.mrb[0].mxu0
        %v1510 = vadd.f32 0.0, %v1509
        %v1511 = vpop.f32.mrb[0].mxu0
        %1512 = vmatprep.mubr.bf16.mxu0 0
        %1513 = vmatmul.mubr.bf16.gmra.mrb[0].mxu0 %v1428
        %v1514 = vpop.f32.mrb[0].mxu0
        %v1515 = vadd.f32 0.0, %v1514
        %v1516 = vpop.f32.mrb[0].mxu0
        %v1517 = vpop.f32.mrb[0].mxu0
        %v1518 = vadd.f32 0.0, %v1517
        %v1519 = vpop.f32.mrb[0].mxu0
        %1520 = vmatprep.mubr.bf16.mxu0 0
        %1521 = vmatmul.mubr.bf16.gmra.mrb[0].mxu0 %v1431
        %v1522 = vpop.f32.mrb[0].mxu0
        %v1523 = vadd.f32 0.0, %v1522
        %v1524 = vpop.f32.mrb[0].mxu0
        %v1525 = vpop.f32.mrb[0].mxu0
        %v1526 = vadd.f32 0.0, %v1525
        %v1527 = vpop.f32.mrb[0].mxu0
        %1528 = vmatprep.mubr.bf16.mxu0 0
        %1529 = vmatmul.mubr.bf16.gmra.mrb[0].mxu0 %v1434
        %v1530 = vpop.f32.mrb[0].mxu0
        %v1531 = vadd.f32 0.0, %v1530
        %v1532 = vpop.f32.mrb[0].mxu0
        %v1533 = vpop.f32.mrb[0].mxu0
        %v1534 = vadd.f32 0.0, %v1533
        %v1535 = vpop.f32.mrb[0].mxu0
        %1536 = vmatprep.mubr.bf16.mxu0 0
        %1537 = vmatmul.mubr.bf16.gmra.mrb[0].mxu0 %v1437
        %v1538 = vpop.f32.mrb[0].mxu0
        %v1539 = vadd.f32 0.0, %v1538
        %v1540 = vpop.f32.mrb[0].mxu0
        %v1541 = vpop.f32.mrb[0].mxu0
        %v1542 = vadd.f32 0.0, %v1541
        %v1543 = vpop.f32.mrb[0].mxu0
        %1544 = vmatprep.mubr.bf16.mxu0 0
        %1545 = vmatmul.mubr.bf16.gmra.mrb[0].mxu0 %v1440
        %v1546 = vpop.f32.mrb[0].mxu0
        %v1547 = vadd.f32 0.0, %v1546
        %v1548 = vpop.f32.mrb[0].mxu0
        %v1549 = vpop.f32.mrb[0].mxu0
        %v1550 = vadd.f32 0.0, %v1549
        %v1551 = vpop.f32.mrb[0].mxu0
        %1552 = vmatprep.mubr.bf16.mxu0 0
        %1553 = vmatmul.mubr.bf16.gmra.mrb[0].mxu0 %v1443
        %v1554 = vpop.f32.mrb[0].mxu0
        %v1555 = vadd.f32 0.0, %v1554
        %v1556 = vpop.f32.mrb[0].mxu0
        %v1557 = vpop.f32.mrb[0].mxu0
        %v1558 = vadd.f32 0.0, %v1557
        %v1559 = vpop.f32.mrb[0].mxu0
        %1560 = vmatprep.mubr.bf16.mxu0 0
        %1561 = vmatmul.mubr.bf16.gmra.mrb[0].mxu0 %v1446
        %v1562 = vpop.f32.mrb[0].mxu0
        %v1563 = vadd.f32 0.0, %v1562
        %v1564 = vpop.f32.mrb[0].mxu0
        %v1565 = vpop.f32.mrb[0].mxu0
        %v1566 = vadd.f32 0.0, %v1565
        %v1567 = vpop.f32.mrb[0].mxu0
        %1568 = vdwg.mxu0
        %1569 = vmax.xlane.f32.xlu0 %v1507
        %v1570 = vpop.xlane.xlu0 %1569
        %1571 = vmax.xlane.f32.xlu0 %v1510
        %v1572 = vpop.xlane.xlu0 %1571
        %1573 = vmax.xlane.f32.xlu0 %v1515
        %v1574 = vpop.xlane.xlu0 %1573
        %1575 = vmax.xlane.f32.xlu0 %v1518
        %v1576 = vpop.xlane.xlu0 %1575
        %1577 = vmax.xlane.f32.xlu0 %v1523
        %v1578 = vpop.xlane.xlu0 %1577
        %1579 = vmax.xlane.f32.xlu0 %v1526
        %v1580 = vpop.xlane.xlu0 %1579
        %1581 = vmax.xlane.f32.xlu0 %v1531
        %v1582 = vpop.xlane.xlu0 %1581
        %1583 = vmax.xlane.f32.xlu0 %v1534
        %v1584 = vpop.xlane.xlu0 %1583
        %1585 = vmax.xlane.f32.xlu0 %v1539
        %v1586 = vpop.xlane.xlu0 %1585
        %1587 = vmax.xlane.f32.xlu0 %v1542
        %v1588 = vpop.xlane.xlu0 %1587
        %1589 = vmax.xlane.f32.xlu0 %v1547
        %v1590 = vpop.xlane.xlu0 %1589
        %1591 = vmax.xlane.f32.xlu0 %v1550
        %v1592 = vpop.xlane.xlu0 %1591
        %1593 = vmax.xlane.f32.xlu0 %v1555
        %v1594 = vpop.xlane.xlu0 %1593
        %1595 = vmax.xlane.f32.xlu0 %v1558
        %v1596 = vpop.xlane.xlu0 %1595
        %1597 = vmax.xlane.f32.xlu0 %v1563
        %v1598 = vpop.xlane.xlu0 %1597
        %1599 = vmax.xlane.f32.xlu0 %v1566
        %v1600 = vpop.xlane.xlu0 %1599
        %v1601 = vsub.f32 %v1507, %v1570
        %v1602 = vsub.f32 %v1510, %v1572
        %v1603 = vsub.f32 %v1515, %v1574
        %v1604 = vsub.f32 %v1518, %v1576
        %v1605 = vsub.f32 %v1523, %v1578
        %v1606 = vsub.f32 %v1526, %v1580
        %v1607 = vsub.f32 %v1531, %v1582
        %v1608 = vsub.f32 %v1534, %v1584
        %v1609 = vsub.f32 %v1539, %v1586
        %v1610 = vsub.f32 %v1542, %v1588
        %v1611 = vsub.f32 %v1547, %v1590
        %v1612 = vsub.f32 %v1550, %v1592
        %v1613 = vsub.f32 %v1555, %v1594
        %v1614 = vsub.f32 %v1558, %v1596
        %v1615 = vsub.f32 %v1563, %v1598
        %v1616 = vsub.f32 %v1566, %v1600
        %v1617 = vmul.f32 %v1601, 1.442695
        %v1618 = vpow.pop %v1617
        %v1619 = vmul.f32 %v1602, 1.442695
        %v1620 = vpow.pop %v1619
        %v1621 = vmul.f32 %v1603, 1.442695
        %v1622 = vpow.pop %v1621
        %v1623 = vmul.f32 %v1604, 1.442695
        %v1624 = vpow.pop %v1623
        %v1625 = vmul.f32 %v1605, 1.442695
        %v1626 = vpow.pop %v1625
        %v1627 = vmul.f32 %v1606, 1.442695
        %v1628 = vpow.pop %v1627
        %v1629 = vmul.f32 %v1607, 1.442695
        %v1630 = vpow.pop %v1629
        %v1631 = vmul.f32 %v1608, 1.442695
        %v1632 = vpow.pop %v1631
        %v1633 = vmul.f32 %v1609, 1.442695
        %v1634 = vpow.pop %v1633
        %v1635 = vmul.f32 %v1610, 1.442695
        %v1636 = vpow.pop %v1635
        %v1637 = vmul.f32 %v1611, 1.442695
        %v1638 = vpow.pop %v1637
        %v1639 = vmul.f32 %v1612, 1.442695
        %v1640 = vpow.pop %v1639
        %v1641 = vmul.f32 %v1613, 1.442695
        %v1642 = vpow.pop %v1641
        %v1643 = vmul.f32 %v1614, 1.442695
        %v1644 = vpow.pop %v1643
        %v1645 = vmul.f32 %v1615, 1.442695
        %v1646 = vpow.pop %v1645
        %v1647 = vmul.f32 %v1616, 1.442695
        %v1648 = vpow.pop %v1647
        %1649 = vadd.xlane.f32.xlu0 %v1618
        %v1650 = vpop.xlane.xlu0 %1649
        %1651 = vadd.xlane.f32.xlu0 %v1620
        %v1652 = vpop.xlane.xlu0 %1651
        %1653 = vadd.xlane.f32.xlu0 %v1622
        %v1654 = vpop.xlane.xlu0 %1653
        %1655 = vadd.xlane.f32.xlu0 %v1624
        %v1656 = vpop.xlane.xlu0 %1655
        %1657 = vadd.xlane.f32.xlu0 %v1626
        %v1658 = vpop.xlane.xlu0 %1657
        %1659 = vadd.xlane.f32.xlu0 %v1628
        %v1660 = vpop.xlane.xlu0 %1659
        %1661 = vadd.xlane.f32.xlu0 %v1630
        %v1662 = vpop.xlane.xlu0 %1661
        %1663 = vadd.xlane.f32.xlu0 %v1632
        %v1664 = vpop.xlane.xlu0 %1663
        %1665 = vadd.xlane.f32.xlu0 %v1634
        %v1666 = vpop.xlane.xlu0 %1665
        %1667 = vadd.xlane.f32.xlu0 %v1636
        %v1668 = vpop.xlane.xlu0 %1667
        %1669 = vadd.xlane.f32.xlu0 %v1638
        %v1670 = vpop.xlane.xlu0 %1669
        %1671 = vadd.xlane.f32.xlu0 %v1640
        %v1672 = vpop.xlane.xlu0 %1671
        %1673 = vadd.xlane.f32.xlu0 %v1642
        %v1674 = vpop.xlane.xlu0 %1673
        %1675 = vadd.xlane.f32.xlu0 %v1644
        %v1676 = vpop.xlane.xlu0 %1675
        %1677 = vadd.xlane.f32.xlu0 %v1646
        %v1678 = vpop.xlane.xlu0 %1677
        %1679 = vadd.xlane.f32.xlu0 %v1648
        %v1680 = vpop.xlane.xlu0 %1679
        %v1681 = vrcp.pop %v1650
        %v1682 = vrcp.pop %v1652
        %v1683 = vrcp.pop %v1654
        %v1684 = vrcp.pop %v1656
        %v1685 = vrcp.pop %v1658
        %v1686 = vrcp.pop %v1660
        %v1687 = vrcp.pop %v1662
        %v1688 = vrcp.pop %v1664
        %v1689 = vrcp.pop %v1666
        %v1690 = vrcp.pop %v1668
        %v1691 = vrcp.pop %v1670
        %v1692 = vrcp.pop %v1672
        %v1693 = vrcp.pop %v1674
        %v1694 = vrcp.pop %v1676
        %v1695 = vrcp.pop %v1678
        %v1696 = vrcp.pop %v1680
        %v1697 = vmul.f32 %v1618, %v1681
        %v1698 = vmul.f32 %v1620, %v1682
        %v1699 = vmul.f32 %v1622, %v1683
        %v1700 = vmul.f32 %v1624, %v1684
        %v1701 = vmul.f32 %v1626, %v1685
        %v1702 = vmul.f32 %v1628, %v1686
        %v1703 = vmul.f32 %v1630, %v1687
        %v1704 = vmul.f32 %v1632, %v1688
        %v1705 = vmul.f32 %v1634, %v1689
        %v1706 = vmul.f32 %v1636, %v1690
        %v1707 = vmul.f32 %v1638, %v1691
        %v1708 = vmul.f32 %v1640, %v1692
        %v1709 = vmul.f32 %v1642, %v1693
        %v1710 = vmul.f32 %v1644, %v1694
        %v1711 = vmul.f32 %v1646, %v1695
        %v1712 = vmul.f32 %v1648, %v1696
        %v1713 = vpack.c.bf16 %v1698, %v1697
        %v1714 = vpack.c.bf16 %v1700, %v1699
        %v1715 = vpack.c.bf16 %v1702, %v1701
        %v1716 = vpack.c.bf16 %v1704, %v1703
        %v1717 = vpack.c.bf16 %v1706, %v1705
        %v1718 = vpack.c.bf16 %v1708, %v1707
        %v1719 = vpack.c.bf16 %v1710, %v1709
        %v1720 = vpack.c.bf16 %v1712, %v1711
        %1721 = vmatprep.subr.bf16.mxu0 0
        %1722 = vmatpush1.bf16.msra.mxu0 %v1393
        %1723 = vmatprep.subr.bf16.mxu0 0
        %1724 = vmatpush1.bf16.msra.mxu0 %v1396
        %1725 = vmatprep.subr.bf16.mxu0 0
        %1726 = vmatpush1.bf16.msra.mxu0 %v1399
        %1727 = vmatprep.subr.bf16.mxu0 0
        %1728 = vmatpush1.bf16.msra.mxu0 %v1402
        %1729 = vmatprep.subr.bf16.mxu0 0
        %1730 = vmatpush1.bf16.msra.mxu0 %v1405
        %1731 = vmatprep.subr.bf16.mxu0 0
        %1732 = vmatpush1.bf16.msra.mxu0 %v1408
        %1733 = vmatprep.subr.bf16.mxu0 0
        %1734 = vmatpush1.bf16.msra.mxu0 %v1411
        %1735 = vmatprep.subr.bf16.mxu0 0
        %1736 = vmatpush1.bf16.msra.mxu0 %v1414
        %1737 = vmatprep.subr.bf16.mxu0 0
        %1738 = vmatpush1.bf16.msra.mxu0 0
        %1739 = vmatprep.subr.bf16.mxu0 0
        %1740 = vmatpush1.bf16.msra.mxu0 0
        %1741 = vmatprep.subr.bf16.mxu0 0
        %1742 = vmatpush1.bf16.msra.mxu0 0
        %1743 = vmatprep.subr.bf16.mxu0 0
        %1744 = vmatpush1.bf16.msra.mxu0 0
        %1745 = vmatprep.subr.bf16.mxu0 0
        %1746 = vmatpush1.bf16.msra.mxu0 0
        %1747 = vmatprep.subr.bf16.mxu0 0
        %1748 = vmatpush1.bf16.msra.mxu0 0
        %1749 = vmatprep.subr.bf16.mxu0 0
        %1750 = vmatpush1.bf16.msra.mxu0 0
        %1751 = vmatprep.subr.bf16.mxu0 0
        %1752 = vmatpush1.bf16.msra.mxu0 0
        %1753 = vmatprep.mubr.bf16.mxu0 0
        %1754 = vmatmul.mubr.bf16.gmra.mrb[0].mxu0 %v1713
        %v1755 = vpop.f32.mrb[0].mxu0
        %v1756 = vadd.f32 0.0, %v1755
        %v1757 = vpop.f32.mrb[0].mxu0
        %v1758 = vpop.f32.mrb[0].mxu0
        %v1759 = vadd.f32 0.0, %v1758
        %v1760 = vpop.f32.mrb[0].mxu0
        %1761 = vmatprep.mubr.bf16.mxu0 0
        %1762 = vmatmul.mubr.bf16.gmra.mrb[0].mxu0 %v1714
        %v1763 = vpop.f32.mrb[0].mxu0
        %v1764 = vadd.f32 0.0, %v1763
        %v1765 = vpop.f32.mrb[0].mxu0
        %v1766 = vpop.f32.mrb[0].mxu0
        %v1767 = vadd.f32 0.0, %v1766
        %v1768 = vpop.f32.mrb[0].mxu0
        %1769 = vmatprep.mubr.bf16.mxu0 0
        %1770 = vmatmul.mubr.bf16.gmra.mrb[0].mxu0 %v1715
        %v1771 = vpop.f32.mrb[0].mxu0
        %v1772 = vadd.f32 0.0, %v1771
        %v1773 = vpop.f32.mrb[0].mxu0
        %v1774 = vpop.f32.mrb[0].mxu0
        %v1775 = vadd.f32 0.0, %v1774
        %v1776 = vpop.f32.mrb[0].mxu0
        %1777 = vmatprep.mubr.bf16.mxu0 0
        %1778 = vmatmul.mubr.bf16.gmra.mrb[0].mxu0 %v1716
        %v1779 = vpop.f32.mrb[0].mxu0
        %v1780 = vadd.f32 0.0, %v1779
        %v1781 = vpop.f32.mrb[0].mxu0
        %v1782 = vpop.f32.mrb[0].mxu0
        %v1783 = vadd.f32 0.0, %v1782
        %v1784 = vpop.f32.mrb[0].mxu0
        %1785 = vmatprep.mubr.bf16.mxu0 0
        %1786 = vmatmul.mubr.bf16.gmra.mrb[0].mxu0 %v1717
        %v1787 = vpop.f32.mrb[0].mxu0
        %v1788 = vadd.f32 0.0, %v1787
        %v1789 = vpop.f32.mrb[0].mxu0
        %v1790 = vpop.f32.mrb[0].mxu0
        %v1791 = vadd.f32 0.0, %v1790
        %v1792 = vpop.f32.mrb[0].mxu0
        %1793 = vmatprep.mubr.bf16.mxu0 0
        %1794 = vmatmul.mubr.bf16.gmra.mrb[0].mxu0 %v1718
        %v1795 = vpop.f32.mrb[0].mxu0
        %v1796 = vadd.f32 0.0, %v1795
        %v1797 = vpop.f32.mrb[0].mxu0
        %v1798 = vpop.f32.mrb[0].mxu0
        %v1799 = vadd.f32 0.0, %v1798
        %v1800 = vpop.f32.mrb[0].mxu0
        %1801 = vmatprep.mubr.bf16.mxu0 0
        %1802 = vmatmul.mubr.bf16.gmra.mrb[0].mxu0 %v1719
        %v1803 = vpop.f32.mrb[0].mxu0
        %v1804 = vadd.f32 0.0, %v1803
        %v1805 = vpop.f32.mrb[0].mxu0
        %v1806 = vpop.f32.mrb[0].mxu0
        %v1807 = vadd.f32 0.0, %v1806
        %v1808 = vpop.f32.mrb[0].mxu0
        %1809 = vmatprep.mubr.bf16.mxu0 0
        %1810 = vmatmul.mubr.bf16.gmra.mrb[0].mxu0 %v1720
        %v1811 = vpop.f32.mrb[0].mxu0
        %v1812 = vadd.f32 0.0, %v1811
        %v1813 = vpop.f32.mrb[0].mxu0
        %v1814 = vpop.f32.mrb[0].mxu0
        %v1815 = vadd.f32 0.0, %v1814
        %v1816 = vpop.f32.mrb[0].mxu0
        %1817 = vdwg.mxu0
        %v1818 = vpack.c.bf16 %v1759, %v1756
        %v1819 = vpack.c.bf16 %v1767, %v1764
        %v1820 = vpack.c.bf16 %v1775, %v1772
        %v1821 = vpack.c.bf16 %v1783, %v1780
        %v1822 = vpack.c.bf16 %v1791, %v1788
        %v1823 = vpack.c.bf16 %v1799, %v1796
        %v1824 = vpack.c.bf16 %v1807, %v1804
        %v1825 = vpack.c.bf16 %v1815, %v1812
        %1826 = vst.msk [vmem:[#allocation2] sm:$0xff] %vm1423, %v1818
        %1827 = vst.msk [vmem:[#allocation2 + $0x8] sm:$0xff] %vm1423, %v1819
        %1828 = vst.msk [vmem:[#allocation2 + $0x10] sm:$0xff] %vm1423, %v1820
        %1829 = vst.msk [vmem:[#allocation2 + $0x18] sm:$0xff] %vm1423, %v1821
        %1830 = vst.msk [vmem:[#allocation2 + $0x20] sm:$0xff] %vm1423, %v1822
        %1831 = vst.msk [vmem:[#allocation2 + $0x28] sm:$0xff] %vm1423, %v1823
        %1832 = vst.msk [vmem:[#allocation2 + $0x30] sm:$0xff] %vm1423, %v1824
        %1833 = vst.msk [vmem:[#allocation2 + $0x38] sm:$0xff] %vm1423, %v1825
        %1842 = vrot.lane.b32.xlu0 %v1415, 96
        %v1843 = vpop.permute.xlu0 %1842
        %1844 = vrot.lane.b32.xlu0 %v1416, 96
        %v1845 = vpop.permute.xlu0 %1844
        %1846 = vrot.lane.b32.xlu0 %v1417, 96
        %v1847 = vpop.permute.xlu0 %1846
        %1848 = vrot.lane.b32.xlu0 %v1418, 96
        %v1849 = vpop.permute.xlu0 %1848
        %1850 = vrot.lane.b32.xlu0 %v1419, 96
        %v1851 = vpop.permute.xlu0 %1850
        %1852 = vrot.lane.b32.xlu0 %v1420, 96
        %v1853 = vpop.permute.xlu0 %1852
        %1854 = vrot.lane.b32.xlu0 %v1421, 96
        %v1855 = vpop.permute.xlu0 %1854
        %1856 = vrot.lane.b32.xlu0 %v1422, 96
        %v1857 = vpop.permute.xlu0 %1856
        %1866 = vrot.lane.b32.xlu0 %v1392, 96
        %v1867 = vpop.permute.xlu0 %1866
        %1868 = vrot.lane.b32.xlu0 %v1395, 96
        %v1869 = vpop.permute.xlu0 %1868
        %1870 = vrot.lane.b32.xlu0 %v1398, 96
        %v1871 = vpop.permute.xlu0 %1870
        %1872 = vrot.lane.b32.xlu0 %v1401, 96
        %v1873 = vpop.permute.xlu0 %1872
        %1874 = vrot.lane.b32.xlu0 %v1404, 96
        %v1875 = vpop.permute.xlu0 %1874
        %1876 = vrot.lane.b32.xlu0 %v1407, 96
        %v1877 = vpop.permute.xlu0 %1876
        %1878 = vrot.lane.b32.xlu0 %v1410, 96
        %v1879 = vpop.permute.xlu0 %1878
        %1880 = vrot.lane.b32.xlu0 %v1413, 96
        %v1881 = vpop.permute.xlu0 %1880
        %v1883 = vsel %vm1423, %v1843, 0
        %v1886 = vsel %vm1423, %v1845, 0
        %v1889 = vsel %vm1423, %v1847, 0
        %v1892 = vsel %vm1423, %v1849, 0
        %v1895 = vsel %vm1423, %v1851, 0
        %v1898 = vsel %vm1423, %v1853, 0
        %v1901 = vsel %vm1423, %v1855, 0
        %v1904 = vsel %vm1423, %v1857, 0
        %v1907 = vsel %vm1423, %v1867, 0
        %v1910 = vsel %vm1423, %v1869, 0
        %v1913 = vsel %vm1423, %v1871, 0
        %v1916 = vsel %vm1423, %v1873, 0
        %v1919 = vsel %vm1423, %v1875, 0
        %v1922 = vsel %vm1423, %v1877, 0
        %v1925 = vsel %vm1423, %v1879, 0
        %v1928 = vsel %vm1423, %v1881, 0
        %1930 = vmatprep.subr.bf16.mxu0 0
        %1931 = vmatpush1.bf16.xpose.msra.mxu0 %v1907
        %1932 = vmatprep.subr.bf16.mxu0 0
        %1933 = vmatpush1.bf16.xpose.msra.mxu0 %v1910
        %1934 = vmatprep.subr.bf16.mxu0 0
        %1935 = vmatpush1.bf16.xpose.msra.mxu0 %v1913
        %1936 = vmatprep.subr.bf16.mxu0 0
        %1937 = vmatpush1.bf16.xpose.msra.mxu0 %v1916
        %1938 = vmatprep.subr.bf16.mxu0 0
        %1939 = vmatpush1.bf16.xpose.msra.mxu0 %v1919
        %1940 = vmatprep.subr.bf16.mxu0 0
        %1941 = vmatpush1.bf16.xpose.msra.mxu0 %v1922
        %1942 = vmatprep.subr.bf16.mxu0 0
        %1943 = vmatpush1.bf16.xpose.msra.mxu0 %v1925
        %1944 = vmatprep.subr.bf16.mxu0 0
        %1945 = vmatpush1.bf16.xpose.msra.mxu0 %v1928
        %1946 = vmatprep.subr.bf16.mxu0 0
        %1947 = vmatpush1.bf16.xpose.msra.mxu0 0
        %1948 = vmatprep.subr.bf16.mxu0 0
        %1949 = vmatpush1.bf16.xpose.msra.mxu0 0
        %1950 = vmatprep.subr.bf16.mxu0 0
        %1951 = vmatpush1.bf16.xpose.msra.mxu0 0
        %1952 = vmatprep.subr.bf16.mxu0 0
        %1953 = vmatpush1.bf16.xpose.msra.mxu0 0
        %1954 = vmatprep.subr.bf16.mxu0 0
        %1955 = vmatpush1.bf16.xpose.msra.mxu0 0
        %1956 = vmatprep.subr.bf16.mxu0 0
        %1957 = vmatpush1.bf16.xpose.msra.mxu0 0
        %1958 = vmatprep.subr.bf16.mxu0 0
        %1959 = vmatpush1.bf16.xpose.msra.mxu0 0
        %1960 = vmatprep.subr.bf16.mxu0 0
        %1961 = vmatpush1.bf16.xpose.msra.mxu0 0
        %1962 = vmatprep.mubr.bf16.mxu0 0
        %1963 = vmatmul.mubr.bf16.gmra.mrb[0].mxu0 %v1883
        %v1964 = vpop.f32.mrb[0].mxu0
        %v1965 = vadd.f32 0.0, %v1964
        %v1966 = vpop.f32.mrb[0].mxu0
        %v1967 = vpop.f32.mrb[0].mxu0
        %v1968 = vadd.f32 0.0, %v1967
        %v1969 = vpop.f32.mrb[0].mxu0
        %1970 = vmatprep.mubr.bf16.mxu0 0
        %1971 = vmatmul.mubr.bf16.gmra.mrb[0].mxu0 %v1886
        %v1972 = vpop.f32.mrb[0].mxu0
        %v1973 = vadd.f32 0.0, %v1972
        %v1974 = vpop.f32.mrb[0].mxu0
        %v1975 = vpop.f32.mrb[0].mxu0
        %v1976 = vadd.f32 0.0, %v1975
        %v1977 = vpop.f32.mrb[0].mxu0
        %1978 = vmatprep.mubr.bf16.mxu0 0
        %1979 = vmatmul.mubr.bf16.gmra.mrb[0].mxu0 %v1889
        %v1980 = vpop.f32.mrb[0].mxu0
        %v1981 = vadd.f32 0.0, %v1980
        %v1982 = vpop.f32.mrb[0].mxu0
        %v1983 = vpop.f32.mrb[0].mxu0
        %v1984 = vadd.f32 0.0, %v1983
        %v1985 = vpop.f32.mrb[0].mxu0
        %1986 = vmatprep.mubr.bf16.mxu0 0
        %1987 = vmatmul.mubr.bf16.gmra.mrb[0].mxu0 %v1892
        %v1988 = vpop.f32.mrb[0].mxu0
        %v1989 = vadd.f32 0.0, %v1988
        %v1990 = vpop.f32.mrb[0].mxu0
        %v1991 = vpop.f32.mrb[0].mxu0
        %v1992 = vadd.f32 0.0, %v1991
        %v1993 = vpop.f32.mrb[0].mxu0
        %1994 = vmatprep.mubr.bf16.mxu0 0
        %1995 = vmatmul.mubr.bf16.gmra.mrb[0].mxu0 %v1895
        %v1996 = vpop.f32.mrb[0].mxu0
        %v1997 = vadd.f32 0.0, %v1996
        %v1998 = vpop.f32.mrb[0].mxu0
        %v1999 = vpop.f32.mrb[0].mxu0
        %v2000 = vadd.f32 0.0, %v1999
        %v2001 = vpop.f32.mrb[0].mxu0
        %2002 = vmatprep.mubr.bf16.mxu0 0
        %2003 = vmatmul.mubr.bf16.gmra.mrb[0].mxu0 %v1898
        %v2004 = vpop.f32.mrb[0].mxu0
        %v2005 = vadd.f32 0.0, %v2004
        %v2006 = vpop.f32.mrb[0].mxu0
        %v2007 = vpop.f32.mrb[0].mxu0
        %v2008 = vadd.f32 0.0, %v2007
        %v2009 = vpop.f32.mrb[0].mxu0
        %2010 = vmatprep.mubr.bf16.mxu0 0
        %2011 = vmatmul.mubr.bf16.gmra.mrb[0].mxu0 %v1901
        %v2012 = vpop.f32.mrb[0].mxu0
        %v2013 = vadd.f32 0.0, %v2012
        %v2014 = vpop.f32.mrb[0].mxu0
        %v2015 = vpop.f32.mrb[0].mxu0
        %v2016 = vadd.f32 0.0, %v2015
        %v2017 = vpop.f32.mrb[0].mxu0
        %2018 = vmatprep.mubr.bf16.mxu0 0
        %2019 = vmatmul.mubr.bf16.gmra.mrb[0].mxu0 %v1904
        %v2020 = vpop.f32.mrb[0].mxu0
        %v2021 = vadd.f32 0.0, %v2020
        %v2022 = vpop.f32.mrb[0].mxu0
        %v2023 = vpop.f32.mrb[0].mxu0
        %v2024 = vadd.f32 0.0, %v2023
        %v2025 = vpop.f32.mrb[0].mxu0
        %2026 = vdwg.mxu0
        %2027 = vmax.xlane.f32.xlu0 %v1965
        %v2028 = vpop.xlane.xlu0 %2027
        %2029 = vmax.xlane.f32.xlu0 %v1968
        %v2030 = vpop.xlane.xlu0 %2029
        %2031 = vmax.xlane.f32.xlu0 %v1973
        %v2032 = vpop.xlane.xlu0 %2031
        %2033 = vmax.xlane.f32.xlu0 %v1976
        %v2034 = vpop.xlane.xlu0 %2033
        %2035 = vmax.xlane.f32.xlu0 %v1981
        %v2036 = vpop.xlane.xlu0 %2035
        %2037 = vmax.xlane.f32.xlu0 %v1984
        %v2038 = vpop.xlane.xlu0 %2037
        %2039 = vmax.xlane.f32.xlu0 %v1989
        %v2040 = vpop.xlane.xlu0 %2039
        %2041 = vmax.xlane.f32.xlu0 %v1992
        %v2042 = vpop.xlane.xlu0 %2041
        %2043 = vmax.xlane.f32.xlu0 %v1997
        %v2044 = vpop.xlane.xlu0 %2043
        %2045 = vmax.xlane.f32.xlu0 %v2000
        %v2046 = vpop.xlane.xlu0 %2045
        %2047 = vmax.xlane.f32.xlu0 %v2005
        %v2048 = vpop.xlane.xlu0 %2047
        %2049 = vmax.xlane.f32.xlu0 %v2008
        %v2050 = vpop.xlane.xlu0 %2049
        %2051 = vmax.xlane.f32.xlu0 %v2013
        %v2052 = vpop.xlane.xlu0 %2051
        %2053 = vmax.xlane.f32.xlu0 %v2016
        %v2054 = vpop.xlane.xlu0 %2053
        %2055 = vmax.xlane.f32.xlu0 %v2021
        %v2056 = vpop.xlane.xlu0 %2055
        %2057 = vmax.xlane.f32.xlu0 %v2024
        %v2058 = vpop.xlane.xlu0 %2057
        %v2059 = vsub.f32 %v1965, %v2028
        %v2060 = vsub.f32 %v1968, %v2030
        %v2061 = vsub.f32 %v1973, %v2032
        %v2062 = vsub.f32 %v1976, %v2034
        %v2063 = vsub.f32 %v1981, %v2036
        %v2064 = vsub.f32 %v1984, %v2038
        %v2065 = vsub.f32 %v1989, %v2040
        %v2066 = vsub.f32 %v1992, %v2042
        %v2067 = vsub.f32 %v1997, %v2044
        %v2068 = vsub.f32 %v2000, %v2046
        %v2069 = vsub.f32 %v2005, %v2048
        %v2070 = vsub.f32 %v2008, %v2050
        %v2071 = vsub.f32 %v2013, %v2052
        %v2072 = vsub.f32 %v2016, %v2054
        %v2073 = vsub.f32 %v2021, %v2056
        %v2074 = vsub.f32 %v2024, %v2058
        %v2075 = vmul.f32 %v2059, 1.442695
        %v2076 = vpow.pop %v2075
        %v2077 = vmul.f32 %v2060, 1.442695
        %v2078 = vpow.pop %v2077
        %v2079 = vmul.f32 %v2061, 1.442695
        %v2080 = vpow.pop %v2079
        %v2081 = vmul.f32 %v2062, 1.442695
        %v2082 = vpow.pop %v2081
        %v2083 = vmul.f32 %v2063, 1.442695
        %v2084 = vpow.pop %v2083
        %v2085 = vmul.f32 %v2064, 1.442695
        %v2086 = vpow.pop %v2085
        %v2087 = vmul.f32 %v2065, 1.442695
        %v2088 = vpow.pop %v2087
        %v2089 = vmul.f32 %v2066, 1.442695
        %v2090 = vpow.pop %v2089
        %v2091 = vmul.f32 %v2067, 1.442695
        %v2092 = vpow.pop %v2091
        %v2093 = vmul.f32 %v2068, 1.442695
        %v2094 = vpow.pop %v2093
        %v2095 = vmul.f32 %v2069, 1.442695
        %v2096 = vpow.pop %v2095
        %v2097 = vmul.f32 %v2070, 1.442695
        %v2098 = vpow.pop %v2097
        %v2099 = vmul.f32 %v2071, 1.442695
        %v2100 = vpow.pop %v2099
        %v2101 = vmul.f32 %v2072, 1.442695
        %v2102 = vpow.pop %v2101
        %v2103 = vmul.f32 %v2073, 1.442695
        %v2104 = vpow.pop %v2103
        %v2105 = vmul.f32 %v2074, 1.442695
        %v2106 = vpow.pop %v2105
        %2107 = vadd.xlane.f32.xlu0 %v2076
        %v2108 = vpop.xlane.xlu0 %2107
        %2109 = vadd.xlane.f32.xlu0 %v2078
        %v2110 = vpop.xlane.xlu0 %2109
        %2111 = vadd.xlane.f32.xlu0 %v2080
        %v2112 = vpop.xlane.xlu0 %2111
        %2113 = vadd.xlane.f32.xlu0 %v2082
        %v2114 = vpop.xlane.xlu0 %2113
        %2115 = vadd.xlane.f32.xlu0 %v2084
        %v2116 = vpop.xlane.xlu0 %2115
        %2117 = vadd.xlane.f32.xlu0 %v2086
        %v2118 = vpop.xlane.xlu0 %2117
        %2119 = vadd.xlane.f32.xlu0 %v2088
        %v2120 = vpop.xlane.xlu0 %2119
        %2121 = vadd.xlane.f32.xlu0 %v2090
        %v2122 = vpop.xlane.xlu0 %2121
        %2123 = vadd.xlane.f32.xlu0 %v2092
        %v2124 = vpop.xlane.xlu0 %2123
        %2125 = vadd.xlane.f32.xlu0 %v2094
        %v2126 = vpop.xlane.xlu0 %2125
        %2127 = vadd.xlane.f32.xlu0 %v2096
        %v2128 = vpop.xlane.xlu0 %2127
        %2129 = vadd.xlane.f32.xlu0 %v2098
        %v2130 = vpop.xlane.xlu0 %2129
        %2131 = vadd.xlane.f32.xlu0 %v2100
        %v2132 = vpop.xlane.xlu0 %2131
        %2133 = vadd.xlane.f32.xlu0 %v2102
        %v2134 = vpop.xlane.xlu0 %2133
        %2135 = vadd.xlane.f32.xlu0 %v2104
        %v2136 = vpop.xlane.xlu0 %2135
        %2137 = vadd.xlane.f32.xlu0 %v2106
        %v2138 = vpop.xlane.xlu0 %2137
        %v2139 = vrcp.pop %v2108
        %v2140 = vrcp.pop %v2110
        %v2141 = vrcp.pop %v2112
        %v2142 = vrcp.pop %v2114
        %v2143 = vrcp.pop %v2116
        %v2144 = vrcp.pop %v2118
        %v2145 = vrcp.pop %v2120
        %v2146 = vrcp.pop %v2122
        %v2147 = vrcp.pop %v2124
        %v2148 = vrcp.pop %v2126
        %v2149 = vrcp.pop %v2128
        %v2150 = vrcp.pop %v2130
        %v2151 = vrcp.pop %v2132
        %v2152 = vrcp.pop %v2134
        %v2153 = vrcp.pop %v2136
        %v2154 = vrcp.pop %v2138
        %v2155 = vmul.f32 %v2076, %v2139
        %v2156 = vmul.f32 %v2078, %v2140
        %v2157 = vmul.f32 %v2080, %v2141
        %v2158 = vmul.f32 %v2082, %v2142
        %v2159 = vmul.f32 %v2084, %v2143
        %v2160 = vmul.f32 %v2086, %v2144
        %v2161 = vmul.f32 %v2088, %v2145
        %v2162 = vmul.f32 %v2090, %v2146
        %v2163 = vmul.f32 %v2092, %v2147
        %v2164 = vmul.f32 %v2094, %v2148
        %v2165 = vmul.f32 %v2096, %v2149
        %v2166 = vmul.f32 %v2098, %v2150
        %v2167 = vmul.f32 %v2100, %v2151
        %v2168 = vmul.f32 %v2102, %v2152
        %v2169 = vmul.f32 %v2104, %v2153
        %v2170 = vmul.f32 %v2106, %v2154
        %v2171 = vpack.c.bf16 %v2156, %v2155
        %v2172 = vpack.c.bf16 %v2158, %v2157
        %v2173 = vpack.c.bf16 %v2160, %v2159
        %v2174 = vpack.c.bf16 %v2162, %v2161
        %v2175 = vpack.c.bf16 %v2164, %v2163
        %v2176 = vpack.c.bf16 %v2166, %v2165
        %v2177 = vpack.c.bf16 %v2168, %v2167
        %v2178 = vpack.c.bf16 %v2170, %v2169
        %2187 = vrot.lane.b32.xlu0 %v1393, 96
        %v2188 = vpop.permute.xlu0 %2187
        %2189 = vrot.lane.b32.xlu0 %v1396, 96
        %v2190 = vpop.permute.xlu0 %2189
        %2191 = vrot.lane.b32.xlu0 %v1399, 96
        %v2192 = vpop.permute.xlu0 %2191
        %2193 = vrot.lane.b32.xlu0 %v1402, 96
        %v2194 = vpop.permute.xlu0 %2193
        %2195 = vrot.lane.b32.xlu0 %v1405, 96
        %v2196 = vpop.permute.xlu0 %2195
        %2197 = vrot.lane.b32.xlu0 %v1408, 96
        %v2198 = vpop.permute.xlu0 %2197
        %2199 = vrot.lane.b32.xlu0 %v1411, 96
        %v2200 = vpop.permute.xlu0 %2199
        %2201 = vrot.lane.b32.xlu0 %v1414, 96
        %v2202 = vpop.permute.xlu0 %2201
        %2211 = vmatprep.subr.bf16.mxu0 0
        %2212 = vmatpush1.bf16.msra.mxu0 %v2188
        %2213 = vmatprep.subr.bf16.mxu0 0
        %2214 = vmatpush1.bf16.msra.mxu0 %v2190
        %2215 = vmatprep.subr.bf16.mxu0 0
        %2216 = vmatpush1.bf16.msra.mxu0 %v2192
        %2217 = vmatprep.subr.bf16.mxu0 0
        %2218 = vmatpush1.bf16.msra.mxu0 %v2194
        %2219 = vmatprep.subr.bf16.mxu0 0
        %2220 = vmatpush1.bf16.msra.mxu0 %v2196
        %2221 = vmatprep.subr.bf16.mxu0 0
        %2222 = vmatpush1.bf16.msra.mxu0 %v2198
        %2223 = vmatprep.subr.bf16.mxu0 0
        %2224 = vmatpush1.bf16.msra.mxu0 %v2200
        %2225 = vmatprep.subr.bf16.mxu0 0
        %2226 = vmatpush1.bf16.msra.mxu0 %v2202
        %2227 = vmatprep.subr.bf16.mxu0 0
        %2228 = vmatpush1.bf16.msra.mxu0 0
        %2229 = vmatprep.subr.bf16.mxu0 0
        %2230 = vmatpush1.bf16.msra.mxu0 0
        %2231 = vmatprep.subr.bf16.mxu0 0
        %2232 = vmatpush1.bf16.msra.mxu0 0
        %2233 = vmatprep.subr.bf16.mxu0 0
        %2234 = vmatpush1.bf16.msra.mxu0 0
        %2235 = vmatprep.subr.bf16.mxu0 0
        %2236 = vmatpush1.bf16.msra.mxu0 0
        %2237 = vmatprep.subr.bf16.mxu0 0
        %2238 = vmatpush1.bf16.msra.mxu0 0
        %2239 = vmatprep.subr.bf16.mxu0 0
        %2240 = vmatpush1.bf16.msra.mxu0 0
        %2241 = vmatprep.subr.bf16.mxu0 0
        %2242 = vmatpush1.bf16.msra.mxu0 0
        %2243 = vmatprep.mubr.bf16.mxu0 0
        %2244 = vmatmul.mubr.bf16.gmra.mrb[0].mxu0 %v2171
        %v2245 = vpop.f32.mrb[0].mxu0
        %v2246 = vadd.f32 0.0, %v2245
        %v2247 = vpop.f32.mrb[0].mxu0
        %v2248 = vpop.f32.mrb[0].mxu0
        %v2249 = vadd.f32 0.0, %v2248
        %v2250 = vpop.f32.mrb[0].mxu0
        %2251 = vmatprep.mubr.bf16.mxu0 0
        %2252 = vmatmul.mubr.bf16.gmra.mrb[0].mxu0 %v2172
        %v2253 = vpop.f32.mrb[0].mxu0
        %v2254 = vadd.f32 0.0, %v2253
        %v2255 = vpop.f32.mrb[0].mxu0
        %v2256 = vpop.f32.mrb[0].mxu0
        %v2257 = vadd.f32 0.0, %v2256
        %v2258 = vpop.f32.mrb[0].mxu0
        %2259 = vmatprep.mubr.bf16.mxu0 0
        %2260 = vmatmul.mubr.bf16.gmra.mrb[0].mxu0 %v2173
        %v2261 = vpop.f32.mrb[0].mxu0
        %v2262 = vadd.f32 0.0, %v2261
        %v2263 = vpop.f32.mrb[0].mxu0
        %v2264 = vpop.f32.mrb[0].mxu0
        %v2265 = vadd.f32 0.0, %v2264
        %v2266 = vpop.f32.mrb[0].mxu0
        %2267 = vmatprep.mubr.bf16.mxu0 0
        %2268 = vmatmul.mubr.bf16.gmra.mrb[0].mxu0 %v2174
        %v2269 = vpop.f32.mrb[0].mxu0
        %v2270 = vadd.f32 0.0, %v2269
        %v2271 = vpop.f32.mrb[0].mxu0
        %v2272 = vpop.f32.mrb[0].mxu0
        %v2273 = vadd.f32 0.0, %v2272
        %v2274 = vpop.f32.mrb[0].mxu0
        %2275 = vmatprep.mubr.bf16.mxu0 0
        %2276 = vmatmul.mubr.bf16.gmra.mrb[0].mxu0 %v2175
        %v2277 = vpop.f32.mrb[0].mxu0
        %v2278 = vadd.f32 0.0, %v2277
        %v2279 = vpop.f32.mrb[0].mxu0
        %v2280 = vpop.f32.mrb[0].mxu0
        %v2281 = vadd.f32 0.0, %v2280
        %v2282 = vpop.f32.mrb[0].mxu0
        %2283 = vmatprep.mubr.bf16.mxu0 0
        %2284 = vmatmul.mubr.bf16.gmra.mrb[0].mxu0 %v2176
        %v2285 = vpop.f32.mrb[0].mxu0
        %v2286 = vadd.f32 0.0, %v2285
        %v2287 = vpop.f32.mrb[0].mxu0
        %v2288 = vpop.f32.mrb[0].mxu0
        %v2289 = vadd.f32 0.0, %v2288
        %v2290 = vpop.f32.mrb[0].mxu0
        %2291 = vmatprep.mubr.bf16.mxu0 0
        %2292 = vmatmul.mubr.bf16.gmra.mrb[0].mxu0 %v2177
        %v2293 = vpop.f32.mrb[0].mxu0
        %v2294 = vadd.f32 0.0, %v2293
        %v2295 = vpop.f32.mrb[0].mxu0
        %v2296 = vpop.f32.mrb[0].mxu0
        %v2297 = vadd.f32 0.0, %v2296
        %v2298 = vpop.f32.mrb[0].mxu0
        %2299 = vmatprep.mubr.bf16.mxu0 0
        %2300 = vmatmul.mubr.bf16.gmra.mrb[0].mxu0 %v2178
        %v2301 = vpop.f32.mrb[0].mxu0
        %v2302 = vadd.f32 0.0, %v2301
        %v2303 = vpop.f32.mrb[0].mxu0
        %v2304 = vpop.f32.mrb[0].mxu0
        %v2305 = vadd.f32 0.0, %v2304
        %v2306 = vpop.f32.mrb[0].mxu0
        %2307 = vdwg.mxu0
        %v2308 = vpack.c.bf16 %v2249, %v2246
        %v2309 = vpack.c.bf16 %v2257, %v2254
        %v2310 = vpack.c.bf16 %v2265, %v2262
        %v2311 = vpack.c.bf16 %v2273, %v2270
        %v2312 = vpack.c.bf16 %v2281, %v2278
        %v2313 = vpack.c.bf16 %v2289, %v2286
        %v2314 = vpack.c.bf16 %v2297, %v2294
        %v2315 = vpack.c.bf16 %v2305, %v2302
        %2324 = vrot.lane.b32.xlu0 %v2308, 32
        %v2325 = vpop.permute.xlu0 %2324
        %2326 = vrot.lane.b32.xlu0 %v2309, 32
        %v2327 = vpop.permute.xlu0 %2326
        %2328 = vrot.lane.b32.xlu0 %v2310, 32
        %v2329 = vpop.permute.xlu0 %2328
        %2330 = vrot.lane.b32.xlu0 %v2311, 32
        %v2331 = vpop.permute.xlu0 %2330
        %2332 = vrot.lane.b32.xlu0 %v2312, 32
        %v2333 = vpop.permute.xlu0 %2332
        %2334 = vrot.lane.b32.xlu0 %v2313, 32
        %v2335 = vpop.permute.xlu0 %2334
        %2336 = vrot.lane.b32.xlu0 %v2314, 32
        %v2337 = vpop.permute.xlu0 %2336
        %2338 = vrot.lane.b32.xlu0 %v2315, 32
        %v2339 = vpop.permute.xlu0 %2338
        %vm2348 = vcmask 523520
        %2349 = vst.msk [vmem:[#allocation2] sm:$0xff] %vm2348, %v2325
        %2350 = vst.msk [vmem:[#allocation2 + $0x8] sm:$0xff] %vm2348, %v2327
        %2351 = vst.msk [vmem:[#allocation2 + $0x10] sm:$0xff] %vm2348, %v2329
        %2352 = vst.msk [vmem:[#allocation2 + $0x18] sm:$0xff] %vm2348, %v2331
        %2353 = vst.msk [vmem:[#allocation2 + $0x20] sm:$0xff] %vm2348, %v2333
        %2354 = vst.msk [vmem:[#allocation2 + $0x28] sm:$0xff] %vm2348, %v2335
        %2355 = vst.msk [vmem:[#allocation2 + $0x30] sm:$0xff] %vm2348, %v2337
        %2356 = vst.msk [vmem:[#allocation2 + $0x38] sm:$0xff] %vm2348, %v2339
        %2357 = vrot.lane.b32.xlu0 %v1415, 64
        %v2358 = vpop.permute.xlu0 %2357
        %2359 = vrot.lane.b32.xlu0 %v1416, 64
        %v2360 = vpop.permute.xlu0 %2359
        %2361 = vrot.lane.b32.xlu0 %v1417, 64
        %v2362 = vpop.permute.xlu0 %2361
        %2363 = vrot.lane.b32.xlu0 %v1418, 64
        %v2364 = vpop.permute.xlu0 %2363
        %2365 = vrot.lane.b32.xlu0 %v1419, 64
        %v2366 = vpop.permute.xlu0 %2365
        %2367 = vrot.lane.b32.xlu0 %v1420, 64
        %v2368 = vpop.permute.xlu0 %2367
        %2369 = vrot.lane.b32.xlu0 %v1421, 64
        %v2370 = vpop.permute.xlu0 %2369
        %2371 = vrot.lane.b32.xlu0 %v1422, 64
        %v2372 = vpop.permute.xlu0 %2371
        %2373 = vrot.lane.b32.xlu0 %v1392, 64
        %v2374 = vpop.permute.xlu0 %2373
        %2375 = vrot.lane.b32.xlu0 %v1395, 64
        %v2376 = vpop.permute.xlu0 %2375
        %2377 = vrot.lane.b32.xlu0 %v1398, 64
        %v2378 = vpop.permute.xlu0 %2377
        %2379 = vrot.lane.b32.xlu0 %v1401, 64
        %v2380 = vpop.permute.xlu0 %2379
        %2381 = vrot.lane.b32.xlu0 %v1404, 64
        %v2382 = vpop.permute.xlu0 %2381
        %2383 = vrot.lane.b32.xlu0 %v1407, 64
        %v2384 = vpop.permute.xlu0 %2383
        %2385 = vrot.lane.b32.xlu0 %v1410, 64
        %v2386 = vpop.permute.xlu0 %2385
        %2387 = vrot.lane.b32.xlu0 %v1413, 64
        %v2388 = vpop.permute.xlu0 %2387
        %v2390 = vsel %vm1423, %v2358, 0
        %v2393 = vsel %vm1423, %v2360, 0
        %v2396 = vsel %vm1423, %v2362, 0
        %v2399 = vsel %vm1423, %v2364, 0
        %v2402 = vsel %vm1423, %v2366, 0
        %v2405 = vsel %vm1423, %v2368, 0
        %v2408 = vsel %vm1423, %v2370, 0
        %v2411 = vsel %vm1423, %v2372, 0
        %v2414 = vsel %vm1423, %v2374, 0
        %v2417 = vsel %vm1423, %v2376, 0
        %v2420 = vsel %vm1423, %v2378, 0
        %v2423 = vsel %vm1423, %v2380, 0
        %v2426 = vsel %vm1423, %v2382, 0
        %v2429 = vsel %vm1423, %v2384, 0
        %v2432 = vsel %vm1423, %v2386, 0
        %v2435 = vsel %vm1423, %v2388, 0
        %2437 = vmatprep.subr.bf16.mxu0 0
        %2438 = vmatpush1.bf16.xpose.msra.mxu0 %v2414
        %2439 = vmatprep.subr.bf16.mxu0 0
        %2440 = vmatpush1.bf16.xpose.msra.mxu0 %v2417
        %2441 = vmatprep.subr.bf16.mxu0 0
        %2442 = vmatpush1.bf16.xpose.msra.mxu0 %v2420
        %2443 = vmatprep.subr.bf16.mxu0 0
        %2444 = vmatpush1.bf16.xpose.msra.mxu0 %v2423
        %2445 = vmatprep.subr.bf16.mxu0 0
        %2446 = vmatpush1.bf16.xpose.msra.mxu0 %v2426
        %2447 = vmatprep.subr.bf16.mxu0 0
        %2448 = vmatpush1.bf16.xpose.msra.mxu0 %v2429
        %2449 = vmatprep.subr.bf16.mxu0 0
        %2450 = vmatpush1.bf16.xpose.msra.mxu0 %v2432
        %2451 = vmatprep.subr.bf16.mxu0 0
        %2452 = vmatpush1.bf16.xpose.msra.mxu0 %v2435
        %2453 = vmatprep.subr.bf16.mxu0 0
        %2454 = vmatpush1.bf16.xpose.msra.mxu0 0
        %2455 = vmatprep.subr.bf16.mxu0 0
        %2456 = vmatpush1.bf16.xpose.msra.mxu0 0
        %2457 = vmatprep.subr.bf16.mxu0 0
        %2458 = vmatpush1.bf16.xpose.msra.mxu0 0
        %2459 = vmatprep.subr.bf16.mxu0 0
        %2460 = vmatpush1.bf16.xpose.msra.mxu0 0
        %2461 = vmatprep.subr.bf16.mxu0 0
        %2462 = vmatpush1.bf16.xpose.msra.mxu0 0
        %2463 = vmatprep.subr.bf16.mxu0 0
        %2464 = vmatpush1.bf16.xpose.msra.mxu0 0
        %2465 = vmatprep.subr.bf16.mxu0 0
        %2466 = vmatpush1.bf16.xpose.msra.mxu0 0
        %2467 = vmatprep.subr.bf16.mxu0 0
        %2468 = vmatpush1.bf16.xpose.msra.mxu0 0
        %2469 = vmatprep.mubr.bf16.mxu0 0
        %2470 = vmatmul.mubr.bf16.gmra.mrb[0].mxu0 %v2390
        %v2471 = vpop.f32.mrb[0].mxu0
        %v2472 = vadd.f32 0.0, %v2471
        %v2473 = vpop.f32.mrb[0].mxu0
        %v2474 = vpop.f32.mrb[0].mxu0
        %v2475 = vadd.f32 0.0, %v2474
        %v2476 = vpop.f32.mrb[0].mxu0
        %2477 = vmatprep.mubr.bf16.mxu0 0
        %2478 = vmatmul.mubr.bf16.gmra.mrb[0].mxu0 %v2393
        %v2479 = vpop.f32.mrb[0].mxu0
        %v2480 = vadd.f32 0.0, %v2479
        %v2481 = vpop.f32.mrb[0].mxu0
        %v2482 = vpop.f32.mrb[0].mxu0
        %v2483 = vadd.f32 0.0, %v2482
        %v2484 = vpop.f32.mrb[0].mxu0
        %2485 = vmatprep.mubr.bf16.mxu0 0
        %2486 = vmatmul.mubr.bf16.gmra.mrb[0].mxu0 %v2396
        %v2487 = vpop.f32.mrb[0].mxu0
        %v2488 = vadd.f32 0.0, %v2487
        %v2489 = vpop.f32.mrb[0].mxu0
        %v2490 = vpop.f32.mrb[0].mxu0
        %v2491 = vadd.f32 0.0, %v2490
        %v2492 = vpop.f32.mrb[0].mxu0
        %2493 = vmatprep.mubr.bf16.mxu0 0
        %2494 = vmatmul.mubr.bf16.gmra.mrb[0].mxu0 %v2399
        %v2495 = vpop.f32.mrb[0].mxu0
        %v2496 = vadd.f32 0.0, %v2495
        %v2497 = vpop.f32.mrb[0].mxu0
        %v2498 = vpop.f32.mrb[0].mxu0
        %v2499 = vadd.f32 0.0, %v2498
        %v2500 = vpop.f32.mrb[0].mxu0
        %2501 = vmatprep.mubr.bf16.mxu0 0
        %2502 = vmatmul.mubr.bf16.gmra.mrb[0].mxu0 %v2402
        %v2503 = vpop.f32.mrb[0].mxu0
        %v2504 = vadd.f32 0.0, %v2503
        %v2505 = vpop.f32.mrb[0].mxu0
        %v2506 = vpop.f32.mrb[0].mxu0
        %v2507 = vadd.f32 0.0, %v2506
        %v2508 = vpop.f32.mrb[0].mxu0
        %2509 = vmatprep.mubr.bf16.mxu0 0
        %2510 = vmatmul.mubr.bf16.gmra.mrb[0].mxu0 %v2405
        %v2511 = vpop.f32.mrb[0].mxu0
        %v2512 = vadd.f32 0.0, %v2511
        %v2513 = vpop.f32.mrb[0].mxu0
        %v2514 = vpop.f32.mrb[0].mxu0
        %v2515 = vadd.f32 0.0, %v2514
        %v2516 = vpop.f32.mrb[0].mxu0
        %2517 = vmatprep.mubr.bf16.mxu0 0
        %2518 = vmatmul.mubr.bf16.gmra.mrb[0].mxu0 %v2408
        %v2519 = vpop.f32.mrb[0].mxu0
        %v2520 = vadd.f32 0.0, %v2519
        %v2521 = vpop.f32.mrb[0].mxu0
        %v2522 = vpop.f32.mrb[0].mxu0
        %v2523 = vadd.f32 0.0, %v2522
        %v2524 = vpop.f32.mrb[0].mxu0
        %2525 = vmatprep.mubr.bf16.mxu0 0
        %2526 = vmatmul.mubr.bf16.gmra.mrb[0].mxu0 %v2411
        %v2527 = vpop.f32.mrb[0].mxu0
        %v2528 = vadd.f32 0.0, %v2527
        %v2529 = vpop.f32.mrb[0].mxu0
        %v2530 = vpop.f32.mrb[0].mxu0
        %v2531 = vadd.f32 0.0, %v2530
        %v2532 = vpop.f32.mrb[0].mxu0
        %2533 = vdwg.mxu0
        %2534 = vmax.xlane.f32.xlu0 %v2472
        %v2535 = vpop.xlane.xlu0 %2534
        %2536 = vmax.xlane.f32.xlu0 %v2475
        %v2537 = vpop.xlane.xlu0 %2536
        %2538 = vmax.xlane.f32.xlu0 %v2480
        %v2539 = vpop.xlane.xlu0 %2538
        %2540 = vmax.xlane.f32.xlu0 %v2483
        %v2541 = vpop.xlane.xlu0 %2540
        %2542 = vmax.xlane.f32.xlu0 %v2488
        %v2543 = vpop.xlane.xlu0 %2542
        %2544 = vmax.xlane.f32.xlu0 %v2491
        %v2545 = vpop.xlane.xlu0 %2544
        %2546 = vmax.xlane.f32.xlu0 %v2496
        %v2547 = vpop.xlane.xlu0 %2546
        %2548 = vmax.xlane.f32.xlu0 %v2499
        %v2549 = vpop.xlane.xlu0 %2548
        %2550 = vmax.xlane.f32.xlu0 %v2504
        %v2551 = vpop.xlane.xlu0 %2550
        %2552 = vmax.xlane.f32.xlu0 %v2507
        %v2553 = vpop.xlane.xlu0 %2552
        %2554 = vmax.xlane.f32.xlu0 %v2512
        %v2555 = vpop.xlane.xlu0 %2554
        %2556 = vmax.xlane.f32.xlu0 %v2515
        %v2557 = vpop.xlane.xlu0 %2556
        %2558 = vmax.xlane.f32.xlu0 %v2520
        %v2559 = vpop.xlane.xlu0 %2558
        %2560 = vmax.xlane.f32.xlu0 %v2523
        %v2561 = vpop.xlane.xlu0 %2560
        %2562 = vmax.xlane.f32.xlu0 %v2528
        %v2563 = vpop.xlane.xlu0 %2562
        %2564 = vmax.xlane.f32.xlu0 %v2531
        %v2565 = vpop.xlane.xlu0 %2564
        %v2566 = vsub.f32 %v2472, %v2535
        %v2567 = vsub.f32 %v2475, %v2537
        %v2568 = vsub.f32 %v2480, %v2539
        %v2569 = vsub.f32 %v2483, %v2541
        %v2570 = vsub.f32 %v2488, %v2543
        %v2571 = vsub.f32 %v2491, %v2545
        %v2572 = vsub.f32 %v2496, %v2547
        %v2573 = vsub.f32 %v2499, %v2549
        %v2574 = vsub.f32 %v2504, %v2551
        %v2575 = vsub.f32 %v2507, %v2553
        %v2576 = vsub.f32 %v2512, %v2555
        %v2577 = vsub.f32 %v2515, %v2557
        %v2578 = vsub.f32 %v2520, %v2559
        %v2579 = vsub.f32 %v2523, %v2561
        %v2580 = vsub.f32 %v2528, %v2563
        %v2581 = vsub.f32 %v2531, %v2565
        %v2582 = vmul.f32 %v2566, 1.442695
        %v2583 = vpow.pop %v2582
        %v2584 = vmul.f32 %v2567, 1.442695
        %v2585 = vpow.pop %v2584
        %v2586 = vmul.f32 %v2568, 1.442695
        %v2587 = vpow.pop %v2586
        %v2588 = vmul.f32 %v2569, 1.442695
        %v2589 = vpow.pop %v2588
        %v2590 = vmul.f32 %v2570, 1.442695
        %v2591 = vpow.pop %v2590
        %v2592 = vmul.f32 %v2571, 1.442695
        %v2593 = vpow.pop %v2592
        %v2594 = vmul.f32 %v2572, 1.442695
        %v2595 = vpow.pop %v2594
        %v2596 = vmul.f32 %v2573, 1.442695
        %v2597 = vpow.pop %v2596
        %v2598 = vmul.f32 %v2574, 1.442695
        %v2599 = vpow.pop %v2598
        %v2600 = vmul.f32 %v2575, 1.442695
        %v2601 = vpow.pop %v2600
        %v2602 = vmul.f32 %v2576, 1.442695
        %v2603 = vpow.pop %v2602
        %v2604 = vmul.f32 %v2577, 1.442695
        %v2605 = vpow.pop %v2604
        %v2606 = vmul.f32 %v2578, 1.442695
        %v2607 = vpow.pop %v2606
        %v2608 = vmul.f32 %v2579, 1.442695
        %v2609 = vpow.pop %v2608
        %v2610 = vmul.f32 %v2580, 1.442695
        %v2611 = vpow.pop %v2610
        %v2612 = vmul.f32 %v2581, 1.442695
        %v2613 = vpow.pop %v2612
        %2614 = vadd.xlane.f32.xlu0 %v2583
        %v2615 = vpop.xlane.xlu0 %2614
        %2616 = vadd.xlane.f32.xlu0 %v2585
        %v2617 = vpop.xlane.xlu0 %2616
        %2618 = vadd.xlane.f32.xlu0 %v2587
        %v2619 = vpop.xlane.xlu0 %2618
        %2620 = vadd.xlane.f32.xlu0 %v2589
        %v2621 = vpop.xlane.xlu0 %2620
        %2622 = vadd.xlane.f32.xlu0 %v2591
        %v2623 = vpop.xlane.xlu0 %2622
        %2624 = vadd.xlane.f32.xlu0 %v2593
        %v2625 = vpop.xlane.xlu0 %2624
        %2626 = vadd.xlane.f32.xlu0 %v2595
        %v2627 = vpop.xlane.xlu0 %2626
        %2628 = vadd.xlane.f32.xlu0 %v2597
        %v2629 = vpop.xlane.xlu0 %2628
        %2630 = vadd.xlane.f32.xlu0 %v2599
        %v2631 = vpop.xlane.xlu0 %2630
        %2632 = vadd.xlane.f32.xlu0 %v2601
        %v2633 = vpop.xlane.xlu0 %2632
        %2634 = vadd.xlane.f32.xlu0 %v2603
        %v2635 = vpop.xlane.xlu0 %2634
        %2636 = vadd.xlane.f32.xlu0 %v2605
        %v2637 = vpop.xlane.xlu0 %2636
        %2638 = vadd.xlane.f32.xlu0 %v2607
        %v2639 = vpop.xlane.xlu0 %2638
        %2640 = vadd.xlane.f32.xlu0 %v2609
        %v2641 = vpop.xlane.xlu0 %2640
        %2642 = vadd.xlane.f32.xlu0 %v2611
        %v2643 = vpop.xlane.xlu0 %2642
        %2644 = vadd.xlane.f32.xlu0 %v2613
        %v2645 = vpop.xlane.xlu0 %2644
        %v2646 = vrcp.pop %v2615
        %v2647 = vrcp.pop %v2617
        %v2648 = vrcp.pop %v2619
        %v2649 = vrcp.pop %v2621
        %v2650 = vrcp.pop %v2623
        %v2651 = vrcp.pop %v2625
        %v2652 = vrcp.pop %v2627
        %v2653 = vrcp.pop %v2629
        %v2654 = vrcp.pop %v2631
        %v2655 = vrcp.pop %v2633
        %v2656 = vrcp.pop %v2635
        %v2657 = vrcp.pop %v2637
        %v2658 = vrcp.pop %v2639
        %v2659 = vrcp.pop %v2641
        %v2660 = vrcp.pop %v2643
        %v2661 = vrcp.pop %v2645
        %v2662 = vmul.f32 %v2583, %v2646
        %v2663 = vmul.f32 %v2585, %v2647
        %v2664 = vmul.f32 %v2587, %v2648
        %v2665 = vmul.f32 %v2589, %v2649
        %v2666 = vmul.f32 %v2591, %v2650
        %v2667 = vmul.f32 %v2593, %v2651
        %v2668 = vmul.f32 %v2595, %v2652
        %v2669 = vmul.f32 %v2597, %v2653
        %v2670 = vmul.f32 %v2599, %v2654
        %v2671 = vmul.f32 %v2601, %v2655
        %v2672 = vmul.f32 %v2603, %v2656
        %v2673 = vmul.f32 %v2605, %v2657
        %v2674 = vmul.f32 %v2607, %v2658
        %v2675 = vmul.f32 %v2609, %v2659
        %v2676 = vmul.f32 %v2611, %v2660
        %v2677 = vmul.f32 %v2613, %v2661
        %v2678 = vpack.c.bf16 %v2663, %v2662
        %v2679 = vpack.c.bf16 %v2665, %v2664
        %v2680 = vpack.c.bf16 %v2667, %v2666
        %v2681 = vpack.c.bf16 %v2669, %v2668
        %v2682 = vpack.c.bf16 %v2671, %v2670
        %v2683 = vpack.c.bf16 %v2673, %v2672
        %v2684 = vpack.c.bf16 %v2675, %v2674
        %v2685 = vpack.c.bf16 %v2677, %v2676
        %2686 = vrot.lane.b32.xlu0 %v1393, 64
        %v2687 = vpop.permute.xlu0 %2686
        %2688 = vrot.lane.b32.xlu0 %v1396, 64
        %v2689 = vpop.permute.xlu0 %2688
        %2690 = vrot.lane.b32.xlu0 %v1399, 64
        %v2691 = vpop.permute.xlu0 %2690
        %2692 = vrot.lane.b32.xlu0 %v1402, 64
        %v2693 = vpop.permute.xlu0 %2692
        %2694 = vrot.lane.b32.xlu0 %v1405, 64
        %v2695 = vpop.permute.xlu0 %2694
        %2696 = vrot.lane.b32.xlu0 %v1408, 64
        %v2697 = vpop.permute.xlu0 %2696
        %2698 = vrot.lane.b32.xlu0 %v1411, 64
        %v2699 = vpop.permute.xlu0 %2698
        %2700 = vrot.lane.b32.xlu0 %v1414, 64
        %v2701 = vpop.permute.xlu0 %2700
        %2710 = vmatprep.subr.bf16.mxu0 0
        %2711 = vmatpush1.bf16.msra.mxu0 %v2687
        %2712 = vmatprep.subr.bf16.mxu0 0
        %2713 = vmatpush1.bf16.msra.mxu0 %v2689
        %2714 = vmatprep.subr.bf16.mxu0 0
        %2715 = vmatpush1.bf16.msra.mxu0 %v2691
        %2716 = vmatprep.subr.bf16.mxu0 0
        %2717 = vmatpush1.bf16.msra.mxu0 %v2693
        %2718 = vmatprep.subr.bf16.mxu0 0
        %2719 = vmatpush1.bf16.msra.mxu0 %v2695
        %2720 = vmatprep.subr.bf16.mxu0 0
        %2721 = vmatpush1.bf16.msra.mxu0 %v2697
        %2722 = vmatprep.subr.bf16.mxu0 0
        %2723 = vmatpush1.bf16.msra.mxu0 %v2699
        %2724 = vmatprep.subr.bf16.mxu0 0
        %2725 = vmatpush1.bf16.msra.mxu0 %v2701
        %2726 = vmatprep.subr.bf16.mxu0 0
        %2727 = vmatpush1.bf16.msra.mxu0 0
        %2728 = vmatprep.subr.bf16.mxu0 0
        %2729 = vmatpush1.bf16.msra.mxu0 0
        %2730 = vmatprep.subr.bf16.mxu0 0
        %2731 = vmatpush1.bf16.msra.mxu0 0
        %2732 = vmatprep.subr.bf16.mxu0 0
        %2733 = vmatpush1.bf16.msra.mxu0 0
        %2734 = vmatprep.subr.bf16.mxu0 0
        %2735 = vmatpush1.bf16.msra.mxu0 0
        %2736 = vmatprep.subr.bf16.mxu0 0
        %2737 = vmatpush1.bf16.msra.mxu0 0
        %2738 = vmatprep.subr.bf16.mxu0 0
        %2739 = vmatpush1.bf16.msra.mxu0 0
        %2740 = vmatprep.subr.bf16.mxu0 0
        %2741 = vmatpush1.bf16.msra.mxu0 0
        %2742 = vmatprep.mubr.bf16.mxu0 0
        %2743 = vmatmul.mubr.bf16.gmra.mrb[0].mxu0 %v2678
        %v2744 = vpop.f32.mrb[0].mxu0
        %v2745 = vadd.f32 0.0, %v2744
        %v2746 = vpop.f32.mrb[0].mxu0
        %v2747 = vpop.f32.mrb[0].mxu0
        %v2748 = vadd.f32 0.0, %v2747
        %v2749 = vpop.f32.mrb[0].mxu0
        %2750 = vmatprep.mubr.bf16.mxu0 0
        %2751 = vmatmul.mubr.bf16.gmra.mrb[0].mxu0 %v2679
        %v2752 = vpop.f32.mrb[0].mxu0
        %v2753 = vadd.f32 0.0, %v2752
        %v2754 = vpop.f32.mrb[0].mxu0
        %v2755 = vpop.f32.mrb[0].mxu0
        %v2756 = vadd.f32 0.0, %v2755
        %v2757 = vpop.f32.mrb[0].mxu0
        %2758 = vmatprep.mubr.bf16.mxu0 0
        %2759 = vmatmul.mubr.bf16.gmra.mrb[0].mxu0 %v2680
        %v2760 = vpop.f32.mrb[0].mxu0
        %v2761 = vadd.f32 0.0, %v2760
        %v2762 = vpop.f32.mrb[0].mxu0
        %v2763 = vpop.f32.mrb[0].mxu0
        %v2764 = vadd.f32 0.0, %v2763
        %v2765 = vpop.f32.mrb[0].mxu0
        %2766 = vmatprep.mubr.bf16.mxu0 0
        %2767 = vmatmul.mubr.bf16.gmra.mrb[0].mxu0 %v2681
        %v2768 = vpop.f32.mrb[0].mxu0
        %v2769 = vadd.f32 0.0, %v2768
        %v2770 = vpop.f32.mrb[0].mxu0
        %v2771 = vpop.f32.mrb[0].mxu0
        %v2772 = vadd.f32 0.0, %v2771
        %v2773 = vpop.f32.mrb[0].mxu0
        %2774 = vmatprep.mubr.bf16.mxu0 0
        %2775 = vmatmul.mubr.bf16.gmra.mrb[0].mxu0 %v2682
        %v2776 = vpop.f32.mrb[0].mxu0
        %v2777 = vadd.f32 0.0, %v2776
        %v2778 = vpop.f32.mrb[0].mxu0
        %v2779 = vpop.f32.mrb[0].mxu0
        %v2780 = vadd.f32 0.0, %v2779
        %v2781 = vpop.f32.mrb[0].mxu0
        %2782 = vmatprep.mubr.bf16.mxu0 0
        %2783 = vmatmul.mubr.bf16.gmra.mrb[0].mxu0 %v2683
        %v2784 = vpop.f32.mrb[0].mxu0
        %v2785 = vadd.f32 0.0, %v2784
        %v2786 = vpop.f32.mrb[0].mxu0
        %v2787 = vpop.f32.mrb[0].mxu0
        %v2788 = vadd.f32 0.0, %v2787
        %v2789 = vpop.f32.mrb[0].mxu0
        %2790 = vmatprep.mubr.bf16.mxu0 0
        %2791 = vmatmul.mubr.bf16.gmra.mrb[0].mxu0 %v2684
        %v2792 = vpop.f32.mrb[0].mxu0
        %v2793 = vadd.f32 0.0, %v2792
        %v2794 = vpop.f32.mrb[0].mxu0
        %v2795 = vpop.f32.mrb[0].mxu0
        %v2796 = vadd.f32 0.0, %v2795
        %v2797 = vpop.f32.mrb[0].mxu0
        %2798 = vmatprep.mubr.bf16.mxu0 0
        %2799 = vmatmul.mubr.bf16.gmra.mrb[0].mxu0 %v2685
        %v2800 = vpop.f32.mrb[0].mxu0
        %v2801 = vadd.f32 0.0, %v2800
        %v2802 = vpop.f32.mrb[0].mxu0
        %v2803 = vpop.f32.mrb[0].mxu0
        %v2804 = vadd.f32 0.0, %v2803
        %v2805 = vpop.f32.mrb[0].mxu0
        %2806 = vdwg.mxu0
        %v2807 = vpack.c.bf16 %v2748, %v2745
        %v2808 = vpack.c.bf16 %v2756, %v2753
        %v2809 = vpack.c.bf16 %v2764, %v2761
        %v2810 = vpack.c.bf16 %v2772, %v2769
        %v2811 = vpack.c.bf16 %v2780, %v2777
        %v2812 = vpack.c.bf16 %v2788, %v2785
        %v2813 = vpack.c.bf16 %v2796, %v2793
        %v2814 = vpack.c.bf16 %v2804, %v2801
        %2823 = vrot.lane.b32.xlu0 %v2807, 64
        %v2824 = vpop.permute.xlu0 %2823
        %2825 = vrot.lane.b32.xlu0 %v2808, 64
        %v2826 = vpop.permute.xlu0 %2825
        %2827 = vrot.lane.b32.xlu0 %v2809, 64
        %v2828 = vpop.permute.xlu0 %2827
        %2829 = vrot.lane.b32.xlu0 %v2810, 64
        %v2830 = vpop.permute.xlu0 %2829
        %2831 = vrot.lane.b32.xlu0 %v2811, 64
        %v2832 = vpop.permute.xlu0 %2831
        %2833 = vrot.lane.b32.xlu0 %v2812, 64
        %v2834 = vpop.permute.xlu0 %2833
        %2835 = vrot.lane.b32.xlu0 %v2813, 64
        %v2836 = vpop.permute.xlu0 %2835
        %2837 = vrot.lane.b32.xlu0 %v2814, 64
        %v2838 = vpop.permute.xlu0 %2837
        %vm2847 = vcmask 785920
        %2848 = vst.msk [vmem:[#allocation2] sm:$0xff] %vm2847, %v2824
        %2849 = vst.msk [vmem:[#allocation2 + $0x8] sm:$0xff] %vm2847, %v2826
        %2850 = vst.msk [vmem:[#allocation2 + $0x10] sm:$0xff] %vm2847, %v2828
        %2851 = vst.msk [vmem:[#allocation2 + $0x18] sm:$0xff] %vm2847, %v2830
        %2852 = vst.msk [vmem:[#allocation2 + $0x20] sm:$0xff] %vm2847, %v2832
        %2853 = vst.msk [vmem:[#allocation2 + $0x28] sm:$0xff] %vm2847, %v2834
        %2854 = vst.msk [vmem:[#allocation2 + $0x30] sm:$0xff] %vm2847, %v2836
        %2855 = vst.msk [vmem:[#allocation2 + $0x38] sm:$0xff] %vm2847, %v2838
        %2856 = vrot.lane.b32.xlu0 %v1415, 32
        %v2857 = vpop.permute.xlu0 %2856
        %2858 = vrot.lane.b32.xlu0 %v1416, 32
        %v2859 = vpop.permute.xlu0 %2858
        %2860 = vrot.lane.b32.xlu0 %v1417, 32
        %v2861 = vpop.permute.xlu0 %2860
        %2862 = vrot.lane.b32.xlu0 %v1418, 32
        %v2863 = vpop.permute.xlu0 %2862
        %2864 = vrot.lane.b32.xlu0 %v1419, 32
        %v2865 = vpop.permute.xlu0 %2864
        %2866 = vrot.lane.b32.xlu0 %v1420, 32
        %v2867 = vpop.permute.xlu0 %2866
        %2868 = vrot.lane.b32.xlu0 %v1421, 32
        %v2869 = vpop.permute.xlu0 %2868
        %2870 = vrot.lane.b32.xlu0 %v1422, 32
        %v2871 = vpop.permute.xlu0 %2870
        %2872 = vrot.lane.b32.xlu0 %v1392, 32
        %v2873 = vpop.permute.xlu0 %2872
        %2874 = vrot.lane.b32.xlu0 %v1395, 32
        %v2875 = vpop.permute.xlu0 %2874
        %2876 = vrot.lane.b32.xlu0 %v1398, 32
        %v2877 = vpop.permute.xlu0 %2876
        %2878 = vrot.lane.b32.xlu0 %v1401, 32
        %v2879 = vpop.permute.xlu0 %2878
        %2880 = vrot.lane.b32.xlu0 %v1404, 32
        %v2881 = vpop.permute.xlu0 %2880
        %2882 = vrot.lane.b32.xlu0 %v1407, 32
        %v2883 = vpop.permute.xlu0 %2882
        %2884 = vrot.lane.b32.xlu0 %v1410, 32
        %v2885 = vpop.permute.xlu0 %2884
        %2886 = vrot.lane.b32.xlu0 %v1413, 32
        %v2887 = vpop.permute.xlu0 %2886
        %v2889 = vsel %vm1423, %v2857, 0
        %v2892 = vsel %vm1423, %v2859, 0
        %v2895 = vsel %vm1423, %v2861, 0
        %v2898 = vsel %vm1423, %v2863, 0
        %v2901 = vsel %vm1423, %v2865, 0
        %v2904 = vsel %vm1423, %v2867, 0
        %v2907 = vsel %vm1423, %v2869, 0
        %v2910 = vsel %vm1423, %v2871, 0
        %v2913 = vsel %vm1423, %v2873, 0
        %v2916 = vsel %vm1423, %v2875, 0
        %v2919 = vsel %vm1423, %v2877, 0
        %v2922 = vsel %vm1423, %v2879, 0
        %v2925 = vsel %vm1423, %v2881, 0
        %v2928 = vsel %vm1423, %v2883, 0
        %v2931 = vsel %vm1423, %v2885, 0
        %v2934 = vsel %vm1423, %v2887, 0
        %2936 = vmatprep.subr.bf16.mxu0 0
        %2937 = vmatpush1.bf16.xpose.msra.mxu0 %v2913
        %2938 = vmatprep.subr.bf16.mxu0 0
        %2939 = vmatpush1.bf16.xpose.msra.mxu0 %v2916
        %2940 = vmatprep.subr.bf16.mxu0 0
        %2941 = vmatpush1.bf16.xpose.msra.mxu0 %v2919
        %2942 = vmatprep.subr.bf16.mxu0 0
        %2943 = vmatpush1.bf16.xpose.msra.mxu0 %v2922
        %2944 = vmatprep.subr.bf16.mxu0 0
        %2945 = vmatpush1.bf16.xpose.msra.mxu0 %v2925
        %2946 = vmatprep.subr.bf16.mxu0 0
        %2947 = vmatpush1.bf16.xpose.msra.mxu0 %v2928
        %2948 = vmatprep.subr.bf16.mxu0 0
        %2949 = vmatpush1.bf16.xpose.msra.mxu0 %v2931
        %2950 = vmatprep.subr.bf16.mxu0 0
        %2951 = vmatpush1.bf16.xpose.msra.mxu0 %v2934
        %2952 = vmatprep.subr.bf16.mxu0 0
        %2953 = vmatpush1.bf16.xpose.msra.mxu0 0
        %2954 = vmatprep.subr.bf16.mxu0 0
        %2955 = vmatpush1.bf16.xpose.msra.mxu0 0
        %2956 = vmatprep.subr.bf16.mxu0 0
        %2957 = vmatpush1.bf16.xpose.msra.mxu0 0
        %2958 = vmatprep.subr.bf16.mxu0 0
        %2959 = vmatpush1.bf16.xpose.msra.mxu0 0
        %2960 = vmatprep.subr.bf16.mxu0 0
        %2961 = vmatpush1.bf16.xpose.msra.mxu0 0
        %2962 = vmatprep.subr.bf16.mxu0 0
        %2963 = vmatpush1.bf16.xpose.msra.mxu0 0
        %2964 = vmatprep.subr.bf16.mxu0 0
        %2965 = vmatpush1.bf16.xpose.msra.mxu0 0
        %2966 = vmatprep.subr.bf16.mxu0 0
        %2967 = vmatpush1.bf16.xpose.msra.mxu0 0
        %2968 = vmatprep.mubr.bf16.mxu0 0
        %2969 = vmatmul.mubr.bf16.gmra.mrb[0].mxu0 %v2889
        %v2970 = vpop.f32.mrb[0].mxu0
        %v2971 = vadd.f32 0.0, %v2970
        %v2972 = vpop.f32.mrb[0].mxu0
        %v2973 = vpop.f32.mrb[0].mxu0
        %v2974 = vadd.f32 0.0, %v2973
        %v2975 = vpop.f32.mrb[0].mxu0
        %2976 = vmatprep.mubr.bf16.mxu0 0
        %2977 = vmatmul.mubr.bf16.gmra.mrb[0].mxu0 %v2892
        %v2978 = vpop.f32.mrb[0].mxu0
        %v2979 = vadd.f32 0.0, %v2978
        %v2980 = vpop.f32.mrb[0].mxu0
        %v2981 = vpop.f32.mrb[0].mxu0
        %v2982 = vadd.f32 0.0, %v2981
        %v2983 = vpop.f32.mrb[0].mxu0
        %2984 = vmatprep.mubr.bf16.mxu0 0
        %2985 = vmatmul.mubr.bf16.gmra.mrb[0].mxu0 %v2895
        %v2986 = vpop.f32.mrb[0].mxu0
        %v2987 = vadd.f32 0.0, %v2986
        %v2988 = vpop.f32.mrb[0].mxu0
        %v2989 = vpop.f32.mrb[0].mxu0
        %v2990 = vadd.f32 0.0, %v2989
        %v2991 = vpop.f32.mrb[0].mxu0
        %2992 = vmatprep.mubr.bf16.mxu0 0
        %2993 = vmatmul.mubr.bf16.gmra.mrb[0].mxu0 %v2898
        %v2994 = vpop.f32.mrb[0].mxu0
        %v2995 = vadd.f32 0.0, %v2994
        %v2996 = vpop.f32.mrb[0].mxu0
        %v2997 = vpop.f32.mrb[0].mxu0
        %v2998 = vadd.f32 0.0, %v2997
        %v2999 = vpop.f32.mrb[0].mxu0
        %3000 = vmatprep.mubr.bf16.mxu0 0
        %3001 = vmatmul.mubr.bf16.gmra.mrb[0].mxu0 %v2901
        %v3002 = vpop.f32.mrb[0].mxu0
        %v3003 = vadd.f32 0.0, %v3002
        %v3004 = vpop.f32.mrb[0].mxu0
        %v3005 = vpop.f32.mrb[0].mxu0
        %v3006 = vadd.f32 0.0, %v3005
        %v3007 = vpop.f32.mrb[0].mxu0
        %3008 = vmatprep.mubr.bf16.mxu0 0
        %3009 = vmatmul.mubr.bf16.gmra.mrb[0].mxu0 %v2904
        %v3010 = vpop.f32.mrb[0].mxu0
        %v3011 = vadd.f32 0.0, %v3010
        %v3012 = vpop.f32.mrb[0].mxu0
        %v3013 = vpop.f32.mrb[0].mxu0
        %v3014 = vadd.f32 0.0, %v3013
        %v3015 = vpop.f32.mrb[0].mxu0
        %3016 = vmatprep.mubr.bf16.mxu0 0
        %3017 = vmatmul.mubr.bf16.gmra.mrb[0].mxu0 %v2907
        %v3018 = vpop.f32.mrb[0].mxu0
        %v3019 = vadd.f32 0.0, %v3018
        %v3020 = vpop.f32.mrb[0].mxu0
        %v3021 = vpop.f32.mrb[0].mxu0
        %v3022 = vadd.f32 0.0, %v3021
        %v3023 = vpop.f32.mrb[0].mxu0
        %3024 = vmatprep.mubr.bf16.mxu0 0
        %3025 = vmatmul.mubr.bf16.gmra.mrb[0].mxu0 %v2910
        %v3026 = vpop.f32.mrb[0].mxu0
        %v3027 = vadd.f32 0.0, %v3026
        %v3028 = vpop.f32.mrb[0].mxu0
        %v3029 = vpop.f32.mrb[0].mxu0
        %v3030 = vadd.f32 0.0, %v3029
        %v3031 = vpop.f32.mrb[0].mxu0
        %3032 = vdwg.mxu0
        %3033 = vmax.xlane.f32.xlu0 %v2971
        %v3034 = vpop.xlane.xlu0 %3033
        %3035 = vmax.xlane.f32.xlu0 %v2974
        %v3036 = vpop.xlane.xlu0 %3035
        %3037 = vmax.xlane.f32.xlu0 %v2979
        %v3038 = vpop.xlane.xlu0 %3037
        %3039 = vmax.xlane.f32.xlu0 %v2982
        %v3040 = vpop.xlane.xlu0 %3039
        %3041 = vmax.xlane.f32.xlu0 %v2987
        %v3042 = vpop.xlane.xlu0 %3041
        %3043 = vmax.xlane.f32.xlu0 %v2990
        %v3044 = vpop.xlane.xlu0 %3043
        %3045 = vmax.xlane.f32.xlu0 %v2995
        %v3046 = vpop.xlane.xlu0 %3045
        %3047 = vmax.xlane.f32.xlu0 %v2998
        %v3048 = vpop.xlane.xlu0 %3047
        %3049 = vmax.xlane.f32.xlu0 %v3003
        %v3050 = vpop.xlane.xlu0 %3049
        %3051 = vmax.xlane.f32.xlu0 %v3006
        %v3052 = vpop.xlane.xlu0 %3051
        %3053 = vmax.xlane.f32.xlu0 %v3011
        %v3054 = vpop.xlane.xlu0 %3053
        %3055 = vmax.xlane.f32.xlu0 %v3014
        %v3056 = vpop.xlane.xlu0 %3055
        %3057 = vmax.xlane.f32.xlu0 %v3019
        %v3058 = vpop.xlane.xlu0 %3057
        %3059 = vmax.xlane.f32.xlu0 %v3022
        %v3060 = vpop.xlane.xlu0 %3059
        %3061 = vmax.xlane.f32.xlu0 %v3027
        %v3062 = vpop.xlane.xlu0 %3061
        %3063 = vmax.xlane.f32.xlu0 %v3030
        %v3064 = vpop.xlane.xlu0 %3063
        %v3065 = vsub.f32 %v2971, %v3034
        %v3066 = vsub.f32 %v2974, %v3036
        %v3067 = vsub.f32 %v2979, %v3038
        %v3068 = vsub.f32 %v2982, %v3040
        %v3069 = vsub.f32 %v2987, %v3042
        %v3070 = vsub.f32 %v2990, %v3044
        %v3071 = vsub.f32 %v2995, %v3046
        %v3072 = vsub.f32 %v2998, %v3048
        %v3073 = vsub.f32 %v3003, %v3050
        %v3074 = vsub.f32 %v3006, %v3052
        %v3075 = vsub.f32 %v3011, %v3054
        %v3076 = vsub.f32 %v3014, %v3056
        %v3077 = vsub.f32 %v3019, %v3058
        %v3078 = vsub.f32 %v3022, %v3060
        %v3079 = vsub.f32 %v3027, %v3062
        %v3080 = vsub.f32 %v3030, %v3064
        %v3081 = vmul.f32 %v3065, 1.442695
        %v3082 = vpow.pop %v3081
        %v3083 = vmul.f32 %v3066, 1.442695
        %v3084 = vpow.pop %v3083
        %v3085 = vmul.f32 %v3067, 1.442695
        %v3086 = vpow.pop %v3085
        %v3087 = vmul.f32 %v3068, 1.442695
        %v3088 = vpow.pop %v3087
        %v3089 = vmul.f32 %v3069, 1.442695
        %v3090 = vpow.pop %v3089
        %v3091 = vmul.f32 %v3070, 1.442695
        %v3092 = vpow.pop %v3091
        %v3093 = vmul.f32 %v3071, 1.442695
        %v3094 = vpow.pop %v3093
        %v3095 = vmul.f32 %v3072, 1.442695
        %v3096 = vpow.pop %v3095
        %v3097 = vmul.f32 %v3073, 1.442695
        %v3098 = vpow.pop %v3097
        %v3099 = vmul.f32 %v3074, 1.442695
        %v3100 = vpow.pop %v3099
        %v3101 = vmul.f32 %v3075, 1.442695
        %v3102 = vpow.pop %v3101
        %v3103 = vmul.f32 %v3076, 1.442695
        %v3104 = vpow.pop %v3103
        %v3105 = vmul.f32 %v3077, 1.442695
        %v3106 = vpow.pop %v3105
        %v3107 = vmul.f32 %v3078, 1.442695
        %v3108 = vpow.pop %v3107
        %v3109 = vmul.f32 %v3079, 1.442695
        %v3110 = vpow.pop %v3109
        %v3111 = vmul.f32 %v3080, 1.442695
        %v3112 = vpow.pop %v3111
        %3113 = vadd.xlane.f32.xlu0 %v3082
        %v3114 = vpop.xlane.xlu0 %3113
        %3115 = vadd.xlane.f32.xlu0 %v3084
        %v3116 = vpop.xlane.xlu0 %3115
        %3117 = vadd.xlane.f32.xlu0 %v3086
        %v3118 = vpop.xlane.xlu0 %3117
        %3119 = vadd.xlane.f32.xlu0 %v3088
        %v3120 = vpop.xlane.xlu0 %3119
        %3121 = vadd.xlane.f32.xlu0 %v3090
        %v3122 = vpop.xlane.xlu0 %3121
        %3123 = vadd.xlane.f32.xlu0 %v3092
        %v3124 = vpop.xlane.xlu0 %3123
        %3125 = vadd.xlane.f32.xlu0 %v3094
        %v3126 = vpop.xlane.xlu0 %3125
        %3127 = vadd.xlane.f32.xlu0 %v3096
        %v3128 = vpop.xlane.xlu0 %3127
        %3129 = vadd.xlane.f32.xlu0 %v3098
        %v3130 = vpop.xlane.xlu0 %3129
        %3131 = vadd.xlane.f32.xlu0 %v3100
        %v3132 = vpop.xlane.xlu0 %3131
        %3133 = vadd.xlane.f32.xlu0 %v3102
        %v3134 = vpop.xlane.xlu0 %3133
        %3135 = vadd.xlane.f32.xlu0 %v3104
        %v3136 = vpop.xlane.xlu0 %3135
        %3137 = vadd.xlane.f32.xlu0 %v3106
        %v3138 = vpop.xlane.xlu0 %3137
        %3139 = vadd.xlane.f32.xlu0 %v3108
        %v3140 = vpop.xlane.xlu0 %3139
        %3141 = vadd.xlane.f32.xlu0 %v3110
        %v3142 = vpop.xlane.xlu0 %3141
        %3143 = vadd.xlane.f32.xlu0 %v3112
        %v3144 = vpop.xlane.xlu0 %3143
        %v3145 = vrcp.pop %v3114
        %v3146 = vrcp.pop %v3116
        %v3147 = vrcp.pop %v3118
        %v3148 = vrcp.pop %v3120
        %v3149 = vrcp.pop %v3122
        %v3150 = vrcp.pop %v3124
        %v3151 = vrcp.pop %v3126
        %v3152 = vrcp.pop %v3128
        %v3153 = vrcp.pop %v3130
        %v3154 = vrcp.pop %v3132
        %v3155 = vrcp.pop %v3134
        %v3156 = vrcp.pop %v3136
        %v3157 = vrcp.pop %v3138
        %v3158 = vrcp.pop %v3140
        %v3159 = vrcp.pop %v3142
        %v3160 = vrcp.pop %v3144
        %v3161 = vmul.f32 %v3082, %v3145
        %v3162 = vmul.f32 %v3084, %v3146
        %v3163 = vmul.f32 %v3086, %v3147
        %v3164 = vmul.f32 %v3088, %v3148
        %v3165 = vmul.f32 %v3090, %v3149
        %v3166 = vmul.f32 %v3092, %v3150
        %v3167 = vmul.f32 %v3094, %v3151
        %v3168 = vmul.f32 %v3096, %v3152
        %v3169 = vmul.f32 %v3098, %v3153
        %v3170 = vmul.f32 %v3100, %v3154
        %v3171 = vmul.f32 %v3102, %v3155
        %v3172 = vmul.f32 %v3104, %v3156
        %v3173 = vmul.f32 %v3106, %v3157
        %v3174 = vmul.f32 %v3108, %v3158
        %v3175 = vmul.f32 %v3110, %v3159
        %v3176 = vmul.f32 %v3112, %v3160
        %v3177 = vpack.c.bf16 %v3162, %v3161
        %v3178 = vpack.c.bf16 %v3164, %v3163
        %v3179 = vpack.c.bf16 %v3166, %v3165
        %v3180 = vpack.c.bf16 %v3168, %v3167
        %v3181 = vpack.c.bf16 %v3170, %v3169
        %v3182 = vpack.c.bf16 %v3172, %v3171
        %v3183 = vpack.c.bf16 %v3174, %v3173
        %v3184 = vpack.c.bf16 %v3176, %v3175
        %3185 = vrot.lane.b32.xlu0 %v1393, 32
        %v3186 = vpop.permute.xlu0 %3185
        %3187 = vrot.lane.b32.xlu0 %v1396, 32
        %v3188 = vpop.permute.xlu0 %3187
        %3189 = vrot.lane.b32.xlu0 %v1399, 32
        %v3190 = vpop.permute.xlu0 %3189
        %3191 = vrot.lane.b32.xlu0 %v1402, 32
        %v3192 = vpop.permute.xlu0 %3191
        %3193 = vrot.lane.b32.xlu0 %v1405, 32
        %v3194 = vpop.permute.xlu0 %3193
        %3195 = vrot.lane.b32.xlu0 %v1408, 32
        %v3196 = vpop.permute.xlu0 %3195
        %3197 = vrot.lane.b32.xlu0 %v1411, 32
        %v3198 = vpop.permute.xlu0 %3197
        %3199 = vrot.lane.b32.xlu0 %v1414, 32
        %v3200 = vpop.permute.xlu0 %3199
        %3209 = vmatprep.subr.bf16.mxu0 0
        %3210 = vmatpush1.bf16.msra.mxu0 %v3186
        %3211 = vmatprep.subr.bf16.mxu0 0
        %3212 = vmatpush1.bf16.msra.mxu0 %v3188
        %3213 = vmatprep.subr.bf16.mxu0 0
        %3214 = vmatpush1.bf16.msra.mxu0 %v3190
        %3215 = vmatprep.subr.bf16.mxu0 0
        %3216 = vmatpush1.bf16.msra.mxu0 %v3192
        %3217 = vmatprep.subr.bf16.mxu0 0
        %3218 = vmatpush1.bf16.msra.mxu0 %v3194
        %3219 = vmatprep.subr.bf16.mxu0 0
        %3220 = vmatpush1.bf16.msra.mxu0 %v3196
        %3221 = vmatprep.subr.bf16.mxu0 0
        %3222 = vmatpush1.bf16.msra.mxu0 %v3198
        %3223 = vmatprep.subr.bf16.mxu0 0
        %3224 = vmatpush1.bf16.msra.mxu0 %v3200
        %3225 = vmatprep.subr.bf16.mxu0 0
        %3226 = vmatpush1.bf16.msra.mxu0 0
        %3227 = vmatprep.subr.bf16.mxu0 0
        %3228 = vmatpush1.bf16.msra.mxu0 0
        %3229 = vmatprep.subr.bf16.mxu0 0
        %3230 = vmatpush1.bf16.msra.mxu0 0
        %3231 = vmatprep.subr.bf16.mxu0 0
        %3232 = vmatpush1.bf16.msra.mxu0 0
        %3233 = vmatprep.subr.bf16.mxu0 0
        %3234 = vmatpush1.bf16.msra.mxu0 0
        %3235 = vmatprep.subr.bf16.mxu0 0
        %3236 = vmatpush1.bf16.msra.mxu0 0
        %3237 = vmatprep.subr.bf16.mxu0 0
        %3238 = vmatpush1.bf16.msra.mxu0 0
        %3239 = vmatprep.subr.bf16.mxu0 0
        %3240 = vmatpush1.bf16.msra.mxu0 0
        %3241 = vmatprep.mubr.bf16.mxu0 0
        %3242 = vmatmul.mubr.bf16.gmra.mrb[0].mxu0 %v3177
        %v3243 = vpop.f32.mrb[0].mxu0
        %v3244 = vadd.f32 0.0, %v3243
        %v3245 = vpop.f32.mrb[0].mxu0
        %v3246 = vpop.f32.mrb[0].mxu0
        %v3247 = vadd.f32 0.0, %v3246
        %v3248 = vpop.f32.mrb[0].mxu0
        %3249 = vmatprep.mubr.bf16.mxu0 0
        %3250 = vmatmul.mubr.bf16.gmra.mrb[0].mxu0 %v3178
        %v3251 = vpop.f32.mrb[0].mxu0
        %v3252 = vadd.f32 0.0, %v3251
        %v3253 = vpop.f32.mrb[0].mxu0
        %v3254 = vpop.f32.mrb[0].mxu0
        %v3255 = vadd.f32 0.0, %v3254
        %v3256 = vpop.f32.mrb[0].mxu0
        %3257 = vmatprep.mubr.bf16.mxu0 0
        %3258 = vmatmul.mubr.bf16.gmra.mrb[0].mxu0 %v3179
        %v3259 = vpop.f32.mrb[0].mxu0
        %v3260 = vadd.f32 0.0, %v3259
        %v3261 = vpop.f32.mrb[0].mxu0
        %v3262 = vpop.f32.mrb[0].mxu0
        %v3263 = vadd.f32 0.0, %v3262
        %v3264 = vpop.f32.mrb[0].mxu0
        %3265 = vmatprep.mubr.bf16.mxu0 0
        %3266 = vmatmul.mubr.bf16.gmra.mrb[0].mxu0 %v3180
        %v3267 = vpop.f32.mrb[0].mxu0
        %v3268 = vadd.f32 0.0, %v3267
        %v3269 = vpop.f32.mrb[0].mxu0
        %v3270 = vpop.f32.mrb[0].mxu0
        %v3271 = vadd.f32 0.0, %v3270
        %v3272 = vpop.f32.mrb[0].mxu0
        %3273 = vmatprep.mubr.bf16.mxu0 0
        %3274 = vmatmul.mubr.bf16.gmra.mrb[0].mxu0 %v3181
        %v3275 = vpop.f32.mrb[0].mxu0
        %v3276 = vadd.f32 0.0, %v3275
        %v3277 = vpop.f32.mrb[0].mxu0
        %v3278 = vpop.f32.mrb[0].mxu0
        %v3279 = vadd.f32 0.0, %v3278
        %v3280 = vpop.f32.mrb[0].mxu0
        %3281 = vmatprep.mubr.bf16.mxu0 0
        %3282 = vmatmul.mubr.bf16.gmra.mrb[0].mxu0 %v3182
        %v3283 = vpop.f32.mrb[0].mxu0
        %v3284 = vadd.f32 0.0, %v3283
        %v3285 = vpop.f32.mrb[0].mxu0
        %v3286 = vpop.f32.mrb[0].mxu0
        %v3287 = vadd.f32 0.0, %v3286
        %v3288 = vpop.f32.mrb[0].mxu0
        %3289 = vmatprep.mubr.bf16.mxu0 0
        %3290 = vmatmul.mubr.bf16.gmra.mrb[0].mxu0 %v3183
        %v3291 = vpop.f32.mrb[0].mxu0
        %v3292 = vadd.f32 0.0, %v3291
        %v3293 = vpop.f32.mrb[0].mxu0
        %v3294 = vpop.f32.mrb[0].mxu0
        %v3295 = vadd.f32 0.0, %v3294
        %v3296 = vpop.f32.mrb[0].mxu0
        %3297 = vmatprep.mubr.bf16.mxu0 0
        %3298 = vmatmul.mubr.bf16.gmra.mrb[0].mxu0 %v3184
        %v3299 = vpop.f32.mrb[0].mxu0
        %v3300 = vadd.f32 0.0, %v3299
        %v3301 = vpop.f32.mrb[0].mxu0
        %v3302 = vpop.f32.mrb[0].mxu0
        %v3303 = vadd.f32 0.0, %v3302
        %v3304 = vpop.f32.mrb[0].mxu0
        %3305 = vdwg.mxu0
        %v3306 = vpack.c.bf16 %v3247, %v3244
        %v3307 = vpack.c.bf16 %v3255, %v3252
        %v3308 = vpack.c.bf16 %v3263, %v3260
        %v3309 = vpack.c.bf16 %v3271, %v3268
        %v3310 = vpack.c.bf16 %v3279, %v3276
        %v3311 = vpack.c.bf16 %v3287, %v3284
        %v3312 = vpack.c.bf16 %v3295, %v3292
        %v3313 = vpack.c.bf16 %v3303, %v3300
        %3322 = vrot.lane.b32.xlu0 %v3306, 96
        %v3323 = vpop.permute.xlu0 %3322
        %3324 = vrot.lane.b32.xlu0 %v3307, 96
        %v3325 = vpop.permute.xlu0 %3324
        %3326 = vrot.lane.b32.xlu0 %v3308, 96
        %v3327 = vpop.permute.xlu0 %3326
        %3328 = vrot.lane.b32.xlu0 %v3309, 96
        %v3329 = vpop.permute.xlu0 %3328
        %3330 = vrot.lane.b32.xlu0 %v3310, 96
        %v3331 = vpop.permute.xlu0 %3330
        %3332 = vrot.lane.b32.xlu0 %v3311, 96
        %v3333 = vpop.permute.xlu0 %3332
        %3334 = vrot.lane.b32.xlu0 %v3312, 96
        %v3335 = vpop.permute.xlu0 %3334
        %3336 = vrot.lane.b32.xlu0 %v3313, 96
        %v3337 = vpop.permute.xlu0 %3336
        %vm3346 = vcmask 1048320
        %3347 = vst.msk [vmem:[#allocation2] sm:$0xff] %vm3346, %v3323
        %3348 = vst.msk [vmem:[#allocation2 + $0x8] sm:$0xff] %vm3346, %v3325
        %3349 = vst.msk [vmem:[#allocation2 + $0x10] sm:$0xff] %vm3346, %v3327
        %3350 = vst.msk [vmem:[#allocation2 + $0x18] sm:$0xff] %vm3346, %v3329
        %3351 = vst.msk [vmem:[#allocation2 + $0x20] sm:$0xff] %vm3346, %v3331
        %3352 = vst.msk [vmem:[#allocation2 + $0x28] sm:$0xff] %vm3346, %v3333
        %3353 = vst.msk [vmem:[#allocation2 + $0x30] sm:$0xff] %vm3346, %v3335
        %3354 = vst.msk [vmem:[#allocation2 + $0x38] sm:$0xff] %vm3346, %v3337
        %v3355 = vld [vmem:[#allocation2] sm:$0xff]
        %v3356 = vld [vmem:[#allocation2 + $0x8] sm:$0xff]
        %v3357 = vld [vmem:[#allocation2 + $0x10] sm:$0xff]
        %v3358 = vld [vmem:[#allocation2 + $0x18] sm:$0xff]
        %v3359 = vld [vmem:[#allocation2 + $0x20] sm:$0xff]
        %v3360 = vld [vmem:[#allocation2 + $0x28] sm:$0xff]
        %v3361 = vld [vmem:[#allocation2 + $0x30] sm:$0xff]
        %v3362 = vld [vmem:[#allocation2 + $0x38] sm:$0xff]
        %v3363 = vld [vmem:[#allocation9] sm:$0xf]
        %v3364 = vld [vmem:[#allocation9 + $0x4] sm:$0xf]
        %v3365 = vld [vmem:[#allocation9 + $0x8] sm:$0xf]
        %v3366 = vld [vmem:[#allocation9 + $0xc] sm:$0xf]
        %v3367 = vld [vmem:[#allocation9 + $0x10] sm:$0xf]
        %v3368 = vld [vmem:[#allocation9 + $0x14] sm:$0xf]
        %v3369 = vld [vmem:[#allocation9 + $0x18] sm:$0xf]
        %v3370 = vld [vmem:[#allocation9 + $0x1c] sm:$0xf]
        %v3371 = vld [vmem:[#allocation9 + $0x20] sm:$0xf]
        %v3372 = vld [vmem:[#allocation9 + $0x24] sm:$0xf]
        %v3373 = vld [vmem:[#allocation9 + $0x28] sm:$0xf]
        %v3374 = vld [vmem:[#allocation9 + $0x2c] sm:$0xf]
        %v3375 = vld [vmem:[#allocation9 + $0x30] sm:$0xf]
        %v3376 = vld [vmem:[#allocation9 + $0x34] sm:$0xf]
        %v3377 = vld [vmem:[#allocation9 + $0x38] sm:$0xf]
        %v3378 = vld [vmem:[#allocation9 + $0x3c] sm:$0xf]
        %v3379 = vld [vmem:[%s6] sm:$0x1]
        %v3380 = vunpack.c.l.bf16 %v3379
        %v3381 = vlaneseq
        %v3382 = vshrl.u32 %v3381, 7
        %v3383 = vsub.s32 0, %v3382
        %v3384 = vrot.slane %v3380, %v3383
        %v3401 = vunpack.c.l.b16 %v3363
        %v3402 = vunpack.c.l.b16 %v3364
        %v3403 = vunpack.c.l.b16 %v3365
        %v3404 = vunpack.c.l.b16 %v3366
        %v3405 = vunpack.c.l.b16 %v3367
        %v3406 = vunpack.c.l.b16 %v3368
        %v3407 = vunpack.c.l.b16 %v3369
        %v3408 = vunpack.c.l.b16 %v3370
        %v3409 = vunpack.c.l.b16 %v3371
        %v3410 = vunpack.c.l.b16 %v3372
        %v3411 = vunpack.c.l.b16 %v3373
        %v3412 = vunpack.c.l.b16 %v3374
        %v3413 = vunpack.c.l.b16 %v3375
        %v3414 = vunpack.c.l.b16 %v3376
        %v3415 = vunpack.c.l.b16 %v3377
        %v3416 = vunpack.c.l.b16 %v3378
        %v3417 = vpack.c.b16 %v3402, %v3401
        %v3418 = vpack.c.b16 %v3404, %v3403
        %v3419 = vpack.c.b16 %v3406, %v3405
        %v3420 = vpack.c.b16 %v3408, %v3407
        %v3421 = vpack.c.b16 %v3410, %v3409
        %v3422 = vpack.c.b16 %v3412, %v3411
        %v3423 = vpack.c.b16 %v3414, %v3413
        %v3424 = vpack.c.b16 %v3416, %v3415
        %3433 = vmatprep.subr.bf16.mxu0 0
        %3434 = vmatpush1.bf16.msra.mxu0 %v3417
        %3435 = vmatprep.subr.bf16.mxu0 0
        %3436 = vmatpush1.bf16.msra.mxu0 %v3418
        %3437 = vmatprep.subr.bf16.mxu0 0
        %3438 = vmatpush1.bf16.msra.mxu0 %v3419
        %3439 = vmatprep.subr.bf16.mxu0 0
        %3440 = vmatpush1.bf16.msra.mxu0 %v3420
        %3441 = vmatprep.subr.bf16.mxu0 0
        %3442 = vmatpush1.bf16.msra.mxu0 %v3421
        %3443 = vmatprep.subr.bf16.mxu0 0
        %3444 = vmatpush1.bf16.msra.mxu0 %v3422
        %3445 = vmatprep.subr.bf16.mxu0 0
        %3446 = vmatpush1.bf16.msra.mxu0 %v3423
        %3447 = vmatprep.subr.bf16.mxu0 0
        %3448 = vmatpush1.bf16.msra.mxu0 %v3424
        %3449 = vmatprep.subr.bf16.mxu0 0
        %3450 = vmatpush1.bf16.msra.mxu0 0
        %3451 = vmatprep.subr.bf16.mxu0 0
        %3452 = vmatpush1.bf16.msra.mxu0 0
        %3453 = vmatprep.subr.bf16.mxu0 0
        %3454 = vmatpush1.bf16.msra.mxu0 0
        %3455 = vmatprep.subr.bf16.mxu0 0
        %3456 = vmatpush1.bf16.msra.mxu0 0
        %3457 = vmatprep.subr.bf16.mxu0 0
        %3458 = vmatpush1.bf16.msra.mxu0 0
        %3459 = vmatprep.subr.bf16.mxu0 0
        %3460 = vmatpush1.bf16.msra.mxu0 0
        %3461 = vmatprep.subr.bf16.mxu0 0
        %3462 = vmatpush1.bf16.msra.mxu0 0
        %3463 = vmatprep.subr.bf16.mxu0 0
        %3464 = vmatpush1.bf16.msra.mxu0 0
        %3465 = vmatprep.mubr.bf16.mxu0 0
        %3466 = vmatmul.mubr.bf16.gmra.mrb[0].mxu0 %v3355
        %v3467 = vpop.f32.mrb[0].mxu0
        %v3468 = vadd.f32 %v3384, %v3467
        %v3469 = vpop.f32.mrb[0].mxu0
        %v3470 = vpop.f32.mrb[0].mxu0
        %v3471 = vadd.f32 %v3384, %v3470
        %v3472 = vpop.f32.mrb[0].mxu0
        %3473 = vmatprep.mubr.bf16.mxu0 0
        %3474 = vmatmul.mubr.bf16.gmra.mrb[0].mxu0 %v3356
        %v3475 = vpop.f32.mrb[0].mxu0
        %v3476 = vadd.f32 %v3384, %v3475
        %v3477 = vpop.f32.mrb[0].mxu0
        %v3478 = vpop.f32.mrb[0].mxu0
        %v3479 = vadd.f32 %v3384, %v3478
        %v3480 = vpop.f32.mrb[0].mxu0
        %3481 = vmatprep.mubr.bf16.mxu0 0
        %3482 = vmatmul.mubr.bf16.gmra.mrb[0].mxu0 %v3357
        %v3483 = vpop.f32.mrb[0].mxu0
        %v3484 = vadd.f32 %v3384, %v3483
        %v3485 = vpop.f32.mrb[0].mxu0
        %v3486 = vpop.f32.mrb[0].mxu0
        %v3487 = vadd.f32 %v3384, %v3486
        %v3488 = vpop.f32.mrb[0].mxu0
        %3489 = vmatprep.mubr.bf16.mxu0 0
        %3490 = vmatmul.mubr.bf16.gmra.mrb[0].mxu0 %v3358
        %v3491 = vpop.f32.mrb[0].mxu0
        %v3492 = vadd.f32 %v3384, %v3491
        %v3493 = vpop.f32.mrb[0].mxu0
        %v3494 = vpop.f32.mrb[0].mxu0
        %v3495 = vadd.f32 %v3384, %v3494
        %v3496 = vpop.f32.mrb[0].mxu0
        %3497 = vmatprep.mubr.bf16.mxu0 0
        %3498 = vmatmul.mubr.bf16.gmra.mrb[0].mxu0 %v3359
        %v3499 = vpop.f32.mrb[0].mxu0
        %v3500 = vadd.f32 %v3384, %v3499
        %v3501 = vpop.f32.mrb[0].mxu0
        %v3502 = vpop.f32.mrb[0].mxu0
        %v3503 = vadd.f32 %v3384, %v3502
        %v3504 = vpop.f32.mrb[0].mxu0
        %3505 = vmatprep.mubr.bf16.mxu0 0
        %3506 = vmatmul.mubr.bf16.gmra.mrb[0].mxu0 %v3360
        %v3507 = vpop.f32.mrb[0].mxu0
        %v3508 = vadd.f32 %v3384, %v3507
        %v3509 = vpop.f32.mrb[0].mxu0
        %v3510 = vpop.f32.mrb[0].mxu0
        %v3511 = vadd.f32 %v3384, %v3510
        %v3512 = vpop.f32.mrb[0].mxu0
        %3513 = vmatprep.mubr.bf16.mxu0 0
        %3514 = vmatmul.mubr.bf16.gmra.mrb[0].mxu0 %v3361
        %v3515 = vpop.f32.mrb[0].mxu0
        %v3516 = vadd.f32 %v3384, %v3515
        %v3517 = vpop.f32.mrb[0].mxu0
        %v3518 = vpop.f32.mrb[0].mxu0
        %v3519 = vadd.f32 %v3384, %v3518
        %v3520 = vpop.f32.mrb[0].mxu0
        %3521 = vmatprep.mubr.bf16.mxu0 0
        %3522 = vmatmul.mubr.bf16.gmra.mrb[0].mxu0 %v3362
        %v3523 = vpop.f32.mrb[0].mxu0
        %v3524 = vadd.f32 %v3384, %v3523
        %v3525 = vpop.f32.mrb[0].mxu0
        %v3526 = vpop.f32.mrb[0].mxu0
        %v3527 = vadd.f32 %v3384, %v3526
        %v3528 = vpop.f32.mrb[0].mxu0
        %3529 = vdwg.mxu0
        %v3530 = vadd.f32 %v3468, %v921
        %v3531 = vadd.f32 %v3471, %v924
        %v3532 = vadd.f32 %v3476, %v929
        %v3533 = vadd.f32 %v3479, %v932
        %v3534 = vadd.f32 %v3484, %v937
        %v3535 = vadd.f32 %v3487, %v940
        %v3536 = vadd.f32 %v3492, %v945
        %v3537 = vadd.f32 %v3495, %v948
        %v3538 = vadd.f32 %v3500, %v953
        %v3539 = vadd.f32 %v3503, %v956
        %v3540 = vadd.f32 %v3508, %v961
        %v3541 = vadd.f32 %v3511, %v964
        %v3542 = vadd.f32 %v3516, %v969
        %v3543 = vadd.f32 %v3519, %v972
        %v3544 = vadd.f32 %v3524, %v977
        %v3545 = vadd.f32 %v3527, %v980
        %v3546 = vld [vmem:[%s7] sm:$0x1]
        %v3547 = vunpack.c.l.bf16 %v3546
        %v3548 = vld [vmem:[%s8] sm:$0x1]
        %v3549 = vunpack.c.l.bf16 %v3548
        %3550 = vadd.xlane.f32.xlu0 %v3530
        %v3551 = vpop.xlane.xlu0 %3550
        %3552 = vadd.xlane.f32.xlu0 %v3531
        %v3553 = vpop.xlane.xlu0 %3552
        %3554 = vadd.xlane.f32.xlu0 %v3532
        %v3555 = vpop.xlane.xlu0 %3554
        %3556 = vadd.xlane.f32.xlu0 %v3533
        %v3557 = vpop.xlane.xlu0 %3556
        %3558 = vadd.xlane.f32.xlu0 %v3534
        %v3559 = vpop.xlane.xlu0 %3558
        %3560 = vadd.xlane.f32.xlu0 %v3535
        %v3561 = vpop.xlane.xlu0 %3560
        %3562 = vadd.xlane.f32.xlu0 %v3536
        %v3563 = vpop.xlane.xlu0 %3562
        %3564 = vadd.xlane.f32.xlu0 %v3537
        %v3565 = vpop.xlane.xlu0 %3564
        %3566 = vadd.xlane.f32.xlu0 %v3538
        %v3567 = vpop.xlane.xlu0 %3566
        %3568 = vadd.xlane.f32.xlu0 %v3539
        %v3569 = vpop.xlane.xlu0 %3568
        %3570 = vadd.xlane.f32.xlu0 %v3540
        %v3571 = vpop.xlane.xlu0 %3570
        %3572 = vadd.xlane.f32.xlu0 %v3541
        %v3573 = vpop.xlane.xlu0 %3572
        %3574 = vadd.xlane.f32.xlu0 %v3542
        %v3575 = vpop.xlane.xlu0 %3574
        %3576 = vadd.xlane.f32.xlu0 %v3543
        %v3577 = vpop.xlane.xlu0 %3576
        %3578 = vadd.xlane.f32.xlu0 %v3544
        %v3579 = vpop.xlane.xlu0 %3578
        %3580 = vadd.xlane.f32.xlu0 %v3545
        %v3581 = vpop.xlane.xlu0 %3580
        %v3582 = vrcp.pop 128.0
        %v3583 = vmul.f32 %v3551, %v3582
        %v3584 = vmul.f32 %v3553, %v3582
        %v3585 = vmul.f32 %v3555, %v3582
        %v3586 = vmul.f32 %v3557, %v3582
        %v3587 = vmul.f32 %v3559, %v3582
        %v3588 = vmul.f32 %v3561, %v3582
        %v3589 = vmul.f32 %v3563, %v3582
        %v3590 = vmul.f32 %v3565, %v3582
        %v3591 = vmul.f32 %v3567, %v3582
        %v3592 = vmul.f32 %v3569, %v3582
        %v3593 = vmul.f32 %v3571, %v3582
        %v3594 = vmul.f32 %v3573, %v3582
        %v3595 = vmul.f32 %v3575, %v3582
        %v3596 = vmul.f32 %v3577, %v3582
        %v3597 = vmul.f32 %v3579, %v3582
        %v3598 = vmul.f32 %v3581, %v3582
        %v3599 = vsub.f32 %v3530, %v3583
        %v3600 = vsub.f32 %v3531, %v3584
        %v3601 = vsub.f32 %v3532, %v3585
        %v3602 = vsub.f32 %v3533, %v3586
        %v3603 = vsub.f32 %v3534, %v3587
        %v3604 = vsub.f32 %v3535, %v3588
        %v3605 = vsub.f32 %v3536, %v3589
        %v3606 = vsub.f32 %v3537, %v3590
        %v3607 = vsub.f32 %v3538, %v3591
        %v3608 = vsub.f32 %v3539, %v3592
        %v3609 = vsub.f32 %v3540, %v3593
        %v3610 = vsub.f32 %v3541, %v3594
        %v3611 = vsub.f32 %v3542, %v3595
        %v3612 = vsub.f32 %v3543, %v3596
        %v3613 = vsub.f32 %v3544, %v3597
        %v3614 = vsub.f32 %v3545, %v3598
        %v3615 = vmul.f32 %v3599, %v3599
        %v3616 = vmul.f32 %v3600, %v3600
        %v3617 = vmul.f32 %v3601, %v3601
        %v3618 = vmul.f32 %v3602, %v3602
        %v3619 = vmul.f32 %v3603, %v3603
        %v3620 = vmul.f32 %v3604, %v3604
        %v3621 = vmul.f32 %v3605, %v3605
        %v3622 = vmul.f32 %v3606, %v3606
        %v3623 = vmul.f32 %v3607, %v3607
        %v3624 = vmul.f32 %v3608, %v3608
        %v3625 = vmul.f32 %v3609, %v3609
        %v3626 = vmul.f32 %v3610, %v3610
        %v3627 = vmul.f32 %v3611, %v3611
        %v3628 = vmul.f32 %v3612, %v3612
        %v3629 = vmul.f32 %v3613, %v3613
        %v3630 = vmul.f32 %v3614, %v3614
        %3631 = vadd.xlane.f32.xlu0 %v3615
        %v3632 = vpop.xlane.xlu0 %3631
        %3633 = vadd.xlane.f32.xlu0 %v3616
        %v3634 = vpop.xlane.xlu0 %3633
        %3635 = vadd.xlane.f32.xlu0 %v3617
        %v3636 = vpop.xlane.xlu0 %3635
        %3637 = vadd.xlane.f32.xlu0 %v3618
        %v3638 = vpop.xlane.xlu0 %3637
        %3639 = vadd.xlane.f32.xlu0 %v3619
        %v3640 = vpop.xlane.xlu0 %3639
        %3641 = vadd.xlane.f32.xlu0 %v3620
        %v3642 = vpop.xlane.xlu0 %3641
        %3643 = vadd.xlane.f32.xlu0 %v3621
        %v3644 = vpop.xlane.xlu0 %3643
        %3645 = vadd.xlane.f32.xlu0 %v3622
        %v3646 = vpop.xlane.xlu0 %3645
        %3647 = vadd.xlane.f32.xlu0 %v3623
        %v3648 = vpop.xlane.xlu0 %3647
        %3649 = vadd.xlane.f32.xlu0 %v3624
        %v3650 = vpop.xlane.xlu0 %3649
        %3651 = vadd.xlane.f32.xlu0 %v3625
        %v3652 = vpop.xlane.xlu0 %3651
        %3653 = vadd.xlane.f32.xlu0 %v3626
        %v3654 = vpop.xlane.xlu0 %3653
        %3655 = vadd.xlane.f32.xlu0 %v3627
        %v3656 = vpop.xlane.xlu0 %3655
        %3657 = vadd.xlane.f32.xlu0 %v3628
        %v3658 = vpop.xlane.xlu0 %3657
        %3659 = vadd.xlane.f32.xlu0 %v3629
        %v3660 = vpop.xlane.xlu0 %3659
        %3661 = vadd.xlane.f32.xlu0 %v3630
        %v3662 = vpop.xlane.xlu0 %3661
        %v3663 = vmul.f32 %v3632, %v3582
        %v3664 = vmul.f32 %v3634, %v3582
        %v3665 = vmul.f32 %v3636, %v3582
        %v3666 = vmul.f32 %v3638, %v3582
        %v3667 = vmul.f32 %v3640, %v3582
        %v3668 = vmul.f32 %v3642, %v3582
        %v3669 = vmul.f32 %v3644, %v3582
        %v3670 = vmul.f32 %v3646, %v3582
        %v3671 = vmul.f32 %v3648, %v3582
        %v3672 = vmul.f32 %v3650, %v3582
        %v3673 = vmul.f32 %v3652, %v3582
        %v3674 = vmul.f32 %v3654, %v3582
        %v3675 = vmul.f32 %v3656, %v3582
        %v3676 = vmul.f32 %v3658, %v3582
        %v3677 = vmul.f32 %v3660, %v3582
        %v3678 = vmul.f32 %v3662, %v3582
        %v3679 = vadd.f32 %v3663, 1e-12
        %v3680 = vadd.f32 %v3664, 1e-12
        %v3681 = vadd.f32 %v3665, 1e-12
        %v3682 = vadd.f32 %v3666, 1e-12
        %v3683 = vadd.f32 %v3667, 1e-12
        %v3684 = vadd.f32 %v3668, 1e-12
        %v3685 = vadd.f32 %v3669, 1e-12
        %v3686 = vadd.f32 %v3670, 1e-12
        %v3687 = vadd.f32 %v3671, 1e-12
        %v3688 = vadd.f32 %v3672, 1e-12
        %v3689 = vadd.f32 %v3673, 1e-12
        %v3690 = vadd.f32 %v3674, 1e-12
        %v3691 = vadd.f32 %v3675, 1e-12
        %v3692 = vadd.f32 %v3676, 1e-12
        %v3693 = vadd.f32 %v3677, 1e-12
        %v3694 = vadd.f32 %v3678, 1e-12
        %v3695 = vrsqrt.pop %v3679
        %v3696 = vrsqrt.pop %v3680
        %v3697 = vrsqrt.pop %v3681
        %v3698 = vrsqrt.pop %v3682
        %v3699 = vrsqrt.pop %v3683
        %v3700 = vrsqrt.pop %v3684
        %v3701 = vrsqrt.pop %v3685
        %v3702 = vrsqrt.pop %v3686
        %v3703 = vrsqrt.pop %v3687
        %v3704 = vrsqrt.pop %v3688
        %v3705 = vrsqrt.pop %v3689
        %v3706 = vrsqrt.pop %v3690
        %v3707 = vrsqrt.pop %v3691
        %v3708 = vrsqrt.pop %v3692
        %v3709 = vrsqrt.pop %v3693
        %v3710 = vrsqrt.pop %v3694
        %v3711 = vmul.f32 %v3599, %v3695
        %v3712 = vmul.f32 %v3600, %v3696
        %v3713 = vmul.f32 %v3601, %v3697
        %v3714 = vmul.f32 %v3602, %v3698
        %v3715 = vmul.f32 %v3603, %v3699
        %v3716 = vmul.f32 %v3604, %v3700
        %v3717 = vmul.f32 %v3605, %v3701
        %v3718 = vmul.f32 %v3606, %v3702
        %v3719 = vmul.f32 %v3607, %v3703
        %v3720 = vmul.f32 %v3608, %v3704
        %v3721 = vmul.f32 %v3609, %v3705
        %v3722 = vmul.f32 %v3610, %v3706
        %v3723 = vmul.f32 %v3611, %v3707
        %v3724 = vmul.f32 %v3612, %v3708
        %v3725 = vmul.f32 %v3613, %v3709
        %v3726 = vmul.f32 %v3614, %v3710
        %v3727 = vlaneseq
        %v3728 = vshrl.u32 %v3727, 7
        %v3729 = vsub.s32 0, %v3728
        %v3730 = vrot.slane %v3547, %v3729
        %v3731 = vmul.f32 %v3711, %v3730
        %v3732 = vmul.f32 %v3712, %v3730
        %v3733 = vmul.f32 %v3713, %v3730
        %v3734 = vmul.f32 %v3714, %v3730
        %v3735 = vmul.f32 %v3715, %v3730
        %v3736 = vmul.f32 %v3716, %v3730
        %v3737 = vmul.f32 %v3717, %v3730
        %v3738 = vmul.f32 %v3718, %v3730
        %v3739 = vmul.f32 %v3719, %v3730
        %v3740 = vmul.f32 %v3720, %v3730
        %v3741 = vmul.f32 %v3721, %v3730
        %v3742 = vmul.f32 %v3722, %v3730
        %v3743 = vmul.f32 %v3723, %v3730
        %v3744 = vmul.f32 %v3724, %v3730
        %v3745 = vmul.f32 %v3725, %v3730
        %v3746 = vmul.f32 %v3726, %v3730
        %v3747 = vlaneseq
        %v3748 = vshrl.u32 %v3747, 7
        %v3749 = vsub.s32 0, %v3748
        %v3750 = vrot.slane %v3549, %v3749
        %v3751 = vadd.f32 %v3731, %v3750
        %v3752 = vadd.f32 %v3732, %v3750
        %v3753 = vadd.f32 %v3733, %v3750
        %v3754 = vadd.f32 %v3734, %v3750
        %v3755 = vadd.f32 %v3735, %v3750
        %v3756 = vadd.f32 %v3736, %v3750
        %v3757 = vadd.f32 %v3737, %v3750
        %v3758 = vadd.f32 %v3738, %v3750
        %v3759 = vadd.f32 %v3739, %v3750
        %v3760 = vadd.f32 %v3740, %v3750
        %v3761 = vadd.f32 %v3741, %v3750
        %v3762 = vadd.f32 %v3742, %v3750
        %v3763 = vadd.f32 %v3743, %v3750
        %v3764 = vadd.f32 %v3744, %v3750
        %v3765 = vadd.f32 %v3745, %v3750
        %v3766 = vadd.f32 %v3746, %v3750
        %v3767 = vpack.c.bf16 %v3752, %v3751
        %v3768 = vpack.c.bf16 %v3754, %v3753
        %v3769 = vpack.c.bf16 %v3756, %v3755
        %v3770 = vpack.c.bf16 %v3758, %v3757
        %v3771 = vpack.c.bf16 %v3760, %v3759
        %v3772 = vpack.c.bf16 %v3762, %v3761
        %v3773 = vpack.c.bf16 %v3764, %v3763
        %v3774 = vpack.c.bf16 %v3766, %v3765
        %v3775 = vld [vmem:[#allocation11] sm:$0xff]
        %v3776 = vld [vmem:[#allocation11 + $0x8] sm:$0xff]
        %v3777 = vld [vmem:[#allocation11 + $0x10] sm:$0xff]
        %v3778 = vld [vmem:[#allocation11 + $0x18] sm:$0xff]
        %v3779 = vld [vmem:[#allocation11 + $0x20] sm:$0xff]
        %v3780 = vld [vmem:[#allocation11 + $0x28] sm:$0xff]
        %v3781 = vld [vmem:[#allocation11 + $0x30] sm:$0xff]
        %v3782 = vld [vmem:[#allocation11 + $0x38] sm:$0xff]
        %v3783 = vld [vmem:[#allocation11 + $0x40] sm:$0xff]
        %v3784 = vld [vmem:[#allocation11 + $0x48] sm:$0xff]
        %v3785 = vld [vmem:[#allocation11 + $0x50] sm:$0xff]
        %v3786 = vld [vmem:[#allocation11 + $0x58] sm:$0xff]
        %v3787 = vld [vmem:[#allocation11 + $0x60] sm:$0xff]
        %v3788 = vld [vmem:[#allocation11 + $0x68] sm:$0xff]
        %v3789 = vld [vmem:[#allocation11 + $0x70] sm:$0xff]
        %v3790 = vld [vmem:[#allocation11 + $0x78] sm:$0xff]
        %v3791 = vld [vmem:[#allocation11 + $0x80] sm:$0xff]
        %v3792 = vld [vmem:[#allocation11 + $0x88] sm:$0xff]
        %v3793 = vld [vmem:[#allocation11 + $0x90] sm:$0xff]
        %v3794 = vld [vmem:[#allocation11 + $0x98] sm:$0xff]
        %v3795 = vld [vmem:[#allocation11 + $0xa0] sm:$0xff]
        %v3796 = vld [vmem:[#allocation11 + $0xa8] sm:$0xff]
        %v3797 = vld [vmem:[#allocation11 + $0xb0] sm:$0xff]
        %v3798 = vld [vmem:[#allocation11 + $0xb8] sm:$0xff]
        %v3799 = vld [vmem:[#allocation11 + $0xc0] sm:$0xff]
        %v3800 = vld [vmem:[#allocation11 + $0xc8] sm:$0xff]
        %v3801 = vld [vmem:[#allocation11 + $0xd0] sm:$0xff]
        %v3802 = vld [vmem:[#allocation11 + $0xd8] sm:$0xff]
        %v3803 = vld [vmem:[#allocation11 + $0xe0] sm:$0xff]
        %v3804 = vld [vmem:[#allocation11 + $0xe8] sm:$0xff]
        %v3805 = vld [vmem:[#allocation11 + $0xf0] sm:$0xff]
        %v3806 = vld [vmem:[#allocation11 + $0xf8] sm:$0xff]
        %v3807 = vld [vmem:[%s10] sm:$0xf]
        %v3808 = vunpack.c.l.bf16 %v3807
        %v3810 = vlaneseq
        %v3811 = vshrl.u32 %v3810, 7
        %v3812 = vsub.s32 0, %v3811
        %v3813 = vrot.slane %v3808, %v3812
        %v3814 = vlaneseq
        %v3815 = vshrl.u32 %v3814, 7
        %v3816 = vsub.s32 2, %v3815
        %v3817 = vrot.slane %v3808, %v3816
        %v3818 = vlaneseq
        %v3819 = vshrl.u32 %v3818, 7
        %v3820 = vsub.s32 4, %v3819
        %v3821 = vrot.slane %v3808, %v3820
        %v3822 = vlaneseq
        %v3823 = vshrl.u32 %v3822, 7
        %v3824 = vsub.s32 6, %v3823
        %v3825 = vrot.slane %v3808, %v3824
        %v3830 = vlaneseq
        %v3831 = vshrl.u32 %v3830, 7
        %v3832 = vsub.s32 0, %v3831
        %v3833 = vrot.slane %v3813, %v3832
        %v3834 = vlaneseq
        %v3835 = vshrl.u32 %v3834, 7
        %v3836 = vsub.s32 0, %v3835
        %v3837 = vrot.slane %v3817, %v3836
        %v3838 = vlaneseq
        %v3839 = vshrl.u32 %v3838, 7
        %v3840 = vsub.s32 0, %v3839
        %v3841 = vrot.slane %v3821, %v3840
        %v3842 = vlaneseq
        %v3843 = vshrl.u32 %v3842, 7
        %v3844 = vsub.s32 0, %v3843
        %v3845 = vrot.slane %v3825, %v3844
        %v3878 = vunpack.c.l.b16 %v3775
        %v3879 = vunpack.c.h.b16 %v3775
        %v3880 = vunpack.c.l.b16 %v3776
        %v3881 = vunpack.c.h.b16 %v3776
        %v3882 = vunpack.c.l.b16 %v3777
        %v3883 = vunpack.c.h.b16 %v3777
        %v3884 = vunpack.c.l.b16 %v3778
        %v3885 = vunpack.c.h.b16 %v3778
        %v3886 = vunpack.c.l.b16 %v3779
        %v3887 = vunpack.c.h.b16 %v3779
        %v3888 = vunpack.c.l.b16 %v3780
        %v3889 = vunpack.c.h.b16 %v3780
        %v3890 = vunpack.c.l.b16 %v3781
        %v3891 = vunpack.c.h.b16 %v3781
        %v3892 = vunpack.c.l.b16 %v3782
        %v3893 = vunpack.c.h.b16 %v3782
        %v3894 = vunpack.c.l.b16 %v3783
        %v3895 = vunpack.c.h.b16 %v3783
        %v3896 = vunpack.c.l.b16 %v3784
        %v3897 = vunpack.c.h.b16 %v3784
        %v3898 = vunpack.c.l.b16 %v3785
        %v3899 = vunpack.c.h.b16 %v3785
        %v3900 = vunpack.c.l.b16 %v3786
        %v3901 = vunpack.c.h.b16 %v3786
        %v3902 = vunpack.c.l.b16 %v3787
        %v3903 = vunpack.c.h.b16 %v3787
        %v3904 = vunpack.c.l.b16 %v3788
        %v3905 = vunpack.c.h.b16 %v3788
        %v3906 = vunpack.c.l.b16 %v3789
        %v3907 = vunpack.c.h.b16 %v3789
        %v3908 = vunpack.c.l.b16 %v3790
        %v3909 = vunpack.c.h.b16 %v3790
        %v3910 = vunpack.c.l.b16 %v3791
        %v3911 = vunpack.c.h.b16 %v3791
        %v3912 = vunpack.c.l.b16 %v3792
        %v3913 = vunpack.c.h.b16 %v3792
        %v3914 = vunpack.c.l.b16 %v3793
        %v3915 = vunpack.c.h.b16 %v3793
        %v3916 = vunpack.c.l.b16 %v3794
        %v3917 = vunpack.c.h.b16 %v3794
        %v3918 = vunpack.c.l.b16 %v3795
        %v3919 = vunpack.c.h.b16 %v3795
        %v3920 = vunpack.c.l.b16 %v3796
        %v3921 = vunpack.c.h.b16 %v3796
        %v3922 = vunpack.c.l.b16 %v3797
        %v3923 = vunpack.c.h.b16 %v3797
        %v3924 = vunpack.c.l.b16 %v3798
        %v3925 = vunpack.c.h.b16 %v3798
        %v3926 = vunpack.c.l.b16 %v3799
        %v3927 = vunpack.c.h.b16 %v3799
        %v3928 = vunpack.c.l.b16 %v3800
        %v3929 = vunpack.c.h.b16 %v3800
        %v3930 = vunpack.c.l.b16 %v3801
        %v3931 = vunpack.c.h.b16 %v3801
        %v3932 = vunpack.c.l.b16 %v3802
        %v3933 = vunpack.c.h.b16 %v3802
        %v3934 = vunpack.c.l.b16 %v3803
        %v3935 = vunpack.c.h.b16 %v3803
        %v3936 = vunpack.c.l.b16 %v3804
        %v3937 = vunpack.c.h.b16 %v3804
        %v3938 = vunpack.c.l.b16 %v3805
        %v3939 = vunpack.c.h.b16 %v3805
        %v3940 = vunpack.c.l.b16 %v3806
        %v3941 = vunpack.c.h.b16 %v3806
        %v3942 = vpack.c.b16 %v3882, %v3878
        %v3943 = vpack.c.b16 %v3883, %v3879
        %v3944 = vpack.c.b16 %v3884, %v3880
        %v3945 = vpack.c.b16 %v3885, %v3881
        %v3946 = vpack.c.b16 %v3890, %v3886
        %v3947 = vpack.c.b16 %v3891, %v3887
        %v3948 = vpack.c.b16 %v3892, %v3888
        %v3949 = vpack.c.b16 %v3893, %v3889
        %v3950 = vpack.c.b16 %v3898, %v3894
        %v3951 = vpack.c.b16 %v3899, %v3895
        %v3952 = vpack.c.b16 %v3900, %v3896
        %v3953 = vpack.c.b16 %v3901, %v3897
        %v3954 = vpack.c.b16 %v3906, %v3902
        %v3955 = vpack.c.b16 %v3907, %v3903
        %v3956 = vpack.c.b16 %v3908, %v3904
        %v3957 = vpack.c.b16 %v3909, %v3905
        %v3958 = vpack.c.b16 %v3914, %v3910
        %v3959 = vpack.c.b16 %v3915, %v3911
        %v3960 = vpack.c.b16 %v3916, %v3912
        %v3961 = vpack.c.b16 %v3917, %v3913
        %v3962 = vpack.c.b16 %v3922, %v3918
        %v3963 = vpack.c.b16 %v3923, %v3919
        %v3964 = vpack.c.b16 %v3924, %v3920
        %v3965 = vpack.c.b16 %v3925, %v3921
        %v3966 = vpack.c.b16 %v3930, %v3926
        %v3967 = vpack.c.b16 %v3931, %v3927
        %v3968 = vpack.c.b16 %v3932, %v3928
        %v3969 = vpack.c.b16 %v3933, %v3929
        %v3970 = vpack.c.b16 %v3938, %v3934
        %v3971 = vpack.c.b16 %v3939, %v3935
        %v3972 = vpack.c.b16 %v3940, %v3936
        %v3973 = vpack.c.b16 %v3941, %v3937
        %4006 = vmatprep.subr.bf16.mxu0 %v3943
        %4007 = vmatpush1.bf16.msra.mxu0 %v3942
        %4008 = vmatprep.subr.bf16.mxu0 %v3947
        %4009 = vmatpush1.bf16.msra.mxu0 %v3946
        %4010 = vmatprep.subr.bf16.mxu0 %v3951
        %4011 = vmatpush1.bf16.msra.mxu0 %v3950
        %4012 = vmatprep.subr.bf16.mxu0 %v3955
        %4013 = vmatpush1.bf16.msra.mxu0 %v3954
        %4014 = vmatprep.subr.bf16.mxu0 %v3959
        %4015 = vmatpush1.bf16.msra.mxu0 %v3958
        %4016 = vmatprep.subr.bf16.mxu0 %v3963
        %4017 = vmatpush1.bf16.msra.mxu0 %v3962
        %4018 = vmatprep.subr.bf16.mxu0 %v3967
        %4019 = vmatpush1.bf16.msra.mxu0 %v3966
        %4020 = vmatprep.subr.bf16.mxu0 %v3971
        %4021 = vmatpush1.bf16.msra.mxu0 %v3970
        %4022 = vmatprep.subr.bf16.mxu0 0
        %4023 = vmatpush1.bf16.msra.mxu0 0
        %4024 = vmatprep.subr.bf16.mxu0 0
        %4025 = vmatpush1.bf16.msra.mxu0 0
        %4026 = vmatprep.subr.bf16.mxu0 0
        %4027 = vmatpush1.bf16.msra.mxu0 0
        %4028 = vmatprep.subr.bf16.mxu0 0
        %4029 = vmatpush1.bf16.msra.mxu0 0
        %4030 = vmatprep.subr.bf16.mxu0 0
        %4031 = vmatpush1.bf16.msra.mxu0 0
        %4032 = vmatprep.subr.bf16.mxu0 0
        %4033 = vmatpush1.bf16.msra.mxu0 0
        %4034 = vmatprep.subr.bf16.mxu0 0
        %4035 = vmatpush1.bf16.msra.mxu0 0
        %4036 = vmatprep.subr.bf16.mxu0 0
        %4037 = vmatpush1.bf16.msra.mxu0 0
        %4038 = vmatprep.mubr.bf16.mxu0 0
        %4039 = vmatmul.mubr.bf16.gmra.mrb[0].mxu0 %v3767
        %v4040 = vpop.f32.mrb[0].mxu0
        %v4041 = vadd.f32 %v3833, %v4040
        %v4042 = vpop.f32.mrb[0].mxu0
        %v4043 = vadd.f32 %v3837, %v4042
        %v4044 = vpop.f32.mrb[0].mxu0
        %v4045 = vadd.f32 %v3833, %v4044
        %v4046 = vpop.f32.mrb[0].mxu0
        %v4047 = vadd.f32 %v3837, %v4046
        %4048 = vmatprep.mubr.bf16.mxu0 0
        %4049 = vmatmul.mubr.bf16.gmra.mrb[0].mxu0 %v3768
        %v4050 = vpop.f32.mrb[0].mxu0
        %v4051 = vadd.f32 %v3833, %v4050
        %v4052 = vpop.f32.mrb[0].mxu0
        %v4053 = vadd.f32 %v3837, %v4052
        %v4054 = vpop.f32.mrb[0].mxu0
        %v4055 = vadd.f32 %v3833, %v4054
        %v4056 = vpop.f32.mrb[0].mxu0
        %v4057 = vadd.f32 %v3837, %v4056
        %4058 = vmatprep.mubr.bf16.mxu0 0
        %4059 = vmatmul.mubr.bf16.gmra.mrb[0].mxu0 %v3769
        %v4060 = vpop.f32.mrb[0].mxu0
        %v4061 = vadd.f32 %v3833, %v4060
        %v4062 = vpop.f32.mrb[0].mxu0
        %v4063 = vadd.f32 %v3837, %v4062
        %v4064 = vpop.f32.mrb[0].mxu0
        %v4065 = vadd.f32 %v3833, %v4064
        %v4066 = vpop.f32.mrb[0].mxu0
        %v4067 = vadd.f32 %v3837, %v4066
        %4068 = vmatprep.mubr.bf16.mxu0 0
        %4069 = vmatmul.mubr.bf16.gmra.mrb[0].mxu0 %v3770
        %v4070 = vpop.f32.mrb[0].mxu0
        %v4071 = vadd.f32 %v3833, %v4070
        %v4072 = vpop.f32.mrb[0].mxu0
        %v4073 = vadd.f32 %v3837, %v4072
        %v4074 = vpop.f32.mrb[0].mxu0
        %v4075 = vadd.f32 %v3833, %v4074
        %v4076 = vpop.f32.mrb[0].mxu0
        %v4077 = vadd.f32 %v3837, %v4076
        %4078 = vmatprep.mubr.bf16.mxu0 0
        %4079 = vmatmul.mubr.bf16.gmra.mrb[0].mxu0 %v3771
        %v4080 = vpop.f32.mrb[0].mxu0
        %v4081 = vadd.f32 %v3833, %v4080
        %v4082 = vpop.f32.mrb[0].mxu0
        %v4083 = vadd.f32 %v3837, %v4082
        %v4084 = vpop.f32.mrb[0].mxu0
        %v4085 = vadd.f32 %v3833, %v4084
        %v4086 = vpop.f32.mrb[0].mxu0
        %v4087 = vadd.f32 %v3837, %v4086
        %4088 = vmatprep.mubr.bf16.mxu0 0
        %4089 = vmatmul.mubr.bf16.gmra.mrb[0].mxu0 %v3772
        %v4090 = vpop.f32.mrb[0].mxu0
        %v4091 = vadd.f32 %v3833, %v4090
        %v4092 = vpop.f32.mrb[0].mxu0
        %v4093 = vadd.f32 %v3837, %v4092
        %v4094 = vpop.f32.mrb[0].mxu0
        %v4095 = vadd.f32 %v3833, %v4094
        %v4096 = vpop.f32.mrb[0].mxu0
        %v4097 = vadd.f32 %v3837, %v4096
        %4098 = vmatprep.mubr.bf16.mxu0 0
        %4099 = vmatmul.mubr.bf16.gmra.mrb[0].mxu0 %v3773
        %v4100 = vpop.f32.mrb[0].mxu0
        %v4101 = vadd.f32 %v3833, %v4100
        %v4102 = vpop.f32.mrb[0].mxu0
        %v4103 = vadd.f32 %v3837, %v4102
        %v4104 = vpop.f32.mrb[0].mxu0
        %v4105 = vadd.f32 %v3833, %v4104
        %v4106 = vpop.f32.mrb[0].mxu0
        %v4107 = vadd.f32 %v3837, %v4106
        %4108 = vmatprep.mubr.bf16.mxu0 0
        %4109 = vmatmul.mubr.bf16.gmra.mrb[0].mxu0 %v3774
        %v4110 = vpop.f32.mrb[0].mxu0
        %v4111 = vadd.f32 %v3833, %v4110
        %v4112 = vpop.f32.mrb[0].mxu0
        %v4113 = vadd.f32 %v3837, %v4112
        %v4114 = vpop.f32.mrb[0].mxu0
        %v4115 = vadd.f32 %v3833, %v4114
        %v4116 = vpop.f32.mrb[0].mxu0
        %v4117 = vadd.f32 %v3837, %v4116
        %4118 = vdwg.mxu0
        %4119 = vmatprep.subr.bf16.mxu0 %v3945
        %4120 = vmatpush1.bf16.msra.mxu0 %v3944
        %4121 = vmatprep.subr.bf16.mxu0 %v3949
        %4122 = vmatpush1.bf16.msra.mxu0 %v3948
        %4123 = vmatprep.subr.bf16.mxu0 %v3953
        %4124 = vmatpush1.bf16.msra.mxu0 %v3952
        %4125 = vmatprep.subr.bf16.mxu0 %v3957
        %4126 = vmatpush1.bf16.msra.mxu0 %v3956
        %4127 = vmatprep.subr.bf16.mxu0 %v3961
        %4128 = vmatpush1.bf16.msra.mxu0 %v3960
        %4129 = vmatprep.subr.bf16.mxu0 %v3965
        %4130 = vmatpush1.bf16.msra.mxu0 %v3964
        %4131 = vmatprep.subr.bf16.mxu0 %v3969
        %4132 = vmatpush1.bf16.msra.mxu0 %v3968
        %4133 = vmatprep.subr.bf16.mxu0 %v3973
        %4134 = vmatpush1.bf16.msra.mxu0 %v3972
        %4135 = vmatprep.subr.bf16.mxu0 0
        %4136 = vmatpush1.bf16.msra.mxu0 0
        %4137 = vmatprep.subr.bf16.mxu0 0
        %4138 = vmatpush1.bf16.msra.mxu0 0
        %4139 = vmatprep.subr.bf16.mxu0 0
        %4140 = vmatpush1.bf16.msra.mxu0 0
        %4141 = vmatprep.subr.bf16.mxu0 0
        %4142 = vmatpush1.bf16.msra.mxu0 0
        %4143 = vmatprep.subr.bf16.mxu0 0
        %4144 = vmatpush1.bf16.msra.mxu0 0
        %4145 = vmatprep.subr.bf16.mxu0 0
        %4146 = vmatpush1.bf16.msra.mxu0 0
        %4147 = vmatprep.subr.bf16.mxu0 0
        %4148 = vmatpush1.bf16.msra.mxu0 0
        %4149 = vmatprep.subr.bf16.mxu0 0
        %4150 = vmatpush1.bf16.msra.mxu0 0
        %4151 = vmatprep.mubr.bf16.mxu0 0
        %4152 = vmatmul.mubr.bf16.gmra.mrb[0].mxu0 %v3767
        %v4153 = vpop.f32.mrb[0].mxu0
        %v4154 = vadd.f32 %v3841, %v4153
        %v4155 = vpop.f32.mrb[0].mxu0
        %v4156 = vadd.f32 %v3845, %v4155
        %v4157 = vpop.f32.mrb[0].mxu0
        %v4158 = vadd.f32 %v3841, %v4157
        %v4159 = vpop.f32.mrb[0].mxu0
        %v4160 = vadd.f32 %v3845, %v4159
        %4161 = vmatprep.mubr.bf16.mxu0 0
        %4162 = vmatmul.mubr.bf16.gmra.mrb[0].mxu0 %v3768
        %v4163 = vpop.f32.mrb[0].mxu0
        %v4164 = vadd.f32 %v3841, %v4163
        %v4165 = vpop.f32.mrb[0].mxu0
        %v4166 = vadd.f32 %v3845, %v4165
        %v4167 = vpop.f32.mrb[0].mxu0
        %v4168 = vadd.f32 %v3841, %v4167
        %v4169 = vpop.f32.mrb[0].mxu0
        %v4170 = vadd.f32 %v3845, %v4169
        %4171 = vmatprep.mubr.bf16.mxu0 0
        %4172 = vmatmul.mubr.bf16.gmra.mrb[0].mxu0 %v3769
        %v4173 = vpop.f32.mrb[0].mxu0
        %v4174 = vadd.f32 %v3841, %v4173
        %v4175 = vpop.f32.mrb[0].mxu0
        %v4176 = vadd.f32 %v3845, %v4175
        %v4177 = vpop.f32.mrb[0].mxu0
        %v4178 = vadd.f32 %v3841, %v4177
        %v4179 = vpop.f32.mrb[0].mxu0
        %v4180 = vadd.f32 %v3845, %v4179
        %4181 = vmatprep.mubr.bf16.mxu0 0
        %4182 = vmatmul.mubr.bf16.gmra.mrb[0].mxu0 %v3770
        %v4183 = vpop.f32.mrb[0].mxu0
        %v4184 = vadd.f32 %v3841, %v4183
        %v4185 = vpop.f32.mrb[0].mxu0
        %v4186 = vadd.f32 %v3845, %v4185
        %v4187 = vpop.f32.mrb[0].mxu0
        %v4188 = vadd.f32 %v3841, %v4187
        %v4189 = vpop.f32.mrb[0].mxu0
        %v4190 = vadd.f32 %v3845, %v4189
        %4191 = vmatprep.mubr.bf16.mxu0 0
        %4192 = vmatmul.mubr.bf16.gmra.mrb[0].mxu0 %v3771
        %v4193 = vpop.f32.mrb[0].mxu0
        %v4194 = vadd.f32 %v3841, %v4193
        %v4195 = vpop.f32.mrb[0].mxu0
        %v4196 = vadd.f32 %v3845, %v4195
        %v4197 = vpop.f32.mrb[0].mxu0
        %v4198 = vadd.f32 %v3841, %v4197
        %v4199 = vpop.f32.mrb[0].mxu0
        %v4200 = vadd.f32 %v3845, %v4199
        %4201 = vmatprep.mubr.bf16.mxu0 0
        %4202 = vmatmul.mubr.bf16.gmra.mrb[0].mxu0 %v3772
        %v4203 = vpop.f32.mrb[0].mxu0
        %v4204 = vadd.f32 %v3841, %v4203
        %v4205 = vpop.f32.mrb[0].mxu0
        %v4206 = vadd.f32 %v3845, %v4205
        %v4207 = vpop.f32.mrb[0].mxu0
        %v4208 = vadd.f32 %v3841, %v4207
        %v4209 = vpop.f32.mrb[0].mxu0
        %v4210 = vadd.f32 %v3845, %v4209
        %4211 = vmatprep.mubr.bf16.mxu0 0
        %4212 = vmatmul.mubr.bf16.gmra.mrb[0].mxu0 %v3773
        %v4213 = vpop.f32.mrb[0].mxu0
        %v4214 = vadd.f32 %v3841, %v4213
        %v4215 = vpop.f32.mrb[0].mxu0
        %v4216 = vadd.f32 %v3845, %v4215
        %v4217 = vpop.f32.mrb[0].mxu0
        %v4218 = vadd.f32 %v3841, %v4217
        %v4219 = vpop.f32.mrb[0].mxu0
        %v4220 = vadd.f32 %v3845, %v4219
        %4221 = vmatprep.mubr.bf16.mxu0 0
        %4222 = vmatmul.mubr.bf16.gmra.mrb[0].mxu0 %v3774
        %v4223 = vpop.f32.mrb[0].mxu0
        %v4224 = vadd.f32 %v3841, %v4223
        %v4225 = vpop.f32.mrb[0].mxu0
        %v4226 = vadd.f32 %v3845, %v4225
        %v4227 = vpop.f32.mrb[0].mxu0
        %v4228 = vadd.f32 %v3841, %v4227
        %v4229 = vpop.f32.mrb[0].mxu0
        %v4230 = vadd.f32 %v3845, %v4229
        %4231 = vdwg.mxu0
        %v4232 = vmul.f32 %v4041, 0.5
        %v4233 = vmul.f32 %v4043, 0.5
        %v4234 = vmul.f32 %v4154, 0.5
        %v4235 = vmul.f32 %v4156, 0.5
        %v4236 = vmul.f32 %v4045, 0.5
        %v4237 = vmul.f32 %v4047, 0.5
        %v4238 = vmul.f32 %v4158, 0.5
        %v4239 = vmul.f32 %v4160, 0.5
        %v4240 = vmul.f32 %v4051, 0.5
        %v4241 = vmul.f32 %v4053, 0.5
        %v4242 = vmul.f32 %v4164, 0.5
        %v4243 = vmul.f32 %v4166, 0.5
        %v4244 = vmul.f32 %v4055, 0.5
        %v4245 = vmul.f32 %v4057, 0.5
        %v4246 = vmul.f32 %v4168, 0.5
        %v4247 = vmul.f32 %v4170, 0.5
        %v4248 = vmul.f32 %v4061, 0.5
        %v4249 = vmul.f32 %v4063, 0.5
        %v4250 = vmul.f32 %v4174, 0.5
        %v4251 = vmul.f32 %v4176, 0.5
        %v4252 = vmul.f32 %v4065, 0.5
        %v4253 = vmul.f32 %v4067, 0.5
        %v4254 = vmul.f32 %v4178, 0.5
        %v4255 = vmul.f32 %v4180, 0.5
        %v4256 = vmul.f32 %v4071, 0.5
        %v4257 = vmul.f32 %v4073, 0.5
        %v4258 = vmul.f32 %v4184, 0.5
        %v4259 = vmul.f32 %v4186, 0.5
        %v4260 = vmul.f32 %v4075, 0.5
        %v4261 = vmul.f32 %v4077, 0.5
        %v4262 = vmul.f32 %v4188, 0.5
        %v4263 = vmul.f32 %v4190, 0.5
        %v4264 = vmul.f32 %v4081, 0.5
        %v4265 = vmul.f32 %v4083, 0.5
        %v4266 = vmul.f32 %v4194, 0.5
        %v4267 = vmul.f32 %v4196, 0.5
        %v4268 = vmul.f32 %v4085, 0.5
        %v4269 = vmul.f32 %v4087, 0.5
        %v4270 = vmul.f32 %v4198, 0.5
        %v4271 = vmul.f32 %v4200, 0.5
        %v4272 = vmul.f32 %v4091, 0.5
        %v4273 = vmul.f32 %v4093, 0.5
        %v4274 = vmul.f32 %v4204, 0.5
        %v4275 = vmul.f32 %v4206, 0.5
        %v4276 = vmul.f32 %v4095, 0.5
        %v4277 = vmul.f32 %v4097, 0.5
        %v4278 = vmul.f32 %v4208, 0.5
        %v4279 = vmul.f32 %v4210, 0.5
        %v4280 = vmul.f32 %v4101, 0.5
        %v4281 = vmul.f32 %v4103, 0.5
        %v4282 = vmul.f32 %v4214, 0.5
        %v4283 = vmul.f32 %v4216, 0.5
        %v4284 = vmul.f32 %v4105, 0.5
        %v4285 = vmul.f32 %v4107, 0.5
        %v4286 = vmul.f32 %v4218, 0.5
        %v4287 = vmul.f32 %v4220, 0.5
        %v4288 = vmul.f32 %v4111, 0.5
        %v4289 = vmul.f32 %v4113, 0.5
        %v4290 = vmul.f32 %v4224, 0.5
        %v4291 = vmul.f32 %v4226, 0.5
        %v4292 = vmul.f32 %v4115, 0.5
        %v4293 = vmul.f32 %v4117, 0.5
        %v4294 = vmul.f32 %v4228, 0.5
        %v4295 = vmul.f32 %v4230, 0.5
        %v4296 = vmul.f32 %v4041, 0.044715
        %v4297 = vmul.f32 %v4043, 0.044715
        %v4298 = vmul.f32 %v4154, 0.044715
        %v4299 = vmul.f32 %v4156, 0.044715
        %v4300 = vmul.f32 %v4045, 0.044715
        %v4301 = vmul.f32 %v4047, 0.044715
        %v4302 = vmul.f32 %v4158, 0.044715
        %v4303 = vmul.f32 %v4160, 0.044715
        %v4304 = vmul.f32 %v4051, 0.044715
        %v4305 = vmul.f32 %v4053, 0.044715
        %v4306 = vmul.f32 %v4164, 0.044715
        %v4307 = vmul.f32 %v4166, 0.044715
        %v4308 = vmul.f32 %v4055, 0.044715
        %v4309 = vmul.f32 %v4057, 0.044715
        %v4310 = vmul.f32 %v4168, 0.044715
        %v4311 = vmul.f32 %v4170, 0.044715
        %v4312 = vmul.f32 %v4061, 0.044715
        %v4313 = vmul.f32 %v4063, 0.044715
        %v4314 = vmul.f32 %v4174, 0.044715
        %v4315 = vmul.f32 %v4176, 0.044715
        %v4316 = vmul.f32 %v4065, 0.044715
        %v4317 = vmul.f32 %v4067, 0.044715
        %v4318 = vmul.f32 %v4178, 0.044715
        %v4319 = vmul.f32 %v4180, 0.044715
        %v4320 = vmul.f32 %v4071, 0.044715
        %v4321 = vmul.f32 %v4073, 0.044715
        %v4322 = vmul.f32 %v4184, 0.044715
        %v4323 = vmul.f32 %v4186, 0.044715
        %v4324 = vmul.f32 %v4075, 0.044715
        %v4325 = vmul.f32 %v4077, 0.044715
        %v4326 = vmul.f32 %v4188, 0.044715
        %v4327 = vmul.f32 %v4190, 0.044715
        %v4328 = vmul.f32 %v4081, 0.044715
        %v4329 = vmul.f32 %v4083, 0.044715
        %v4330 = vmul.f32 %v4194, 0.044715
        %v4331 = vmul.f32 %v4196, 0.044715
        %v4332 = vmul.f32 %v4085, 0.044715
        %v4333 = vmul.f32 %v4087, 0.044715
        %v4334 = vmul.f32 %v4198, 0.044715
        %v4335 = vmul.f32 %v4200, 0.044715
        %v4336 = vmul.f32 %v4091, 0.044715
        %v4337 = vmul.f32 %v4093, 0.044715
        %v4338 = vmul.f32 %v4204, 0.044715
        %v4339 = vmul.f32 %v4206, 0.044715
        %v4340 = vmul.f32 %v4095, 0.044715
        %v4341 = vmul.f32 %v4097, 0.044715
        %v4342 = vmul.f32 %v4208, 0.044715
        %v4343 = vmul.f32 %v4210, 0.044715
        %v4344 = vmul.f32 %v4101, 0.044715
        %v4345 = vmul.f32 %v4103, 0.044715
        %v4346 = vmul.f32 %v4214, 0.044715
        %v4347 = vmul.f32 %v4216, 0.044715
        %v4348 = vmul.f32 %v4105, 0.044715
        %v4349 = vmul.f32 %v4107, 0.044715
        %v4350 = vmul.f32 %v4218, 0.044715
        %v4351 = vmul.f32 %v4220, 0.044715
        %v4352 = vmul.f32 %v4111, 0.044715
        %v4353 = vmul.f32 %v4113, 0.044715
        %v4354 = vmul.f32 %v4224, 0.044715
        %v4355 = vmul.f32 %v4226, 0.044715
        %v4356 = vmul.f32 %v4115, 0.044715
        %v4357 = vmul.f32 %v4117, 0.044715
        %v4358 = vmul.f32 %v4228, 0.044715
        %v4359 = vmul.f32 %v4230, 0.044715
        %v4360 = vmul.f32 %v4296, %v4041
        %v4361 = vmul.f32 %v4297, %v4043
        %v4362 = vmul.f32 %v4298, %v4154
        %v4363 = vmul.f32 %v4299, %v4156
        %v4364 = vmul.f32 %v4300, %v4045
        %v4365 = vmul.f32 %v4301, %v4047
        %v4366 = vmul.f32 %v4302, %v4158
        %v4367 = vmul.f32 %v4303, %v4160
        %v4368 = vmul.f32 %v4304, %v4051
        %v4369 = vmul.f32 %v4305, %v4053
        %v4370 = vmul.f32 %v4306, %v4164
        %v4371 = vmul.f32 %v4307, %v4166
        %v4372 = vmul.f32 %v4308, %v4055
        %v4373 = vmul.f32 %v4309, %v4057
        %v4374 = vmul.f32 %v4310, %v4168
        %v4375 = vmul.f32 %v4311, %v4170
        %v4376 = vmul.f32 %v4312, %v4061
        %v4377 = vmul.f32 %v4313, %v4063
        %v4378 = vmul.f32 %v4314, %v4174
        %v4379 = vmul.f32 %v4315, %v4176
        %v4380 = vmul.f32 %v4316, %v4065
        %v4381 = vmul.f32 %v4317, %v4067
        %v4382 = vmul.f32 %v4318, %v4178
        %v4383 = vmul.f32 %v4319, %v4180
        %v4384 = vmul.f32 %v4320, %v4071
        %v4385 = vmul.f32 %v4321, %v4073
        %v4386 = vmul.f32 %v4322, %v4184
        %v4387 = vmul.f32 %v4323, %v4186
        %v4388 = vmul.f32 %v4324, %v4075
        %v4389 = vmul.f32 %v4325, %v4077
        %v4390 = vmul.f32 %v4326, %v4188
        %v4391 = vmul.f32 %v4327, %v4190
        %v4392 = vmul.f32 %v4328, %v4081
        %v4393 = vmul.f32 %v4329, %v4083
        %v4394 = vmul.f32 %v4330, %v4194
        %v4395 = vmul.f32 %v4331, %v4196
        %v4396 = vmul.f32 %v4332, %v4085
        %v4397 = vmul.f32 %v4333, %v4087
        %v4398 = vmul.f32 %v4334, %v4198
        %v4399 = vmul.f32 %v4335, %v4200
        %v4400 = vmul.f32 %v4336, %v4091
        %v4401 = vmul.f32 %v4337, %v4093
        %v4402 = vmul.f32 %v4338, %v4204
        %v4403 = vmul.f32 %v4339, %v4206
        %v4404 = vmul.f32 %v4340, %v4095
        %v4405 = vmul.f32 %v4341, %v4097
        %v4406 = vmul.f32 %v4342, %v4208
        %v4407 = vmul.f32 %v4343, %v4210
        %v4408 = vmul.f32 %v4344, %v4101
        %v4409 = vmul.f32 %v4345, %v4103
        %v4410 = vmul.f32 %v4346, %v4214
        %v4411 = vmul.f32 %v4347, %v4216
        %v4412 = vmul.f32 %v4348, %v4105
        %v4413 = vmul.f32 %v4349, %v4107
        %v4414 = vmul.f32 %v4350, %v4218
        %v4415 = vmul.f32 %v4351, %v4220
        %v4416 = vmul.f32 %v4352, %v4111
        %v4417 = vmul.f32 %v4353, %v4113
        %v4418 = vmul.f32 %v4354, %v4224
        %v4419 = vmul.f32 %v4355, %v4226
        %v4420 = vmul.f32 %v4356, %v4115
        %v4421 = vmul.f32 %v4357, %v4117
        %v4422 = vmul.f32 %v4358, %v4228
        %v4423 = vmul.f32 %v4359, %v4230
        %v4424 = vmul.f32 %v4360, %v4041
        %v4425 = vmul.f32 %v4361, %v4043
        %v4426 = vmul.f32 %v4362, %v4154
        %v4427 = vmul.f32 %v4363, %v4156
        %v4428 = vmul.f32 %v4364, %v4045
        %v4429 = vmul.f32 %v4365, %v4047
        %v4430 = vmul.f32 %v4366, %v4158
        %v4431 = vmul.f32 %v4367, %v4160
        %v4432 = vmul.f32 %v4368, %v4051
        %v4433 = vmul.f32 %v4369, %v4053
        %v4434 = vmul.f32 %v4370, %v4164
        %v4435 = vmul.f32 %v4371, %v4166
        %v4436 = vmul.f32 %v4372, %v4055
        %v4437 = vmul.f32 %v4373, %v4057
        %v4438 = vmul.f32 %v4374, %v4168
        %v4439 = vmul.f32 %v4375, %v4170
        %v4440 = vmul.f32 %v4376, %v4061
        %v4441 = vmul.f32 %v4377, %v4063
        %v4442 = vmul.f32 %v4378, %v4174
        %v4443 = vmul.f32 %v4379, %v4176
        %v4444 = vmul.f32 %v4380, %v4065
        %v4445 = vmul.f32 %v4381, %v4067
        %v4446 = vmul.f32 %v4382, %v4178
        %v4447 = vmul.f32 %v4383, %v4180
        %v4448 = vmul.f32 %v4384, %v4071
        %v4449 = vmul.f32 %v4385, %v4073
        %v4450 = vmul.f32 %v4386, %v4184
        %v4451 = vmul.f32 %v4387, %v4186
        %v4452 = vmul.f32 %v4388, %v4075
        %v4453 = vmul.f32 %v4389, %v4077
        %v4454 = vmul.f32 %v4390, %v4188
        %v4455 = vmul.f32 %v4391, %v4190
        %v4456 = vmul.f32 %v4392, %v4081
        %v4457 = vmul.f32 %v4393, %v4083
        %v4458 = vmul.f32 %v4394, %v4194
        %v4459 = vmul.f32 %v4395, %v4196
        %v4460 = vmul.f32 %v4396, %v4085
        %v4461 = vmul.f32 %v4397, %v4087
        %v4462 = vmul.f32 %v4398, %v4198
        %v4463 = vmul.f32 %v4399, %v4200
        %v4464 = vmul.f32 %v4400, %v4091
        %v4465 = vmul.f32 %v4401, %v4093
        %v4466 = vmul.f32 %v4402, %v4204
        %v4467 = vmul.f32 %v4403, %v4206
        %v4468 = vmul.f32 %v4404, %v4095
        %v4469 = vmul.f32 %v4405, %v4097
        %v4470 = vmul.f32 %v4406, %v4208
        %v4471 = vmul.f32 %v4407, %v4210
        %v4472 = vmul.f32 %v4408, %v4101
        %v4473 = vmul.f32 %v4409, %v4103
        %v4474 = vmul.f32 %v4410, %v4214
        %v4475 = vmul.f32 %v4411, %v4216
        %v4476 = vmul.f32 %v4412, %v4105
        %v4477 = vmul.f32 %v4413, %v4107
        %v4478 = vmul.f32 %v4414, %v4218
        %v4479 = vmul.f32 %v4415, %v4220
        %v4480 = vmul.f32 %v4416, %v4111
        %v4481 = vmul.f32 %v4417, %v4113
        %v4482 = vmul.f32 %v4418, %v4224
        %v4483 = vmul.f32 %v4419, %v4226
        %v4484 = vmul.f32 %v4420, %v4115
        %v4485 = vmul.f32 %v4421, %v4117
        %v4486 = vmul.f32 %v4422, %v4228
        %v4487 = vmul.f32 %v4423, %v4230
        %v4488 = vadd.f32 %v4041, %v4424
        %v4489 = vadd.f32 %v4043, %v4425
        %v4490 = vadd.f32 %v4154, %v4426
        %v4491 = vadd.f32 %v4156, %v4427
        %v4492 = vadd.f32 %v4045, %v4428
        %v4493 = vadd.f32 %v4047, %v4429
        %v4494 = vadd.f32 %v4158, %v4430
        %v4495 = vadd.f32 %v4160, %v4431
        %v4496 = vadd.f32 %v4051, %v4432
        %v4497 = vadd.f32 %v4053, %v4433
        %v4498 = vadd.f32 %v4164, %v4434
        %v4499 = vadd.f32 %v4166, %v4435
        %v4500 = vadd.f32 %v4055, %v4436
        %v4501 = vadd.f32 %v4057, %v4437
        %v4502 = vadd.f32 %v4168, %v4438
        %v4503 = vadd.f32 %v4170, %v4439
        %v4504 = vadd.f32 %v4061, %v4440
        %v4505 = vadd.f32 %v4063, %v4441
        %v4506 = vadd.f32 %v4174, %v4442
        %v4507 = vadd.f32 %v4176, %v4443
        %v4508 = vadd.f32 %v4065, %v4444
        %v4509 = vadd.f32 %v4067, %v4445
        %v4510 = vadd.f32 %v4178, %v4446
        %v4511 = vadd.f32 %v4180, %v4447
        %v4512 = vadd.f32 %v4071, %v4448
        %v4513 = vadd.f32 %v4073, %v4449
        %v4514 = vadd.f32 %v4184, %v4450
        %v4515 = vadd.f32 %v4186, %v4451
        %v4516 = vadd.f32 %v4075, %v4452
        %v4517 = vadd.f32 %v4077, %v4453
        %v4518 = vadd.f32 %v4188, %v4454
        %v4519 = vadd.f32 %v4190, %v4455
        %v4520 = vadd.f32 %v4081, %v4456
        %v4521 = vadd.f32 %v4083, %v4457
        %v4522 = vadd.f32 %v4194, %v4458
        %v4523 = vadd.f32 %v4196, %v4459
        %v4524 = vadd.f32 %v4085, %v4460
        %v4525 = vadd.f32 %v4087, %v4461
        %v4526 = vadd.f32 %v4198, %v4462
        %v4527 = vadd.f32 %v4200, %v4463
        %v4528 = vadd.f32 %v4091, %v4464
        %v4529 = vadd.f32 %v4093, %v4465
        %v4530 = vadd.f32 %v4204, %v4466
        %v4531 = vadd.f32 %v4206, %v4467
        %v4532 = vadd.f32 %v4095, %v4468
        %v4533 = vadd.f32 %v4097, %v4469
        %v4534 = vadd.f32 %v4208, %v4470
        %v4535 = vadd.f32 %v4210, %v4471
        %v4536 = vadd.f32 %v4101, %v4472
        %v4537 = vadd.f32 %v4103, %v4473
        %v4538 = vadd.f32 %v4214, %v4474
        %v4539 = vadd.f32 %v4216, %v4475
        %v4540 = vadd.f32 %v4105, %v4476
        %v4541 = vadd.f32 %v4107, %v4477
        %v4542 = vadd.f32 %v4218, %v4478
        %v4543 = vadd.f32 %v4220, %v4479
        %v4544 = vadd.f32 %v4111, %v4480
        %v4545 = vadd.f32 %v4113, %v4481
        %v4546 = vadd.f32 %v4224, %v4482
        %v4547 = vadd.f32 %v4226, %v4483
        %v4548 = vadd.f32 %v4115, %v4484
        %v4549 = vadd.f32 %v4117, %v4485
        %v4550 = vadd.f32 %v4228, %v4486
        %v4551 = vadd.f32 %v4230, %v4487
        %v4552 = vmul.f32 %v4488, 0.7978846
        %v4553 = vmul.f32 %v4489, 0.7978846
        %v4554 = vmul.f32 %v4490, 0.7978846
        %v4555 = vmul.f32 %v4491, 0.7978846
        %v4556 = vmul.f32 %v4492, 0.7978846
        %v4557 = vmul.f32 %v4493, 0.7978846
        %v4558 = vmul.f32 %v4494, 0.7978846
        %v4559 = vmul.f32 %v4495, 0.7978846
        %v4560 = vmul.f32 %v4496, 0.7978846
        %v4561 = vmul.f32 %v4497, 0.7978846
        %v4562 = vmul.f32 %v4498, 0.7978846
        %v4563 = vmul.f32 %v4499, 0.7978846
        %v4564 = vmul.f32 %v4500, 0.7978846
        %v4565 = vmul.f32 %v4501, 0.7978846
        %v4566 = vmul.f32 %v4502, 0.7978846
        %v4567 = vmul.f32 %v4503, 0.7978846
        %v4568 = vmul.f32 %v4504, 0.7978846
        %v4569 = vmul.f32 %v4505, 0.7978846
        %v4570 = vmul.f32 %v4506, 0.7978846
        %v4571 = vmul.f32 %v4507, 0.7978846
        %v4572 = vmul.f32 %v4508, 0.7978846
        %v4573 = vmul.f32 %v4509, 0.7978846
        %v4574 = vmul.f32 %v4510, 0.7978846
        %v4575 = vmul.f32 %v4511, 0.7978846
        %v4576 = vmul.f32 %v4512, 0.7978846
        %v4577 = vmul.f32 %v4513, 0.7978846
        %v4578 = vmul.f32 %v4514, 0.7978846
        %v4579 = vmul.f32 %v4515, 0.7978846
        %v4580 = vmul.f32 %v4516, 0.7978846
        %v4581 = vmul.f32 %v4517, 0.7978846
        %v4582 = vmul.f32 %v4518, 0.7978846
        %v4583 = vmul.f32 %v4519, 0.7978846
        %v4584 = vmul.f32 %v4520, 0.7978846
        %v4585 = vmul.f32 %v4521, 0.7978846
        %v4586 = vmul.f32 %v4522, 0.7978846
        %v4587 = vmul.f32 %v4523, 0.7978846
        %v4588 = vmul.f32 %v4524, 0.7978846
        %v4589 = vmul.f32 %v4525, 0.7978846
        %v4590 = vmul.f32 %v4526, 0.7978846
        %v4591 = vmul.f32 %v4527, 0.7978846
        %v4592 = vmul.f32 %v4528, 0.7978846
        %v4593 = vmul.f32 %v4529, 0.7978846
        %v4594 = vmul.f32 %v4530, 0.7978846
        %v4595 = vmul.f32 %v4531, 0.7978846
        %v4596 = vmul.f32 %v4532, 0.7978846
        %v4597 = vmul.f32 %v4533, 0.7978846
        %v4598 = vmul.f32 %v4534, 0.7978846
        %v4599 = vmul.f32 %v4535, 0.7978846
        %v4600 = vmul.f32 %v4536, 0.7978846
        %v4601 = vmul.f32 %v4537, 0.7978846
        %v4602 = vmul.f32 %v4538, 0.7978846
        %v4603 = vmul.f32 %v4539, 0.7978846
        %v4604 = vmul.f32 %v4540, 0.7978846
        %v4605 = vmul.f32 %v4541, 0.7978846
        %v4606 = vmul.f32 %v4542, 0.7978846
        %v4607 = vmul.f32 %v4543, 0.7978846
        %v4608 = vmul.f32 %v4544, 0.7978846
        %v4609 = vmul.f32 %v4545, 0.7978846
        %v4610 = vmul.f32 %v4546, 0.7978846
        %v4611 = vmul.f32 %v4547, 0.7978846
        %v4612 = vmul.f32 %v4548, 0.7978846
        %v4613 = vmul.f32 %v4549, 0.7978846
        %v4614 = vmul.f32 %v4550, 0.7978846
        %v4615 = vmul.f32 %v4551, 0.7978846
        %v4616 = vtanh.pop %v4552
        %v4617 = vtanh.pop %v4553
        %v4618 = vtanh.pop %v4554
        %v4619 = vtanh.pop %v4555
        %v4620 = vtanh.pop %v4556
        %v4621 = vtanh.pop %v4557
        %v4622 = vtanh.pop %v4558
        %v4623 = vtanh.pop %v4559
        %v4624 = vtanh.pop %v4560
        %v4625 = vtanh.pop %v4561
        %v4626 = vtanh.pop %v4562
        %v4627 = vtanh.pop %v4563
        %v4628 = vtanh.pop %v4564
        %v4629 = vtanh.pop %v4565
        %v4630 = vtanh.pop %v4566
        %v4631 = vtanh.pop %v4567
        %v4632 = vtanh.pop %v4568
        %v4633 = vtanh.pop %v4569
        %v4634 = vtanh.pop %v4570
        %v4635 = vtanh.pop %v4571
        %v4636 = vtanh.pop %v4572
        %v4637 = vtanh.pop %v4573
        %v4638 = vtanh.pop %v4574
        %v4639 = vtanh.pop %v4575
        %v4640 = vtanh.pop %v4576
        %v4641 = vtanh.pop %v4577
        %v4642 = vtanh.pop %v4578
        %v4643 = vtanh.pop %v4579
        %v4644 = vtanh.pop %v4580
        %v4645 = vtanh.pop %v4581
        %v4646 = vtanh.pop %v4582
        %v4647 = vtanh.pop %v4583
        %v4648 = vtanh.pop %v4584
        %v4649 = vtanh.pop %v4585
        %v4650 = vtanh.pop %v4586
        %v4651 = vtanh.pop %v4587
        %v4652 = vtanh.pop %v4588
        %v4653 = vtanh.pop %v4589
        %v4654 = vtanh.pop %v4590
        %v4655 = vtanh.pop %v4591
        %v4656 = vtanh.pop %v4592
        %v4657 = vtanh.pop %v4593
        %v4658 = vtanh.pop %v4594
        %v4659 = vtanh.pop %v4595
        %v4660 = vtanh.pop %v4596
        %v4661 = vtanh.pop %v4597
        %v4662 = vtanh.pop %v4598
        %v4663 = vtanh.pop %v4599
        %v4664 = vtanh.pop %v4600
        %v4665 = vtanh.pop %v4601
        %v4666 = vtanh.pop %v4602
        %v4667 = vtanh.pop %v4603
        %v4668 = vtanh.pop %v4604
        %v4669 = vtanh.pop %v4605
        %v4670 = vtanh.pop %v4606
        %v4671 = vtanh.pop %v4607
        %v4672 = vtanh.pop %v4608
        %v4673 = vtanh.pop %v4609
        %v4674 = vtanh.pop %v4610
        %v4675 = vtanh.pop %v4611
        %v4676 = vtanh.pop %v4612
        %v4677 = vtanh.pop %v4613
        %v4678 = vtanh.pop %v4614
        %v4679 = vtanh.pop %v4615
        %v4680 = vadd.f32 %v4616, 1.0
        %v4681 = vadd.f32 %v4617, 1.0
        %v4682 = vadd.f32 %v4618, 1.0
        %v4683 = vadd.f32 %v4619, 1.0
        %v4684 = vadd.f32 %v4620, 1.0
        %v4685 = vadd.f32 %v4621, 1.0
        %v4686 = vadd.f32 %v4622, 1.0
        %v4687 = vadd.f32 %v4623, 1.0
        %v4688 = vadd.f32 %v4624, 1.0
        %v4689 = vadd.f32 %v4625, 1.0
        %v4690 = vadd.f32 %v4626, 1.0
        %v4691 = vadd.f32 %v4627, 1.0
        %v4692 = vadd.f32 %v4628, 1.0
        %v4693 = vadd.f32 %v4629, 1.0
        %v4694 = vadd.f32 %v4630, 1.0
        %v4695 = vadd.f32 %v4631, 1.0
        %v4696 = vadd.f32 %v4632, 1.0
        %v4697 = vadd.f32 %v4633, 1.0
        %v4698 = vadd.f32 %v4634, 1.0
        %v4699 = vadd.f32 %v4635, 1.0
        %v4700 = vadd.f32 %v4636, 1.0
        %v4701 = vadd.f32 %v4637, 1.0
        %v4702 = vadd.f32 %v4638, 1.0
        %v4703 = vadd.f32 %v4639, 1.0
        %v4704 = vadd.f32 %v4640, 1.0
        %v4705 = vadd.f32 %v4641, 1.0
        %v4706 = vadd.f32 %v4642, 1.0
        %v4707 = vadd.f32 %v4643, 1.0
        %v4708 = vadd.f32 %v4644, 1.0
        %v4709 = vadd.f32 %v4645, 1.0
        %v4710 = vadd.f32 %v4646, 1.0
        %v4711 = vadd.f32 %v4647, 1.0
        %v4712 = vadd.f32 %v4648, 1.0
        %v4713 = vadd.f32 %v4649, 1.0
        %v4714 = vadd.f32 %v4650, 1.0
        %v4715 = vadd.f32 %v4651, 1.0
        %v4716 = vadd.f32 %v4652, 1.0
        %v4717 = vadd.f32 %v4653, 1.0
        %v4718 = vadd.f32 %v4654, 1.0
        %v4719 = vadd.f32 %v4655, 1.0
        %v4720 = vadd.f32 %v4656, 1.0
        %v4721 = vadd.f32 %v4657, 1.0
        %v4722 = vadd.f32 %v4658, 1.0
        %v4723 = vadd.f32 %v4659, 1.0
        %v4724 = vadd.f32 %v4660, 1.0
        %v4725 = vadd.f32 %v4661, 1.0
        %v4726 = vadd.f32 %v4662, 1.0
        %v4727 = vadd.f32 %v4663, 1.0
        %v4728 = vadd.f32 %v4664, 1.0
        %v4729 = vadd.f32 %v4665, 1.0
        %v4730 = vadd.f32 %v4666, 1.0
        %v4731 = vadd.f32 %v4667, 1.0
        %v4732 = vadd.f32 %v4668, 1.0
        %v4733 = vadd.f32 %v4669, 1.0
        %v4734 = vadd.f32 %v4670, 1.0
        %v4735 = vadd.f32 %v4671, 1.0
        %v4736 = vadd.f32 %v4672, 1.0
        %v4737 = vadd.f32 %v4673, 1.0
        %v4738 = vadd.f32 %v4674, 1.0
        %v4739 = vadd.f32 %v4675, 1.0
        %v4740 = vadd.f32 %v4676, 1.0
        %v4741 = vadd.f32 %v4677, 1.0
        %v4742 = vadd.f32 %v4678, 1.0
        %v4743 = vadd.f32 %v4679, 1.0
        %v4744 = vmul.f32 %v4232, %v4680
        %v4745 = vmul.f32 %v4233, %v4681
        %v4746 = vmul.f32 %v4234, %v4682
        %v4747 = vmul.f32 %v4235, %v4683
        %v4748 = vmul.f32 %v4236, %v4684
        %v4749 = vmul.f32 %v4237, %v4685
        %v4750 = vmul.f32 %v4238, %v4686
        %v4751 = vmul.f32 %v4239, %v4687
        %v4752 = vmul.f32 %v4240, %v4688
        %v4753 = vmul.f32 %v4241, %v4689
        %v4754 = vmul.f32 %v4242, %v4690
        %v4755 = vmul.f32 %v4243, %v4691
        %v4756 = vmul.f32 %v4244, %v4692
        %v4757 = vmul.f32 %v4245, %v4693
        %v4758 = vmul.f32 %v4246, %v4694
        %v4759 = vmul.f32 %v4247, %v4695
        %v4760 = vmul.f32 %v4248, %v4696
        %v4761 = vmul.f32 %v4249, %v4697
        %v4762 = vmul.f32 %v4250, %v4698
        %v4763 = vmul.f32 %v4251, %v4699
        %v4764 = vmul.f32 %v4252, %v4700
        %v4765 = vmul.f32 %v4253, %v4701
        %v4766 = vmul.f32 %v4254, %v4702
        %v4767 = vmul.f32 %v4255, %v4703
        %v4768 = vmul.f32 %v4256, %v4704
        %v4769 = vmul.f32 %v4257, %v4705
        %v4770 = vmul.f32 %v4258, %v4706
        %v4771 = vmul.f32 %v4259, %v4707
        %v4772 = vmul.f32 %v4260, %v4708
        %v4773 = vmul.f32 %v4261, %v4709
        %v4774 = vmul.f32 %v4262, %v4710
        %v4775 = vmul.f32 %v4263, %v4711
        %v4776 = vmul.f32 %v4264, %v4712
        %v4777 = vmul.f32 %v4265, %v4713
        %v4778 = vmul.f32 %v4266, %v4714
        %v4779 = vmul.f32 %v4267, %v4715
        %v4780 = vmul.f32 %v4268, %v4716
        %v4781 = vmul.f32 %v4269, %v4717
        %v4782 = vmul.f32 %v4270, %v4718
        %v4783 = vmul.f32 %v4271, %v4719
        %v4784 = vmul.f32 %v4272, %v4720
        %v4785 = vmul.f32 %v4273, %v4721
        %v4786 = vmul.f32 %v4274, %v4722
        %v4787 = vmul.f32 %v4275, %v4723
        %v4788 = vmul.f32 %v4276, %v4724
        %v4789 = vmul.f32 %v4277, %v4725
        %v4790 = vmul.f32 %v4278, %v4726
        %v4791 = vmul.f32 %v4279, %v4727
        %v4792 = vmul.f32 %v4280, %v4728
        %v4793 = vmul.f32 %v4281, %v4729
        %v4794 = vmul.f32 %v4282, %v4730
        %v4795 = vmul.f32 %v4283, %v4731
        %v4796 = vmul.f32 %v4284, %v4732
        %v4797 = vmul.f32 %v4285, %v4733
        %v4798 = vmul.f32 %v4286, %v4734
        %v4799 = vmul.f32 %v4287, %v4735
        %v4800 = vmul.f32 %v4288, %v4736
        %v4801 = vmul.f32 %v4289, %v4737
        %v4802 = vmul.f32 %v4290, %v4738
        %v4803 = vmul.f32 %v4291, %v4739
        %v4804 = vmul.f32 %v4292, %v4740
        %v4805 = vmul.f32 %v4293, %v4741
        %v4806 = vmul.f32 %v4294, %v4742
        %v4807 = vmul.f32 %v4295, %v4743
        %v4808 = vpack.c.bf16 %v4748, %v4744
        %v4809 = vpack.c.bf16 %v4749, %v4745
        %v4810 = vpack.c.bf16 %v4750, %v4746
        %v4811 = vpack.c.bf16 %v4751, %v4747
        %v4812 = vpack.c.bf16 %v4756, %v4752
        %v4813 = vpack.c.bf16 %v4757, %v4753
        %v4814 = vpack.c.bf16 %v4758, %v4754
        %v4815 = vpack.c.bf16 %v4759, %v4755
        %v4816 = vpack.c.bf16 %v4764, %v4760
        %v4817 = vpack.c.bf16 %v4765, %v4761
        %v4818 = vpack.c.bf16 %v4766, %v4762
        %v4819 = vpack.c.bf16 %v4767, %v4763
        %v4820 = vpack.c.bf16 %v4772, %v4768
        %v4821 = vpack.c.bf16 %v4773, %v4769
        %v4822 = vpack.c.bf16 %v4774, %v4770
        %v4823 = vpack.c.bf16 %v4775, %v4771
        %v4824 = vpack.c.bf16 %v4780, %v4776
        %v4825 = vpack.c.bf16 %v4781, %v4777
        %v4826 = vpack.c.bf16 %v4782, %v4778
        %v4827 = vpack.c.bf16 %v4783, %v4779
        %v4828 = vpack.c.bf16 %v4788, %v4784
        %v4829 = vpack.c.bf16 %v4789, %v4785
        %v4830 = vpack.c.bf16 %v4790, %v4786
        %v4831 = vpack.c.bf16 %v4791, %v4787
        %v4832 = vpack.c.bf16 %v4796, %v4792
        %v4833 = vpack.c.bf16 %v4797, %v4793
        %v4834 = vpack.c.bf16 %v4798, %v4794
        %v4835 = vpack.c.bf16 %v4799, %v4795
        %v4836 = vpack.c.bf16 %v4804, %v4800
        %v4837 = vpack.c.bf16 %v4805, %v4801
        %v4838 = vpack.c.bf16 %v4806, %v4802
        %v4839 = vpack.c.bf16 %v4807, %v4803
        %v4840 = vld [vmem:[#allocation12] sm:$0xf]
        %v4841 = vld [vmem:[#allocation12 + $0x4] sm:$0xf]
        %v4842 = vld [vmem:[#allocation12 + $0x8] sm:$0xf]
        %v4843 = vld [vmem:[#allocation12 + $0xc] sm:$0xf]
        %v4844 = vld [vmem:[#allocation12 + $0x10] sm:$0xf]
        %v4845 = vld [vmem:[#allocation12 + $0x14] sm:$0xf]
        %v4846 = vld [vmem:[#allocation12 + $0x18] sm:$0xf]
        %v4847 = vld [vmem:[#allocation12 + $0x1c] sm:$0xf]
        %v4848 = vld [vmem:[#allocation12 + $0x20] sm:$0xf]
        %v4849 = vld [vmem:[#allocation12 + $0x24] sm:$0xf]
        %v4850 = vld [vmem:[#allocation12 + $0x28] sm:$0xf]
        %v4851 = vld [vmem:[#allocation12 + $0x2c] sm:$0xf]
        %v4852 = vld [vmem:[#allocation12 + $0x30] sm:$0xf]
        %v4853 = vld [vmem:[#allocation12 + $0x34] sm:$0xf]
        %v4854 = vld [vmem:[#allocation12 + $0x38] sm:$0xf]
        %v4855 = vld [vmem:[#allocation12 + $0x3c] sm:$0xf]
        %v4856 = vld [vmem:[#allocation12 + $0x40] sm:$0xf]
        %v4857 = vld [vmem:[#allocation12 + $0x44] sm:$0xf]
        %v4858 = vld [vmem:[#allocation12 + $0x48] sm:$0xf]
        %v4859 = vld [vmem:[#allocation12 + $0x4c] sm:$0xf]
        %v4860 = vld [vmem:[#allocation12 + $0x50] sm:$0xf]
        %v4861 = vld [vmem:[#allocation12 + $0x54] sm:$0xf]
        %v4862 = vld [vmem:[#allocation12 + $0x58] sm:$0xf]
        %v4863 = vld [vmem:[#allocation12 + $0x5c] sm:$0xf]
        %v4864 = vld [vmem:[#allocation12 + $0x60] sm:$0xf]
        %v4865 = vld [vmem:[#allocation12 + $0x64] sm:$0xf]
        %v4866 = vld [vmem:[#allocation12 + $0x68] sm:$0xf]
        %v4867 = vld [vmem:[#allocation12 + $0x6c] sm:$0xf]
        %v4868 = vld [vmem:[#allocation12 + $0x70] sm:$0xf]
        %v4869 = vld [vmem:[#allocation12 + $0x74] sm:$0xf]
        %v4870 = vld [vmem:[#allocation12 + $0x78] sm:$0xf]
        %v4871 = vld [vmem:[#allocation12 + $0x7c] sm:$0xf]
        %v4872 = vld [vmem:[#allocation12 + $0x80] sm:$0xf]
        %v4873 = vld [vmem:[#allocation12 + $0x84] sm:$0xf]
        %v4874 = vld [vmem:[#allocation12 + $0x88] sm:$0xf]
        %v4875 = vld [vmem:[#allocation12 + $0x8c] sm:$0xf]
        %v4876 = vld [vmem:[#allocation12 + $0x90] sm:$0xf]
        %v4877 = vld [vmem:[#allocation12 + $0x94] sm:$0xf]
        %v4878 = vld [vmem:[#allocation12 + $0x98] sm:$0xf]
        %v4879 = vld [vmem:[#allocation12 + $0x9c] sm:$0xf]
        %v4880 = vld [vmem:[#allocation12 + $0xa0] sm:$0xf]
        %v4881 = vld [vmem:[#allocation12 + $0xa4] sm:$0xf]
        %v4882 = vld [vmem:[#allocation12 + $0xa8] sm:$0xf]
        %v4883 = vld [vmem:[#allocation12 + $0xac] sm:$0xf]
        %v4884 = vld [vmem:[#allocation12 + $0xb0] sm:$0xf]
        %v4885 = vld [vmem:[#allocation12 + $0xb4] sm:$0xf]
        %v4886 = vld [vmem:[#allocation12 + $0xb8] sm:$0xf]
        %v4887 = vld [vmem:[#allocation12 + $0xbc] sm:$0xf]
        %v4888 = vld [vmem:[#allocation12 + $0xc0] sm:$0xf]
        %v4889 = vld [vmem:[#allocation12 + $0xc4] sm:$0xf]
        %v4890 = vld [vmem:[#allocation12 + $0xc8] sm:$0xf]
        %v4891 = vld [vmem:[#allocation12 + $0xcc] sm:$0xf]
        %v4892 = vld [vmem:[#allocation12 + $0xd0] sm:$0xf]
        %v4893 = vld [vmem:[#allocation12 + $0xd4] sm:$0xf]
        %v4894 = vld [vmem:[#allocation12 + $0xd8] sm:$0xf]
        %v4895 = vld [vmem:[#allocation12 + $0xdc] sm:$0xf]
        %v4896 = vld [vmem:[#allocation12 + $0xe0] sm:$0xf]
        %v4897 = vld [vmem:[#allocation12 + $0xe4] sm:$0xf]
        %v4898 = vld [vmem:[#allocation12 + $0xe8] sm:$0xf]
        %v4899 = vld [vmem:[#allocation12 + $0xec] sm:$0xf]
        %v4900 = vld [vmem:[#allocation12 + $0xf0] sm:$0xf]
        %v4901 = vld [vmem:[#allocation12 + $0xf4] sm:$0xf]
        %v4902 = vld [vmem:[#allocation12 + $0xf8] sm:$0xf]
        %v4903 = vld [vmem:[#allocation12 + $0xfc] sm:$0xf]
        %v4904 = vld [vmem:[%s12] sm:$0x1]
        %v4905 = vunpack.c.l.bf16 %v4904
        %v4906 = vlaneseq
        %v4907 = vshrl.u32 %v4906, 7
        %v4908 = vsub.s32 0, %v4907
        %v4909 = vrot.slane %v4905, %v4908
        %v4974 = vunpack.c.l.b16 %v4840
        %v4975 = vunpack.c.l.b16 %v4841
        %v4976 = vunpack.c.l.b16 %v4842
        %v4977 = vunpack.c.l.b16 %v4843
        %v4978 = vunpack.c.l.b16 %v4844
        %v4979 = vunpack.c.l.b16 %v4845
        %v4980 = vunpack.c.l.b16 %v4846
        %v4981 = vunpack.c.l.b16 %v4847
        %v4982 = vunpack.c.l.b16 %v4848
        %v4983 = vunpack.c.l.b16 %v4849
        %v4984 = vunpack.c.l.b16 %v4850
        %v4985 = vunpack.c.l.b16 %v4851
        %v4986 = vunpack.c.l.b16 %v4852
        %v4987 = vunpack.c.l.b16 %v4853
        %v4988 = vunpack.c.l.b16 %v4854
        %v4989 = vunpack.c.l.b16 %v4855
        %v4990 = vunpack.c.l.b16 %v4856
        %v4991 = vunpack.c.l.b16 %v4857
        %v4992 = vunpack.c.l.b16 %v4858
        %v4993 = vunpack.c.l.b16 %v4859
        %v4994 = vunpack.c.l.b16 %v4860
        %v4995 = vunpack.c.l.b16 %v4861
        %v4996 = vunpack.c.l.b16 %v4862
        %v4997 = vunpack.c.l.b16 %v4863
        %v4998 = vunpack.c.l.b16 %v4864
        %v4999 = vunpack.c.l.b16 %v4865
        %v5000 = vunpack.c.l.b16 %v4866
        %v5001 = vunpack.c.l.b16 %v4867
        %v5002 = vunpack.c.l.b16 %v4868
        %v5003 = vunpack.c.l.b16 %v4869
        %v5004 = vunpack.c.l.b16 %v4870
        %v5005 = vunpack.c.l.b16 %v4871
        %v5006 = vunpack.c.l.b16 %v4872
        %v5007 = vunpack.c.l.b16 %v4873
        %v5008 = vunpack.c.l.b16 %v4874
        %v5009 = vunpack.c.l.b16 %v4875
        %v5010 = vunpack.c.l.b16 %v4876
        %v5011 = vunpack.c.l.b16 %v4877
        %v5012 = vunpack.c.l.b16 %v4878
        %v5013 = vunpack.c.l.b16 %v4879
        %v5014 = vunpack.c.l.b16 %v4880
        %v5015 = vunpack.c.l.b16 %v4881
        %v5016 = vunpack.c.l.b16 %v4882
        %v5017 = vunpack.c.l.b16 %v4883
        %v5018 = vunpack.c.l.b16 %v4884
        %v5019 = vunpack.c.l.b16 %v4885
        %v5020 = vunpack.c.l.b16 %v4886
        %v5021 = vunpack.c.l.b16 %v4887
        %v5022 = vunpack.c.l.b16 %v4888
        %v5023 = vunpack.c.l.b16 %v4889
        %v5024 = vunpack.c.l.b16 %v4890
        %v5025 = vunpack.c.l.b16 %v4891
        %v5026 = vunpack.c.l.b16 %v4892
        %v5027 = vunpack.c.l.b16 %v4893
        %v5028 = vunpack.c.l.b16 %v4894
        %v5029 = vunpack.c.l.b16 %v4895
        %v5030 = vunpack.c.l.b16 %v4896
        %v5031 = vunpack.c.l.b16 %v4897
        %v5032 = vunpack.c.l.b16 %v4898
        %v5033 = vunpack.c.l.b16 %v4899
        %v5034 = vunpack.c.l.b16 %v4900
        %v5035 = vunpack.c.l.b16 %v4901
        %v5036 = vunpack.c.l.b16 %v4902
        %v5037 = vunpack.c.l.b16 %v4903
        %v5038 = vpack.c.b16 %v4975, %v4974
        %v5039 = vpack.c.b16 %v4977, %v4976
        %v5040 = vpack.c.b16 %v4979, %v4978
        %v5041 = vpack.c.b16 %v4981, %v4980
        %v5042 = vpack.c.b16 %v4983, %v4982
        %v5043 = vpack.c.b16 %v4985, %v4984
        %v5044 = vpack.c.b16 %v4987, %v4986
        %v5045 = vpack.c.b16 %v4989, %v4988
        %v5046 = vpack.c.b16 %v4991, %v4990
        %v5047 = vpack.c.b16 %v4993, %v4992
        %v5048 = vpack.c.b16 %v4995, %v4994
        %v5049 = vpack.c.b16 %v4997, %v4996
        %v5050 = vpack.c.b16 %v4999, %v4998
        %v5051 = vpack.c.b16 %v5001, %v5000
        %v5052 = vpack.c.b16 %v5003, %v5002
        %v5053 = vpack.c.b16 %v5005, %v5004
        %v5054 = vpack.c.b16 %v5007, %v5006
        %v5055 = vpack.c.b16 %v5009, %v5008
        %v5056 = vpack.c.b16 %v5011, %v5010
        %v5057 = vpack.c.b16 %v5013, %v5012
        %v5058 = vpack.c.b16 %v5015, %v5014
        %v5059 = vpack.c.b16 %v5017, %v5016
        %v5060 = vpack.c.b16 %v5019, %v5018
        %v5061 = vpack.c.b16 %v5021, %v5020
        %v5062 = vpack.c.b16 %v5023, %v5022
        %v5063 = vpack.c.b16 %v5025, %v5024
        %v5064 = vpack.c.b16 %v5027, %v5026
        %v5065 = vpack.c.b16 %v5029, %v5028
        %v5066 = vpack.c.b16 %v5031, %v5030
        %v5067 = vpack.c.b16 %v5033, %v5032
        %v5068 = vpack.c.b16 %v5035, %v5034
        %v5069 = vpack.c.b16 %v5037, %v5036
        %5102 = vmatprep.subr.bf16.mxu0 0
        %5103 = vmatpush1.bf16.msra.mxu0 %v5038
        %5104 = vmatprep.subr.bf16.mxu0 0
        %5105 = vmatpush1.bf16.msra.mxu0 %v5039
        %5106 = vmatprep.subr.bf16.mxu0 0
        %5107 = vmatpush1.bf16.msra.mxu0 %v5040
        %5108 = vmatprep.subr.bf16.mxu0 0
        %5109 = vmatpush1.bf16.msra.mxu0 %v5041
        %5110 = vmatprep.subr.bf16.mxu0 0
        %5111 = vmatpush1.bf16.msra.mxu0 %v5042
        %5112 = vmatprep.subr.bf16.mxu0 0
        %5113 = vmatpush1.bf16.msra.mxu0 %v5043
        %5114 = vmatprep.subr.bf16.mxu0 0
        %5115 = vmatpush1.bf16.msra.mxu0 %v5044
        %5116 = vmatprep.subr.bf16.mxu0 0
        %5117 = vmatpush1.bf16.msra.mxu0 %v5045
        %5118 = vmatprep.subr.bf16.mxu0 0
        %5119 = vmatpush1.bf16.msra.mxu0 %v5046
        %5120 = vmatprep.subr.bf16.mxu0 0
        %5121 = vmatpush1.bf16.msra.mxu0 %v5047
        %5122 = vmatprep.subr.bf16.mxu0 0
        %5123 = vmatpush1.bf16.msra.mxu0 %v5048
        %5124 = vmatprep.subr.bf16.mxu0 0
        %5125 = vmatpush1.bf16.msra.mxu0 %v5049
        %5126 = vmatprep.subr.bf16.mxu0 0
        %5127 = vmatpush1.bf16.msra.mxu0 %v5050
        %5128 = vmatprep.subr.bf16.mxu0 0
        %5129 = vmatpush1.bf16.msra.mxu0 %v5051
        %5130 = vmatprep.subr.bf16.mxu0 0
        %5131 = vmatpush1.bf16.msra.mxu0 %v5052
        %5132 = vmatprep.subr.bf16.mxu0 0
        %5133 = vmatpush1.bf16.msra.mxu0 %v5053
        %5134 = vmatprep.mubr.bf16.mxu0 %v4809
        %5135 = vmatmul.mubr.bf16.gmra.mrb[0].mxu0 %v4808
        %v5136 = vpop.f32.mrb[0].mxu0
        %v5137 = vadd.f32 %v4909, %v5136
        %v5138 = vpop.f32.mrb[0].mxu0
        %v5139 = vpop.f32.mrb[0].mxu0
        %v5140 = vadd.f32 %v4909, %v5139
        %v5141 = vpop.f32.mrb[0].mxu0
        %5142 = vmatprep.mubr.bf16.mxu0 %v4813
        %5143 = vmatmul.mubr.bf16.gmra.mrb[0].mxu0 %v4812
        %v5144 = vpop.f32.mrb[0].mxu0
        %v5145 = vadd.f32 %v4909, %v5144
        %v5146 = vpop.f32.mrb[0].mxu0
        %v5147 = vpop.f32.mrb[0].mxu0
        %v5148 = vadd.f32 %v4909, %v5147
        %v5149 = vpop.f32.mrb[0].mxu0
        %5150 = vmatprep.mubr.bf16.mxu0 %v4817
        %5151 = vmatmul.mubr.bf16.gmra.mrb[0].mxu0 %v4816
        %v5152 = vpop.f32.mrb[0].mxu0
        %v5153 = vadd.f32 %v4909, %v5152
        %v5154 = vpop.f32.mrb[0].mxu0
        %v5155 = vpop.f32.mrb[0].mxu0
        %v5156 = vadd.f32 %v4909, %v5155
        %v5157 = vpop.f32.mrb[0].mxu0
        %5158 = vmatprep.mubr.bf16.mxu0 %v4821
        %5159 = vmatmul.mubr.bf16.gmra.mrb[0].mxu0 %v4820
        %v5160 = vpop.f32.mrb[0].mxu0
        %v5161 = vadd.f32 %v4909, %v5160
        %v5162 = vpop.f32.mrb[0].mxu0
        %v5163 = vpop.f32.mrb[0].mxu0
        %v5164 = vadd.f32 %v4909, %v5163
        %v5165 = vpop.f32.mrb[0].mxu0
        %5166 = vmatprep.mubr.bf16.mxu0 %v4825
        %5167 = vmatmul.mubr.bf16.gmra.mrb[0].mxu0 %v4824
        %v5168 = vpop.f32.mrb[0].mxu0
        %v5169 = vadd.f32 %v4909, %v5168
        %v5170 = vpop.f32.mrb[0].mxu0
        %v5171 = vpop.f32.mrb[0].mxu0
        %v5172 = vadd.f32 %v4909, %v5171
        %v5173 = vpop.f32.mrb[0].mxu0
        %5174 = vmatprep.mubr.bf16.mxu0 %v4829
        %5175 = vmatmul.mubr.bf16.gmra.mrb[0].mxu0 %v4828
        %v5176 = vpop.f32.mrb[0].mxu0
        %v5177 = vadd.f32 %v4909, %v5176
        %v5178 = vpop.f32.mrb[0].mxu0
        %v5179 = vpop.f32.mrb[0].mxu0
        %v5180 = vadd.f32 %v4909, %v5179
        %v5181 = vpop.f32.mrb[0].mxu0
        %5182 = vmatprep.mubr.bf16.mxu0 %v4833
        %5183 = vmatmul.mubr.bf16.gmra.mrb[0].mxu0 %v4832
        %v5184 = vpop.f32.mrb[0].mxu0
        %v5185 = vadd.f32 %v4909, %v5184
        %v5186 = vpop.f32.mrb[0].mxu0
        %v5187 = vpop.f32.mrb[0].mxu0
        %v5188 = vadd.f32 %v4909, %v5187
        %v5189 = vpop.f32.mrb[0].mxu0
        %5190 = vmatprep.mubr.bf16.mxu0 %v4837
        %5191 = vmatmul.mubr.bf16.gmra.mrb[0].mxu0 %v4836
        %v5192 = vpop.f32.mrb[0].mxu0
        %v5193 = vadd.f32 %v4909, %v5192
        %v5194 = vpop.f32.mrb[0].mxu0
        %v5195 = vpop.f32.mrb[0].mxu0
        %v5196 = vadd.f32 %v4909, %v5195
        %v5197 = vpop.f32.mrb[0].mxu0
        %5198 = vdwg.mxu0
        %5199 = vmatprep.subr.bf16.mxu0 0
        %5200 = vmatpush1.bf16.msra.mxu0 %v5054
        %5201 = vmatprep.subr.bf16.mxu0 0
        %5202 = vmatpush1.bf16.msra.mxu0 %v5055
        %5203 = vmatprep.subr.bf16.mxu0 0
        %5204 = vmatpush1.bf16.msra.mxu0 %v5056
        %5205 = vmatprep.subr.bf16.mxu0 0
        %5206 = vmatpush1.bf16.msra.mxu0 %v5057
        %5207 = vmatprep.subr.bf16.mxu0 0
        %5208 = vmatpush1.bf16.msra.mxu0 %v5058
        %5209 = vmatprep.subr.bf16.mxu0 0
        %5210 = vmatpush1.bf16.msra.mxu0 %v5059
        %5211 = vmatprep.subr.bf16.mxu0 0
        %5212 = vmatpush1.bf16.msra.mxu0 %v5060
        %5213 = vmatprep.subr.bf16.mxu0 0
        %5214 = vmatpush1.bf16.msra.mxu0 %v5061
        %5215 = vmatprep.subr.bf16.mxu0 0
        %5216 = vmatpush1.bf16.msra.mxu0 %v5062
        %5217 = vmatprep.subr.bf16.mxu0 0
        %5218 = vmatpush1.bf16.msra.mxu0 %v5063
        %5219 = vmatprep.subr.bf16.mxu0 0
        %5220 = vmatpush1.bf16.msra.mxu0 %v5064
        %5221 = vmatprep.subr.bf16.mxu0 0
        %5222 = vmatpush1.bf16.msra.mxu0 %v5065
        %5223 = vmatprep.subr.bf16.mxu0 0
        %5224 = vmatpush1.bf16.msra.mxu0 %v5066
        %5225 = vmatprep.subr.bf16.mxu0 0
        %5226 = vmatpush1.bf16.msra.mxu0 %v5067
        %5227 = vmatprep.subr.bf16.mxu0 0
        %5228 = vmatpush1.bf16.msra.mxu0 %v5068
        %5229 = vmatprep.subr.bf16.mxu0 0
        %5230 = vmatpush1.bf16.msra.mxu0 %v5069
        %5231 = vmatprep.mubr.bf16.mxu0 %v4811
        %5232 = vmatmul.mubr.bf16.gmra.mrb[0].mxu0 %v4810
        %v5233 = vpop.f32.mrb[0].mxu0
        %v5234 = vadd.f32 %v5137, %v5233
        %v5235 = vpop.f32.mrb[0].mxu0
        %v5236 = vpop.f32.mrb[0].mxu0
        %v5237 = vadd.f32 %v5140, %v5236
        %v5238 = vpop.f32.mrb[0].mxu0
        %5239 = vmatprep.mubr.bf16.mxu0 %v4815
        %5240 = vmatmul.mubr.bf16.gmra.mrb[0].mxu0 %v4814
        %v5241 = vpop.f32.mrb[0].mxu0
        %v5242 = vadd.f32 %v5145, %v5241
        %v5243 = vpop.f32.mrb[0].mxu0
        %v5244 = vpop.f32.mrb[0].mxu0
        %v5245 = vadd.f32 %v5148, %v5244
        %v5246 = vpop.f32.mrb[0].mxu0
        %5247 = vmatprep.mubr.bf16.mxu0 %v4819
        %5248 = vmatmul.mubr.bf16.gmra.mrb[0].mxu0 %v4818
        %v5249 = vpop.f32.mrb[0].mxu0
        %v5250 = vadd.f32 %v5153, %v5249
        %v5251 = vpop.f32.mrb[0].mxu0
        %v5252 = vpop.f32.mrb[0].mxu0
        %v5253 = vadd.f32 %v5156, %v5252
        %v5254 = vpop.f32.mrb[0].mxu0
        %5255 = vmatprep.mubr.bf16.mxu0 %v4823
        %5256 = vmatmul.mubr.bf16.gmra.mrb[0].mxu0 %v4822
        %v5257 = vpop.f32.mrb[0].mxu0
        %v5258 = vadd.f32 %v5161, %v5257
        %v5259 = vpop.f32.mrb[0].mxu0
        %v5260 = vpop.f32.mrb[0].mxu0
        %v5261 = vadd.f32 %v5164, %v5260
        %v5262 = vpop.f32.mrb[0].mxu0
        %5263 = vmatprep.mubr.bf16.mxu0 %v4827
        %5264 = vmatmul.mubr.bf16.gmra.mrb[0].mxu0 %v4826
        %v5265 = vpop.f32.mrb[0].mxu0
        %v5266 = vadd.f32 %v5169, %v5265
        %v5267 = vpop.f32.mrb[0].mxu0
        %v5268 = vpop.f32.mrb[0].mxu0
        %v5269 = vadd.f32 %v5172, %v5268
        %v5270 = vpop.f32.mrb[0].mxu0
        %5271 = vmatprep.mubr.bf16.mxu0 %v4831
        %5272 = vmatmul.mubr.bf16.gmra.mrb[0].mxu0 %v4830
        %v5273 = vpop.f32.mrb[0].mxu0
        %v5274 = vadd.f32 %v5177, %v5273
        %v5275 = vpop.f32.mrb[0].mxu0
        %v5276 = vpop.f32.mrb[0].mxu0
        %v5277 = vadd.f32 %v5180, %v5276
        %v5278 = vpop.f32.mrb[0].mxu0
        %5279 = vmatprep.mubr.bf16.mxu0 %v4835
        %5280 = vmatmul.mubr.bf16.gmra.mrb[0].mxu0 %v4834
        %v5281 = vpop.f32.mrb[0].mxu0
        %v5282 = vadd.f32 %v5185, %v5281
        %v5283 = vpop.f32.mrb[0].mxu0
        %v5284 = vpop.f32.mrb[0].mxu0
        %v5285 = vadd.f32 %v5188, %v5284
        %v5286 = vpop.f32.mrb[0].mxu0
        %5287 = vmatprep.mubr.bf16.mxu0 %v4839
        %5288 = vmatmul.mubr.bf16.gmra.mrb[0].mxu0 %v4838
        %v5289 = vpop.f32.mrb[0].mxu0
        %v5290 = vadd.f32 %v5193, %v5289
        %v5291 = vpop.f32.mrb[0].mxu0
        %v5292 = vpop.f32.mrb[0].mxu0
        %v5293 = vadd.f32 %v5196, %v5292
        %v5294 = vpop.f32.mrb[0].mxu0
        %5295 = vdwg.mxu0
        %v5296 = vadd.f32 %v5234, %v3751
        %v5297 = vadd.f32 %v5237, %v3752
        %v5298 = vadd.f32 %v5242, %v3753
        %v5299 = vadd.f32 %v5245, %v3754
        %v5300 = vadd.f32 %v5250, %v3755
        %v5301 = vadd.f32 %v5253, %v3756
        %v5302 = vadd.f32 %v5258, %v3757
        %v5303 = vadd.f32 %v5261, %v3758
        %v5304 = vadd.f32 %v5266, %v3759
        %v5305 = vadd.f32 %v5269, %v3760
        %v5306 = vadd.f32 %v5274, %v3761
        %v5307 = vadd.f32 %v5277, %v3762
        %v5308 = vadd.f32 %v5282, %v3763
        %v5309 = vadd.f32 %v5285, %v3764
        %v5310 = vadd.f32 %v5290, %v3765
        %v5311 = vadd.f32 %v5293, %v3766
        %v5312 = vld [vmem:[%s13] sm:$0x1]
        %v5313 = vunpack.c.l.bf16 %v5312
        %v5314 = vld [vmem:[%s14] sm:$0x1]
        %v5315 = vunpack.c.l.bf16 %v5314
        %5316 = vadd.xlane.f32.xlu0 %v5296
        %v5317 = vpop.xlane.xlu0 %5316
        %5318 = vadd.xlane.f32.xlu0 %v5297
        %v5319 = vpop.xlane.xlu0 %5318
        %5320 = vadd.xlane.f32.xlu0 %v5298
        %v5321 = vpop.xlane.xlu0 %5320
        %5322 = vadd.xlane.f32.xlu0 %v5299
        %v5323 = vpop.xlane.xlu0 %5322
        %5324 = vadd.xlane.f32.xlu0 %v5300
        %v5325 = vpop.xlane.xlu0 %5324
        %5326 = vadd.xlane.f32.xlu0 %v5301
        %v5327 = vpop.xlane.xlu0 %5326
        %5328 = vadd.xlane.f32.xlu0 %v5302
        %v5329 = vpop.xlane.xlu0 %5328
        %5330 = vadd.xlane.f32.xlu0 %v5303
        %v5331 = vpop.xlane.xlu0 %5330
        %5332 = vadd.xlane.f32.xlu0 %v5304
        %v5333 = vpop.xlane.xlu0 %5332
        %5334 = vadd.xlane.f32.xlu0 %v5305
        %v5335 = vpop.xlane.xlu0 %5334
        %5336 = vadd.xlane.f32.xlu0 %v5306
        %v5337 = vpop.xlane.xlu0 %5336
        %5338 = vadd.xlane.f32.xlu0 %v5307
        %v5339 = vpop.xlane.xlu0 %5338
        %5340 = vadd.xlane.f32.xlu0 %v5308
        %v5341 = vpop.xlane.xlu0 %5340
        %5342 = vadd.xlane.f32.xlu0 %v5309
        %v5343 = vpop.xlane.xlu0 %5342
        %5344 = vadd.xlane.f32.xlu0 %v5310
        %v5345 = vpop.xlane.xlu0 %5344
        %5346 = vadd.xlane.f32.xlu0 %v5311
        %v5347 = vpop.xlane.xlu0 %5346
        %v5348 = vmul.f32 %v5317, %v3582
        %v5349 = vmul.f32 %v5319, %v3582
        %v5350 = vmul.f32 %v5321, %v3582
        %v5351 = vmul.f32 %v5323, %v3582
        %v5352 = vmul.f32 %v5325, %v3582
        %v5353 = vmul.f32 %v5327, %v3582
        %v5354 = vmul.f32 %v5329, %v3582
        %v5355 = vmul.f32 %v5331, %v3582
        %v5356 = vmul.f32 %v5333, %v3582
        %v5357 = vmul.f32 %v5335, %v3582
        %v5358 = vmul.f32 %v5337, %v3582
        %v5359 = vmul.f32 %v5339, %v3582
        %v5360 = vmul.f32 %v5341, %v3582
        %v5361 = vmul.f32 %v5343, %v3582
        %v5362 = vmul.f32 %v5345, %v3582
        %v5363 = vmul.f32 %v5347, %v3582
        %v5364 = vsub.f32 %v5296, %v5348
        %v5365 = vsub.f32 %v5297, %v5349
        %v5366 = vsub.f32 %v5298, %v5350
        %v5367 = vsub.f32 %v5299, %v5351
        %v5368 = vsub.f32 %v5300, %v5352
        %v5369 = vsub.f32 %v5301, %v5353
        %v5370 = vsub.f32 %v5302, %v5354
        %v5371 = vsub.f32 %v5303, %v5355
        %v5372 = vsub.f32 %v5304, %v5356
        %v5373 = vsub.f32 %v5305, %v5357
        %v5374 = vsub.f32 %v5306, %v5358
        %v5375 = vsub.f32 %v5307, %v5359
        %v5376 = vsub.f32 %v5308, %v5360
        %v5377 = vsub.f32 %v5309, %v5361
        %v5378 = vsub.f32 %v5310, %v5362
        %v5379 = vsub.f32 %v5311, %v5363
        %v5380 = vmul.f32 %v5364, %v5364
        %v5381 = vmul.f32 %v5365, %v5365
        %v5382 = vmul.f32 %v5366, %v5366
        %v5383 = vmul.f32 %v5367, %v5367
        %v5384 = vmul.f32 %v5368, %v5368
        %v5385 = vmul.f32 %v5369, %v5369
        %v5386 = vmul.f32 %v5370, %v5370
        %v5387 = vmul.f32 %v5371, %v5371
        %v5388 = vmul.f32 %v5372, %v5372
        %v5389 = vmul.f32 %v5373, %v5373
        %v5390 = vmul.f32 %v5374, %v5374
        %v5391 = vmul.f32 %v5375, %v5375
        %v5392 = vmul.f32 %v5376, %v5376
        %v5393 = vmul.f32 %v5377, %v5377
        %v5394 = vmul.f32 %v5378, %v5378
        %v5395 = vmul.f32 %v5379, %v5379
        %5396 = vadd.xlane.f32.xlu0 %v5380
        %v5397 = vpop.xlane.xlu0 %5396
        %5398 = vadd.xlane.f32.xlu0 %v5381
        %v5399 = vpop.xlane.xlu0 %5398
        %5400 = vadd.xlane.f32.xlu0 %v5382
        %v5401 = vpop.xlane.xlu0 %5400
        %5402 = vadd.xlane.f32.xlu0 %v5383
        %v5403 = vpop.xlane.xlu0 %5402
        %5404 = vadd.xlane.f32.xlu0 %v5384
        %v5405 = vpop.xlane.xlu0 %5404
        %5406 = vadd.xlane.f32.xlu0 %v5385
        %v5407 = vpop.xlane.xlu0 %5406
        %5408 = vadd.xlane.f32.xlu0 %v5386
        %v5409 = vpop.xlane.xlu0 %5408
        %5410 = vadd.xlane.f32.xlu0 %v5387
        %v5411 = vpop.xlane.xlu0 %5410
        %5412 = vadd.xlane.f32.xlu0 %v5388
        %v5413 = vpop.xlane.xlu0 %5412
        %5414 = vadd.xlane.f32.xlu0 %v5389
        %v5415 = vpop.xlane.xlu0 %5414
        %5416 = vadd.xlane.f32.xlu0 %v5390
        %v5417 = vpop.xlane.xlu0 %5416
        %5418 = vadd.xlane.f32.xlu0 %v5391
        %v5419 = vpop.xlane.xlu0 %5418
        %5420 = vadd.xlane.f32.xlu0 %v5392
        %v5421 = vpop.xlane.xlu0 %5420
        %5422 = vadd.xlane.f32.xlu0 %v5393
        %v5423 = vpop.xlane.xlu0 %5422
        %5424 = vadd.xlane.f32.xlu0 %v5394
        %v5425 = vpop.xlane.xlu0 %5424
        %5426 = vadd.xlane.f32.xlu0 %v5395
        %v5427 = vpop.xlane.xlu0 %5426
        %v5428 = vmul.f32 %v5397, %v3582
        %v5429 = vmul.f32 %v5399, %v3582
        %v5430 = vmul.f32 %v5401, %v3582
        %v5431 = vmul.f32 %v5403, %v3582
        %v5432 = vmul.f32 %v5405, %v3582
        %v5433 = vmul.f32 %v5407, %v3582
        %v5434 = vmul.f32 %v5409, %v3582
        %v5435 = vmul.f32 %v5411, %v3582
        %v5436 = vmul.f32 %v5413, %v3582
        %v5437 = vmul.f32 %v5415, %v3582
        %v5438 = vmul.f32 %v5417, %v3582
        %v5439 = vmul.f32 %v5419, %v3582
        %v5440 = vmul.f32 %v5421, %v3582
        %v5441 = vmul.f32 %v5423, %v3582
        %v5442 = vmul.f32 %v5425, %v3582
        %v5443 = vmul.f32 %v5427, %v3582
        %v5444 = vadd.f32 %v5428, 1e-12
        %v5445 = vadd.f32 %v5429, 1e-12
        %v5446 = vadd.f32 %v5430, 1e-12
        %v5447 = vadd.f32 %v5431, 1e-12
        %v5448 = vadd.f32 %v5432, 1e-12
        %v5449 = vadd.f32 %v5433, 1e-12
        %v5450 = vadd.f32 %v5434, 1e-12
        %v5451 = vadd.f32 %v5435, 1e-12
        %v5452 = vadd.f32 %v5436, 1e-12
        %v5453 = vadd.f32 %v5437, 1e-12
        %v5454 = vadd.f32 %v5438, 1e-12
        %v5455 = vadd.f32 %v5439, 1e-12
        %v5456 = vadd.f32 %v5440, 1e-12
        %v5457 = vadd.f32 %v5441, 1e-12
        %v5458 = vadd.f32 %v5442, 1e-12
        %v5459 = vadd.f32 %v5443, 1e-12
        %v5460 = vrsqrt.pop %v5444
        %v5461 = vrsqrt.pop %v5445
        %v5462 = vrsqrt.pop %v5446
        %v5463 = vrsqrt.pop %v5447
        %v5464 = vrsqrt.pop %v5448
        %v5465 = vrsqrt.pop %v5449
        %v5466 = vrsqrt.pop %v5450
        %v5467 = vrsqrt.pop %v5451
        %v5468 = vrsqrt.pop %v5452
        %v5469 = vrsqrt.pop %v5453
        %v5470 = vrsqrt.pop %v5454
        %v5471 = vrsqrt.pop %v5455
        %v5472 = vrsqrt.pop %v5456
        %v5473 = vrsqrt.pop %v5457
        %v5474 = vrsqrt.pop %v5458
        %v5475 = vrsqrt.pop %v5459
        %v5476 = vmul.f32 %v5364, %v5460
        %v5477 = vmul.f32 %v5365, %v5461
        %v5478 = vmul.f32 %v5366, %v5462
        %v5479 = vmul.f32 %v5367, %v5463
        %v5480 = vmul.f32 %v5368, %v5464
        %v5481 = vmul.f32 %v5369, %v5465
        %v5482 = vmul.f32 %v5370, %v5466
        %v5483 = vmul.f32 %v5371, %v5467
        %v5484 = vmul.f32 %v5372, %v5468
        %v5485 = vmul.f32 %v5373, %v5469
        %v5486 = vmul.f32 %v5374, %v5470
        %v5487 = vmul.f32 %v5375, %v5471
        %v5488 = vmul.f32 %v5376, %v5472
        %v5489 = vmul.f32 %v5377, %v5473
        %v5490 = vmul.f32 %v5378, %v5474
        %v5491 = vmul.f32 %v5379, %v5475
        %v5492 = vlaneseq
        %v5493 = vshrl.u32 %v5492, 7
        %v5494 = vsub.s32 0, %v5493
        %v5495 = vrot.slane %v5313, %v5494
        %v5496 = vmul.f32 %v5476, %v5495
        %v5497 = vmul.f32 %v5477, %v5495
        %v5498 = vmul.f32 %v5478, %v5495
        %v5499 = vmul.f32 %v5479, %v5495
        %v5500 = vmul.f32 %v5480, %v5495
        %v5501 = vmul.f32 %v5481, %v5495
        %v5502 = vmul.f32 %v5482, %v5495
        %v5503 = vmul.f32 %v5483, %v5495
        %v5504 = vmul.f32 %v5484, %v5495
        %v5505 = vmul.f32 %v5485, %v5495
        %v5506 = vmul.f32 %v5486, %v5495
        %v5507 = vmul.f32 %v5487, %v5495
        %v5508 = vmul.f32 %v5488, %v5495
        %v5509 = vmul.f32 %v5489, %v5495
        %v5510 = vmul.f32 %v5490, %v5495
        %v5511 = vmul.f32 %v5491, %v5495
        %v5512 = vlaneseq
        %v5513 = vshrl.u32 %v5512, 7
        %v5514 = vsub.s32 0, %v5513
        %v5515 = vrot.slane %v5315, %v5514
        %v5516 = vadd.f32 %v5496, %v5515
        %v5517 = vadd.f32 %v5497, %v5515
        %v5518 = vadd.f32 %v5498, %v5515
        %v5519 = vadd.f32 %v5499, %v5515
        %v5520 = vadd.f32 %v5500, %v5515
        %v5521 = vadd.f32 %v5501, %v5515
        %v5522 = vadd.f32 %v5502, %v5515
        %v5523 = vadd.f32 %v5503, %v5515
        %v5524 = vadd.f32 %v5504, %v5515
        %v5525 = vadd.f32 %v5505, %v5515
        %v5526 = vadd.f32 %v5506, %v5515
        %v5527 = vadd.f32 %v5507, %v5515
        %v5528 = vadd.f32 %v5508, %v5515
        %v5529 = vadd.f32 %v5509, %v5515
        %v5530 = vadd.f32 %v5510, %v5515
        %v5531 = vadd.f32 %v5511, %v5515
        %v5532 = vpack.c.bf16 %v5517, %v5516
        %v5533 = vpack.c.bf16 %v5519, %v5518
        %v5534 = vpack.c.bf16 %v5521, %v5520
        %v5535 = vpack.c.bf16 %v5523, %v5522
        %v5536 = vpack.c.bf16 %v5525, %v5524
        %v5537 = vpack.c.bf16 %v5527, %v5526
        %v5538 = vpack.c.bf16 %v5529, %v5528
        %v5539 = vpack.c.bf16 %v5531, %v5530
        %s5540 = scalar_lea.vmem [#allocation8], 192
        %v5541 = vld [vmem:[%s5540] sm:$0xff]
        %v5542 = vld [vmem:[%s5540 + $0x8] sm:$0xf]
        %v5543 = vld [vmem:[%s5540 + $0xc] sm:$0xff]
        %v5544 = vld [vmem:[%s5540 + $0x14] sm:$0xf]
        %v5545 = vld [vmem:[%s5540 + $0x18] sm:$0xff]
        %v5546 = vld [vmem:[%s5540 + $0x20] sm:$0xf]
        %v5547 = vld [vmem:[%s5540 + $0x24] sm:$0xff]
        %v5548 = vld [vmem:[%s5540 + $0x2c] sm:$0xf]
        %v5549 = vld [vmem:[%s5540 + $0x30] sm:$0xff]
        %v5550 = vld [vmem:[%s5540 + $0x38] sm:$0xf]
        %v5551 = vld [vmem:[%s5540 + $0x3c] sm:$0xff]
        %v5552 = vld [vmem:[%s5540 + $0x44] sm:$0xf]
        %v5553 = vld [vmem:[%s5540 + $0x48] sm:$0xff]
        %v5554 = vld [vmem:[%s5540 + $0x50] sm:$0xf]
        %v5555 = vld [vmem:[%s5540 + $0x54] sm:$0xff]
        %v5556 = vld [vmem:[%s5540 + $0x5c] sm:$0xf]
        %v5557 = vld [vmem:[%s5540 + $0x60] sm:$0xff]
        %v5558 = vld [vmem:[%s5540 + $0x68] sm:$0xf]
        %v5559 = vld [vmem:[%s5540 + $0x6c] sm:$0xff]
        %v5560 = vld [vmem:[%s5540 + $0x74] sm:$0xf]
        %v5561 = vld [vmem:[%s5540 + $0x78] sm:$0xff]
        %v5562 = vld [vmem:[%s5540 + $0x80] sm:$0xf]
        %v5563 = vld [vmem:[%s5540 + $0x84] sm:$0xff]
        %v5564 = vld [vmem:[%s5540 + $0x8c] sm:$0xf]
        %v5565 = vld [vmem:[%s5540 + $0x90] sm:$0xff]
        %v5566 = vld [vmem:[%s5540 + $0x98] sm:$0xf]
        %v5567 = vld [vmem:[%s5540 + $0x9c] sm:$0xff]
        %v5568 = vld [vmem:[%s5540 + $0xa4] sm:$0xf]
        %v5569 = vld [vmem:[%s5540 + $0xa8] sm:$0xff]
        %v5570 = vld [vmem:[%s5540 + $0xb0] sm:$0xf]
        %v5571 = vld [vmem:[%s5540 + $0xb4] sm:$0xff]
        %v5572 = vld [vmem:[%s5540 + $0xbc] sm:$0xf]
        %s5573 = scalar_lea.vmem %s4, 3
        %v5574 = vld [vmem:[%s5573] sm:$0x7]
        %v5575 = vunpack.c.l.bf16 %v5574
        %v5577 = vlaneseq
        %v5578 = vshrl.u32 %v5577, 7
        %v5579 = vsub.s32 0, %v5578
        %v5580 = vrot.slane %v5575, %v5579
        %v5581 = vlaneseq
        %v5582 = vshrl.u32 %v5581, 7
        %v5583 = vsub.s32 2, %v5582
        %v5584 = vrot.slane %v5575, %v5583
        %v5585 = vlaneseq
        %v5586 = vshrl.u32 %v5585, 7
        %v5587 = vsub.s32 4, %v5586
        %v5588 = vrot.slane %v5575, %v5587
        %v5592 = vlaneseq
        %v5593 = vshrl.u32 %v5592, 7
        %v5594 = vsub.s32 0, %v5593
        %v5595 = vrot.slane %v5580, %v5594
        %v5596 = vlaneseq
        %v5597 = vshrl.u32 %v5596, 7
        %v5598 = vsub.s32 0, %v5597
        %v5599 = vrot.slane %v5584, %v5598
        %v5600 = vlaneseq
        %v5601 = vshrl.u32 %v5600, 7
        %v5602 = vsub.s32 0, %v5601
        %v5603 = vrot.slane %v5588, %v5602
        %v5636 = vunpack.c.l.b16 %v5541
        %v5637 = vunpack.c.h.b16 %v5541
        %v5638 = vunpack.c.l.b16 %v5542
        %v5639 = vunpack.c.l.b16 %v5543
        %v5640 = vunpack.c.h.b16 %v5543
        %v5641 = vunpack.c.l.b16 %v5544
        %v5642 = vunpack.c.l.b16 %v5545
        %v5643 = vunpack.c.h.b16 %v5545
        %v5644 = vunpack.c.l.b16 %v5546
        %v5645 = vunpack.c.l.b16 %v5547
        %v5646 = vunpack.c.h.b16 %v5547
        %v5647 = vunpack.c.l.b16 %v5548
        %v5648 = vunpack.c.l.b16 %v5549
        %v5649 = vunpack.c.h.b16 %v5549
        %v5650 = vunpack.c.l.b16 %v5550
        %v5651 = vunpack.c.l.b16 %v5551
        %v5652 = vunpack.c.h.b16 %v5551
        %v5653 = vunpack.c.l.b16 %v5552
        %v5654 = vunpack.c.l.b16 %v5553
        %v5655 = vunpack.c.h.b16 %v5553
        %v5656 = vunpack.c.l.b16 %v5554
        %v5657 = vunpack.c.l.b16 %v5555
        %v5658 = vunpack.c.h.b16 %v5555
        %v5659 = vunpack.c.l.b16 %v5556
        %v5660 = vunpack.c.l.b16 %v5557
        %v5661 = vunpack.c.h.b16 %v5557
        %v5662 = vunpack.c.l.b16 %v5558
        %v5663 = vunpack.c.l.b16 %v5559
        %v5664 = vunpack.c.h.b16 %v5559
        %v5665 = vunpack.c.l.b16 %v5560
        %v5666 = vunpack.c.l.b16 %v5561
        %v5667 = vunpack.c.h.b16 %v5561
        %v5668 = vunpack.c.l.b16 %v5562
        %v5669 = vunpack.c.l.b16 %v5563
        %v5670 = vunpack.c.h.b16 %v5563
        %v5671 = vunpack.c.l.b16 %v5564
        %v5672 = vunpack.c.l.b16 %v5565
        %v5673 = vunpack.c.h.b16 %v5565
        %v5674 = vunpack.c.l.b16 %v5566
        %v5675 = vunpack.c.l.b16 %v5567
        %v5676 = vunpack.c.h.b16 %v5567
        %v5677 = vunpack.c.l.b16 %v5568
        %v5678 = vunpack.c.l.b16 %v5569
        %v5679 = vunpack.c.h.b16 %v5569
        %v5680 = vunpack.c.l.b16 %v5570
        %v5681 = vunpack.c.l.b16 %v5571
        %v5682 = vunpack.c.h.b16 %v5571
        %v5683 = vunpack.c.l.b16 %v5572
        %v5684 = vpack.c.b16 %v5639, %v5636
        %v5685 = vpack.c.b16 %v5640, %v5637
        %v5686 = vpack.c.b16 %v5641, %v5638
        %v5687 = vpack.c.b16 %v5645, %v5642
        %v5688 = vpack.c.b16 %v5646, %v5643
        %v5689 = vpack.c.b16 %v5647, %v5644
        %v5690 = vpack.c.b16 %v5651, %v5648
        %v5691 = vpack.c.b16 %v5652, %v5649
        %v5692 = vpack.c.b16 %v5653, %v5650
        %v5693 = vpack.c.b16 %v5657, %v5654
        %v5694 = vpack.c.b16 %v5658, %v5655
        %v5695 = vpack.c.b16 %v5659, %v5656
        %v5696 = vpack.c.b16 %v5663, %v5660
        %v5697 = vpack.c.b16 %v5664, %v5661
        %v5698 = vpack.c.b16 %v5665, %v5662
        %v5699 = vpack.c.b16 %v5669, %v5666
        %v5700 = vpack.c.b16 %v5670, %v5667
        %v5701 = vpack.c.b16 %v5671, %v5668
        %v5702 = vpack.c.b16 %v5675, %v5672
        %v5703 = vpack.c.b16 %v5676, %v5673
        %v5704 = vpack.c.b16 %v5677, %v5674
        %v5705 = vpack.c.b16 %v5681, %v5678
        %v5706 = vpack.c.b16 %v5682, %v5679
        %v5707 = vpack.c.b16 %v5683, %v5680
        %5732 = vmatprep.subr.bf16.mxu0 %v5685
        %5733 = vmatpush1.bf16.msra.mxu0 %v5684
        %5734 = vmatprep.subr.bf16.mxu0 %v5688
        %5735 = vmatpush1.bf16.msra.mxu0 %v5687
        %5736 = vmatprep.subr.bf16.mxu0 %v5691
        %5737 = vmatpush1.bf16.msra.mxu0 %v5690
        %5738 = vmatprep.subr.bf16.mxu0 %v5694
        %5739 = vmatpush1.bf16.msra.mxu0 %v5693
        %5740 = vmatprep.subr.bf16.mxu0 %v5697
        %5741 = vmatpush1.bf16.msra.mxu0 %v5696
        %5742 = vmatprep.subr.bf16.mxu0 %v5700
        %5743 = vmatpush1.bf16.msra.mxu0 %v5699
        %5744 = vmatprep.subr.bf16.mxu0 %v5703
        %5745 = vmatpush1.bf16.msra.mxu0 %v5702
        %5746 = vmatprep.subr.bf16.mxu0 %v5706
        %5747 = vmatpush1.bf16.msra.mxu0 %v5705
        %5748 = vmatprep.subr.bf16.mxu0 0
        %5749 = vmatpush1.bf16.msra.mxu0 0
        %5750 = vmatprep.subr.bf16.mxu0 0
        %5751 = vmatpush1.bf16.msra.mxu0 0
        %5752 = vmatprep.subr.bf16.mxu0 0
        %5753 = vmatpush1.bf16.msra.mxu0 0
        %5754 = vmatprep.subr.bf16.mxu0 0
        %5755 = vmatpush1.bf16.msra.mxu0 0
        %5756 = vmatprep.subr.bf16.mxu0 0
        %5757 = vmatpush1.bf16.msra.mxu0 0
        %5758 = vmatprep.subr.bf16.mxu0 0
        %5759 = vmatpush1.bf16.msra.mxu0 0
        %5760 = vmatprep.subr.bf16.mxu0 0
        %5761 = vmatpush1.bf16.msra.mxu0 0
        %5762 = vmatprep.subr.bf16.mxu0 0
        %5763 = vmatpush1.bf16.msra.mxu0 0
        %5764 = vmatprep.mubr.bf16.mxu0 0
        %5765 = vmatmul.mubr.bf16.gmra.mrb[0].mxu0 %v5532
        %v5766 = vpop.f32.mrb[0].mxu0
        %v5767 = vadd.f32 %v5595, %v5766
        %v5768 = vpop.f32.mrb[0].mxu0
        %v5769 = vadd.f32 %v5599, %v5768
        %v5770 = vpop.f32.mrb[0].mxu0
        %v5771 = vadd.f32 %v5595, %v5770
        %v5772 = vpop.f32.mrb[0].mxu0
        %v5773 = vadd.f32 %v5599, %v5772
        %5774 = vmatprep.mubr.bf16.mxu0 0
        %5775 = vmatmul.mubr.bf16.gmra.mrb[0].mxu0 %v5533
        %v5776 = vpop.f32.mrb[0].mxu0
        %v5777 = vadd.f32 %v5595, %v5776
        %v5778 = vpop.f32.mrb[0].mxu0
        %v5779 = vadd.f32 %v5599, %v5778
        %v5780 = vpop.f32.mrb[0].mxu0
        %v5781 = vadd.f32 %v5595, %v5780
        %v5782 = vpop.f32.mrb[0].mxu0
        %v5783 = vadd.f32 %v5599, %v5782
        %5784 = vmatprep.mubr.bf16.mxu0 0
        %5785 = vmatmul.mubr.bf16.gmra.mrb[0].mxu0 %v5534
        %v5786 = vpop.f32.mrb[0].mxu0
        %v5787 = vadd.f32 %v5595, %v5786
        %v5788 = vpop.f32.mrb[0].mxu0
        %v5789 = vadd.f32 %v5599, %v5788
        %v5790 = vpop.f32.mrb[0].mxu0
        %v5791 = vadd.f32 %v5595, %v5790
        %v5792 = vpop.f32.mrb[0].mxu0
        %v5793 = vadd.f32 %v5599, %v5792
        %5794 = vmatprep.mubr.bf16.mxu0 0
        %5795 = vmatmul.mubr.bf16.gmra.mrb[0].mxu0 %v5535
        %v5796 = vpop.f32.mrb[0].mxu0
        %v5797 = vadd.f32 %v5595, %v5796
        %v5798 = vpop.f32.mrb[0].mxu0
        %v5799 = vadd.f32 %v5599, %v5798
        %v5800 = vpop.f32.mrb[0].mxu0
        %v5801 = vadd.f32 %v5595, %v5800
        %v5802 = vpop.f32.mrb[0].mxu0
        %v5803 = vadd.f32 %v5599, %v5802
        %5804 = vmatprep.mubr.bf16.mxu0 0
        %5805 = vmatmul.mubr.bf16.gmra.mrb[0].mxu0 %v5536
        %v5806 = vpop.f32.mrb[0].mxu0
        %v5807 = vadd.f32 %v5595, %v5806
        %v5808 = vpop.f32.mrb[0].mxu0
        %v5809 = vadd.f32 %v5599, %v5808
        %v5810 = vpop.f32.mrb[0].mxu0
        %v5811 = vadd.f32 %v5595, %v5810
        %v5812 = vpop.f32.mrb[0].mxu0
        %v5813 = vadd.f32 %v5599, %v5812
        %5814 = vmatprep.mubr.bf16.mxu0 0
        %5815 = vmatmul.mubr.bf16.gmra.mrb[0].mxu0 %v5537
        %v5816 = vpop.f32.mrb[0].mxu0
        %v5817 = vadd.f32 %v5595, %v5816
        %v5818 = vpop.f32.mrb[0].mxu0
        %v5819 = vadd.f32 %v5599, %v5818
        %v5820 = vpop.f32.mrb[0].mxu0
        %v5821 = vadd.f32 %v5595, %v5820
        %v5822 = vpop.f32.mrb[0].mxu0
        %v5823 = vadd.f32 %v5599, %v5822
        %5824 = vmatprep.mubr.bf16.mxu0 0
        %5825 = vmatmul.mubr.bf16.gmra.mrb[0].mxu0 %v5538
        %v5826 = vpop.f32.mrb[0].mxu0
        %v5827 = vadd.f32 %v5595, %v5826
        %v5828 = vpop.f32.mrb[0].mxu0
        %v5829 = vadd.f32 %v5599, %v5828
        %v5830 = vpop.f32.mrb[0].mxu0
        %v5831 = vadd.f32 %v5595, %v5830
        %v5832 = vpop.f32.mrb[0].mxu0
        %v5833 = vadd.f32 %v5599, %v5832
        %5834 = vmatprep.mubr.bf16.mxu0 0
        %5835 = vmatmul.mubr.bf16.gmra.mrb[0].mxu0 %v5539
        %v5836 = vpop.f32.mrb[0].mxu0
        %v5837 = vadd.f32 %v5595, %v5836
        %v5838 = vpop.f32.mrb[0].mxu0
        %v5839 = vadd.f32 %v5599, %v5838
        %v5840 = vpop.f32.mrb[0].mxu0
        %v5841 = vadd.f32 %v5595, %v5840
        %v5842 = vpop.f32.mrb[0].mxu0
        %v5843 = vadd.f32 %v5599, %v5842
        %5844 = vdwg.mxu0
        %5845 = vmatprep.subr.bf16.mxu0 0
        %5846 = vmatpush1.bf16.msra.mxu0 %v5686
        %5847 = vmatprep.subr.bf16.mxu0 0
        %5848 = vmatpush1.bf16.msra.mxu0 %v5689
        %5849 = vmatprep.subr.bf16.mxu0 0
        %5850 = vmatpush1.bf16.msra.mxu0 %v5692
        %5851 = vmatprep.subr.bf16.mxu0 0
        %5852 = vmatpush1.bf16.msra.mxu0 %v5695
        %5853 = vmatprep.subr.bf16.mxu0 0
        %5854 = vmatpush1.bf16.msra.mxu0 %v5698
        %5855 = vmatprep.subr.bf16.mxu0 0
        %5856 = vmatpush1.bf16.msra.mxu0 %v5701
        %5857 = vmatprep.subr.bf16.mxu0 0
        %5858 = vmatpush1.bf16.msra.mxu0 %v5704
        %5859 = vmatprep.subr.bf16.mxu0 0
        %5860 = vmatpush1.bf16.msra.mxu0 %v5707
        %5861 = vmatprep.subr.bf16.mxu0 0
        %5862 = vmatpush1.bf16.msra.mxu0 0
        %5863 = vmatprep.subr.bf16.mxu0 0
        %5864 = vmatpush1.bf16.msra.mxu0 0
        %5865 = vmatprep.subr.bf16.mxu0 0
        %5866 = vmatpush1.bf16.msra.mxu0 0
        %5867 = vmatprep.subr.bf16.mxu0 0
        %5868 = vmatpush1.bf16.msra.mxu0 0
        %5869 = vmatprep.subr.bf16.mxu0 0
        %5870 = vmatpush1.bf16.msra.mxu0 0
        %5871 = vmatprep.subr.bf16.mxu0 0
        %5872 = vmatpush1.bf16.msra.mxu0 0
        %5873 = vmatprep.subr.bf16.mxu0 0
        %5874 = vmatpush1.bf16.msra.mxu0 0
        %5875 = vmatprep.subr.bf16.mxu0 0
        %5876 = vmatpush1.bf16.msra.mxu0 0
        %5877 = vmatprep.mubr.bf16.mxu0 0
        %5878 = vmatmul.mubr.bf16.gmra.mrb[0].mxu0 %v5532
        %v5879 = vpop.f32.mrb[0].mxu0
        %v5880 = vadd.f32 %v5603, %v5879
        %v5881 = vpop.f32.mrb[0].mxu0
        %v5882 = vpop.f32.mrb[0].mxu0
        %v5883 = vadd.f32 %v5603, %v5882
        %v5884 = vpop.f32.mrb[0].mxu0
        %5885 = vmatprep.mubr.bf16.mxu0 0
        %5886 = vmatmul.mubr.bf16.gmra.mrb[0].mxu0 %v5533
        %v5887 = vpop.f32.mrb[0].mxu0
        %v5888 = vadd.f32 %v5603, %v5887
        %v5889 = vpop.f32.mrb[0].mxu0
        %v5890 = vpop.f32.mrb[0].mxu0
        %v5891 = vadd.f32 %v5603, %v5890
        %v5892 = vpop.f32.mrb[0].mxu0
        %5893 = vmatprep.mubr.bf16.mxu0 0
        %5894 = vmatmul.mubr.bf16.gmra.mrb[0].mxu0 %v5534
        %v5895 = vpop.f32.mrb[0].mxu0
        %v5896 = vadd.f32 %v5603, %v5895
        %v5897 = vpop.f32.mrb[0].mxu0
        %v5898 = vpop.f32.mrb[0].mxu0
        %v5899 = vadd.f32 %v5603, %v5898
        %v5900 = vpop.f32.mrb[0].mxu0
        %5901 = vmatprep.mubr.bf16.mxu0 0
        %5902 = vmatmul.mubr.bf16.gmra.mrb[0].mxu0 %v5535
        %v5903 = vpop.f32.mrb[0].mxu0
        %v5904 = vadd.f32 %v5603, %v5903
        %v5905 = vpop.f32.mrb[0].mxu0
        %v5906 = vpop.f32.mrb[0].mxu0
        %v5907 = vadd.f32 %v5603, %v5906
        %v5908 = vpop.f32.mrb[0].mxu0
        %5909 = vmatprep.mubr.bf16.mxu0 0
        %5910 = vmatmul.mubr.bf16.gmra.mrb[0].mxu0 %v5536
        %v5911 = vpop.f32.mrb[0].mxu0
        %v5912 = vadd.f32 %v5603, %v5911
        %v5913 = vpop.f32.mrb[0].mxu0
        %v5914 = vpop.f32.mrb[0].mxu0
        %v5915 = vadd.f32 %v5603, %v5914
        %v5916 = vpop.f32.mrb[0].mxu0
        %5917 = vmatprep.mubr.bf16.mxu0 0
        %5918 = vmatmul.mubr.bf16.gmra.mrb[0].mxu0 %v5537
        %v5919 = vpop.f32.mrb[0].mxu0
        %v5920 = vadd.f32 %v5603, %v5919
        %v5921 = vpop.f32.mrb[0].mxu0
        %v5922 = vpop.f32.mrb[0].mxu0
        %v5923 = vadd.f32 %v5603, %v5922
        %v5924 = vpop.f32.mrb[0].mxu0
        %5925 = vmatprep.mubr.bf16.mxu0 0
        %5926 = vmatmul.mubr.bf16.gmra.mrb[0].mxu0 %v5538
        %v5927 = vpop.f32.mrb[0].mxu0
        %v5928 = vadd.f32 %v5603, %v5927
        %v5929 = vpop.f32.mrb[0].mxu0
        %v5930 = vpop.f32.mrb[0].mxu0
        %v5931 = vadd.f32 %v5603, %v5930
        %v5932 = vpop.f32.mrb[0].mxu0
        %5933 = vmatprep.mubr.bf16.mxu0 0
        %5934 = vmatmul.mubr.bf16.gmra.mrb[0].mxu0 %v5539
        %v5935 = vpop.f32.mrb[0].mxu0
        %v5936 = vadd.f32 %v5603, %v5935
        %v5937 = vpop.f32.mrb[0].mxu0
        %v5938 = vpop.f32.mrb[0].mxu0
        %v5939 = vadd.f32 %v5603, %v5938
        %v5940 = vpop.f32.mrb[0].mxu0
        %5941 = vdwg.mxu0
        %v5942 = vpack.c.bf16 %v5771, %v5767
        %v5943 = vpack.c.bf16 %v5773, %v5769
        %v5944 = vpack.c.bf16 %v5883, %v5880
        %v5945 = vpack.c.bf16 %v5781, %v5777
        %v5946 = vpack.c.bf16 %v5783, %v5779
        %v5947 = vpack.c.bf16 %v5891, %v5888
        %v5948 = vpack.c.bf16 %v5791, %v5787
        %v5949 = vpack.c.bf16 %v5793, %v5789
        %v5950 = vpack.c.bf16 %v5899, %v5896
        %v5951 = vpack.c.bf16 %v5801, %v5797
        %v5952 = vpack.c.bf16 %v5803, %v5799
        %v5953 = vpack.c.bf16 %v5907, %v5904
        %v5954 = vpack.c.bf16 %v5811, %v5807
        %v5955 = vpack.c.bf16 %v5813, %v5809
        %v5956 = vpack.c.bf16 %v5915, %v5912
        %v5957 = vpack.c.bf16 %v5821, %v5817
        %v5958 = vpack.c.bf16 %v5823, %v5819
        %v5959 = vpack.c.bf16 %v5923, %v5920
        %v5960 = vpack.c.bf16 %v5831, %v5827
        %v5961 = vpack.c.bf16 %v5833, %v5829
        %v5962 = vpack.c.bf16 %v5931, %v5928
        %v5963 = vpack.c.bf16 %v5841, %v5837
        %v5964 = vpack.c.bf16 %v5843, %v5839
        %v5965 = vpack.c.bf16 %v5939, %v5936
        %v5966 = vmul.bf16 %v5942, 1043676725
        %v5967 = vmul.bf16 %v5945, 1043676725
        %v5968 = vmul.bf16 %v5948, 1043676725
        %v5969 = vmul.bf16 %v5951, 1043676725
        %v5970 = vmul.bf16 %v5954, 1043676725
        %v5971 = vmul.bf16 %v5957, 1043676725
        %v5972 = vmul.bf16 %v5960, 1043676725
        %v5973 = vmul.bf16 %v5963, 1043676725
        %v5975 = vsel %vm1423, %v5966, 0
        %v5978 = vsel %vm1423, %v5967, 0
        %v5981 = vsel %vm1423, %v5968, 0
        %v5984 = vsel %vm1423, %v5969, 0
        %v5987 = vsel %vm1423, %v5970, 0
        %v5990 = vsel %vm1423, %v5971, 0
        %v5993 = vsel %vm1423, %v5972, 0
        %v5996 = vsel %vm1423, %v5973, 0
        %v5999 = vsel %vm1423, %v5943, 0
        %v6002 = vsel %vm1423, %v5946, 0
        %v6005 = vsel %vm1423, %v5949, 0
        %v6008 = vsel %vm1423, %v5952, 0
        %v6011 = vsel %vm1423, %v5955, 0
        %v6014 = vsel %vm1423, %v5958, 0
        %v6017 = vsel %vm1423, %v5961, 0
        %v6020 = vsel %vm1423, %v5964, 0
        %6022 = vmatprep.subr.bf16.mxu0 0
        %6023 = vmatpush1.bf16.xpose.msra.mxu0 %v5999
        %6024 = vmatprep.subr.bf16.mxu0 0
        %6025 = vmatpush1.bf16.xpose.msra.mxu0 %v6002
        %6026 = vmatprep.subr.bf16.mxu0 0
        %6027 = vmatpush1.bf16.xpose.msra.mxu0 %v6005
        %6028 = vmatprep.subr.bf16.mxu0 0
        %6029 = vmatpush1.bf16.xpose.msra.mxu0 %v6008
        %6030 = vmatprep.subr.bf16.mxu0 0
        %6031 = vmatpush1.bf16.xpose.msra.mxu0 %v6011
        %6032 = vmatprep.subr.bf16.mxu0 0
        %6033 = vmatpush1.bf16.xpose.msra.mxu0 %v6014
        %6034 = vmatprep.subr.bf16.mxu0 0
        %6035 = vmatpush1.bf16.xpose.msra.mxu0 %v6017
        %6036 = vmatprep.subr.bf16.mxu0 0
        %6037 = vmatpush1.bf16.xpose.msra.mxu0 %v6020
        %6038 = vmatprep.subr.bf16.mxu0 0
        %6039 = vmatpush1.bf16.xpose.msra.mxu0 0
        %6040 = vmatprep.subr.bf16.mxu0 0
        %6041 = vmatpush1.bf16.xpose.msra.mxu0 0
        %6042 = vmatprep.subr.bf16.mxu0 0
        %6043 = vmatpush1.bf16.xpose.msra.mxu0 0
        %6044 = vmatprep.subr.bf16.mxu0 0
        %6045 = vmatpush1.bf16.xpose.msra.mxu0 0
        %6046 = vmatprep.subr.bf16.mxu0 0
        %6047 = vmatpush1.bf16.xpose.msra.mxu0 0
        %6048 = vmatprep.subr.bf16.mxu0 0
        %6049 = vmatpush1.bf16.xpose.msra.mxu0 0
        %6050 = vmatprep.subr.bf16.mxu0 0
        %6051 = vmatpush1.bf16.xpose.msra.mxu0 0
        %6052 = vmatprep.subr.bf16.mxu0 0
        %6053 = vmatpush1.bf16.xpose.msra.mxu0 0
        %6054 = vmatprep.mubr.bf16.mxu0 0
        %6055 = vmatmul.mubr.bf16.gmra.mrb[0].mxu0 %v5975
        %v6056 = vpop.f32.mrb[0].mxu0
        %v6057 = vadd.f32 0.0, %v6056
        %v6058 = vpop.f32.mrb[0].mxu0
        %v6059 = vpop.f32.mrb[0].mxu0
        %v6060 = vadd.f32 0.0, %v6059
        %v6061 = vpop.f32.mrb[0].mxu0
        %6062 = vmatprep.mubr.bf16.mxu0 0
        %6063 = vmatmul.mubr.bf16.gmra.mrb[0].mxu0 %v5978
        %v6064 = vpop.f32.mrb[0].mxu0
        %v6065 = vadd.f32 0.0, %v6064
        %v6066 = vpop.f32.mrb[0].mxu0
        %v6067 = vpop.f32.mrb[0].mxu0
        %v6068 = vadd.f32 0.0, %v6067
        %v6069 = vpop.f32.mrb[0].mxu0
        %6070 = vmatprep.mubr.bf16.mxu0 0
        %6071 = vmatmul.mubr.bf16.gmra.mrb[0].mxu0 %v5981
        %v6072 = vpop.f32.mrb[0].mxu0
        %v6073 = vadd.f32 0.0, %v6072
        %v6074 = vpop.f32.mrb[0].mxu0
        %v6075 = vpop.f32.mrb[0].mxu0
        %v6076 = vadd.f32 0.0, %v6075
        %v6077 = vpop.f32.mrb[0].mxu0
        %6078 = vmatprep.mubr.bf16.mxu0 0
        %6079 = vmatmul.mubr.bf16.gmra.mrb[0].mxu0 %v5984
        %v6080 = vpop.f32.mrb[0].mxu0
        %v6081 = vadd.f32 0.0, %v6080
        %v6082 = vpop.f32.mrb[0].mxu0
        %v6083 = vpop.f32.mrb[0].mxu0
        %v6084 = vadd.f32 0.0, %v6083
        %v6085 = vpop.f32.mrb[0].mxu0
        %6086 = vmatprep.mubr.bf16.mxu0 0
        %6087 = vmatmul.mubr.bf16.gmra.mrb[0].mxu0 %v5987
        %v6088 = vpop.f32.mrb[0].mxu0
        %v6089 = vadd.f32 0.0, %v6088
        %v6090 = vpop.f32.mrb[0].mxu0
        %v6091 = vpop.f32.mrb[0].mxu0
        %v6092 = vadd.f32 0.0, %v6091
        %v6093 = vpop.f32.mrb[0].mxu0
        %6094 = vmatprep.mubr.bf16.mxu0 0
        %6095 = vmatmul.mubr.bf16.gmra.mrb[0].mxu0 %v5990
        %v6096 = vpop.f32.mrb[0].mxu0
        %v6097 = vadd.f32 0.0, %v6096
        %v6098 = vpop.f32.mrb[0].mxu0
        %v6099 = vpop.f32.mrb[0].mxu0
        %v6100 = vadd.f32 0.0, %v6099
        %v6101 = vpop.f32.mrb[0].mxu0
        %6102 = vmatprep.mubr.bf16.mxu0 0
        %6103 = vmatmul.mubr.bf16.gmra.mrb[0].mxu0 %v5993
        %v6104 = vpop.f32.mrb[0].mxu0
        %v6105 = vadd.f32 0.0, %v6104
        %v6106 = vpop.f32.mrb[0].mxu0
        %v6107 = vpop.f32.mrb[0].mxu0
        %v6108 = vadd.f32 0.0, %v6107
        %v6109 = vpop.f32.mrb[0].mxu0
        %6110 = vmatprep.mubr.bf16.mxu0 0
        %6111 = vmatmul.mubr.bf16.gmra.mrb[0].mxu0 %v5996
        %v6112 = vpop.f32.mrb[0].mxu0
        %v6113 = vadd.f32 0.0, %v6112
        %v6114 = vpop.f32.mrb[0].mxu0
        %v6115 = vpop.f32.mrb[0].mxu0
        %v6116 = vadd.f32 0.0, %v6115
        %v6117 = vpop.f32.mrb[0].mxu0
        %6118 = vdwg.mxu0
        %6119 = vmax.xlane.f32.xlu0 %v6057
        %v6120 = vpop.xlane.xlu0 %6119
        %6121 = vmax.xlane.f32.xlu0 %v6060
        %v6122 = vpop.xlane.xlu0 %6121
        %6123 = vmax.xlane.f32.xlu0 %v6065
        %v6124 = vpop.xlane.xlu0 %6123
        %6125 = vmax.xlane.f32.xlu0 %v6068
        %v6126 = vpop.xlane.xlu0 %6125
        %6127 = vmax.xlane.f32.xlu0 %v6073
        %v6128 = vpop.xlane.xlu0 %6127
        %6129 = vmax.xlane.f32.xlu0 %v6076
        %v6130 = vpop.xlane.xlu0 %6129
        %6131 = vmax.xlane.f32.xlu0 %v6081
        %v6132 = vpop.xlane.xlu0 %6131
        %6133 = vmax.xlane.f32.xlu0 %v6084
        %v6134 = vpop.xlane.xlu0 %6133
        %6135 = vmax.xlane.f32.xlu0 %v6089
        %v6136 = vpop.xlane.xlu0 %6135
        %6137 = vmax.xlane.f32.xlu0 %v6092
        %v6138 = vpop.xlane.xlu0 %6137
        %6139 = vmax.xlane.f32.xlu0 %v6097
        %v6140 = vpop.xlane.xlu0 %6139
        %6141 = vmax.xlane.f32.xlu0 %v6100
        %v6142 = vpop.xlane.xlu0 %6141
        %6143 = vmax.xlane.f32.xlu0 %v6105
        %v6144 = vpop.xlane.xlu0 %6143
        %6145 = vmax.xlane.f32.xlu0 %v6108
        %v6146 = vpop.xlane.xlu0 %6145
        %6147 = vmax.xlane.f32.xlu0 %v6113
        %v6148 = vpop.xlane.xlu0 %6147
        %6149 = vmax.xlane.f32.xlu0 %v6116
        %v6150 = vpop.xlane.xlu0 %6149
        %v6151 = vsub.f32 %v6057, %v6120
        %v6152 = vsub.f32 %v6060, %v6122
        %v6153 = vsub.f32 %v6065, %v6124
        %v6154 = vsub.f32 %v6068, %v6126
        %v6155 = vsub.f32 %v6073, %v6128
        %v6156 = vsub.f32 %v6076, %v6130
        %v6157 = vsub.f32 %v6081, %v6132
        %v6158 = vsub.f32 %v6084, %v6134
        %v6159 = vsub.f32 %v6089, %v6136
        %v6160 = vsub.f32 %v6092, %v6138
        %v6161 = vsub.f32 %v6097, %v6140
        %v6162 = vsub.f32 %v6100, %v6142
        %v6163 = vsub.f32 %v6105, %v6144
        %v6164 = vsub.f32 %v6108, %v6146
        %v6165 = vsub.f32 %v6113, %v6148
        %v6166 = vsub.f32 %v6116, %v6150
        %v6167 = vmul.f32 %v6151, 1.442695
        %v6168 = vpow.pop %v6167
        %v6169 = vmul.f32 %v6152, 1.442695
        %v6170 = vpow.pop %v6169
        %v6171 = vmul.f32 %v6153, 1.442695
        %v6172 = vpow.pop %v6171
        %v6173 = vmul.f32 %v6154, 1.442695
        %v6174 = vpow.pop %v6173
        %v6175 = vmul.f32 %v6155, 1.442695
        %v6176 = vpow.pop %v6175
        %v6177 = vmul.f32 %v6156, 1.442695
        %v6178 = vpow.pop %v6177
        %v6179 = vmul.f32 %v6157, 1.442695
        %v6180 = vpow.pop %v6179
        %v6181 = vmul.f32 %v6158, 1.442695
        %v6182 = vpow.pop %v6181
        %v6183 = vmul.f32 %v6159, 1.442695
        %v6184 = vpow.pop %v6183
        %v6185 = vmul.f32 %v6160, 1.442695
        %v6186 = vpow.pop %v6185
        %v6187 = vmul.f32 %v6161, 1.442695
        %v6188 = vpow.pop %v6187
        %v6189 = vmul.f32 %v6162, 1.442695
        %v6190 = vpow.pop %v6189
        %v6191 = vmul.f32 %v6163, 1.442695
        %v6192 = vpow.pop %v6191
        %v6193 = vmul.f32 %v6164, 1.442695
        %v6194 = vpow.pop %v6193
        %v6195 = vmul.f32 %v6165, 1.442695
        %v6196 = vpow.pop %v6195
        %v6197 = vmul.f32 %v6166, 1.442695
        %v6198 = vpow.pop %v6197
        %6199 = vadd.xlane.f32.xlu0 %v6168
        %v6200 = vpop.xlane.xlu0 %6199
        %6201 = vadd.xlane.f32.xlu0 %v6170
        %v6202 = vpop.xlane.xlu0 %6201
        %6203 = vadd.xlane.f32.xlu0 %v6172
        %v6204 = vpop.xlane.xlu0 %6203
        %6205 = vadd.xlane.f32.xlu0 %v6174
        %v6206 = vpop.xlane.xlu0 %6205
        %6207 = vadd.xlane.f32.xlu0 %v6176
        %v6208 = vpop.xlane.xlu0 %6207
        %6209 = vadd.xlane.f32.xlu0 %v6178
        %v6210 = vpop.xlane.xlu0 %6209
        %6211 = vadd.xlane.f32.xlu0 %v6180
        %v6212 = vpop.xlane.xlu0 %6211
        %6213 = vadd.xlane.f32.xlu0 %v6182
        %v6214 = vpop.xlane.xlu0 %6213
        %6215 = vadd.xlane.f32.xlu0 %v6184
        %v6216 = vpop.xlane.xlu0 %6215
        %6217 = vadd.xlane.f32.xlu0 %v6186
        %v6218 = vpop.xlane.xlu0 %6217
        %6219 = vadd.xlane.f32.xlu0 %v6188
        %v6220 = vpop.xlane.xlu0 %6219
        %6221 = vadd.xlane.f32.xlu0 %v6190
        %v6222 = vpop.xlane.xlu0 %6221
        %6223 = vadd.xlane.f32.xlu0 %v6192
        %v6224 = vpop.xlane.xlu0 %6223
        %6225 = vadd.xlane.f32.xlu0 %v6194
        %v6226 = vpop.xlane.xlu0 %6225
        %6227 = vadd.xlane.f32.xlu0 %v6196
        %v6228 = vpop.xlane.xlu0 %6227
        %6229 = vadd.xlane.f32.xlu0 %v6198
        %v6230 = vpop.xlane.xlu0 %6229
        %v6231 = vrcp.pop %v6200
        %v6232 = vrcp.pop %v6202
        %v6233 = vrcp.pop %v6204
        %v6234 = vrcp.pop %v6206
        %v6235 = vrcp.pop %v6208
        %v6236 = vrcp.pop %v6210
        %v6237 = vrcp.pop %v6212
        %v6238 = vrcp.pop %v6214
        %v6239 = vrcp.pop %v6216
        %v6240 = vrcp.pop %v6218
        %v6241 = vrcp.pop %v6220
        %v6242 = vrcp.pop %v6222
        %v6243 = vrcp.pop %v6224
        %v6244 = vrcp.pop %v6226
        %v6245 = vrcp.pop %v6228
        %v6246 = vrcp.pop %v6230
        %v6247 = vmul.f32 %v6168, %v6231
        %v6248 = vmul.f32 %v6170, %v6232
        %v6249 = vmul.f32 %v6172, %v6233
        %v6250 = vmul.f32 %v6174, %v6234
        %v6251 = vmul.f32 %v6176, %v6235
        %v6252 = vmul.f32 %v6178, %v6236
        %v6253 = vmul.f32 %v6180, %v6237
        %v6254 = vmul.f32 %v6182, %v6238
        %v6255 = vmul.f32 %v6184, %v6239
        %v6256 = vmul.f32 %v6186, %v6240
        %v6257 = vmul.f32 %v6188, %v6241
        %v6258 = vmul.f32 %v6190, %v6242
        %v6259 = vmul.f32 %v6192, %v6243
        %v6260 = vmul.f32 %v6194, %v6244
        %v6261 = vmul.f32 %v6196, %v6245
        %v6262 = vmul.f32 %v6198, %v6246
        %v6263 = vpack.c.bf16 %v6248, %v6247
        %v6264 = vpack.c.bf16 %v6250, %v6249
        %v6265 = vpack.c.bf16 %v6252, %v6251
        %v6266 = vpack.c.bf16 %v6254, %v6253
        %v6267 = vpack.c.bf16 %v6256, %v6255
        %v6268 = vpack.c.bf16 %v6258, %v6257
        %v6269 = vpack.c.bf16 %v6260, %v6259
        %v6270 = vpack.c.bf16 %v6262, %v6261
        %6271 = vmatprep.subr.bf16.mxu0 0
        %6272 = vmatpush1.bf16.msra.mxu0 %v5944
        %6273 = vmatprep.subr.bf16.mxu0 0
        %6274 = vmatpush1.bf16.msra.mxu0 %v5947
        %6275 = vmatprep.subr.bf16.mxu0 0
        %6276 = vmatpush1.bf16.msra.mxu0 %v5950
        %6277 = vmatprep.subr.bf16.mxu0 0
        %6278 = vmatpush1.bf16.msra.mxu0 %v5953
        %6279 = vmatprep.subr.bf16.mxu0 0
        %6280 = vmatpush1.bf16.msra.mxu0 %v5956
        %6281 = vmatprep.subr.bf16.mxu0 0
        %6282 = vmatpush1.bf16.msra.mxu0 %v5959
        %6283 = vmatprep.subr.bf16.mxu0 0
        %6284 = vmatpush1.bf16.msra.mxu0 %v5962
        %6285 = vmatprep.subr.bf16.mxu0 0
        %6286 = vmatpush1.bf16.msra.mxu0 %v5965
        %6287 = vmatprep.subr.bf16.mxu0 0
        %6288 = vmatpush1.bf16.msra.mxu0 0
        %6289 = vmatprep.subr.bf16.mxu0 0
        %6290 = vmatpush1.bf16.msra.mxu0 0
        %6291 = vmatprep.subr.bf16.mxu0 0
        %6292 = vmatpush1.bf16.msra.mxu0 0
        %6293 = vmatprep.subr.bf16.mxu0 0
        %6294 = vmatpush1.bf16.msra.mxu0 0
        %6295 = vmatprep.subr.bf16.mxu0 0
        %6296 = vmatpush1.bf16.msra.mxu0 0
        %6297 = vmatprep.subr.bf16.mxu0 0
        %6298 = vmatpush1.bf16.msra.mxu0 0
        %6299 = vmatprep.subr.bf16.mxu0 0
        %6300 = vmatpush1.bf16.msra.mxu0 0
        %6301 = vmatprep.subr.bf16.mxu0 0
        %6302 = vmatpush1.bf16.msra.mxu0 0
        %6303 = vmatprep.mubr.bf16.mxu0 0
        %6304 = vmatmul.mubr.bf16.gmra.mrb[0].mxu0 %v6263
        %v6305 = vpop.f32.mrb[0].mxu0
        %v6306 = vadd.f32 0.0, %v6305
        %v6307 = vpop.f32.mrb[0].mxu0
        %v6308 = vpop.f32.mrb[0].mxu0
        %v6309 = vadd.f32 0.0, %v6308
        %v6310 = vpop.f32.mrb[0].mxu0
        %6311 = vmatprep.mubr.bf16.mxu0 0
        %6312 = vmatmul.mubr.bf16.gmra.mrb[0].mxu0 %v6264
        %v6313 = vpop.f32.mrb[0].mxu0
        %v6314 = vadd.f32 0.0, %v6313
        %v6315 = vpop.f32.mrb[0].mxu0
        %v6316 = vpop.f32.mrb[0].mxu0
        %v6317 = vadd.f32 0.0, %v6316
        %v6318 = vpop.f32.mrb[0].mxu0
        %6319 = vmatprep.mubr.bf16.mxu0 0
        %6320 = vmatmul.mubr.bf16.gmra.mrb[0].mxu0 %v6265
        %v6321 = vpop.f32.mrb[0].mxu0
        %v6322 = vadd.f32 0.0, %v6321
        %v6323 = vpop.f32.mrb[0].mxu0
        %v6324 = vpop.f32.mrb[0].mxu0
        %v6325 = vadd.f32 0.0, %v6324
        %v6326 = vpop.f32.mrb[0].mxu0
        %6327 = vmatprep.mubr.bf16.mxu0 0
        %6328 = vmatmul.mubr.bf16.gmra.mrb[0].mxu0 %v6266
        %v6329 = vpop.f32.mrb[0].mxu0
        %v6330 = vadd.f32 0.0, %v6329
        %v6331 = vpop.f32.mrb[0].mxu0
        %v6332 = vpop.f32.mrb[0].mxu0
        %v6333 = vadd.f32 0.0, %v6332
        %v6334 = vpop.f32.mrb[0].mxu0
        %6335 = vmatprep.mubr.bf16.mxu0 0
        %6336 = vmatmul.mubr.bf16.gmra.mrb[0].mxu0 %v6267
        %v6337 = vpop.f32.mrb[0].mxu0
        %v6338 = vadd.f32 0.0, %v6337
        %v6339 = vpop.f32.mrb[0].mxu0
        %v6340 = vpop.f32.mrb[0].mxu0
        %v6341 = vadd.f32 0.0, %v6340
        %v6342 = vpop.f32.mrb[0].mxu0
        %6343 = vmatprep.mubr.bf16.mxu0 0
        %6344 = vmatmul.mubr.bf16.gmra.mrb[0].mxu0 %v6268
        %v6345 = vpop.f32.mrb[0].mxu0
        %v6346 = vadd.f32 0.0, %v6345
        %v6347 = vpop.f32.mrb[0].mxu0
        %v6348 = vpop.f32.mrb[0].mxu0
        %v6349 = vadd.f32 0.0, %v6348
        %v6350 = vpop.f32.mrb[0].mxu0
        %6351 = vmatprep.mubr.bf16.mxu0 0
        %6352 = vmatmul.mubr.bf16.gmra.mrb[0].mxu0 %v6269
        %v6353 = vpop.f32.mrb[0].mxu0
        %v6354 = vadd.f32 0.0, %v6353
        %v6355 = vpop.f32.mrb[0].mxu0
        %v6356 = vpop.f32.mrb[0].mxu0
        %v6357 = vadd.f32 0.0, %v6356
        %v6358 = vpop.f32.mrb[0].mxu0
        %6359 = vmatprep.mubr.bf16.mxu0 0
        %6360 = vmatmul.mubr.bf16.gmra.mrb[0].mxu0 %v6270
        %v6361 = vpop.f32.mrb[0].mxu0
        %v6362 = vadd.f32 0.0, %v6361
        %v6363 = vpop.f32.mrb[0].mxu0
        %v6364 = vpop.f32.mrb[0].mxu0
        %v6365 = vadd.f32 0.0, %v6364
        %v6366 = vpop.f32.mrb[0].mxu0
        %6367 = vdwg.mxu0
        %v6368 = vpack.c.bf16 %v6309, %v6306
        %v6369 = vpack.c.bf16 %v6317, %v6314
        %v6370 = vpack.c.bf16 %v6325, %v6322
        %v6371 = vpack.c.bf16 %v6333, %v6330
        %v6372 = vpack.c.bf16 %v6341, %v6338
        %v6373 = vpack.c.bf16 %v6349, %v6346
        %v6374 = vpack.c.bf16 %v6357, %v6354
        %v6375 = vpack.c.bf16 %v6365, %v6362
        %6376 = vst.msk [vmem:[#allocation2] sm:$0xff] %vm1423, %v6368
        %6377 = vst.msk [vmem:[#allocation2 + $0x8] sm:$0xff] %vm1423, %v6369
        %6378 = vst.msk [vmem:[#allocation2 + $0x10] sm:$0xff] %vm1423, %v6370
        %6379 = vst.msk [vmem:[#allocation2 + $0x18] sm:$0xff] %vm1423, %v6371
        %6380 = vst.msk [vmem:[#allocation2 + $0x20] sm:$0xff] %vm1423, %v6372
        %6381 = vst.msk [vmem:[#allocation2 + $0x28] sm:$0xff] %vm1423, %v6373
        %6382 = vst.msk [vmem:[#allocation2 + $0x30] sm:$0xff] %vm1423, %v6374
        %6383 = vst.msk [vmem:[#allocation2 + $0x38] sm:$0xff] %vm1423, %v6375
        %6392 = vrot.lane.b32.xlu0 %v5966, 96
        %v6393 = vpop.permute.xlu0 %6392
        %6394 = vrot.lane.b32.xlu0 %v5967, 96
        %v6395 = vpop.permute.xlu0 %6394
        %6396 = vrot.lane.b32.xlu0 %v5968, 96
        %v6397 = vpop.permute.xlu0 %6396
        %6398 = vrot.lane.b32.xlu0 %v5969, 96
        %v6399 = vpop.permute.xlu0 %6398
        %6400 = vrot.lane.b32.xlu0 %v5970, 96
        %v6401 = vpop.permute.xlu0 %6400
        %6402 = vrot.lane.b32.xlu0 %v5971, 96
        %v6403 = vpop.permute.xlu0 %6402
        %6404 = vrot.lane.b32.xlu0 %v5972, 96
        %v6405 = vpop.permute.xlu0 %6404
        %6406 = vrot.lane.b32.xlu0 %v5973, 96
        %v6407 = vpop.permute.xlu0 %6406
        %6416 = vrot.lane.b32.xlu0 %v5943, 96
        %v6417 = vpop.permute.xlu0 %6416
        %6418 = vrot.lane.b32.xlu0 %v5946, 96
        %v6419 = vpop.permute.xlu0 %6418
        %6420 = vrot.lane.b32.xlu0 %v5949, 96
        %v6421 = vpop.permute.xlu0 %6420
        %6422 = vrot.lane.b32.xlu0 %v5952, 96
        %v6423 = vpop.permute.xlu0 %6422
        %6424 = vrot.lane.b32.xlu0 %v5955, 96
        %v6425 = vpop.permute.xlu0 %6424
        %6426 = vrot.lane.b32.xlu0 %v5958, 96
        %v6427 = vpop.permute.xlu0 %6426
        %6428 = vrot.lane.b32.xlu0 %v5961, 96
        %v6429 = vpop.permute.xlu0 %6428
        %6430 = vrot.lane.b32.xlu0 %v5964, 96
        %v6431 = vpop.permute.xlu0 %6430
        %v6433 = vsel %vm1423, %v6393, 0
        %v6436 = vsel %vm1423, %v6395, 0
        %v6439 = vsel %vm1423, %v6397, 0
        %v6442 = vsel %vm1423, %v6399, 0
        %v6445 = vsel %vm1423, %v6401, 0
        %v6448 = vsel %vm1423, %v6403, 0
        %v6451 = vsel %vm1423, %v6405, 0
        %v6454 = vsel %vm1423, %v6407, 0
        %v6457 = vsel %vm1423, %v6417, 0
        %v6460 = vsel %vm1423, %v6419, 0
        %v6463 = vsel %vm1423, %v6421, 0
        %v6466 = vsel %vm1423, %v6423, 0
        %v6469 = vsel %vm1423, %v6425, 0
        %v6472 = vsel %vm1423, %v6427, 0
        %v6475 = vsel %vm1423, %v6429, 0
        %v6478 = vsel %vm1423, %v6431, 0
        %6480 = vmatprep.subr.bf16.mxu0 0
        %6481 = vmatpush1.bf16.xpose.msra.mxu0 %v6457
        %6482 = vmatprep.subr.bf16.mxu0 0
        %6483 = vmatpush1.bf16.xpose.msra.mxu0 %v6460
        %6484 = vmatprep.subr.bf16.mxu0 0
        %6485 = vmatpush1.bf16.xpose.msra.mxu0 %v6463
        %6486 = vmatprep.subr.bf16.mxu0 0
        %6487 = vmatpush1.bf16.xpose.msra.mxu0 %v6466
        %6488 = vmatprep.subr.bf16.mxu0 0
        %6489 = vmatpush1.bf16.xpose.msra.mxu0 %v6469
        %6490 = vmatprep.subr.bf16.mxu0 0
        %6491 = vmatpush1.bf16.xpose.msra.mxu0 %v6472
        %6492 = vmatprep.subr.bf16.mxu0 0
        %6493 = vmatpush1.bf16.xpose.msra.mxu0 %v6475
        %6494 = vmatprep.subr.bf16.mxu0 0
        %6495 = vmatpush1.bf16.xpose.msra.mxu0 %v6478
        %6496 = vmatprep.subr.bf16.mxu0 0
        %6497 = vmatpush1.bf16.xpose.msra.mxu0 0
        %6498 = vmatprep.subr.bf16.mxu0 0
        %6499 = vmatpush1.bf16.xpose.msra.mxu0 0
        %6500 = vmatprep.subr.bf16.mxu0 0
        %6501 = vmatpush1.bf16.xpose.msra.mxu0 0
        %6502 = vmatprep.subr.bf16.mxu0 0
        %6503 = vmatpush1.bf16.xpose.msra.mxu0 0
        %6504 = vmatprep.subr.bf16.mxu0 0
        %6505 = vmatpush1.bf16.xpose.msra.mxu0 0
        %6506 = vmatprep.subr.bf16.mxu0 0
        %6507 = vmatpush1.bf16.xpose.msra.mxu0 0
        %6508 = vmatprep.subr.bf16.mxu0 0
        %6509 = vmatpush1.bf16.xpose.msra.mxu0 0
        %6510 = vmatprep.subr.bf16.mxu0 0
        %6511 = vmatpush1.bf16.xpose.msra.mxu0 0
        %6512 = vmatprep.mubr.bf16.mxu0 0
        %6513 = vmatmul.mubr.bf16.gmra.mrb[0].mxu0 %v6433
        %v6514 = vpop.f32.mrb[0].mxu0
        %v6515 = vadd.f32 0.0, %v6514
        %v6516 = vpop.f32.mrb[0].mxu0
        %v6517 = vpop.f32.mrb[0].mxu0
        %v6518 = vadd.f32 0.0, %v6517
        %v6519 = vpop.f32.mrb[0].mxu0
        %6520 = vmatprep.mubr.bf16.mxu0 0
        %6521 = vmatmul.mubr.bf16.gmra.mrb[0].mxu0 %v6436
        %v6522 = vpop.f32.mrb[0].mxu0
        %v6523 = vadd.f32 0.0, %v6522
        %v6524 = vpop.f32.mrb[0].mxu0
        %v6525 = vpop.f32.mrb[0].mxu0
        %v6526 = vadd.f32 0.0, %v6525
        %v6527 = vpop.f32.mrb[0].mxu0
        %6528 = vmatprep.mubr.bf16.mxu0 0
        %6529 = vmatmul.mubr.bf16.gmra.mrb[0].mxu0 %v6439
        %v6530 = vpop.f32.mrb[0].mxu0
        %v6531 = vadd.f32 0.0, %v6530
        %v6532 = vpop.f32.mrb[0].mxu0
        %v6533 = vpop.f32.mrb[0].mxu0
        %v6534 = vadd.f32 0.0, %v6533
        %v6535 = vpop.f32.mrb[0].mxu0
        %6536 = vmatprep.mubr.bf16.mxu0 0
        %6537 = vmatmul.mubr.bf16.gmra.mrb[0].mxu0 %v6442
        %v6538 = vpop.f32.mrb[0].mxu0
        %v6539 = vadd.f32 0.0, %v6538
        %v6540 = vpop.f32.mrb[0].mxu0
        %v6541 = vpop.f32.mrb[0].mxu0
        %v6542 = vadd.f32 0.0, %v6541
        %v6543 = vpop.f32.mrb[0].mxu0
        %6544 = vmatprep.mubr.bf16.mxu0 0
        %6545 = vmatmul.mubr.bf16.gmra.mrb[0].mxu0 %v6445
        %v6546 = vpop.f32.mrb[0].mxu0
        %v6547 = vadd.f32 0.0, %v6546
        %v6548 = vpop.f32.mrb[0].mxu0
        %v6549 = vpop.f32.mrb[0].mxu0
        %v6550 = vadd.f32 0.0, %v6549
        %v6551 = vpop.f32.mrb[0].mxu0
        %6552 = vmatprep.mubr.bf16.mxu0 0
        %6553 = vmatmul.mubr.bf16.gmra.mrb[0].mxu0 %v6448
        %v6554 = vpop.f32.mrb[0].mxu0
        %v6555 = vadd.f32 0.0, %v6554
        %v6556 = vpop.f32.mrb[0].mxu0
        %v6557 = vpop.f32.mrb[0].mxu0
        %v6558 = vadd.f32 0.0, %v6557
        %v6559 = vpop.f32.mrb[0].mxu0
        %6560 = vmatprep.mubr.bf16.mxu0 0
        %6561 = vmatmul.mubr.bf16.gmra.mrb[0].mxu0 %v6451
        %v6562 = vpop.f32.mrb[0].mxu0
        %v6563 = vadd.f32 0.0, %v6562
        %v6564 = vpop.f32.mrb[0].mxu0
        %v6565 = vpop.f32.mrb[0].mxu0
        %v6566 = vadd.f32 0.0, %v6565
        %v6567 = vpop.f32.mrb[0].mxu0
        %6568 = vmatprep.mubr.bf16.mxu0 0
        %6569 = vmatmul.mubr.bf16.gmra.mrb[0].mxu0 %v6454
        %v6570 = vpop.f32.mrb[0].mxu0
        %v6571 = vadd.f32 0.0, %v6570
        %v6572 = vpop.f32.mrb[0].mxu0
        %v6573 = vpop.f32.mrb[0].mxu0
        %v6574 = vadd.f32 0.0, %v6573
        %v6575 = vpop.f32.mrb[0].mxu0
        %6576 = vdwg.mxu0
        %6577 = vmax.xlane.f32.xlu0 %v6515
        %v6578 = vpop.xlane.xlu0 %6577
        %6579 = vmax.xlane.f32.xlu0 %v6518
        %v6580 = vpop.xlane.xlu0 %6579
        %6581 = vmax.xlane.f32.xlu0 %v6523
        %v6582 = vpop.xlane.xlu0 %6581
        %6583 = vmax.xlane.f32.xlu0 %v6526
        %v6584 = vpop.xlane.xlu0 %6583
        %6585 = vmax.xlane.f32.xlu0 %v6531
        %v6586 = vpop.xlane.xlu0 %6585
        %6587 = vmax.xlane.f32.xlu0 %v6534
        %v6588 = vpop.xlane.xlu0 %6587
        %6589 = vmax.xlane.f32.xlu0 %v6539
        %v6590 = vpop.xlane.xlu0 %6589
        %6591 = vmax.xlane.f32.xlu0 %v6542
        %v6592 = vpop.xlane.xlu0 %6591
        %6593 = vmax.xlane.f32.xlu0 %v6547
        %v6594 = vpop.xlane.xlu0 %6593
        %6595 = vmax.xlane.f32.xlu0 %v6550
        %v6596 = vpop.xlane.xlu0 %6595
        %6597 = vmax.xlane.f32.xlu0 %v6555
        %v6598 = vpop.xlane.xlu0 %6597
        %6599 = vmax.xlane.f32.xlu0 %v6558
        %v6600 = vpop.xlane.xlu0 %6599
        %6601 = vmax.xlane.f32.xlu0 %v6563
        %v6602 = vpop.xlane.xlu0 %6601
        %6603 = vmax.xlane.f32.xlu0 %v6566
        %v6604 = vpop.xlane.xlu0 %6603
        %6605 = vmax.xlane.f32.xlu0 %v6571
        %v6606 = vpop.xlane.xlu0 %6605
        %6607 = vmax.xlane.f32.xlu0 %v6574
        %v6608 = vpop.xlane.xlu0 %6607
        %v6609 = vsub.f32 %v6515, %v6578
        %v6610 = vsub.f32 %v6518, %v6580
        %v6611 = vsub.f32 %v6523, %v6582
        %v6612 = vsub.f32 %v6526, %v6584
        %v6613 = vsub.f32 %v6531, %v6586
        %v6614 = vsub.f32 %v6534, %v6588
        %v6615 = vsub.f32 %v6539, %v6590
        %v6616 = vsub.f32 %v6542, %v6592
        %v6617 = vsub.f32 %v6547, %v6594
        %v6618 = vsub.f32 %v6550, %v6596
        %v6619 = vsub.f32 %v6555, %v6598
        %v6620 = vsub.f32 %v6558, %v6600
        %v6621 = vsub.f32 %v6563, %v6602
        %v6622 = vsub.f32 %v6566, %v6604
        %v6623 = vsub.f32 %v6571, %v6606
        %v6624 = vsub.f32 %v6574, %v6608
        %v6625 = vmul.f32 %v6609, 1.442695
        %v6626 = vpow.pop %v6625
        %v6627 = vmul.f32 %v6610, 1.442695
        %v6628 = vpow.pop %v6627
        %v6629 = vmul.f32 %v6611, 1.442695
        %v6630 = vpow.pop %v6629
        %v6631 = vmul.f32 %v6612, 1.442695
        %v6632 = vpow.pop %v6631
        %v6633 = vmul.f32 %v6613, 1.442695
        %v6634 = vpow.pop %v6633
        %v6635 = vmul.f32 %v6614, 1.442695
        %v6636 = vpow.pop %v6635
        %v6637 = vmul.f32 %v6615, 1.442695
        %v6638 = vpow.pop %v6637
        %v6639 = vmul.f32 %v6616, 1.442695
        %v6640 = vpow.pop %v6639
        %v6641 = vmul.f32 %v6617, 1.442695
        %v6642 = vpow.pop %v6641
        %v6643 = vmul.f32 %v6618, 1.442695
        %v6644 = vpow.pop %v6643
        %v6645 = vmul.f32 %v6619, 1.442695
        %v6646 = vpow.pop %v6645
        %v6647 = vmul.f32 %v6620, 1.442695
        %v6648 = vpow.pop %v6647
        %v6649 = vmul.f32 %v6621, 1.442695
        %v6650 = vpow.pop %v6649
        %v6651 = vmul.f32 %v6622, 1.442695
        %v6652 = vpow.pop %v6651
        %v6653 = vmul.f32 %v6623, 1.442695
        %v6654 = vpow.pop %v6653
        %v6655 = vmul.f32 %v6624, 1.442695
        %v6656 = vpow.pop %v6655
        %6657 = vadd.xlane.f32.xlu0 %v6626
        %v6658 = vpop.xlane.xlu0 %6657
        %6659 = vadd.xlane.f32.xlu0 %v6628
        %v6660 = vpop.xlane.xlu0 %6659
        %6661 = vadd.xlane.f32.xlu0 %v6630
        %v6662 = vpop.xlane.xlu0 %6661
        %6663 = vadd.xlane.f32.xlu0 %v6632
        %v6664 = vpop.xlane.xlu0 %6663
        %6665 = vadd.xlane.f32.xlu0 %v6634
        %v6666 = vpop.xlane.xlu0 %6665
        %6667 = vadd.xlane.f32.xlu0 %v6636
        %v6668 = vpop.xlane.xlu0 %6667
        %6669 = vadd.xlane.f32.xlu0 %v6638
        %v6670 = vpop.xlane.xlu0 %6669
        %6671 = vadd.xlane.f32.xlu0 %v6640
        %v6672 = vpop.xlane.xlu0 %6671
        %6673 = vadd.xlane.f32.xlu0 %v6642
        %v6674 = vpop.xlane.xlu0 %6673
        %6675 = vadd.xlane.f32.xlu0 %v6644
        %v6676 = vpop.xlane.xlu0 %6675
        %6677 = vadd.xlane.f32.xlu0 %v6646
        %v6678 = vpop.xlane.xlu0 %6677
        %6679 = vadd.xlane.f32.xlu0 %v6648
        %v6680 = vpop.xlane.xlu0 %6679
        %6681 = vadd.xlane.f32.xlu0 %v6650
        %v6682 = vpop.xlane.xlu0 %6681
        %6683 = vadd.xlane.f32.xlu0 %v6652
        %v6684 = vpop.xlane.xlu0 %6683
        %6685 = vadd.xlane.f32.xlu0 %v6654
        %v6686 = vpop.xlane.xlu0 %6685
        %6687 = vadd.xlane.f32.xlu0 %v6656
        %v6688 = vpop.xlane.xlu0 %6687
        %v6689 = vrcp.pop %v6658
        %v6690 = vrcp.pop %v6660
        %v6691 = vrcp.pop %v6662
        %v6692 = vrcp.pop %v6664
        %v6693 = vrcp.pop %v6666
        %v6694 = vrcp.pop %v6668
        %v6695 = vrcp.pop %v6670
        %v6696 = vrcp.pop %v6672
        %v6697 = vrcp.pop %v6674
        %v6698 = vrcp.pop %v6676
        %v6699 = vrcp.pop %v6678
        %v6700 = vrcp.pop %v6680
        %v6701 = vrcp.pop %v6682
        %v6702 = vrcp.pop %v6684
        %v6703 = vrcp.pop %v6686
        %v6704 = vrcp.pop %v6688
        %v6705 = vmul.f32 %v6626, %v6689
        %v6706 = vmul.f32 %v6628, %v6690
        %v6707 = vmul.f32 %v6630, %v6691
        %v6708 = vmul.f32 %v6632, %v6692
        %v6709 = vmul.f32 %v6634, %v6693
        %v6710 = vmul.f32 %v6636, %v6694
        %v6711 = vmul.f32 %v6638, %v6695
        %v6712 = vmul.f32 %v6640, %v6696
        %v6713 = vmul.f32 %v6642, %v6697
        %v6714 = vmul.f32 %v6644, %v6698
        %v6715 = vmul.f32 %v6646, %v6699
        %v6716 = vmul.f32 %v6648, %v6700
        %v6717 = vmul.f32 %v6650, %v6701
        %v6718 = vmul.f32 %v6652, %v6702
        %v6719 = vmul.f32 %v6654, %v6703
        %v6720 = vmul.f32 %v6656, %v6704
        %v6721 = vpack.c.bf16 %v6706, %v6705
        %v6722 = vpack.c.bf16 %v6708, %v6707
        %v6723 = vpack.c.bf16 %v6710, %v6709
        %v6724 = vpack.c.bf16 %v6712, %v6711
        %v6725 = vpack.c.bf16 %v6714, %v6713
        %v6726 = vpack.c.bf16 %v6716, %v6715
        %v6727 = vpack.c.bf16 %v6718, %v6717
        %v6728 = vpack.c.bf16 %v6720, %v6719
        %6737 = vrot.lane.b32.xlu0 %v5944, 96
        %v6738 = vpop.permute.xlu0 %6737
        %6739 = vrot.lane.b32.xlu0 %v5947, 96
        %v6740 = vpop.permute.xlu0 %6739
        %6741 = vrot.lane.b32.xlu0 %v5950, 96
        %v6742 = vpop.permute.xlu0 %6741
        %6743 = vrot.lane.b32.xlu0 %v5953, 96
        %v6744 = vpop.permute.xlu0 %6743
        %6745 = vrot.lane.b32.xlu0 %v5956, 96
        %v6746 = vpop.permute.xlu0 %6745
        %6747 = vrot.lane.b32.xlu0 %v5959, 96
        %v6748 = vpop.permute.xlu0 %6747
        %6749 = vrot.lane.b32.xlu0 %v5962, 96
        %v6750 = vpop.permute.xlu0 %6749
        %6751 = vrot.lane.b32.xlu0 %v5965, 96
        %v6752 = vpop.permute.xlu0 %6751
        %6761 = vmatprep.subr.bf16.mxu0 0
        %6762 = vmatpush1.bf16.msra.mxu0 %v6738
        %6763 = vmatprep.subr.bf16.mxu0 0
        %6764 = vmatpush1.bf16.msra.mxu0 %v6740
        %6765 = vmatprep.subr.bf16.mxu0 0
        %6766 = vmatpush1.bf16.msra.mxu0 %v6742
        %6767 = vmatprep.subr.bf16.mxu0 0
        %6768 = vmatpush1.bf16.msra.mxu0 %v6744
        %6769 = vmatprep.subr.bf16.mxu0 0
        %6770 = vmatpush1.bf16.msra.mxu0 %v6746
        %6771 = vmatprep.subr.bf16.mxu0 0
        %6772 = vmatpush1.bf16.msra.mxu0 %v6748
        %6773 = vmatprep.subr.bf16.mxu0 0
        %6774 = vmatpush1.bf16.msra.mxu0 %v6750
        %6775 = vmatprep.subr.bf16.mxu0 0
        %6776 = vmatpush1.bf16.msra.mxu0 %v6752
        %6777 = vmatprep.subr.bf16.mxu0 0
        %6778 = vmatpush1.bf16.msra.mxu0 0
        %6779 = vmatprep.subr.bf16.mxu0 0
        %6780 = vmatpush1.bf16.msra.mxu0 0
        %6781 = vmatprep.subr.bf16.mxu0 0
        %6782 = vmatpush1.bf16.msra.mxu0 0
        %6783 = vmatprep.subr.bf16.mxu0 0
        %6784 = vmatpush1.bf16.msra.mxu0 0
        %6785 = vmatprep.subr.bf16.mxu0 0
        %6786 = vmatpush1.bf16.msra.mxu0 0
        %6787 = vmatprep.subr.bf16.mxu0 0
        %6788 = vmatpush1.bf16.msra.mxu0 0
        %6789 = vmatprep.subr.bf16.mxu0 0
        %6790 = vmatpush1.bf16.msra.mxu0 0
        %6791 = vmatprep.subr.bf16.mxu0 0
        %6792 = vmatpush1.bf16.msra.mxu0 0
        %6793 = vmatprep.mubr.bf16.mxu0 0
        %6794 = vmatmul.mubr.bf16.gmra.mrb[0].mxu0 %v6721
        %v6795 = vpop.f32.mrb[0].mxu0
        %v6796 = vadd.f32 0.0, %v6795
        %v6797 = vpop.f32.mrb[0].mxu0
        %v6798 = vpop.f32.mrb[0].mxu0
        %v6799 = vadd.f32 0.0, %v6798
        %v6800 = vpop.f32.mrb[0].mxu0
        %6801 = vmatprep.mubr.bf16.mxu0 0
        %6802 = vmatmul.mubr.bf16.gmra.mrb[0].mxu0 %v6722
        %v6803 = vpop.f32.mrb[0].mxu0
        %v6804 = vadd.f32 0.0, %v6803
        %v6805 = vpop.f32.mrb[0].mxu0
        %v6806 = vpop.f32.mrb[0].mxu0
        %v6807 = vadd.f32 0.0, %v6806
        %v6808 = vpop.f32.mrb[0].mxu0
        %6809 = vmatprep.mubr.bf16.mxu0 0
        %6810 = vmatmul.mubr.bf16.gmra.mrb[0].mxu0 %v6723
        %v6811 = vpop.f32.mrb[0].mxu0
        %v6812 = vadd.f32 0.0, %v6811
        %v6813 = vpop.f32.mrb[0].mxu0
        %v6814 = vpop.f32.mrb[0].mxu0
        %v6815 = vadd.f32 0.0, %v6814
        %v6816 = vpop.f32.mrb[0].mxu0
        %6817 = vmatprep.mubr.bf16.mxu0 0
        %6818 = vmatmul.mubr.bf16.gmra.mrb[0].mxu0 %v6724
        %v6819 = vpop.f32.mrb[0].mxu0
        %v6820 = vadd.f32 0.0, %v6819
        %v6821 = vpop.f32.mrb[0].mxu0
        %v6822 = vpop.f32.mrb[0].mxu0
        %v6823 = vadd.f32 0.0, %v6822
        %v6824 = vpop.f32.mrb[0].mxu0
        %6825 = vmatprep.mubr.bf16.mxu0 0
        %6826 = vmatmul.mubr.bf16.gmra.mrb[0].mxu0 %v6725
        %v6827 = vpop.f32.mrb[0].mxu0
        %v6828 = vadd.f32 0.0, %v6827
        %v6829 = vpop.f32.mrb[0].mxu0
        %v6830 = vpop.f32.mrb[0].mxu0
        %v6831 = vadd.f32 0.0, %v6830
        %v6832 = vpop.f32.mrb[0].mxu0
        %6833 = vmatprep.mubr.bf16.mxu0 0
        %6834 = vmatmul.mubr.bf16.gmra.mrb[0].mxu0 %v6726
        %v6835 = vpop.f32.mrb[0].mxu0
        %v6836 = vadd.f32 0.0, %v6835
        %v6837 = vpop.f32.mrb[0].mxu0
        %v6838 = vpop.f32.mrb[0].mxu0
        %v6839 = vadd.f32 0.0, %v6838
        %v6840 = vpop.f32.mrb[0].mxu0
        %6841 = vmatprep.mubr.bf16.mxu0 0
        %6842 = vmatmul.mubr.bf16.gmra.mrb[0].mxu0 %v6727
        %v6843 = vpop.f32.mrb[0].mxu0
        %v6844 = vadd.f32 0.0, %v6843
        %v6845 = vpop.f32.mrb[0].mxu0
        %v6846 = vpop.f32.mrb[0].mxu0
        %v6847 = vadd.f32 0.0, %v6846
        %v6848 = vpop.f32.mrb[0].mxu0
        %6849 = vmatprep.mubr.bf16.mxu0 0
        %6850 = vmatmul.mubr.bf16.gmra.mrb[0].mxu0 %v6728
        %v6851 = vpop.f32.mrb[0].mxu0
        %v6852 = vadd.f32 0.0, %v6851
        %v6853 = vpop.f32.mrb[0].mxu0
        %v6854 = vpop.f32.mrb[0].mxu0
        %v6855 = vadd.f32 0.0, %v6854
        %v6856 = vpop.f32.mrb[0].mxu0
        %6857 = vdwg.mxu0
        %v6858 = vpack.c.bf16 %v6799, %v6796
        %v6859 = vpack.c.bf16 %v6807, %v6804
        %v6860 = vpack.c.bf16 %v6815, %v6812
        %v6861 = vpack.c.bf16 %v6823, %v6820
        %v6862 = vpack.c.bf16 %v6831, %v6828
        %v6863 = vpack.c.bf16 %v6839, %v6836
        %v6864 = vpack.c.bf16 %v6847, %v6844
        %v6865 = vpack.c.bf16 %v6855, %v6852
        %6874 = vrot.lane.b32.xlu0 %v6858, 32
        %v6875 = vpop.permute.xlu0 %6874
        %6876 = vrot.lane.b32.xlu0 %v6859, 32
        %v6877 = vpop.permute.xlu0 %6876
        %6878 = vrot.lane.b32.xlu0 %v6860, 32
        %v6879 = vpop.permute.xlu0 %6878
        %6880 = vrot.lane.b32.xlu0 %v6861, 32
        %v6881 = vpop.permute.xlu0 %6880
        %6882 = vrot.lane.b32.xlu0 %v6862, 32
        %v6883 = vpop.permute.xlu0 %6882
        %6884 = vrot.lane.b32.xlu0 %v6863, 32
        %v6885 = vpop.permute.xlu0 %6884
        %6886 = vrot.lane.b32.xlu0 %v6864, 32
        %v6887 = vpop.permute.xlu0 %6886
        %6888 = vrot.lane.b32.xlu0 %v6865, 32
        %v6889 = vpop.permute.xlu0 %6888
        %6898 = vst.msk [vmem:[#allocation2] sm:$0xff] %vm2348, %v6875
        %6899 = vst.msk [vmem:[#allocation2 + $0x8] sm:$0xff] %vm2348, %v6877
        %6900 = vst.msk [vmem:[#allocation2 + $0x10] sm:$0xff] %vm2348, %v6879
        %6901 = vst.msk [vmem:[#allocation2 + $0x18] sm:$0xff] %vm2348, %v6881
        %6902 = vst.msk [vmem:[#allocation2 + $0x20] sm:$0xff] %vm2348, %v6883
        %6903 = vst.msk [vmem:[#allocation2 + $0x28] sm:$0xff] %vm2348, %v6885
        %6904 = vst.msk [vmem:[#allocation2 + $0x30] sm:$0xff] %vm2348, %v6887
        %6905 = vst.msk [vmem:[#allocation2 + $0x38] sm:$0xff] %vm2348, %v6889
        %6906 = vrot.lane.b32.xlu0 %v5966, 64
        %v6907 = vpop.permute.xlu0 %6906
        %6908 = vrot.lane.b32.xlu0 %v5967, 64
        %v6909 = vpop.permute.xlu0 %6908
        %6910 = vrot.lane.b32.xlu0 %v5968, 64
        %v6911 = vpop.permute.xlu0 %6910
        %6912 = vrot.lane.b32.xlu0 %v5969, 64
        %v6913 = vpop.permute.xlu0 %6912
        %6914 = vrot.lane.b32.xlu0 %v5970, 64
        %v6915 = vpop.permute.xlu0 %6914
        %6916 = vrot.lane.b32.xlu0 %v5971, 64
        %v6917 = vpop.permute.xlu0 %6916
        %6918 = vrot.lane.b32.xlu0 %v5972, 64
        %v6919 = vpop.permute.xlu0 %6918
        %6920 = vrot.lane.b32.xlu0 %v5973, 64
        %v6921 = vpop.permute.xlu0 %6920
        %6922 = vrot.lane.b32.xlu0 %v5943, 64
        %v6923 = vpop.permute.xlu0 %6922
        %6924 = vrot.lane.b32.xlu0 %v5946, 64
        %v6925 = vpop.permute.xlu0 %6924
        %6926 = vrot.lane.b32.xlu0 %v5949, 64
        %v6927 = vpop.permute.xlu0 %6926
        %6928 = vrot.lane.b32.xlu0 %v5952, 64
        %v6929 = vpop.permute.xlu0 %6928
        %6930 = vrot.lane.b32.xlu0 %v5955, 64
        %v6931 = vpop.permute.xlu0 %6930
        %6932 = vrot.lane.b32.xlu0 %v5958, 64
        %v6933 = vpop.permute.xlu0 %6932
        %6934 = vrot.lane.b32.xlu0 %v5961, 64
        %v6935 = vpop.permute.xlu0 %6934
        %6936 = vrot.lane.b32.xlu0 %v5964, 64
        %v6937 = vpop.permute.xlu0 %6936
        %v6939 = vsel %vm1423, %v6907, 0
        %v6942 = vsel %vm1423, %v6909, 0
        %v6945 = vsel %vm1423, %v6911, 0
        %v6948 = vsel %vm1423, %v6913, 0
        %v6951 = vsel %vm1423, %v6915, 0
        %v6954 = vsel %vm1423, %v6917, 0
        %v6957 = vsel %vm1423, %v6919, 0
        %v6960 = vsel %vm1423, %v6921, 0
        %v6963 = vsel %vm1423, %v6923, 0
        %v6966 = vsel %vm1423, %v6925, 0
        %v6969 = vsel %vm1423, %v6927, 0
        %v6972 = vsel %vm1423, %v6929, 0
        %v6975 = vsel %vm1423, %v6931, 0
        %v6978 = vsel %vm1423, %v6933, 0
        %v6981 = vsel %vm1423, %v6935, 0
        %v6984 = vsel %vm1423, %v6937, 0
        %6986 = vmatprep.subr.bf16.mxu0 0
        %6987 = vmatpush1.bf16.xpose.msra.mxu0 %v6963
        %6988 = vmatprep.subr.bf16.mxu0 0
        %6989 = vmatpush1.bf16.xpose.msra.mxu0 %v6966
        %6990 = vmatprep.subr.bf16.mxu0 0
        %6991 = vmatpush1.bf16.xpose.msra.mxu0 %v6969
        %6992 = vmatprep.subr.bf16.mxu0 0
        %6993 = vmatpush1.bf16.xpose.msra.mxu0 %v6972
        %6994 = vmatprep.subr.bf16.mxu0 0
        %6995 = vmatpush1.bf16.xpose.msra.mxu0 %v6975
        %6996 = vmatprep.subr.bf16.mxu0 0
        %6997 = vmatpush1.bf16.xpose.msra.mxu0 %v6978
        %6998 = vmatprep.subr.bf16.mxu0 0
        %6999 = vmatpush1.bf16.xpose.msra.mxu0 %v6981
        %7000 = vmatprep.subr.bf16.mxu0 0
        %7001 = vmatpush1.bf16.xpose.msra.mxu0 %v6984
        %7002 = vmatprep.subr.bf16.mxu0 0
        %7003 = vmatpush1.bf16.xpose.msra.mxu0 0
        %7004 = vmatprep.subr.bf16.mxu0 0
        %7005 = vmatpush1.bf16.xpose.msra.mxu0 0
        %7006 = vmatprep.subr.bf16.mxu0 0
        %7007 = vmatpush1.bf16.xpose.msra.mxu0 0
        %7008 = vmatprep.subr.bf16.mxu0 0
        %7009 = vmatpush1.bf16.xpose.msra.mxu0 0
        %7010 = vmatprep.subr.bf16.mxu0 0
        %7011 = vmatpush1.bf16.xpose.msra.mxu0 0
        %7012 = vmatprep.subr.bf16.mxu0 0
        %7013 = vmatpush1.bf16.xpose.msra.mxu0 0
        %7014 = vmatprep.subr.bf16.mxu0 0
        %7015 = vmatpush1.bf16.xpose.msra.mxu0 0
        %7016 = vmatprep.subr.bf16.mxu0 0
        %7017 = vmatpush1.bf16.xpose.msra.mxu0 0
        %7018 = vmatprep.mubr.bf16.mxu0 0
        %7019 = vmatmul.mubr.bf16.gmra.mrb[0].mxu0 %v6939
        %v7020 = vpop.f32.mrb[0].mxu0
        %v7021 = vadd.f32 0.0, %v7020
        %v7022 = vpop.f32.mrb[0].mxu0
        %v7023 = vpop.f32.mrb[0].mxu0
        %v7024 = vadd.f32 0.0, %v7023
        %v7025 = vpop.f32.mrb[0].mxu0
        %7026 = vmatprep.mubr.bf16.mxu0 0
        %7027 = vmatmul.mubr.bf16.gmra.mrb[0].mxu0 %v6942
        %v7028 = vpop.f32.mrb[0].mxu0
        %v7029 = vadd.f32 0.0, %v7028
        %v7030 = vpop.f32.mrb[0].mxu0
        %v7031 = vpop.f32.mrb[0].mxu0
        %v7032 = vadd.f32 0.0, %v7031
        %v7033 = vpop.f32.mrb[0].mxu0
        %7034 = vmatprep.mubr.bf16.mxu0 0
        %7035 = vmatmul.mubr.bf16.gmra.mrb[0].mxu0 %v6945
        %v7036 = vpop.f32.mrb[0].mxu0
        %v7037 = vadd.f32 0.0, %v7036
        %v7038 = vpop.f32.mrb[0].mxu0
        %v7039 = vpop.f32.mrb[0].mxu0
        %v7040 = vadd.f32 0.0, %v7039
        %v7041 = vpop.f32.mrb[0].mxu0
        %7042 = vmatprep.mubr.bf16.mxu0 0
        %7043 = vmatmul.mubr.bf16.gmra.mrb[0].mxu0 %v6948
        %v7044 = vpop.f32.mrb[0].mxu0
        %v7045 = vadd.f32 0.0, %v7044
        %v7046 = vpop.f32.mrb[0].mxu0
        %v7047 = vpop.f32.mrb[0].mxu0
        %v7048 = vadd.f32 0.0, %v7047
        %v7049 = vpop.f32.mrb[0].mxu0
        %7050 = vmatprep.mubr.bf16.mxu0 0
        %7051 = vmatmul.mubr.bf16.gmra.mrb[0].mxu0 %v6951
        %v7052 = vpop.f32.mrb[0].mxu0
        %v7053 = vadd.f32 0.0, %v7052
        %v7054 = vpop.f32.mrb[0].mxu0
        %v7055 = vpop.f32.mrb[0].mxu0
        %v7056 = vadd.f32 0.0, %v7055
        %v7057 = vpop.f32.mrb[0].mxu0
        %7058 = vmatprep.mubr.bf16.mxu0 0
        %7059 = vmatmul.mubr.bf16.gmra.mrb[0].mxu0 %v6954
        %v7060 = vpop.f32.mrb[0].mxu0
        %v7061 = vadd.f32 0.0, %v7060
        %v7062 = vpop.f32.mrb[0].mxu0
        %v7063 = vpop.f32.mrb[0].mxu0
        %v7064 = vadd.f32 0.0, %v7063
        %v7065 = vpop.f32.mrb[0].mxu0
        %7066 = vmatprep.mubr.bf16.mxu0 0
        %7067 = vmatmul.mubr.bf16.gmra.mrb[0].mxu0 %v6957
        %v7068 = vpop.f32.mrb[0].mxu0
        %v7069 = vadd.f32 0.0, %v7068
        %v7070 = vpop.f32.mrb[0].mxu0
        %v7071 = vpop.f32.mrb[0].mxu0
        %v7072 = vadd.f32 0.0, %v7071
        %v7073 = vpop.f32.mrb[0].mxu0
        %7074 = vmatprep.mubr.bf16.mxu0 0
        %7075 = vmatmul.mubr.bf16.gmra.mrb[0].mxu0 %v6960
        %v7076 = vpop.f32.mrb[0].mxu0
        %v7077 = vadd.f32 0.0, %v7076
        %v7078 = vpop.f32.mrb[0].mxu0
        %v7079 = vpop.f32.mrb[0].mxu0
        %v7080 = vadd.f32 0.0, %v7079
        %v7081 = vpop.f32.mrb[0].mxu0
        %7082 = vdwg.mxu0
        %7083 = vmax.xlane.f32.xlu0 %v7021
        %v7084 = vpop.xlane.xlu0 %7083
        %7085 = vmax.xlane.f32.xlu0 %v7024
        %v7086 = vpop.xlane.xlu0 %7085
        %7087 = vmax.xlane.f32.xlu0 %v7029
        %v7088 = vpop.xlane.xlu0 %7087
        %7089 = vmax.xlane.f32.xlu0 %v7032
        %v7090 = vpop.xlane.xlu0 %7089
        %7091 = vmax.xlane.f32.xlu0 %v7037
        %v7092 = vpop.xlane.xlu0 %7091
        %7093 = vmax.xlane.f32.xlu0 %v7040
        %v7094 = vpop.xlane.xlu0 %7093
        %7095 = vmax.xlane.f32.xlu0 %v7045
        %v7096 = vpop.xlane.xlu0 %7095
        %7097 = vmax.xlane.f32.xlu0 %v7048
        %v7098 = vpop.xlane.xlu0 %7097
        %7099 = vmax.xlane.f32.xlu0 %v7053
        %v7100 = vpop.xlane.xlu0 %7099
        %7101 = vmax.xlane.f32.xlu0 %v7056
        %v7102 = vpop.xlane.xlu0 %7101
        %7103 = vmax.xlane.f32.xlu0 %v7061
        %v7104 = vpop.xlane.xlu0 %7103
        %7105 = vmax.xlane.f32.xlu0 %v7064
        %v7106 = vpop.xlane.xlu0 %7105
        %7107 = vmax.xlane.f32.xlu0 %v7069
        %v7108 = vpop.xlane.xlu0 %7107
        %7109 = vmax.xlane.f32.xlu0 %v7072
        %v7110 = vpop.xlane.xlu0 %7109
        %7111 = vmax.xlane.f32.xlu0 %v7077
        %v7112 = vpop.xlane.xlu0 %7111
        %7113 = vmax.xlane.f32.xlu0 %v7080
        %v7114 = vpop.xlane.xlu0 %7113
        %v7115 = vsub.f32 %v7021, %v7084
        %v7116 = vsub.f32 %v7024, %v7086
        %v7117 = vsub.f32 %v7029, %v7088
        %v7118 = vsub.f32 %v7032, %v7090
        %v7119 = vsub.f32 %v7037, %v7092
        %v7120 = vsub.f32 %v7040, %v7094
        %v7121 = vsub.f32 %v7045, %v7096
        %v7122 = vsub.f32 %v7048, %v7098
        %v7123 = vsub.f32 %v7053, %v7100
        %v7124 = vsub.f32 %v7056, %v7102
        %v7125 = vsub.f32 %v7061, %v7104
        %v7126 = vsub.f32 %v7064, %v7106
        %v7127 = vsub.f32 %v7069, %v7108
        %v7128 = vsub.f32 %v7072, %v7110
        %v7129 = vsub.f32 %v7077, %v7112
        %v7130 = vsub.f32 %v7080, %v7114
        %v7131 = vmul.f32 %v7115, 1.442695
        %v7132 = vpow.pop %v7131
        %v7133 = vmul.f32 %v7116, 1.442695
        %v7134 = vpow.pop %v7133
        %v7135 = vmul.f32 %v7117, 1.442695
        %v7136 = vpow.pop %v7135
        %v7137 = vmul.f32 %v7118, 1.442695
        %v7138 = vpow.pop %v7137
        %v7139 = vmul.f32 %v7119, 1.442695
        %v7140 = vpow.pop %v7139
        %v7141 = vmul.f32 %v7120, 1.442695
        %v7142 = vpow.pop %v7141
        %v7143 = vmul.f32 %v7121, 1.442695
        %v7144 = vpow.pop %v7143
        %v7145 = vmul.f32 %v7122, 1.442695
        %v7146 = vpow.pop %v7145
        %v7147 = vmul.f32 %v7123, 1.442695
        %v7148 = vpow.pop %v7147
        %v7149 = vmul.f32 %v7124, 1.442695
        %v7150 = vpow.pop %v7149
        %v7151 = vmul.f32 %v7125, 1.442695
        %v7152 = vpow.pop %v7151
        %v7153 = vmul.f32 %v7126, 1.442695
        %v7154 = vpow.pop %v7153
        %v7155 = vmul.f32 %v7127, 1.442695
        %v7156 = vpow.pop %v7155
        %v7157 = vmul.f32 %v7128, 1.442695
        %v7158 = vpow.pop %v7157
        %v7159 = vmul.f32 %v7129, 1.442695
        %v7160 = vpow.pop %v7159
        %v7161 = vmul.f32 %v7130, 1.442695
        %v7162 = vpow.pop %v7161
        %7163 = vadd.xlane.f32.xlu0 %v7132
        %v7164 = vpop.xlane.xlu0 %7163
        %7165 = vadd.xlane.f32.xlu0 %v7134
        %v7166 = vpop.xlane.xlu0 %7165
        %7167 = vadd.xlane.f32.xlu0 %v7136
        %v7168 = vpop.xlane.xlu0 %7167
        %7169 = vadd.xlane.f32.xlu0 %v7138
        %v7170 = vpop.xlane.xlu0 %7169
        %7171 = vadd.xlane.f32.xlu0 %v7140
        %v7172 = vpop.xlane.xlu0 %7171
        %7173 = vadd.xlane.f32.xlu0 %v7142
        %v7174 = vpop.xlane.xlu0 %7173
        %7175 = vadd.xlane.f32.xlu0 %v7144
        %v7176 = vpop.xlane.xlu0 %7175
        %7177 = vadd.xlane.f32.xlu0 %v7146
        %v7178 = vpop.xlane.xlu0 %7177
        %7179 = vadd.xlane.f32.xlu0 %v7148
        %v7180 = vpop.xlane.xlu0 %7179
        %7181 = vadd.xlane.f32.xlu0 %v7150
        %v7182 = vpop.xlane.xlu0 %7181
        %7183 = vadd.xlane.f32.xlu0 %v7152
        %v7184 = vpop.xlane.xlu0 %7183
        %7185 = vadd.xlane.f32.xlu0 %v7154
        %v7186 = vpop.xlane.xlu0 %7185
        %7187 = vadd.xlane.f32.xlu0 %v7156
        %v7188 = vpop.xlane.xlu0 %7187
        %7189 = vadd.xlane.f32.xlu0 %v7158
        %v7190 = vpop.xlane.xlu0 %7189
        %7191 = vadd.xlane.f32.xlu0 %v7160
        %v7192 = vpop.xlane.xlu0 %7191
        %7193 = vadd.xlane.f32.xlu0 %v7162
        %v7194 = vpop.xlane.xlu0 %7193
        %v7195 = vrcp.pop %v7164
        %v7196 = vrcp.pop %v7166
        %v7197 = vrcp.pop %v7168
        %v7198 = vrcp.pop %v7170
        %v7199 = vrcp.pop %v7172
        %v7200 = vrcp.pop %v7174
        %v7201 = vrcp.pop %v7176
        %v7202 = vrcp.pop %v7178
        %v7203 = vrcp.pop %v7180
        %v7204 = vrcp.pop %v7182
        %v7205 = vrcp.pop %v7184
        %v7206 = vrcp.pop %v7186
        %v7207 = vrcp.pop %v7188
        %v7208 = vrcp.pop %v7190
        %v7209 = vrcp.pop %v7192
        %v7210 = vrcp.pop %v7194
        %v7211 = vmul.f32 %v7132, %v7195
        %v7212 = vmul.f32 %v7134, %v7196
        %v7213 = vmul.f32 %v7136, %v7197
        %v7214 = vmul.f32 %v7138, %v7198
        %v7215 = vmul.f32 %v7140, %v7199
        %v7216 = vmul.f32 %v7142, %v7200
        %v7217 = vmul.f32 %v7144, %v7201
        %v7218 = vmul.f32 %v7146, %v7202
        %v7219 = vmul.f32 %v7148, %v7203
        %v7220 = vmul.f32 %v7150, %v7204
        %v7221 = vmul.f32 %v7152, %v7205
        %v7222 = vmul.f32 %v7154, %v7206
        %v7223 = vmul.f32 %v7156, %v7207
        %v7224 = vmul.f32 %v7158, %v7208
        %v7225 = vmul.f32 %v7160, %v7209
        %v7226 = vmul.f32 %v7162, %v7210
        %v7227 = vpack.c.bf16 %v7212, %v7211
        %v7228 = vpack.c.bf16 %v7214, %v7213
        %v7229 = vpack.c.bf16 %v7216, %v7215
        %v7230 = vpack.c.bf16 %v7218, %v7217
        %v7231 = vpack.c.bf16 %v7220, %v7219
        %v7232 = vpack.c.bf16 %v7222, %v7221
        %v7233 = vpack.c.bf16 %v7224, %v7223
        %v7234 = vpack.c.bf16 %v7226, %v7225
        %7235 = vrot.lane.b32.xlu0 %v5944, 64
        %v7236 = vpop.permute.xlu0 %7235
        %7237 = vrot.lane.b32.xlu0 %v5947, 64
        %v7238 = vpop.permute.xlu0 %7237
        %7239 = vrot.lane.b32.xlu0 %v5950, 64
        %v7240 = vpop.permute.xlu0 %7239
        %7241 = vrot.lane.b32.xlu0 %v5953, 64
        %v7242 = vpop.permute.xlu0 %7241
        %7243 = vrot.lane.b32.xlu0 %v5956, 64
        %v7244 = vpop.permute.xlu0 %7243
        %7245 = vrot.lane.b32.xlu0 %v5959, 64
        %v7246 = vpop.permute.xlu0 %7245
        %7247 = vrot.lane.b32.xlu0 %v5962, 64
        %v7248 = vpop.permute.xlu0 %7247
        %7249 = vrot.lane.b32.xlu0 %v5965, 64
        %v7250 = vpop.permute.xlu0 %7249
        %7259 = vmatprep.subr.bf16.mxu0 0
        %7260 = vmatpush1.bf16.msra.mxu0 %v7236
        %7261 = vmatprep.subr.bf16.mxu0 0
        %7262 = vmatpush1.bf16.msra.mxu0 %v7238
        %7263 = vmatprep.subr.bf16.mxu0 0
        %7264 = vmatpush1.bf16.msra.mxu0 %v7240
        %7265 = vmatprep.subr.bf16.mxu0 0
        %7266 = vmatpush1.bf16.msra.mxu0 %v7242
        %7267 = vmatprep.subr.bf16.mxu0 0
        %7268 = vmatpush1.bf16.msra.mxu0 %v7244
        %7269 = vmatprep.subr.bf16.mxu0 0
        %7270 = vmatpush1.bf16.msra.mxu0 %v7246
        %7271 = vmatprep.subr.bf16.mxu0 0
        %7272 = vmatpush1.bf16.msra.mxu0 %v7248
        %7273 = vmatprep.subr.bf16.mxu0 0
        %7274 = vmatpush1.bf16.msra.mxu0 %v7250
        %7275 = vmatprep.subr.bf16.mxu0 0
        %7276 = vmatpush1.bf16.msra.mxu0 0
        %7277 = vmatprep.subr.bf16.mxu0 0
        %7278 = vmatpush1.bf16.msra.mxu0 0
        %7279 = vmatprep.subr.bf16.mxu0 0
        %7280 = vmatpush1.bf16.msra.mxu0 0
        %7281 = vmatprep.subr.bf16.mxu0 0
        %7282 = vmatpush1.bf16.msra.mxu0 0
        %7283 = vmatprep.subr.bf16.mxu0 0
        %7284 = vmatpush1.bf16.msra.mxu0 0
        %7285 = vmatprep.subr.bf16.mxu0 0
        %7286 = vmatpush1.bf16.msra.mxu0 0
        %7287 = vmatprep.subr.bf16.mxu0 0
        %7288 = vmatpush1.bf16.msra.mxu0 0
        %7289 = vmatprep.subr.bf16.mxu0 0
        %7290 = vmatpush1.bf16.msra.mxu0 0
        %7291 = vmatprep.mubr.bf16.mxu0 0
        %7292 = vmatmul.mubr.bf16.gmra.mrb[0].mxu0 %v7227
        %v7293 = vpop.f32.mrb[0].mxu0
        %v7294 = vadd.f32 0.0, %v7293
        %v7295 = vpop.f32.mrb[0].mxu0
        %v7296 = vpop.f32.mrb[0].mxu0
        %v7297 = vadd.f32 0.0, %v7296
        %v7298 = vpop.f32.mrb[0].mxu0
        %7299 = vmatprep.mubr.bf16.mxu0 0
        %7300 = vmatmul.mubr.bf16.gmra.mrb[0].mxu0 %v7228
        %v7301 = vpop.f32.mrb[0].mxu0
        %v7302 = vadd.f32 0.0, %v7301
        %v7303 = vpop.f32.mrb[0].mxu0
        %v7304 = vpop.f32.mrb[0].mxu0
        %v7305 = vadd.f32 0.0, %v7304
        %v7306 = vpop.f32.mrb[0].mxu0
        %7307 = vmatprep.mubr.bf16.mxu0 0
        %7308 = vmatmul.mubr.bf16.gmra.mrb[0].mxu0 %v7229
        %v7309 = vpop.f32.mrb[0].mxu0
        %v7310 = vadd.f32 0.0, %v7309
        %v7311 = vpop.f32.mrb[0].mxu0
        %v7312 = vpop.f32.mrb[0].mxu0
        %v7313 = vadd.f32 0.0, %v7312
        %v7314 = vpop.f32.mrb[0].mxu0
        %7315 = vmatprep.mubr.bf16.mxu0 0
        %7316 = vmatmul.mubr.bf16.gmra.mrb[0].mxu0 %v7230
        %v7317 = vpop.f32.mrb[0].mxu0
        %v7318 = vadd.f32 0.0, %v7317
        %v7319 = vpop.f32.mrb[0].mxu0
        %v7320 = vpop.f32.mrb[0].mxu0
        %v7321 = vadd.f32 0.0, %v7320
        %v7322 = vpop.f32.mrb[0].mxu0
        %7323 = vmatprep.mubr.bf16.mxu0 0
        %7324 = vmatmul.mubr.bf16.gmra.mrb[0].mxu0 %v7231
        %v7325 = vpop.f32.mrb[0].mxu0
        %v7326 = vadd.f32 0.0, %v7325
        %v7327 = vpop.f32.mrb[0].mxu0
        %v7328 = vpop.f32.mrb[0].mxu0
        %v7329 = vadd.f32 0.0, %v7328
        %v7330 = vpop.f32.mrb[0].mxu0
        %7331 = vmatprep.mubr.bf16.mxu0 0
        %7332 = vmatmul.mubr.bf16.gmra.mrb[0].mxu0 %v7232
        %v7333 = vpop.f32.mrb[0].mxu0
        %v7334 = vadd.f32 0.0, %v7333
        %v7335 = vpop.f32.mrb[0].mxu0
        %v7336 = vpop.f32.mrb[0].mxu0
        %v7337 = vadd.f32 0.0, %v7336
        %v7338 = vpop.f32.mrb[0].mxu0
        %7339 = vmatprep.mubr.bf16.mxu0 0
        %7340 = vmatmul.mubr.bf16.gmra.mrb[0].mxu0 %v7233
        %v7341 = vpop.f32.mrb[0].mxu0
        %v7342 = vadd.f32 0.0, %v7341
        %v7343 = vpop.f32.mrb[0].mxu0
        %v7344 = vpop.f32.mrb[0].mxu0
        %v7345 = vadd.f32 0.0, %v7344
        %v7346 = vpop.f32.mrb[0].mxu0
        %7347 = vmatprep.mubr.bf16.mxu0 0
        %7348 = vmatmul.mubr.bf16.gmra.mrb[0].mxu0 %v7234
        %v7349 = vpop.f32.mrb[0].mxu0
        %v7350 = vadd.f32 0.0, %v7349
        %v7351 = vpop.f32.mrb[0].mxu0
        %v7352 = vpop.f32.mrb[0].mxu0
        %v7353 = vadd.f32 0.0, %v7352
        %v7354 = vpop.f32.mrb[0].mxu0
        %7355 = vdwg.mxu0
        %v7356 = vpack.c.bf16 %v7297, %v7294
        %v7357 = vpack.c.bf16 %v7305, %v7302
        %v7358 = vpack.c.bf16 %v7313, %v7310
        %v7359 = vpack.c.bf16 %v7321, %v7318
        %v7360 = vpack.c.bf16 %v7329, %v7326
        %v7361 = vpack.c.bf16 %v7337, %v7334
        %v7362 = vpack.c.bf16 %v7345, %v7342
        %v7363 = vpack.c.bf16 %v7353, %v7350
        %7372 = vrot.lane.b32.xlu0 %v7356, 64
        %v7373 = vpop.permute.xlu0 %7372
        %7374 = vrot.lane.b32.xlu0 %v7357, 64
        %v7375 = vpop.permute.xlu0 %7374
        %7376 = vrot.lane.b32.xlu0 %v7358, 64
        %v7377 = vpop.permute.xlu0 %7376
        %7378 = vrot.lane.b32.xlu0 %v7359, 64
        %v7379 = vpop.permute.xlu0 %7378
        %7380 = vrot.lane.b32.xlu0 %v7360, 64
        %v7381 = vpop.permute.xlu0 %7380
        %7382 = vrot.lane.b32.xlu0 %v7361, 64
        %v7383 = vpop.permute.xlu0 %7382
        %7384 = vrot.lane.b32.xlu0 %v7362, 64
        %v7385 = vpop.permute.xlu0 %7384
        %7386 = vrot.lane.b32.xlu0 %v7363, 64
        %v7387 = vpop.permute.xlu0 %7386
        %7396 = vst.msk [vmem:[#allocation2] sm:$0xff] %vm2847, %v7373
        %7397 = vst.msk [vmem:[#allocation2 + $0x8] sm:$0xff] %vm2847, %v7375
        %7398 = vst.msk [vmem:[#allocation2 + $0x10] sm:$0xff] %vm2847, %v7377
        %7399 = vst.msk [vmem:[#allocation2 + $0x18] sm:$0xff] %vm2847, %v7379
        %7400 = vst.msk [vmem:[#allocation2 + $0x20] sm:$0xff] %vm2847, %v7381
        %7401 = vst.msk [vmem:[#allocation2 + $0x28] sm:$0xff] %vm2847, %v7383
        %7402 = vst.msk [vmem:[#allocation2 + $0x30] sm:$0xff] %vm2847, %v7385
        %7403 = vst.msk [vmem:[#allocation2 + $0x38] sm:$0xff] %vm2847, %v7387
        %7404 = vrot.lane.b32.xlu0 %v5966, 32
        %v7405 = vpop.permute.xlu0 %7404
        %7406 = vrot.lane.b32.xlu0 %v5967, 32
        %v7407 = vpop.permute.xlu0 %7406
        %7408 = vrot.lane.b32.xlu0 %v5968, 32
        %v7409 = vpop.permute.xlu0 %7408
        %7410 = vrot.lane.b32.xlu0 %v5969, 32
        %v7411 = vpop.permute.xlu0 %7410
        %7412 = vrot.lane.b32.xlu0 %v5970, 32
        %v7413 = vpop.permute.xlu0 %7412
        %7414 = vrot.lane.b32.xlu0 %v5971, 32
        %v7415 = vpop.permute.xlu0 %7414
        %7416 = vrot.lane.b32.xlu0 %v5972, 32
        %v7417 = vpop.permute.xlu0 %7416
        %7418 = vrot.lane.b32.xlu0 %v5973, 32
        %v7419 = vpop.permute.xlu0 %7418
        %7420 = vrot.lane.b32.xlu0 %v5943, 32
        %v7421 = vpop.permute.xlu0 %7420
        %7422 = vrot.lane.b32.xlu0 %v5946, 32
        %v7423 = vpop.permute.xlu0 %7422
        %7424 = vrot.lane.b32.xlu0 %v5949, 32
        %v7425 = vpop.permute.xlu0 %7424
        %7426 = vrot.lane.b32.xlu0 %v5952, 32
        %v7427 = vpop.permute.xlu0 %7426
        %7428 = vrot.lane.b32.xlu0 %v5955, 32
        %v7429 = vpop.permute.xlu0 %7428
        %7430 = vrot.lane.b32.xlu0 %v5958, 32
        %v7431 = vpop.permute.xlu0 %7430
        %7432 = vrot.lane.b32.xlu0 %v5961, 32
        %v7433 = vpop.permute.xlu0 %7432
        %7434 = vrot.lane.b32.xlu0 %v5964, 32
        %v7435 = vpop.permute.xlu0 %7434
        %v7437 = vsel %vm1423, %v7405, 0
        %v7440 = vsel %vm1423, %v7407, 0
        %v7443 = vsel %vm1423, %v7409, 0
        %v7446 = vsel %vm1423, %v7411, 0
        %v7449 = vsel %vm1423, %v7413, 0
        %v7452 = vsel %vm1423, %v7415, 0
        %v7455 = vsel %vm1423, %v7417, 0
        %v7458 = vsel %vm1423, %v7419, 0
        %v7461 = vsel %vm1423, %v7421, 0
        %v7464 = vsel %vm1423, %v7423, 0
        %v7467 = vsel %vm1423, %v7425, 0
        %v7470 = vsel %vm1423, %v7427, 0
        %v7473 = vsel %vm1423, %v7429, 0
        %v7476 = vsel %vm1423, %v7431, 0
        %v7479 = vsel %vm1423, %v7433, 0
        %v7482 = vsel %vm1423, %v7435, 0
        %7484 = vmatprep.subr.bf16.mxu0 0
        %7485 = vmatpush1.bf16.xpose.msra.mxu0 %v7461
        %7486 = vmatprep.subr.bf16.mxu0 0
        %7487 = vmatpush1.bf16.xpose.msra.mxu0 %v7464
        %7488 = vmatprep.subr.bf16.mxu0 0
        %7489 = vmatpush1.bf16.xpose.msra.mxu0 %v7467
        %7490 = vmatprep.subr.bf16.mxu0 0
        %7491 = vmatpush1.bf16.xpose.msra.mxu0 %v7470
        %7492 = vmatprep.subr.bf16.mxu0 0
        %7493 = vmatpush1.bf16.xpose.msra.mxu0 %v7473
        %7494 = vmatprep.subr.bf16.mxu0 0
        %7495 = vmatpush1.bf16.xpose.msra.mxu0 %v7476
        %7496 = vmatprep.subr.bf16.mxu0 0
        %7497 = vmatpush1.bf16.xpose.msra.mxu0 %v7479
        %7498 = vmatprep.subr.bf16.mxu0 0
        %7499 = vmatpush1.bf16.xpose.msra.mxu0 %v7482
        %7500 = vmatprep.subr.bf16.mxu0 0
        %7501 = vmatpush1.bf16.xpose.msra.mxu0 0
        %7502 = vmatprep.subr.bf16.mxu0 0
        %7503 = vmatpush1.bf16.xpose.msra.mxu0 0
        %7504 = vmatprep.subr.bf16.mxu0 0
        %7505 = vmatpush1.bf16.xpose.msra.mxu0 0
        %7506 = vmatprep.subr.bf16.mxu0 0
        %7507 = vmatpush1.bf16.xpose.msra.mxu0 0
        %7508 = vmatprep.subr.bf16.mxu0 0
        %7509 = vmatpush1.bf16.xpose.msra.mxu0 0
        %7510 = vmatprep.subr.bf16.mxu0 0
        %7511 = vmatpush1.bf16.xpose.msra.mxu0 0
        %7512 = vmatprep.subr.bf16.mxu0 0
        %7513 = vmatpush1.bf16.xpose.msra.mxu0 0
        %7514 = vmatprep.subr.bf16.mxu0 0
        %7515 = vmatpush1.bf16.xpose.msra.mxu0 0
        %7516 = vmatprep.mubr.bf16.mxu0 0
        %7517 = vmatmul.mubr.bf16.gmra.mrb[0].mxu0 %v7437
        %v7518 = vpop.f32.mrb[0].mxu0
        %v7519 = vadd.f32 0.0, %v7518
        %v7520 = vpop.f32.mrb[0].mxu0
        %v7521 = vpop.f32.mrb[0].mxu0
        %v7522 = vadd.f32 0.0, %v7521
        %v7523 = vpop.f32.mrb[0].mxu0
        %7524 = vmatprep.mubr.bf16.mxu0 0
        %7525 = vmatmul.mubr.bf16.gmra.mrb[0].mxu0 %v7440
        %v7526 = vpop.f32.mrb[0].mxu0
        %v7527 = vadd.f32 0.0, %v7526
        %v7528 = vpop.f32.mrb[0].mxu0
        %v7529 = vpop.f32.mrb[0].mxu0
        %v7530 = vadd.f32 0.0, %v7529
        %v7531 = vpop.f32.mrb[0].mxu0
        %7532 = vmatprep.mubr.bf16.mxu0 0
        %7533 = vmatmul.mubr.bf16.gmra.mrb[0].mxu0 %v7443
        %v7534 = vpop.f32.mrb[0].mxu0
        %v7535 = vadd.f32 0.0, %v7534
        %v7536 = vpop.f32.mrb[0].mxu0
        %v7537 = vpop.f32.mrb[0].mxu0
        %v7538 = vadd.f32 0.0, %v7537
        %v7539 = vpop.f32.mrb[0].mxu0
        %7540 = vmatprep.mubr.bf16.mxu0 0
        %7541 = vmatmul.mubr.bf16.gmra.mrb[0].mxu0 %v7446
        %v7542 = vpop.f32.mrb[0].mxu0
        %v7543 = vadd.f32 0.0, %v7542
        %v7544 = vpop.f32.mrb[0].mxu0
        %v7545 = vpop.f32.mrb[0].mxu0
        %v7546 = vadd.f32 0.0, %v7545
        %v7547 = vpop.f32.mrb[0].mxu0
        %7548 = vmatprep.mubr.bf16.mxu0 0
        %7549 = vmatmul.mubr.bf16.gmra.mrb[0].mxu0 %v7449
        %v7550 = vpop.f32.mrb[0].mxu0
        %v7551 = vadd.f32 0.0, %v7550
        %v7552 = vpop.f32.mrb[0].mxu0
        %v7553 = vpop.f32.mrb[0].mxu0
        %v7554 = vadd.f32 0.0, %v7553
        %v7555 = vpop.f32.mrb[0].mxu0
        %7556 = vmatprep.mubr.bf16.mxu0 0
        %7557 = vmatmul.mubr.bf16.gmra.mrb[0].mxu0 %v7452
        %v7558 = vpop.f32.mrb[0].mxu0
        %v7559 = vadd.f32 0.0, %v7558
        %v7560 = vpop.f32.mrb[0].mxu0
        %v7561 = vpop.f32.mrb[0].mxu0
        %v7562 = vadd.f32 0.0, %v7561
        %v7563 = vpop.f32.mrb[0].mxu0
        %7564 = vmatprep.mubr.bf16.mxu0 0
        %7565 = vmatmul.mubr.bf16.gmra.mrb[0].mxu0 %v7455
        %v7566 = vpop.f32.mrb[0].mxu0
        %v7567 = vadd.f32 0.0, %v7566
        %v7568 = vpop.f32.mrb[0].mxu0
        %v7569 = vpop.f32.mrb[0].mxu0
        %v7570 = vadd.f32 0.0, %v7569
        %v7571 = vpop.f32.mrb[0].mxu0
        %7572 = vmatprep.mubr.bf16.mxu0 0
        %7573 = vmatmul.mubr.bf16.gmra.mrb[0].mxu0 %v7458
        %v7574 = vpop.f32.mrb[0].mxu0
        %v7575 = vadd.f32 0.0, %v7574
        %v7576 = vpop.f32.mrb[0].mxu0
        %v7577 = vpop.f32.mrb[0].mxu0
        %v7578 = vadd.f32 0.0, %v7577
        %v7579 = vpop.f32.mrb[0].mxu0
        %7580 = vdwg.mxu0
        %7581 = vmax.xlane.f32.xlu0 %v7519
        %v7582 = vpop.xlane.xlu0 %7581
        %7583 = vmax.xlane.f32.xlu0 %v7522
        %v7584 = vpop.xlane.xlu0 %7583
        %7585 = vmax.xlane.f32.xlu0 %v7527
        %v7586 = vpop.xlane.xlu0 %7585
        %7587 = vmax.xlane.f32.xlu0 %v7530
        %v7588 = vpop.xlane.xlu0 %7587
        %7589 = vmax.xlane.f32.xlu0 %v7535
        %v7590 = vpop.xlane.xlu0 %7589
        %7591 = vmax.xlane.f32.xlu0 %v7538
        %v7592 = vpop.xlane.xlu0 %7591
        %7593 = vmax.xlane.f32.xlu0 %v7543
        %v7594 = vpop.xlane.xlu0 %7593
        %7595 = vmax.xlane.f32.xlu0 %v7546
        %v7596 = vpop.xlane.xlu0 %7595
        %7597 = vmax.xlane.f32.xlu0 %v7551
        %v7598 = vpop.xlane.xlu0 %7597
        %7599 = vmax.xlane.f32.xlu0 %v7554
        %v7600 = vpop.xlane.xlu0 %7599
        %7601 = vmax.xlane.f32.xlu0 %v7559
        %v7602 = vpop.xlane.xlu0 %7601
        %7603 = vmax.xlane.f32.xlu0 %v7562
        %v7604 = vpop.xlane.xlu0 %7603
        %7605 = vmax.xlane.f32.xlu0 %v7567
        %v7606 = vpop.xlane.xlu0 %7605
        %7607 = vmax.xlane.f32.xlu0 %v7570
        %v7608 = vpop.xlane.xlu0 %7607
        %7609 = vmax.xlane.f32.xlu0 %v7575
        %v7610 = vpop.xlane.xlu0 %7609
        %7611 = vmax.xlane.f32.xlu0 %v7578
        %v7612 = vpop.xlane.xlu0 %7611
        %v7613 = vsub.f32 %v7519, %v7582
        %v7614 = vsub.f32 %v7522, %v7584
        %v7615 = vsub.f32 %v7527, %v7586
        %v7616 = vsub.f32 %v7530, %v7588
        %v7617 = vsub.f32 %v7535, %v7590
        %v7618 = vsub.f32 %v7538, %v7592
        %v7619 = vsub.f32 %v7543, %v7594
        %v7620 = vsub.f32 %v7546, %v7596
        %v7621 = vsub.f32 %v7551, %v7598
        %v7622 = vsub.f32 %v7554, %v7600
        %v7623 = vsub.f32 %v7559, %v7602
        %v7624 = vsub.f32 %v7562, %v7604
        %v7625 = vsub.f32 %v7567, %v7606
        %v7626 = vsub.f32 %v7570, %v7608
        %v7627 = vsub.f32 %v7575, %v7610
        %v7628 = vsub.f32 %v7578, %v7612
        %v7629 = vmul.f32 %v7613, 1.442695
        %v7630 = vpow.pop %v7629
        %v7631 = vmul.f32 %v7614, 1.442695
        %v7632 = vpow.pop %v7631
        %v7633 = vmul.f32 %v7615, 1.442695
        %v7634 = vpow.pop %v7633
        %v7635 = vmul.f32 %v7616, 1.442695
        %v7636 = vpow.pop %v7635
        %v7637 = vmul.f32 %v7617, 1.442695
        %v7638 = vpow.pop %v7637
        %v7639 = vmul.f32 %v7618, 1.442695
        %v7640 = vpow.pop %v7639
        %v7641 = vmul.f32 %v7619, 1.442695
        %v7642 = vpow.pop %v7641
        %v7643 = vmul.f32 %v7620, 1.442695
        %v7644 = vpow.pop %v7643
        %v7645 = vmul.f32 %v7621, 1.442695
        %v7646 = vpow.pop %v7645
        %v7647 = vmul.f32 %v7622, 1.442695
        %v7648 = vpow.pop %v7647
        %v7649 = vmul.f32 %v7623, 1.442695
        %v7650 = vpow.pop %v7649
        %v7651 = vmul.f32 %v7624, 1.442695
        %v7652 = vpow.pop %v7651
        %v7653 = vmul.f32 %v7625, 1.442695
        %v7654 = vpow.pop %v7653
        %v7655 = vmul.f32 %v7626, 1.442695
        %v7656 = vpow.pop %v7655
        %v7657 = vmul.f32 %v7627, 1.442695
        %v7658 = vpow.pop %v7657
        %v7659 = vmul.f32 %v7628, 1.442695
        %v7660 = vpow.pop %v7659
        %7661 = vadd.xlane.f32.xlu0 %v7630
        %v7662 = vpop.xlane.xlu0 %7661
        %7663 = vadd.xlane.f32.xlu0 %v7632
        %v7664 = vpop.xlane.xlu0 %7663
        %7665 = vadd.xlane.f32.xlu0 %v7634
        %v7666 = vpop.xlane.xlu0 %7665
        %7667 = vadd.xlane.f32.xlu0 %v7636
        %v7668 = vpop.xlane.xlu0 %7667
        %7669 = vadd.xlane.f32.xlu0 %v7638
        %v7670 = vpop.xlane.xlu0 %7669
        %7671 = vadd.xlane.f32.xlu0 %v7640
        %v7672 = vpop.xlane.xlu0 %7671
        %7673 = vadd.xlane.f32.xlu0 %v7642
        %v7674 = vpop.xlane.xlu0 %7673
        %7675 = vadd.xlane.f32.xlu0 %v7644
        %v7676 = vpop.xlane.xlu0 %7675
        %7677 = vadd.xlane.f32.xlu0 %v7646
        %v7678 = vpop.xlane.xlu0 %7677
        %7679 = vadd.xlane.f32.xlu0 %v7648
        %v7680 = vpop.xlane.xlu0 %7679
        %7681 = vadd.xlane.f32.xlu0 %v7650
        %v7682 = vpop.xlane.xlu0 %7681
        %7683 = vadd.xlane.f32.xlu0 %v7652
        %v7684 = vpop.xlane.xlu0 %7683
        %7685 = vadd.xlane.f32.xlu0 %v7654
        %v7686 = vpop.xlane.xlu0 %7685
        %7687 = vadd.xlane.f32.xlu0 %v7656
        %v7688 = vpop.xlane.xlu0 %7687
        %7689 = vadd.xlane.f32.xlu0 %v7658
        %v7690 = vpop.xlane.xlu0 %7689
        %7691 = vadd.xlane.f32.xlu0 %v7660
        %v7692 = vpop.xlane.xlu0 %7691
        %v7693 = vrcp.pop %v7662
        %v7694 = vrcp.pop %v7664
        %v7695 = vrcp.pop %v7666
        %v7696 = vrcp.pop %v7668
        %v7697 = vrcp.pop %v7670
        %v7698 = vrcp.pop %v7672
        %v7699 = vrcp.pop %v7674
        %v7700 = vrcp.pop %v7676
        %v7701 = vrcp.pop %v7678
        %v7702 = vrcp.pop %v7680
        %v7703 = vrcp.pop %v7682
        %v7704 = vrcp.pop %v7684
        %v7705 = vrcp.pop %v7686
        %v7706 = vrcp.pop %v7688
        %v7707 = vrcp.pop %v7690
        %v7708 = vrcp.pop %v7692
        %v7709 = vmul.f32 %v7630, %v7693
        %v7710 = vmul.f32 %v7632, %v7694
        %v7711 = vmul.f32 %v7634, %v7695
        %v7712 = vmul.f32 %v7636, %v7696
        %v7713 = vmul.f32 %v7638, %v7697
        %v7714 = vmul.f32 %v7640, %v7698
        %v7715 = vmul.f32 %v7642, %v7699
        %v7716 = vmul.f32 %v7644, %v7700
        %v7717 = vmul.f32 %v7646, %v7701
        %v7718 = vmul.f32 %v7648, %v7702
        %v7719 = vmul.f32 %v7650, %v7703
        %v7720 = vmul.f32 %v7652, %v7704
        %v7721 = vmul.f32 %v7654, %v7705
        %v7722 = vmul.f32 %v7656, %v7706
        %v7723 = vmul.f32 %v7658, %v7707
        %v7724 = vmul.f32 %v7660, %v7708
        %v7725 = vpack.c.bf16 %v7710, %v7709
        %v7726 = vpack.c.bf16 %v7712, %v7711
        %v7727 = vpack.c.bf16 %v7714, %v7713
        %v7728 = vpack.c.bf16 %v7716, %v7715
        %v7729 = vpack.c.bf16 %v7718, %v7717
        %v7730 = vpack.c.bf16 %v7720, %v7719
        %v7731 = vpack.c.bf16 %v7722, %v7721
        %v7732 = vpack.c.bf16 %v7724, %v7723
        %7733 = vrot.lane.b32.xlu0 %v5944, 32
        %v7734 = vpop.permute.xlu0 %7733
        %7735 = vrot.lane.b32.xlu0 %v5947, 32
        %v7736 = vpop.permute.xlu0 %7735
        %7737 = vrot.lane.b32.xlu0 %v5950, 32
        %v7738 = vpop.permute.xlu0 %7737
        %7739 = vrot.lane.b32.xlu0 %v5953, 32
        %v7740 = vpop.permute.xlu0 %7739
        %7741 = vrot.lane.b32.xlu0 %v5956, 32
        %v7742 = vpop.permute.xlu0 %7741
        %7743 = vrot.lane.b32.xlu0 %v5959, 32
        %v7744 = vpop.permute.xlu0 %7743
        %7745 = vrot.lane.b32.xlu0 %v5962, 32
        %v7746 = vpop.permute.xlu0 %7745
        %7747 = vrot.lane.b32.xlu0 %v5965, 32
        %v7748 = vpop.permute.xlu0 %7747
        %7757 = vmatprep.subr.bf16.mxu0 0
        %7758 = vmatpush1.bf16.msra.mxu0 %v7734
        %7759 = vmatprep.subr.bf16.mxu0 0
        %7760 = vmatpush1.bf16.msra.mxu0 %v7736
        %7761 = vmatprep.subr.bf16.mxu0 0
        %7762 = vmatpush1.bf16.msra.mxu0 %v7738
        %7763 = vmatprep.subr.bf16.mxu0 0
        %7764 = vmatpush1.bf16.msra.mxu0 %v7740
        %7765 = vmatprep.subr.bf16.mxu0 0
        %7766 = vmatpush1.bf16.msra.mxu0 %v7742
        %7767 = vmatprep.subr.bf16.mxu0 0
        %7768 = vmatpush1.bf16.msra.mxu0 %v7744
        %7769 = vmatprep.subr.bf16.mxu0 0
        %7770 = vmatpush1.bf16.msra.mxu0 %v7746
        %7771 = vmatprep.subr.bf16.mxu0 0
        %7772 = vmatpush1.bf16.msra.mxu0 %v7748
        %7773 = vmatprep.subr.bf16.mxu0 0
        %7774 = vmatpush1.bf16.msra.mxu0 0
        %7775 = vmatprep.subr.bf16.mxu0 0
        %7776 = vmatpush1.bf16.msra.mxu0 0
        %7777 = vmatprep.subr.bf16.mxu0 0
        %7778 = vmatpush1.bf16.msra.mxu0 0
        %7779 = vmatprep.subr.bf16.mxu0 0
        %7780 = vmatpush1.bf16.msra.mxu0 0
        %7781 = vmatprep.subr.bf16.mxu0 0
        %7782 = vmatpush1.bf16.msra.mxu0 0
        %7783 = vmatprep.subr.bf16.mxu0 0
        %7784 = vmatpush1.bf16.msra.mxu0 0
        %7785 = vmatprep.subr.bf16.mxu0 0
        %7786 = vmatpush1.bf16.msra.mxu0 0
        %7787 = vmatprep.subr.bf16.mxu0 0
        %7788 = vmatpush1.bf16.msra.mxu0 0
        %7789 = vmatprep.mubr.bf16.mxu0 0
        %7790 = vmatmul.mubr.bf16.gmra.mrb[0].mxu0 %v7725
        %v7791 = vpop.f32.mrb[0].mxu0
        %v7792 = vadd.f32 0.0, %v7791
        %v7793 = vpop.f32.mrb[0].mxu0
        %v7794 = vpop.f32.mrb[0].mxu0
        %v7795 = vadd.f32 0.0, %v7794
        %v7796 = vpop.f32.mrb[0].mxu0
        %7797 = vmatprep.mubr.bf16.mxu0 0
        %7798 = vmatmul.mubr.bf16.gmra.mrb[0].mxu0 %v7726
        %v7799 = vpop.f32.mrb[0].mxu0
        %v7800 = vadd.f32 0.0, %v7799
        %v7801 = vpop.f32.mrb[0].mxu0
        %v7802 = vpop.f32.mrb[0].mxu0
        %v7803 = vadd.f32 0.0, %v7802
        %v7804 = vpop.f32.mrb[0].mxu0
        %7805 = vmatprep.mubr.bf16.mxu0 0
        %7806 = vmatmul.mubr.bf16.gmra.mrb[0].mxu0 %v7727
        %v7807 = vpop.f32.mrb[0].mxu0
        %v7808 = vadd.f32 0.0, %v7807
        %v7809 = vpop.f32.mrb[0].mxu0
        %v7810 = vpop.f32.mrb[0].mxu0
        %v7811 = vadd.f32 0.0, %v7810
        %v7812 = vpop.f32.mrb[0].mxu0
        %7813 = vmatprep.mubr.bf16.mxu0 0
        %7814 = vmatmul.mubr.bf16.gmra.mrb[0].mxu0 %v7728
        %v7815 = vpop.f32.mrb[0].mxu0
        %v7816 = vadd.f32 0.0, %v7815
        %v7817 = vpop.f32.mrb[0].mxu0
        %v7818 = vpop.f32.mrb[0].mxu0
        %v7819 = vadd.f32 0.0, %v7818
        %v7820 = vpop.f32.mrb[0].mxu0
        %7821 = vmatprep.mubr.bf16.mxu0 0
        %7822 = vmatmul.mubr.bf16.gmra.mrb[0].mxu0 %v7729
        %v7823 = vpop.f32.mrb[0].mxu0
        %v7824 = vadd.f32 0.0, %v7823
        %v7825 = vpop.f32.mrb[0].mxu0
        %v7826 = vpop.f32.mrb[0].mxu0
        %v7827 = vadd.f32 0.0, %v7826
        %v7828 = vpop.f32.mrb[0].mxu0
        %7829 = vmatprep.mubr.bf16.mxu0 0
        %7830 = vmatmul.mubr.bf16.gmra.mrb[0].mxu0 %v7730
        %v7831 = vpop.f32.mrb[0].mxu0
        %v7832 = vadd.f32 0.0, %v7831
        %v7833 = vpop.f32.mrb[0].mxu0
        %v7834 = vpop.f32.mrb[0].mxu0
        %v7835 = vadd.f32 0.0, %v7834
        %v7836 = vpop.f32.mrb[0].mxu0
        %7837 = vmatprep.mubr.bf16.mxu0 0
        %7838 = vmatmul.mubr.bf16.gmra.mrb[0].mxu0 %v7731
        %v7839 = vpop.f32.mrb[0].mxu0
        %v7840 = vadd.f32 0.0, %v7839
        %v7841 = vpop.f32.mrb[0].mxu0
        %v7842 = vpop.f32.mrb[0].mxu0
        %v7843 = vadd.f32 0.0, %v7842
        %v7844 = vpop.f32.mrb[0].mxu0
        %7845 = vmatprep.mubr.bf16.mxu0 0
        %7846 = vmatmul.mubr.bf16.gmra.mrb[0].mxu0 %v7732
        %v7847 = vpop.f32.mrb[0].mxu0
        %v7848 = vadd.f32 0.0, %v7847
        %v7849 = vpop.f32.mrb[0].mxu0
        %v7850 = vpop.f32.mrb[0].mxu0
        %v7851 = vadd.f32 0.0, %v7850
        %v7852 = vpop.f32.mrb[0].mxu0
        %7853 = vdwg.mxu0
        %v7854 = vpack.c.bf16 %v7795, %v7792
        %v7855 = vpack.c.bf16 %v7803, %v7800
        %v7856 = vpack.c.bf16 %v7811, %v7808
        %v7857 = vpack.c.bf16 %v7819, %v7816
        %v7858 = vpack.c.bf16 %v7827, %v7824
        %v7859 = vpack.c.bf16 %v7835, %v7832
        %v7860 = vpack.c.bf16 %v7843, %v7840
        %v7861 = vpack.c.bf16 %v7851, %v7848
        %7870 = vrot.lane.b32.xlu0 %v7854, 96
        %v7871 = vpop.permute.xlu0 %7870
        %7872 = vrot.lane.b32.xlu0 %v7855, 96
        %v7873 = vpop.permute.xlu0 %7872
        %7874 = vrot.lane.b32.xlu0 %v7856, 96
        %v7875 = vpop.permute.xlu0 %7874
        %7876 = vrot.lane.b32.xlu0 %v7857, 96
        %v7877 = vpop.permute.xlu0 %7876
        %7878 = vrot.lane.b32.xlu0 %v7858, 96
        %v7879 = vpop.permute.xlu0 %7878
        %7880 = vrot.lane.b32.xlu0 %v7859, 96
        %v7881 = vpop.permute.xlu0 %7880
        %7882 = vrot.lane.b32.xlu0 %v7860, 96
        %v7883 = vpop.permute.xlu0 %7882
        %7884 = vrot.lane.b32.xlu0 %v7861, 96
        %v7885 = vpop.permute.xlu0 %7884
        %7894 = vst.msk [vmem:[#allocation2] sm:$0xff] %vm3346, %v7871
        %7895 = vst.msk [vmem:[#allocation2 + $0x8] sm:$0xff] %vm3346, %v7873
        %7896 = vst.msk [vmem:[#allocation2 + $0x10] sm:$0xff] %vm3346, %v7875
        %7897 = vst.msk [vmem:[#allocation2 + $0x18] sm:$0xff] %vm3346, %v7877
        %7898 = vst.msk [vmem:[#allocation2 + $0x20] sm:$0xff] %vm3346, %v7879
        %7899 = vst.msk [vmem:[#allocation2 + $0x28] sm:$0xff] %vm3346, %v7881
        %7900 = vst.msk [vmem:[#allocation2 + $0x30] sm:$0xff] %vm3346, %v7883
        %7901 = vst.msk [vmem:[#allocation2 + $0x38] sm:$0xff] %vm3346, %v7885
        %v7902 = vld [vmem:[#allocation2] sm:$0xff]
        %v7903 = vld [vmem:[#allocation2 + $0x8] sm:$0xff]
        %v7904 = vld [vmem:[#allocation2 + $0x10] sm:$0xff]
        %v7905 = vld [vmem:[#allocation2 + $0x18] sm:$0xff]
        %v7906 = vld [vmem:[#allocation2 + $0x20] sm:$0xff]
        %v7907 = vld [vmem:[#allocation2 + $0x28] sm:$0xff]
        %v7908 = vld [vmem:[#allocation2 + $0x30] sm:$0xff]
        %v7909 = vld [vmem:[#allocation2 + $0x38] sm:$0xff]
        %s7910 = scalar_lea.vmem [#allocation9], 64
        %v7911 = vld [vmem:[%s7910] sm:$0xf]
        %v7912 = vld [vmem:[%s7910 + $0x4] sm:$0xf]
        %v7913 = vld [vmem:[%s7910 + $0x8] sm:$0xf]
        %v7914 = vld [vmem:[%s7910 + $0xc] sm:$0xf]
        %v7915 = vld [vmem:[%s7910 + $0x10] sm:$0xf]
        %v7916 = vld [vmem:[%s7910 + $0x14] sm:$0xf]
        %v7917 = vld [vmem:[%s7910 + $0x18] sm:$0xf]
        %v7918 = vld [vmem:[%s7910 + $0x1c] sm:$0xf]
        %v7919 = vld [vmem:[%s7910 + $0x20] sm:$0xf]
        %v7920 = vld [vmem:[%s7910 + $0x24] sm:$0xf]
        %v7921 = vld [vmem:[%s7910 + $0x28] sm:$0xf]
        %v7922 = vld [vmem:[%s7910 + $0x2c] sm:$0xf]
        %v7923 = vld [vmem:[%s7910 + $0x30] sm:$0xf]
        %v7924 = vld [vmem:[%s7910 + $0x34] sm:$0xf]
        %v7925 = vld [vmem:[%s7910 + $0x38] sm:$0xf]
        %v7926 = vld [vmem:[%s7910 + $0x3c] sm:$0xf]
        %s7927 = scalar_lea.vmem %s6, 1
        %v7928 = vld [vmem:[%s7927] sm:$0x1]
        %v7929 = vunpack.c.l.bf16 %v7928
        %v7930 = vlaneseq
        %v7931 = vshrl.u32 %v7930, 7
        %v7932 = vsub.s32 0, %v7931
        %v7933 = vrot.slane %v7929, %v7932
        %v7950 = vunpack.c.l.b16 %v7911
        %v7951 = vunpack.c.l.b16 %v7912
        %v7952 = vunpack.c.l.b16 %v7913
        %v7953 = vunpack.c.l.b16 %v7914
        %v7954 = vunpack.c.l.b16 %v7915
        %v7955 = vunpack.c.l.b16 %v7916
        %v7956 = vunpack.c.l.b16 %v7917
        %v7957 = vunpack.c.l.b16 %v7918
        %v7958 = vunpack.c.l.b16 %v7919
        %v7959 = vunpack.c.l.b16 %v7920
        %v7960 = vunpack.c.l.b16 %v7921
        %v7961 = vunpack.c.l.b16 %v7922
        %v7962 = vunpack.c.l.b16 %v7923
        %v7963 = vunpack.c.l.b16 %v7924
        %v7964 = vunpack.c.l.b16 %v7925
        %v7965 = vunpack.c.l.b16 %v7926
        %v7966 = vpack.c.b16 %v7951, %v7950
        %v7967 = vpack.c.b16 %v7953, %v7952
        %v7968 = vpack.c.b16 %v7955, %v7954
        %v7969 = vpack.c.b16 %v7957, %v7956
        %v7970 = vpack.c.b16 %v7959, %v7958
        %v7971 = vpack.c.b16 %v7961, %v7960
        %v7972 = vpack.c.b16 %v7963, %v7962
        %v7973 = vpack.c.b16 %v7965, %v7964
        %7982 = vmatprep.subr.bf16.mxu0 0
        %7983 = vmatpush1.bf16.msra.mxu0 %v7966
        %7984 = vmatprep.subr.bf16.mxu0 0
        %7985 = vmatpush1.bf16.msra.mxu0 %v7967
        %7986 = vmatprep.subr.bf16.mxu0 0
        %7987 = vmatpush1.bf16.msra.mxu0 %v7968
        %7988 = vmatprep.subr.bf16.mxu0 0
        %7989 = vmatpush1.bf16.msra.mxu0 %v7969
        %7990 = vmatprep.subr.bf16.mxu0 0
        %7991 = vmatpush1.bf16.msra.mxu0 %v7970
        %7992 = vmatprep.subr.bf16.mxu0 0
        %7993 = vmatpush1.bf16.msra.mxu0 %v7971
        %7994 = vmatprep.subr.bf16.mxu0 0
        %7995 = vmatpush1.bf16.msra.mxu0 %v7972
        %7996 = vmatprep.subr.bf16.mxu0 0
        %7997 = vmatpush1.bf16.msra.mxu0 %v7973
        %7998 = vmatprep.subr.bf16.mxu0 0
        %7999 = vmatpush1.bf16.msra.mxu0 0
        %8000 = vmatprep.subr.bf16.mxu0 0
        %8001 = vmatpush1.bf16.msra.mxu0 0
        %8002 = vmatprep.subr.bf16.mxu0 0
        %8003 = vmatpush1.bf16.msra.mxu0 0
        %8004 = vmatprep.subr.bf16.mxu0 0
        %8005 = vmatpush1.bf16.msra.mxu0 0
        %8006 = vmatprep.subr.bf16.mxu0 0
        %8007 = vmatpush1.bf16.msra.mxu0 0
        %8008 = vmatprep.subr.bf16.mxu0 0
        %8009 = vmatpush1.bf16.msra.mxu0 0
        %8010 = vmatprep.subr.bf16.mxu0 0
        %8011 = vmatpush1.bf16.msra.mxu0 0
        %8012 = vmatprep.subr.bf16.mxu0 0
        %8013 = vmatpush1.bf16.msra.mxu0 0
        %8014 = vmatprep.mubr.bf16.mxu0 0
        %8015 = vmatmul.mubr.bf16.gmra.mrb[0].mxu0 %v7902
        %v8016 = vpop.f32.mrb[0].mxu0
        %v8017 = vadd.f32 %v7933, %v8016
        %v8018 = vpop.f32.mrb[0].mxu0
        %v8019 = vpop.f32.mrb[0].mxu0
        %v8020 = vadd.f32 %v7933, %v8019
        %v8021 = vpop.f32.mrb[0].mxu0
        %8022 = vmatprep.mubr.bf16.mxu0 0
        %8023 = vmatmul.mubr.bf16.gmra.mrb[0].mxu0 %v7903
        %v8024 = vpop.f32.mrb[0].mxu0
        %v8025 = vadd.f32 %v7933, %v8024
        %v8026 = vpop.f32.mrb[0].mxu0
        %v8027 = vpop.f32.mrb[0].mxu0
        %v8028 = vadd.f32 %v7933, %v8027
        %v8029 = vpop.f32.mrb[0].mxu0
        %8030 = vmatprep.mubr.bf16.mxu0 0
        %8031 = vmatmul.mubr.bf16.gmra.mrb[0].mxu0 %v7904
        %v8032 = vpop.f32.mrb[0].mxu0
        %v8033 = vadd.f32 %v7933, %v8032
        %v8034 = vpop.f32.mrb[0].mxu0
        %v8035 = vpop.f32.mrb[0].mxu0
        %v8036 = vadd.f32 %v7933, %v8035
        %v8037 = vpop.f32.mrb[0].mxu0
        %8038 = vmatprep.mubr.bf16.mxu0 0
        %8039 = vmatmul.mubr.bf16.gmra.mrb[0].mxu0 %v7905
        %v8040 = vpop.f32.mrb[0].mxu0
        %v8041 = vadd.f32 %v7933, %v8040
        %v8042 = vpop.f32.mrb[0].mxu0
        %v8043 = vpop.f32.mrb[0].mxu0
        %v8044 = vadd.f32 %v7933, %v8043
        %v8045 = vpop.f32.mrb[0].mxu0
        %8046 = vmatprep.mubr.bf16.mxu0 0
        %8047 = vmatmul.mubr.bf16.gmra.mrb[0].mxu0 %v7906
        %v8048 = vpop.f32.mrb[0].mxu0
        %v8049 = vadd.f32 %v7933, %v8048
        %v8050 = vpop.f32.mrb[0].mxu0
        %v8051 = vpop.f32.mrb[0].mxu0
        %v8052 = vadd.f32 %v7933, %v8051
        %v8053 = vpop.f32.mrb[0].mxu0
        %8054 = vmatprep.mubr.bf16.mxu0 0
        %8055 = vmatmul.mubr.bf16.gmra.mrb[0].mxu0 %v7907
        %v8056 = vpop.f32.mrb[0].mxu0
        %v8057 = vadd.f32 %v7933, %v8056
        %v8058 = vpop.f32.mrb[0].mxu0
        %v8059 = vpop.f32.mrb[0].mxu0
        %v8060 = vadd.f32 %v7933, %v8059
        %v8061 = vpop.f32.mrb[0].mxu0
        %8062 = vmatprep.mubr.bf16.mxu0 0
        %8063 = vmatmul.mubr.bf16.gmra.mrb[0].mxu0 %v7908
        %v8064 = vpop.f32.mrb[0].mxu0
        %v8065 = vadd.f32 %v7933, %v8064
        %v8066 = vpop.f32.mrb[0].mxu0
        %v8067 = vpop.f32.mrb[0].mxu0
        %v8068 = vadd.f32 %v7933, %v8067
        %v8069 = vpop.f32.mrb[0].mxu0
        %8070 = vmatprep.mubr.bf16.mxu0 0
        %8071 = vmatmul.mubr.bf16.gmra.mrb[0].mxu0 %v7909
        %v8072 = vpop.f32.mrb[0].mxu0
        %v8073 = vadd.f32 %v7933, %v8072
        %v8074 = vpop.f32.mrb[0].mxu0
        %v8075 = vpop.f32.mrb[0].mxu0
        %v8076 = vadd.f32 %v7933, %v8075
        %v8077 = vpop.f32.mrb[0].mxu0
        %8078 = vdwg.mxu0
        %v8079 = vadd.f32 %v8017, %v5516
        %v8080 = vadd.f32 %v8020, %v5517
        %v8081 = vadd.f32 %v8025, %v5518
        %v8082 = vadd.f32 %v8028, %v5519
        %v8083 = vadd.f32 %v8033, %v5520
        %v8084 = vadd.f32 %v8036, %v5521
        %v8085 = vadd.f32 %v8041, %v5522
        %v8086 = vadd.f32 %v8044, %v5523
        %v8087 = vadd.f32 %v8049, %v5524
        %v8088 = vadd.f32 %v8052, %v5525
        %v8089 = vadd.f32 %v8057, %v5526
        %v8090 = vadd.f32 %v8060, %v5527
        %v8091 = vadd.f32 %v8065, %v5528
        %v8092 = vadd.f32 %v8068, %v5529
        %v8093 = vadd.f32 %v8073, %v5530
        %v8094 = vadd.f32 %v8076, %v5531
        %s8095 = scalar_lea.vmem %s7, 1
        %v8096 = vld [vmem:[%s8095] sm:$0x1]
        %v8097 = vunpack.c.l.bf16 %v8096
        %s8098 = scalar_lea.vmem %s8, 1
        %v8099 = vld [vmem:[%s8098] sm:$0x1]
        %v8100 = vunpack.c.l.bf16 %v8099
        %8101 = vadd.xlane.f32.xlu0 %v8079
        %v8102 = vpop.xlane.xlu0 %8101
        %8103 = vadd.xlane.f32.xlu0 %v8080
        %v8104 = vpop.xlane.xlu0 %8103
        %8105 = vadd.xlane.f32.xlu0 %v8081
        %v8106 = vpop.xlane.xlu0 %8105
        %8107 = vadd.xlane.f32.xlu0 %v8082
        %v8108 = vpop.xlane.xlu0 %8107
        %8109 = vadd.xlane.f32.xlu0 %v8083
        %v8110 = vpop.xlane.xlu0 %8109
        %8111 = vadd.xlane.f32.xlu0 %v8084
        %v8112 = vpop.xlane.xlu0 %8111
        %8113 = vadd.xlane.f32.xlu0 %v8085
        %v8114 = vpop.xlane.xlu0 %8113
        %8115 = vadd.xlane.f32.xlu0 %v8086
        %v8116 = vpop.xlane.xlu0 %8115
        %8117 = vadd.xlane.f32.xlu0 %v8087
        %v8118 = vpop.xlane.xlu0 %8117
        %8119 = vadd.xlane.f32.xlu0 %v8088
        %v8120 = vpop.xlane.xlu0 %8119
        %8121 = vadd.xlane.f32.xlu0 %v8089
        %v8122 = vpop.xlane.xlu0 %8121
        %8123 = vadd.xlane.f32.xlu0 %v8090
        %v8124 = vpop.xlane.xlu0 %8123
        %8125 = vadd.xlane.f32.xlu0 %v8091
        %v8126 = vpop.xlane.xlu0 %8125
        %8127 = vadd.xlane.f32.xlu0 %v8092
        %v8128 = vpop.xlane.xlu0 %8127
        %8129 = vadd.xlane.f32.xlu0 %v8093
        %v8130 = vpop.xlane.xlu0 %8129
        %8131 = vadd.xlane.f32.xlu0 %v8094
        %v8132 = vpop.xlane.xlu0 %8131
        %v8133 = vmul.f32 %v8102, %v3582
        %v8134 = vmul.f32 %v8104, %v3582
        %v8135 = vmul.f32 %v8106, %v3582
        %v8136 = vmul.f32 %v8108, %v3582
        %v8137 = vmul.f32 %v8110, %v3582
        %v8138 = vmul.f32 %v8112, %v3582
        %v8139 = vmul.f32 %v8114, %v3582
        %v8140 = vmul.f32 %v8116, %v3582
        %v8141 = vmul.f32 %v8118, %v3582
        %v8142 = vmul.f32 %v8120, %v3582
        %v8143 = vmul.f32 %v8122, %v3582
        %v8144 = vmul.f32 %v8124, %v3582
        %v8145 = vmul.f32 %v8126, %v3582
        %v8146 = vmul.f32 %v8128, %v3582
        %v8147 = vmul.f32 %v8130, %v3582
        %v8148 = vmul.f32 %v8132, %v3582
        %v8149 = vsub.f32 %v8079, %v8133
        %v8150 = vsub.f32 %v8080, %v8134
        %v8151 = vsub.f32 %v8081, %v8135
        %v8152 = vsub.f32 %v8082, %v8136
        %v8153 = vsub.f32 %v8083, %v8137
        %v8154 = vsub.f32 %v8084, %v8138
        %v8155 = vsub.f32 %v8085, %v8139
        %v8156 = vsub.f32 %v8086, %v8140
        %v8157 = vsub.f32 %v8087, %v8141
        %v8158 = vsub.f32 %v8088, %v8142
        %v8159 = vsub.f32 %v8089, %v8143
        %v8160 = vsub.f32 %v8090, %v8144
        %v8161 = vsub.f32 %v8091, %v8145
        %v8162 = vsub.f32 %v8092, %v8146
        %v8163 = vsub.f32 %v8093, %v8147
        %v8164 = vsub.f32 %v8094, %v8148
        %v8165 = vmul.f32 %v8149, %v8149
        %v8166 = vmul.f32 %v8150, %v8150
        %v8167 = vmul.f32 %v8151, %v8151
        %v8168 = vmul.f32 %v8152, %v8152
        %v8169 = vmul.f32 %v8153, %v8153
        %v8170 = vmul.f32 %v8154, %v8154
        %v8171 = vmul.f32 %v8155, %v8155
        %v8172 = vmul.f32 %v8156, %v8156
        %v8173 = vmul.f32 %v8157, %v8157
        %v8174 = vmul.f32 %v8158, %v8158
        %v8175 = vmul.f32 %v8159, %v8159
        %v8176 = vmul.f32 %v8160, %v8160
        %v8177 = vmul.f32 %v8161, %v8161
        %v8178 = vmul.f32 %v8162, %v8162
        %v8179 = vmul.f32 %v8163, %v8163
        %v8180 = vmul.f32 %v8164, %v8164
        %8181 = vadd.xlane.f32.xlu0 %v8165
        %v8182 = vpop.xlane.xlu0 %8181
        %8183 = vadd.xlane.f32.xlu0 %v8166
        %v8184 = vpop.xlane.xlu0 %8183
        %8185 = vadd.xlane.f32.xlu0 %v8167
        %v8186 = vpop.xlane.xlu0 %8185
        %8187 = vadd.xlane.f32.xlu0 %v8168
        %v8188 = vpop.xlane.xlu0 %8187
        %8189 = vadd.xlane.f32.xlu0 %v8169
        %v8190 = vpop.xlane.xlu0 %8189
        %8191 = vadd.xlane.f32.xlu0 %v8170
        %v8192 = vpop.xlane.xlu0 %8191
        %8193 = vadd.xlane.f32.xlu0 %v8171
        %v8194 = vpop.xlane.xlu0 %8193
        %8195 = vadd.xlane.f32.xlu0 %v8172
        %v8196 = vpop.xlane.xlu0 %8195
        %8197 = vadd.xlane.f32.xlu0 %v8173
        %v8198 = vpop.xlane.xlu0 %8197
        %8199 = vadd.xlane.f32.xlu0 %v8174
        %v8200 = vpop.xlane.xlu0 %8199
        %8201 = vadd.xlane.f32.xlu0 %v8175
        %v8202 = vpop.xlane.xlu0 %8201
        %8203 = vadd.xlane.f32.xlu0 %v8176
        %v8204 = vpop.xlane.xlu0 %8203
        %8205 = vadd.xlane.f32.xlu0 %v8177
        %v8206 = vpop.xlane.xlu0 %8205
        %8207 = vadd.xlane.f32.xlu0 %v8178
        %v8208 = vpop.xlane.xlu0 %8207
        %8209 = vadd.xlane.f32.xlu0 %v8179
        %v8210 = vpop.xlane.xlu0 %8209
        %8211 = vadd.xlane.f32.xlu0 %v8180
        %v8212 = vpop.xlane.xlu0 %8211
        %v8213 = vmul.f32 %v8182, %v3582
        %v8214 = vmul.f32 %v8184, %v3582
        %v8215 = vmul.f32 %v8186, %v3582
        %v8216 = vmul.f32 %v8188, %v3582
        %v8217 = vmul.f32 %v8190, %v3582
        %v8218 = vmul.f32 %v8192, %v3582
        %v8219 = vmul.f32 %v8194, %v3582
        %v8220 = vmul.f32 %v8196, %v3582
        %v8221 = vmul.f32 %v8198, %v3582
        %v8222 = vmul.f32 %v8200, %v3582
        %v8223 = vmul.f32 %v8202, %v3582
        %v8224 = vmul.f32 %v8204, %v3582
        %v8225 = vmul.f32 %v8206, %v3582
        %v8226 = vmul.f32 %v8208, %v3582
        %v8227 = vmul.f32 %v8210, %v3582
        %v8228 = vmul.f32 %v8212, %v3582
        %v8229 = vadd.f32 %v8213, 1e-12
        %v8230 = vadd.f32 %v8214, 1e-12
        %v8231 = vadd.f32 %v8215, 1e-12
        %v8232 = vadd.f32 %v8216, 1e-12
        %v8233 = vadd.f32 %v8217, 1e-12
        %v8234 = vadd.f32 %v8218, 1e-12
        %v8235 = vadd.f32 %v8219, 1e-12
        %v8236 = vadd.f32 %v8220, 1e-12
        %v8237 = vadd.f32 %v8221, 1e-12
        %v8238 = vadd.f32 %v8222, 1e-12
        %v8239 = vadd.f32 %v8223, 1e-12
        %v8240 = vadd.f32 %v8224, 1e-12
        %v8241 = vadd.f32 %v8225, 1e-12
        %v8242 = vadd.f32 %v8226, 1e-12
        %v8243 = vadd.f32 %v8227, 1e-12
        %v8244 = vadd.f32 %v8228, 1e-12
        %v8245 = vrsqrt.pop %v8229
        %v8246 = vrsqrt.pop %v8230
        %v8247 = vrsqrt.pop %v8231
        %v8248 = vrsqrt.pop %v8232
        %v8249 = vrsqrt.pop %v8233
        %v8250 = vrsqrt.pop %v8234
        %v8251 = vrsqrt.pop %v8235
        %v8252 = vrsqrt.pop %v8236
        %v8253 = vrsqrt.pop %v8237
        %v8254 = vrsqrt.pop %v8238
        %v8255 = vrsqrt.pop %v8239
        %v8256 = vrsqrt.pop %v8240
        %v8257 = vrsqrt.pop %v8241
        %v8258 = vrsqrt.pop %v8242
        %v8259 = vrsqrt.pop %v8243
        %v8260 = vrsqrt.pop %v8244
        %v8261 = vmul.f32 %v8149, %v8245
        %v8262 = vmul.f32 %v8150, %v8246
        %v8263 = vmul.f32 %v8151, %v8247
        %v8264 = vmul.f32 %v8152, %v8248
        %v8265 = vmul.f32 %v8153, %v8249
        %v8266 = vmul.f32 %v8154, %v8250
        %v8267 = vmul.f32 %v8155, %v8251
        %v8268 = vmul.f32 %v8156, %v8252
        %v8269 = vmul.f32 %v8157, %v8253
        %v8270 = vmul.f32 %v8158, %v8254
        %v8271 = vmul.f32 %v8159, %v8255
        %v8272 = vmul.f32 %v8160, %v8256
        %v8273 = vmul.f32 %v8161, %v8257
        %v8274 = vmul.f32 %v8162, %v8258
        %v8275 = vmul.f32 %v8163, %v8259
        %v8276 = vmul.f32 %v8164, %v8260
        %v8277 = vlaneseq
        %v8278 = vshrl.u32 %v8277, 7
        %v8279 = vsub.s32 0, %v8278
        %v8280 = vrot.slane %v8097, %v8279
        %v8281 = vmul.f32 %v8261, %v8280
        %v8282 = vmul.f32 %v8262, %v8280
        %v8283 = vmul.f32 %v8263, %v8280
        %v8284 = vmul.f32 %v8264, %v8280
        %v8285 = vmul.f32 %v8265, %v8280
        %v8286 = vmul.f32 %v8266, %v8280
        %v8287 = vmul.f32 %v8267, %v8280
        %v8288 = vmul.f32 %v8268, %v8280
        %v8289 = vmul.f32 %v8269, %v8280
        %v8290 = vmul.f32 %v8270, %v8280
        %v8291 = vmul.f32 %v8271, %v8280
        %v8292 = vmul.f32 %v8272, %v8280
        %v8293 = vmul.f32 %v8273, %v8280
        %v8294 = vmul.f32 %v8274, %v8280
        %v8295 = vmul.f32 %v8275, %v8280
        %v8296 = vmul.f32 %v8276, %v8280
        %v8297 = vlaneseq
        %v8298 = vshrl.u32 %v8297, 7
        %v8299 = vsub.s32 0, %v8298
        %v8300 = vrot.slane %v8100, %v8299
        %v8301 = vadd.f32 %v8281, %v8300
        %v8302 = vadd.f32 %v8282, %v8300
        %v8303 = vadd.f32 %v8283, %v8300
        %v8304 = vadd.f32 %v8284, %v8300
        %v8305 = vadd.f32 %v8285, %v8300
        %v8306 = vadd.f32 %v8286, %v8300
        %v8307 = vadd.f32 %v8287, %v8300
        %v8308 = vadd.f32 %v8288, %v8300
        %v8309 = vadd.f32 %v8289, %v8300
        %v8310 = vadd.f32 %v8290, %v8300
        %v8311 = vadd.f32 %v8291, %v8300
        %v8312 = vadd.f32 %v8292, %v8300
        %v8313 = vadd.f32 %v8293, %v8300
        %v8314 = vadd.f32 %v8294, %v8300
        %v8315 = vadd.f32 %v8295, %v8300
        %v8316 = vadd.f32 %v8296, %v8300
        %v8317 = vpack.c.bf16 %v8302, %v8301
        %v8318 = vpack.c.bf16 %v8304, %v8303
        %v8319 = vpack.c.bf16 %v8306, %v8305
        %v8320 = vpack.c.bf16 %v8308, %v8307
        %v8321 = vpack.c.bf16 %v8310, %v8309
        %v8322 = vpack.c.bf16 %v8312, %v8311
        %v8323 = vpack.c.bf16 %v8314, %v8313
        %v8324 = vpack.c.bf16 %v8316, %v8315
        %s8325 = scalar_lea.vmem [#allocation11], 256
        %v8326 = vld [vmem:[%s8325] sm:$0xff]
        %v8327 = vld [vmem:[%s8325 + $0x8] sm:$0xff]
        %v8328 = vld [vmem:[%s8325 + $0x10] sm:$0xff]
        %v8329 = vld [vmem:[%s8325 + $0x18] sm:$0xff]
        %v8330 = vld [vmem:[%s8325 + $0x20] sm:$0xff]
        %v8331 = vld [vmem:[%s8325 + $0x28] sm:$0xff]
        %v8332 = vld [vmem:[%s8325 + $0x30] sm:$0xff]
        %v8333 = vld [vmem:[%s8325 + $0x38] sm:$0xff]
        %v8334 = vld [vmem:[%s8325 + $0x40] sm:$0xff]
        %v8335 = vld [vmem:[%s8325 + $0x48] sm:$0xff]
        %v8336 = vld [vmem:[%s8325 + $0x50] sm:$0xff]
        %v8337 = vld [vmem:[%s8325 + $0x58] sm:$0xff]
        %v8338 = vld [vmem:[%s8325 + $0x60] sm:$0xff]
        %v8339 = vld [vmem:[%s8325 + $0x68] sm:$0xff]
        %v8340 = vld [vmem:[%s8325 + $0x70] sm:$0xff]
        %v8341 = vld [vmem:[%s8325 + $0x78] sm:$0xff]
        %v8342 = vld [vmem:[%s8325 + $0x80] sm:$0xff]
        %v8343 = vld [vmem:[%s8325 + $0x88] sm:$0xff]
        %v8344 = vld [vmem:[%s8325 + $0x90] sm:$0xff]
        %v8345 = vld [vmem:[%s8325 + $0x98] sm:$0xff]
        %v8346 = vld [vmem:[%s8325 + $0xa0] sm:$0xff]
        %v8347 = vld [vmem:[%s8325 + $0xa8] sm:$0xff]
        %v8348 = vld [vmem:[%s8325 + $0xb0] sm:$0xff]
        %v8349 = vld [vmem:[%s8325 + $0xb8] sm:$0xff]
        %v8350 = vld [vmem:[%s8325 + $0xc0] sm:$0xff]
        %v8351 = vld [vmem:[%s8325 + $0xc8] sm:$0xff]
        %v8352 = vld [vmem:[%s8325 + $0xd0] sm:$0xff]
        %v8353 = vld [vmem:[%s8325 + $0xd8] sm:$0xff]
        %v8354 = vld [vmem:[%s8325 + $0xe0] sm:$0xff]
        %v8355 = vld [vmem:[%s8325 + $0xe8] sm:$0xff]
        %v8356 = vld [vmem:[%s8325 + $0xf0] sm:$0xff]
        %v8357 = vld [vmem:[%s8325 + $0xf8] sm:$0xff]
        %s8358 = scalar_lea.vmem %s10, 4
        %v8359 = vld [vmem:[%s8358] sm:$0xf]
        %v8360 = vunpack.c.l.bf16 %v8359
        %v8362 = vlaneseq
        %v8363 = vshrl.u32 %v8362, 7
        %v8364 = vsub.s32 0, %v8363
        %v8365 = vrot.slane %v8360, %v8364
        %v8366 = vlaneseq
        %v8367 = vshrl.u32 %v8366, 7
        %v8368 = vsub.s32 2, %v8367
        %v8369 = vrot.slane %v8360, %v8368
        %v8370 = vlaneseq
        %v8371 = vshrl.u32 %v8370, 7
        %v8372 = vsub.s32 4, %v8371
        %v8373 = vrot.slane %v8360, %v8372
        %v8374 = vlaneseq
        %v8375 = vshrl.u32 %v8374, 7
        %v8376 = vsub.s32 6, %v8375
        %v8377 = vrot.slane %v8360, %v8376
        %v8382 = vlaneseq
        %v8383 = vshrl.u32 %v8382, 7
        %v8384 = vsub.s32 0, %v8383
        %v8385 = vrot.slane %v8365, %v8384
        %v8386 = vlaneseq
        %v8387 = vshrl.u32 %v8386, 7
        %v8388 = vsub.s32 0, %v8387
        %v8389 = vrot.slane %v8369, %v8388
        %v8390 = vlaneseq
        %v8391 = vshrl.u32 %v8390, 7
        %v8392 = vsub.s32 0, %v8391
        %v8393 = vrot.slane %v8373, %v8392
        %v8394 = vlaneseq
        %v8395 = vshrl.u32 %v8394, 7
        %v8396 = vsub.s32 0, %v8395
        %v8397 = vrot.slane %v8377, %v8396
        %v8430 = vunpack.c.l.b16 %v8326
        %v8431 = vunpack.c.h.b16 %v8326
        %v8432 = vunpack.c.l.b16 %v8327
        %v8433 = vunpack.c.h.b16 %v8327
        %v8434 = vunpack.c.l.b16 %v8328
        %v8435 = vunpack.c.h.b16 %v8328
        %v8436 = vunpack.c.l.b16 %v8329
        %v8437 = vunpack.c.h.b16 %v8329
        %v8438 = vunpack.c.l.b16 %v8330
        %v8439 = vunpack.c.h.b16 %v8330
        %v8440 = vunpack.c.l.b16 %v8331
        %v8441 = vunpack.c.h.b16 %v8331
        %v8442 = vunpack.c.l.b16 %v8332
        %v8443 = vunpack.c.h.b16 %v8332
        %v8444 = vunpack.c.l.b16 %v8333
        %v8445 = vunpack.c.h.b16 %v8333
        %v8446 = vunpack.c.l.b16 %v8334
        %v8447 = vunpack.c.h.b16 %v8334
        %v8448 = vunpack.c.l.b16 %v8335
        %v8449 = vunpack.c.h.b16 %v8335
        %v8450 = vunpack.c.l.b16 %v8336
        %v8451 = vunpack.c.h.b16 %v8336
        %v8452 = vunpack.c.l.b16 %v8337
        %v8453 = vunpack.c.h.b16 %v8337
        %v8454 = vunpack.c.l.b16 %v8338
        %v8455 = vunpack.c.h.b16 %v8338
        %v8456 = vunpack.c.l.b16 %v8339
        %v8457 = vunpack.c.h.b16 %v8339
        %v8458 = vunpack.c.l.b16 %v8340
        %v8459 = vunpack.c.h.b16 %v8340
        %v8460 = vunpack.c.l.b16 %v8341
        %v8461 = vunpack.c.h.b16 %v8341
        %v8462 = vunpack.c.l.b16 %v8342
        %v8463 = vunpack.c.h.b16 %v8342
        %v8464 = vunpack.c.l.b16 %v8343
        %v8465 = vunpack.c.h.b16 %v8343
        %v8466 = vunpack.c.l.b16 %v8344
        %v8467 = vunpack.c.h.b16 %v8344
        %v8468 = vunpack.c.l.b16 %v8345
        %v8469 = vunpack.c.h.b16 %v8345
        %v8470 = vunpack.c.l.b16 %v8346
        %v8471 = vunpack.c.h.b16 %v8346
        %v8472 = vunpack.c.l.b16 %v8347
        %v8473 = vunpack.c.h.b16 %v8347
        %v8474 = vunpack.c.l.b16 %v8348
        %v8475 = vunpack.c.h.b16 %v8348
        %v8476 = vunpack.c.l.b16 %v8349
        %v8477 = vunpack.c.h.b16 %v8349
        %v8478 = vunpack.c.l.b16 %v8350
        %v8479 = vunpack.c.h.b16 %v8350
        %v8480 = vunpack.c.l.b16 %v8351
        %v8481 = vunpack.c.h.b16 %v8351
        %v8482 = vunpack.c.l.b16 %v8352
        %v8483 = vunpack.c.h.b16 %v8352
        %v8484 = vunpack.c.l.b16 %v8353
        %v8485 = vunpack.c.h.b16 %v8353
        %v8486 = vunpack.c.l.b16 %v8354
        %v8487 = vunpack.c.h.b16 %v8354
        %v8488 = vunpack.c.l.b16 %v8355
        %v8489 = vunpack.c.h.b16 %v8355
        %v8490 = vunpack.c.l.b16 %v8356
        %v8491 = vunpack.c.h.b16 %v8356
        %v8492 = vunpack.c.l.b16 %v8357
        %v8493 = vunpack.c.h.b16 %v8357
        %v8494 = vpack.c.b16 %v8434, %v8430
        %v8495 = vpack.c.b16 %v8435, %v8431
        %v8496 = vpack.c.b16 %v8436, %v8432
        %v8497 = vpack.c.b16 %v8437, %v8433
        %v8498 = vpack.c.b16 %v8442, %v8438
        %v8499 = vpack.c.b16 %v8443, %v8439
        %v8500 = vpack.c.b16 %v8444, %v8440
        %v8501 = vpack.c.b16 %v8445, %v8441
        %v8502 = vpack.c.b16 %v8450, %v8446
        %v8503 = vpack.c.b16 %v8451, %v8447
        %v8504 = vpack.c.b16 %v8452, %v8448
        %v8505 = vpack.c.b16 %v8453, %v8449
        %v8506 = vpack.c.b16 %v8458, %v8454
        %v8507 = vpack.c.b16 %v8459, %v8455
        %v8508 = vpack.c.b16 %v8460, %v8456
        %v8509 = vpack.c.b16 %v8461, %v8457
        %v8510 = vpack.c.b16 %v8466, %v8462
        %v8511 = vpack.c.b16 %v8467, %v8463
        %v8512 = vpack.c.b16 %v8468, %v8464
        %v8513 = vpack.c.b16 %v8469, %v8465
        %v8514 = vpack.c.b16 %v8474, %v8470
        %v8515 = vpack.c.b16 %v8475, %v8471
        %v8516 = vpack.c.b16 %v8476, %v8472
        %v8517 = vpack.c.b16 %v8477, %v8473
        %v8518 = vpack.c.b16 %v8482, %v8478
        %v8519 = vpack.c.b16 %v8483, %v8479
        %v8520 = vpack.c.b16 %v8484, %v8480
        %v8521 = vpack.c.b16 %v8485, %v8481
        %v8522 = vpack.c.b16 %v8490, %v8486
        %v8523 = vpack.c.b16 %v8491, %v8487
        %v8524 = vpack.c.b16 %v8492, %v8488
        %v8525 = vpack.c.b16 %v8493, %v8489
        %8558 = vmatprep.subr.bf16.mxu0 %v8495
        %8559 = vmatpush1.bf16.msra.mxu0 %v8494
        %8560 = vmatprep.subr.bf16.mxu0 %v8499
        %8561 = vmatpush1.bf16.msra.mxu0 %v8498
        %8562 = vmatprep.subr.bf16.mxu0 %v8503
        %8563 = vmatpush1.bf16.msra.mxu0 %v8502
        %8564 = vmatprep.subr.bf16.mxu0 %v8507
        %8565 = vmatpush1.bf16.msra.mxu0 %v8506
        %8566 = vmatprep.subr.bf16.mxu0 %v8511
        %8567 = vmatpush1.bf16.msra.mxu0 %v8510
        %8568 = vmatprep.subr.bf16.mxu0 %v8515
        %8569 = vmatpush1.bf16.msra.mxu0 %v8514
        %8570 = vmatprep.subr.bf16.mxu0 %v8519
        %8571 = vmatpush1.bf16.msra.mxu0 %v8518
        %8572 = vmatprep.subr.bf16.mxu0 %v8523
        %8573 = vmatpush1.bf16.msra.mxu0 %v8522
        %8574 = vmatprep.subr.bf16.mxu0 0
        %8575 = vmatpush1.bf16.msra.mxu0 0
        %8576 = vmatprep.subr.bf16.mxu0 0
        %8577 = vmatpush1.bf16.msra.mxu0 0
        %8578 = vmatprep.subr.bf16.mxu0 0
        %8579 = vmatpush1.bf16.msra.mxu0 0
        %8580 = vmatprep.subr.bf16.mxu0 0
        %8581 = vmatpush1.bf16.msra.mxu0 0
        %8582 = vmatprep.subr.bf16.mxu0 0
        %8583 = vmatpush1.bf16.msra.mxu0 0
        %8584 = vmatprep.subr.bf16.mxu0 0
        %8585 = vmatpush1.bf16.msra.mxu0 0
        %8586 = vmatprep.subr.bf16.mxu0 0
        %8587 = vmatpush1.bf16.msra.mxu0 0
        %8588 = vmatprep.subr.bf16.mxu0 0
        %8589 = vmatpush1.bf16.msra.mxu0 0
        %8590 = vmatprep.mubr.bf16.mxu0 0
        %8591 = vmatmul.mubr.bf16.gmra.mrb[0].mxu0 %v8317
        %v8592 = vpop.f32.mrb[0].mxu0
        %v8593 = vadd.f32 %v8385, %v8592
        %v8594 = vpop.f32.mrb[0].mxu0
        %v8595 = vadd.f32 %v8389, %v8594
        %v8596 = vpop.f32.mrb[0].mxu0
        %v8597 = vadd.f32 %v8385, %v8596
        %v8598 = vpop.f32.mrb[0].mxu0
        %v8599 = vadd.f32 %v8389, %v8598
        %8600 = vmatprep.mubr.bf16.mxu0 0
        %8601 = vmatmul.mubr.bf16.gmra.mrb[0].mxu0 %v8318
        %v8602 = vpop.f32.mrb[0].mxu0
        %v8603 = vadd.f32 %v8385, %v8602
        %v8604 = vpop.f32.mrb[0].mxu0
        %v8605 = vadd.f32 %v8389, %v8604
        %v8606 = vpop.f32.mrb[0].mxu0
        %v8607 = vadd.f32 %v8385, %v8606
        %v8608 = vpop.f32.mrb[0].mxu0
        %v8609 = vadd.f32 %v8389, %v8608
        %8610 = vmatprep.mubr.bf16.mxu0 0
        %8611 = vmatmul.mubr.bf16.gmra.mrb[0].mxu0 %v8319
        %v8612 = vpop.f32.mrb[0].mxu0
        %v8613 = vadd.f32 %v8385, %v8612
        %v8614 = vpop.f32.mrb[0].mxu0
        %v8615 = vadd.f32 %v8389, %v8614
        %v8616 = vpop.f32.mrb[0].mxu0
        %v8617 = vadd.f32 %v8385, %v8616
        %v8618 = vpop.f32.mrb[0].mxu0
        %v8619 = vadd.f32 %v8389, %v8618
        %8620 = vmatprep.mubr.bf16.mxu0 0
        %8621 = vmatmul.mubr.bf16.gmra.mrb[0].mxu0 %v8320
        %v8622 = vpop.f32.mrb[0].mxu0
        %v8623 = vadd.f32 %v8385, %v8622
        %v8624 = vpop.f32.mrb[0].mxu0
        %v8625 = vadd.f32 %v8389, %v8624
        %v8626 = vpop.f32.mrb[0].mxu0
        %v8627 = vadd.f32 %v8385, %v8626
        %v8628 = vpop.f32.mrb[0].mxu0
        %v8629 = vadd.f32 %v8389, %v8628
        %8630 = vmatprep.mubr.bf16.mxu0 0
        %8631 = vmatmul.mubr.bf16.gmra.mrb[0].mxu0 %v8321
        %v8632 = vpop.f32.mrb[0].mxu0
        %v8633 = vadd.f32 %v8385, %v8632
        %v8634 = vpop.f32.mrb[0].mxu0
        %v8635 = vadd.f32 %v8389, %v8634
        %v8636 = vpop.f32.mrb[0].mxu0
        %v8637 = vadd.f32 %v8385, %v8636
        %v8638 = vpop.f32.mrb[0].mxu0
        %v8639 = vadd.f32 %v8389, %v8638
        %8640 = vmatprep.mubr.bf16.mxu0 0
        %8641 = vmatmul.mubr.bf16.gmra.mrb[0].mxu0 %v8322
        %v8642 = vpop.f32.mrb[0].mxu0
        %v8643 = vadd.f32 %v8385, %v8642
        %v8644 = vpop.f32.mrb[0].mxu0
        %v8645 = vadd.f32 %v8389, %v8644
        %v8646 = vpop.f32.mrb[0].mxu0
        %v8647 = vadd.f32 %v8385, %v8646
        %v8648 = vpop.f32.mrb[0].mxu0
        %v8649 = vadd.f32 %v8389, %v8648
        %8650 = vmatprep.mubr.bf16.mxu0 0
        %8651 = vmatmul.mubr.bf16.gmra.mrb[0].mxu0 %v8323
        %v8652 = vpop.f32.mrb[0].mxu0
        %v8653 = vadd.f32 %v8385, %v8652
        %v8654 = vpop.f32.mrb[0].mxu0
        %v8655 = vadd.f32 %v8389, %v8654
        %v8656 = vpop.f32.mrb[0].mxu0
        %v8657 = vadd.f32 %v8385, %v8656
        %v8658 = vpop.f32.mrb[0].mxu0
        %v8659 = vadd.f32 %v8389, %v8658
        %8660 = vmatprep.mubr.bf16.mxu0 0
        %8661 = vmatmul.mubr.bf16.gmra.mrb[0].mxu0 %v8324
        %v8662 = vpop.f32.mrb[0].mxu0
        %v8663 = vadd.f32 %v8385, %v8662
        %v8664 = vpop.f32.mrb[0].mxu0
        %v8665 = vadd.f32 %v8389, %v8664
        %v8666 = vpop.f32.mrb[0].mxu0
        %v8667 = vadd.f32 %v8385, %v8666
        %v8668 = vpop.f32.mrb[0].mxu0
        %v8669 = vadd.f32 %v8389, %v8668
        %8670 = vdwg.mxu0
        %8671 = vmatprep.subr.bf16.mxu0 %v8497
        %8672 = vmatpush1.bf16.msra.mxu0 %v8496
        %8673 = vmatprep.subr.bf16.mxu0 %v8501
        %8674 = vmatpush1.bf16.msra.mxu0 %v8500
        %8675 = vmatprep.subr.bf16.mxu0 %v8505
        %8676 = vmatpush1.bf16.msra.mxu0 %v8504
        %8677 = vmatprep.subr.bf16.mxu0 %v8509
        %8678 = vmatpush1.bf16.msra.mxu0 %v8508
        %8679 = vmatprep.subr.bf16.mxu0 %v8513
        %8680 = vmatpush1.bf16.msra.mxu0 %v8512
        %8681 = vmatprep.subr.bf16.mxu0 %v8517
        %8682 = vmatpush1.bf16.msra.mxu0 %v8516
        %8683 = vmatprep.subr.bf16.mxu0 %v8521
        %8684 = vmatpush1.bf16.msra.mxu0 %v8520
        %8685 = vmatprep.subr.bf16.mxu0 %v8525
        %8686 = vmatpush1.bf16.msra.mxu0 %v8524
        %8687 = vmatprep.subr.bf16.mxu0 0
        %8688 = vmatpush1.bf16.msra.mxu0 0
        %8689 = vmatprep.subr.bf16.mxu0 0
        %8690 = vmatpush1.bf16.msra.mxu0 0
        %8691 = vmatprep.subr.bf16.mxu0 0
        %8692 = vmatpush1.bf16.msra.mxu0 0
        %8693 = vmatprep.subr.bf16.mxu0 0
        %8694 = vmatpush1.bf16.msra.mxu0 0
        %8695 = vmatprep.subr.bf16.mxu0 0
        %8696 = vmatpush1.bf16.msra.mxu0 0
        %8697 = vmatprep.subr.bf16.mxu0 0
        %8698 = vmatpush1.bf16.msra.mxu0 0
        %8699 = vmatprep.subr.bf16.mxu0 0
        %8700 = vmatpush1.bf16.msra.mxu0 0
        %8701 = vmatprep.subr.bf16.mxu0 0
        %8702 = vmatpush1.bf16.msra.mxu0 0
        %8703 = vmatprep.mubr.bf16.mxu0 0
        %8704 = vmatmul.mubr.bf16.gmra.mrb[0].mxu0 %v8317
        %v8705 = vpop.f32.mrb[0].mxu0
        %v8706 = vadd.f32 %v8393, %v8705
        %v8707 = vpop.f32.mrb[0].mxu0
        %v8708 = vadd.f32 %v8397, %v8707
        %v8709 = vpop.f32.mrb[0].mxu0
        %v8710 = vadd.f32 %v8393, %v8709
        %v8711 = vpop.f32.mrb[0].mxu0
        %v8712 = vadd.f32 %v8397, %v8711
        %8713 = vmatprep.mubr.bf16.mxu0 0
        %8714 = vmatmul.mubr.bf16.gmra.mrb[0].mxu0 %v8318
        %v8715 = vpop.f32.mrb[0].mxu0
        %v8716 = vadd.f32 %v8393, %v8715
        %v8717 = vpop.f32.mrb[0].mxu0
        %v8718 = vadd.f32 %v8397, %v8717
        %v8719 = vpop.f32.mrb[0].mxu0
        %v8720 = vadd.f32 %v8393, %v8719
        %v8721 = vpop.f32.mrb[0].mxu0
        %v8722 = vadd.f32 %v8397, %v8721
        %8723 = vmatprep.mubr.bf16.mxu0 0
        %8724 = vmatmul.mubr.bf16.gmra.mrb[0].mxu0 %v8319
        %v8725 = vpop.f32.mrb[0].mxu0
        %v8726 = vadd.f32 %v8393, %v8725
        %v8727 = vpop.f32.mrb[0].mxu0
        %v8728 = vadd.f32 %v8397, %v8727
        %v8729 = vpop.f32.mrb[0].mxu0
        %v8730 = vadd.f32 %v8393, %v8729
        %v8731 = vpop.f32.mrb[0].mxu0
        %v8732 = vadd.f32 %v8397, %v8731
        %8733 = vmatprep.mubr.bf16.mxu0 0
        %8734 = vmatmul.mubr.bf16.gmra.mrb[0].mxu0 %v8320
        %v8735 = vpop.f32.mrb[0].mxu0
        %v8736 = vadd.f32 %v8393, %v8735
        %v8737 = vpop.f32.mrb[0].mxu0
        %v8738 = vadd.f32 %v8397, %v8737
        %v8739 = vpop.f32.mrb[0].mxu0
        %v8740 = vadd.f32 %v8393, %v8739
        %v8741 = vpop.f32.mrb[0].mxu0
        %v8742 = vadd.f32 %v8397, %v8741
        %8743 = vmatprep.mubr.bf16.mxu0 0
        %8744 = vmatmul.mubr.bf16.gmra.mrb[0].mxu0 %v8321
        %v8745 = vpop.f32.mrb[0].mxu0
        %v8746 = vadd.f32 %v8393, %v8745
        %v8747 = vpop.f32.mrb[0].mxu0
        %v8748 = vadd.f32 %v8397, %v8747
        %v8749 = vpop.f32.mrb[0].mxu0
        %v8750 = vadd.f32 %v8393, %v8749
        %v8751 = vpop.f32.mrb[0].mxu0
        %v8752 = vadd.f32 %v8397, %v8751
        %8753 = vmatprep.mubr.bf16.mxu0 0
        %8754 = vmatmul.mubr.bf16.gmra.mrb[0].mxu0 %v8322
        %v8755 = vpop.f32.mrb[0].mxu0
        %v8756 = vadd.f32 %v8393, %v8755
        %v8757 = vpop.f32.mrb[0].mxu0
        %v8758 = vadd.f32 %v8397, %v8757
        %v8759 = vpop.f32.mrb[0].mxu0
        %v8760 = vadd.f32 %v8393, %v8759
        %v8761 = vpop.f32.mrb[0].mxu0
        %v8762 = vadd.f32 %v8397, %v8761
        %8763 = vmatprep.mubr.bf16.mxu0 0
        %8764 = vmatmul.mubr.bf16.gmra.mrb[0].mxu0 %v8323
        %v8765 = vpop.f32.mrb[0].mxu0
        %v8766 = vadd.f32 %v8393, %v8765
        %v8767 = vpop.f32.mrb[0].mxu0
        %v8768 = vadd.f32 %v8397, %v8767
        %v8769 = vpop.f32.mrb[0].mxu0
        %v8770 = vadd.f32 %v8393, %v8769
        %v8771 = vpop.f32.mrb[0].mxu0
        %v8772 = vadd.f32 %v8397, %v8771
        %8773 = vmatprep.mubr.bf16.mxu0 0
        %8774 = vmatmul.mubr.bf16.gmra.mrb[0].mxu0 %v8324
        %v8775 = vpop.f32.mrb[0].mxu0
        %v8776 = vadd.f32 %v8393, %v8775
        %v8777 = vpop.f32.mrb[0].mxu0
        %v8778 = vadd.f32 %v8397, %v8777
        %v8779 = vpop.f32.mrb[0].mxu0
        %v8780 = vadd.f32 %v8393, %v8779
        %v8781 = vpop.f32.mrb[0].mxu0
        %v8782 = vadd.f32 %v8397, %v8781
        %8783 = vdwg.mxu0
        %v8784 = vmul.f32 %v8593, 0.5
        %v8785 = vmul.f32 %v8595, 0.5
        %v8786 = vmul.f32 %v8706, 0.5
        %v8787 = vmul.f32 %v8708, 0.5
        %v8788 = vmul.f32 %v8597, 0.5
        %v8789 = vmul.f32 %v8599, 0.5
        %v8790 = vmul.f32 %v8710, 0.5
        %v8791 = vmul.f32 %v8712, 0.5
        %v8792 = vmul.f32 %v8603, 0.5
        %v8793 = vmul.f32 %v8605, 0.5
        %v8794 = vmul.f32 %v8716, 0.5
        %v8795 = vmul.f32 %v8718, 0.5
        %v8796 = vmul.f32 %v8607, 0.5
        %v8797 = vmul.f32 %v8609, 0.5
        %v8798 = vmul.f32 %v8720, 0.5
        %v8799 = vmul.f32 %v8722, 0.5
        %v8800 = vmul.f32 %v8613, 0.5
        %v8801 = vmul.f32 %v8615, 0.5
        %v8802 = vmul.f32 %v8726, 0.5
        %v8803 = vmul.f32 %v8728, 0.5
        %v8804 = vmul.f32 %v8617, 0.5
        %v8805 = vmul.f32 %v8619, 0.5
        %v8806 = vmul.f32 %v8730, 0.5
        %v8807 = vmul.f32 %v8732, 0.5
        %v8808 = vmul.f32 %v8623, 0.5
        %v8809 = vmul.f32 %v8625, 0.5
        %v8810 = vmul.f32 %v8736, 0.5
        %v8811 = vmul.f32 %v8738, 0.5
        %v8812 = vmul.f32 %v8627, 0.5
        %v8813 = vmul.f32 %v8629, 0.5
        %v8814 = vmul.f32 %v8740, 0.5
        %v8815 = vmul.f32 %v8742, 0.5
        %v8816 = vmul.f32 %v8633, 0.5
        %v8817 = vmul.f32 %v8635, 0.5
        %v8818 = vmul.f32 %v8746, 0.5
        %v8819 = vmul.f32 %v8748, 0.5
        %v8820 = vmul.f32 %v8637, 0.5
        %v8821 = vmul.f32 %v8639, 0.5
        %v8822 = vmul.f32 %v8750, 0.5
        %v8823 = vmul.f32 %v8752, 0.5
        %v8824 = vmul.f32 %v8643, 0.5
        %v8825 = vmul.f32 %v8645, 0.5
        %v8826 = vmul.f32 %v8756, 0.5
        %v8827 = vmul.f32 %v8758, 0.5
        %v8828 = vmul.f32 %v8647, 0.5
        %v8829 = vmul.f32 %v8649, 0.5
        %v8830 = vmul.f32 %v8760, 0.5
        %v8831 = vmul.f32 %v8762, 0.5
        %v8832 = vmul.f32 %v8653, 0.5
        %v8833 = vmul.f32 %v8655, 0.5
        %v8834 = vmul.f32 %v8766, 0.5
        %v8835 = vmul.f32 %v8768, 0.5
        %v8836 = vmul.f32 %v8657, 0.5
        %v8837 = vmul.f32 %v8659, 0.5
        %v8838 = vmul.f32 %v8770, 0.5
        %v8839 = vmul.f32 %v8772, 0.5
        %v8840 = vmul.f32 %v8663, 0.5
        %v8841 = vmul.f32 %v8665, 0.5
        %v8842 = vmul.f32 %v8776, 0.5
        %v8843 = vmul.f32 %v8778, 0.5
        %v8844 = vmul.f32 %v8667, 0.5
        %v8845 = vmul.f32 %v8669, 0.5
        %v8846 = vmul.f32 %v8780, 0.5
        %v8847 = vmul.f32 %v8782, 0.5
        %v8848 = vmul.f32 %v8593, 0.044715
        %v8849 = vmul.f32 %v8595, 0.044715
        %v8850 = vmul.f32 %v8706, 0.044715
        %v8851 = vmul.f32 %v8708, 0.044715
        %v8852 = vmul.f32 %v8597, 0.044715
        %v8853 = vmul.f32 %v8599, 0.044715
        %v8854 = vmul.f32 %v8710, 0.044715
        %v8855 = vmul.f32 %v8712, 0.044715
        %v8856 = vmul.f32 %v8603, 0.044715
        %v8857 = vmul.f32 %v8605, 0.044715
        %v8858 = vmul.f32 %v8716, 0.044715
        %v8859 = vmul.f32 %v8718, 0.044715
        %v8860 = vmul.f32 %v8607, 0.044715
        %v8861 = vmul.f32 %v8609, 0.044715
        %v8862 = vmul.f32 %v8720, 0.044715
        %v8863 = vmul.f32 %v8722, 0.044715
        %v8864 = vmul.f32 %v8613, 0.044715
        %v8865 = vmul.f32 %v8615, 0.044715
        %v8866 = vmul.f32 %v8726, 0.044715
        %v8867 = vmul.f32 %v8728, 0.044715
        %v8868 = vmul.f32 %v8617, 0.044715
        %v8869 = vmul.f32 %v8619, 0.044715
        %v8870 = vmul.f32 %v8730, 0.044715
        %v8871 = vmul.f32 %v8732, 0.044715
        %v8872 = vmul.f32 %v8623, 0.044715
        %v8873 = vmul.f32 %v8625, 0.044715
        %v8874 = vmul.f32 %v8736, 0.044715
        %v8875 = vmul.f32 %v8738, 0.044715
        %v8876 = vmul.f32 %v8627, 0.044715
        %v8877 = vmul.f32 %v8629, 0.044715
        %v8878 = vmul.f32 %v8740, 0.044715
        %v8879 = vmul.f32 %v8742, 0.044715
        %v8880 = vmul.f32 %v8633, 0.044715
        %v8881 = vmul.f32 %v8635, 0.044715
        %v8882 = vmul.f32 %v8746, 0.044715
        %v8883 = vmul.f32 %v8748, 0.044715
        %v8884 = vmul.f32 %v8637, 0.044715
        %v8885 = vmul.f32 %v8639, 0.044715
        %v8886 = vmul.f32 %v8750, 0.044715
        %v8887 = vmul.f32 %v8752, 0.044715
        %v8888 = vmul.f32 %v8643, 0.044715
        %v8889 = vmul.f32 %v8645, 0.044715
        %v8890 = vmul.f32 %v8756, 0.044715
        %v8891 = vmul.f32 %v8758, 0.044715
        %v8892 = vmul.f32 %v8647, 0.044715
        %v8893 = vmul.f32 %v8649, 0.044715
        %v8894 = vmul.f32 %v8760, 0.044715
        %v8895 = vmul.f32 %v8762, 0.044715
        %v8896 = vmul.f32 %v8653, 0.044715
        %v8897 = vmul.f32 %v8655, 0.044715
        %v8898 = vmul.f32 %v8766, 0.044715
        %v8899 = vmul.f32 %v8768, 0.044715
        %v8900 = vmul.f32 %v8657, 0.044715
        %v8901 = vmul.f32 %v8659, 0.044715
        %v8902 = vmul.f32 %v8770, 0.044715
        %v8903 = vmul.f32 %v8772, 0.044715
        %v8904 = vmul.f32 %v8663, 0.044715
        %v8905 = vmul.f32 %v8665, 0.044715
        %v8906 = vmul.f32 %v8776, 0.044715
        %v8907 = vmul.f32 %v8778, 0.044715
        %v8908 = vmul.f32 %v8667, 0.044715
        %v8909 = vmul.f32 %v8669, 0.044715
        %v8910 = vmul.f32 %v8780, 0.044715
        %v8911 = vmul.f32 %v8782, 0.044715
        %v8912 = vmul.f32 %v8848, %v8593
        %v8913 = vmul.f32 %v8849, %v8595
        %v8914 = vmul.f32 %v8850, %v8706
        %v8915 = vmul.f32 %v8851, %v8708
        %v8916 = vmul.f32 %v8852, %v8597
        %v8917 = vmul.f32 %v8853, %v8599
        %v8918 = vmul.f32 %v8854, %v8710
        %v8919 = vmul.f32 %v8855, %v8712
        %v8920 = vmul.f32 %v8856, %v8603
        %v8921 = vmul.f32 %v8857, %v8605
        %v8922 = vmul.f32 %v8858, %v8716
        %v8923 = vmul.f32 %v8859, %v8718
        %v8924 = vmul.f32 %v8860, %v8607
        %v8925 = vmul.f32 %v8861, %v8609
        %v8926 = vmul.f32 %v8862, %v8720
        %v8927 = vmul.f32 %v8863, %v8722
        %v8928 = vmul.f32 %v8864, %v8613
        %v8929 = vmul.f32 %v8865, %v8615
        %v8930 = vmul.f32 %v8866, %v8726
        %v8931 = vmul.f32 %v8867, %v8728
        %v8932 = vmul.f32 %v8868, %v8617
        %v8933 = vmul.f32 %v8869, %v8619
        %v8934 = vmul.f32 %v8870, %v8730
        %v8935 = vmul.f32 %v8871, %v8732
        %v8936 = vmul.f32 %v8872, %v8623
        %v8937 = vmul.f32 %v8873, %v8625
        %v8938 = vmul.f32 %v8874, %v8736
        %v8939 = vmul.f32 %v8875, %v8738
        %v8940 = vmul.f32 %v8876, %v8627
        %v8941 = vmul.f32 %v8877, %v8629
        %v8942 = vmul.f32 %v8878, %v8740
        %v8943 = vmul.f32 %v8879, %v8742
        %v8944 = vmul.f32 %v8880, %v8633
        %v8945 = vmul.f32 %v8881, %v8635
        %v8946 = vmul.f32 %v8882, %v8746
        %v8947 = vmul.f32 %v8883, %v8748
        %v8948 = vmul.f32 %v8884, %v8637
        %v8949 = vmul.f32 %v8885, %v8639
        %v8950 = vmul.f32 %v8886, %v8750
        %v8951 = vmul.f32 %v8887, %v8752
        %v8952 = vmul.f32 %v8888, %v8643
        %v8953 = vmul.f32 %v8889, %v8645
        %v8954 = vmul.f32 %v8890, %v8756
        %v8955 = vmul.f32 %v8891, %v8758
        %v8956 = vmul.f32 %v8892, %v8647
        %v8957 = vmul.f32 %v8893, %v8649
        %v8958 = vmul.f32 %v8894, %v8760
        %v8959 = vmul.f32 %v8895, %v8762
        %v8960 = vmul.f32 %v8896, %v8653
        %v8961 = vmul.f32 %v8897, %v8655
        %v8962 = vmul.f32 %v8898, %v8766
        %v8963 = vmul.f32 %v8899, %v8768
        %v8964 = vmul.f32 %v8900, %v8657
        %v8965 = vmul.f32 %v8901, %v8659
        %v8966 = vmul.f32 %v8902, %v8770
        %v8967 = vmul.f32 %v8903, %v8772
        %v8968 = vmul.f32 %v8904, %v8663
        %v8969 = vmul.f32 %v8905, %v8665
        %v8970 = vmul.f32 %v8906, %v8776
        %v8971 = vmul.f32 %v8907, %v8778
        %v8972 = vmul.f32 %v8908, %v8667
        %v8973 = vmul.f32 %v8909, %v8669
        %v8974 = vmul.f32 %v8910, %v8780
        %v8975 = vmul.f32 %v8911, %v8782
        %v8976 = vmul.f32 %v8912, %v8593
        %v8977 = vmul.f32 %v8913, %v8595
        %v8978 = vmul.f32 %v8914, %v8706
        %v8979 = vmul.f32 %v8915, %v8708
        %v8980 = vmul.f32 %v8916, %v8597
        %v8981 = vmul.f32 %v8917, %v8599
        %v8982 = vmul.f32 %v8918, %v8710
        %v8983 = vmul.f32 %v8919, %v8712
        %v8984 = vmul.f32 %v8920, %v8603
        %v8985 = vmul.f32 %v8921, %v8605
        %v8986 = vmul.f32 %v8922, %v8716
        %v8987 = vmul.f32 %v8923, %v8718
        %v8988 = vmul.f32 %v8924, %v8607
        %v8989 = vmul.f32 %v8925, %v8609
        %v8990 = vmul.f32 %v8926, %v8720
        %v8991 = vmul.f32 %v8927, %v8722
        %v8992 = vmul.f32 %v8928, %v8613
        %v8993 = vmul.f32 %v8929, %v8615
        %v8994 = vmul.f32 %v8930, %v8726
        %v8995 = vmul.f32 %v8931, %v8728
        %v8996 = vmul.f32 %v8932, %v8617
        %v8997 = vmul.f32 %v8933, %v8619
        %v8998 = vmul.f32 %v8934, %v8730
        %v8999 = vmul.f32 %v8935, %v8732
        %v9000 = vmul.f32 %v8936, %v8623
        %v9001 = vmul.f32 %v8937, %v8625
        %v9002 = vmul.f32 %v8938, %v8736
        %v9003 = vmul.f32 %v8939, %v8738
        %v9004 = vmul.f32 %v8940, %v8627
        %v9005 = vmul.f32 %v8941, %v8629
        %v9006 = vmul.f32 %v8942, %v8740
        %v9007 = vmul.f32 %v8943, %v8742
        %v9008 = vmul.f32 %v8944, %v8633
        %v9009 = vmul.f32 %v8945, %v8635
        %v9010 = vmul.f32 %v8946, %v8746
        %v9011 = vmul.f32 %v8947, %v8748
        %v9012 = vmul.f32 %v8948, %v8637
        %v9013 = vmul.f32 %v8949, %v8639
        %v9014 = vmul.f32 %v8950, %v8750
        %v9015 = vmul.f32 %v8951, %v8752
        %v9016 = vmul.f32 %v8952, %v8643
        %v9017 = vmul.f32 %v8953, %v8645
        %v9018 = vmul.f32 %v8954, %v8756
        %v9019 = vmul.f32 %v8955, %v8758
        %v9020 = vmul.f32 %v8956, %v8647
        %v9021 = vmul.f32 %v8957, %v8649
        %v9022 = vmul.f32 %v8958, %v8760
        %v9023 = vmul.f32 %v8959, %v8762
        %v9024 = vmul.f32 %v8960, %v8653
        %v9025 = vmul.f32 %v8961, %v8655
        %v9026 = vmul.f32 %v8962, %v8766
        %v9027 = vmul.f32 %v8963, %v8768
        %v9028 = vmul.f32 %v8964, %v8657
        %v9029 = vmul.f32 %v8965, %v8659
        %v9030 = vmul.f32 %v8966, %v8770
        %v9031 = vmul.f32 %v8967, %v8772
        %v9032 = vmul.f32 %v8968, %v8663
        %v9033 = vmul.f32 %v8969, %v8665
        %v9034 = vmul.f32 %v8970, %v8776
        %v9035 = vmul.f32 %v8971, %v8778
        %v9036 = vmul.f32 %v8972, %v8667
        %v9037 = vmul.f32 %v8973, %v8669
        %v9038 = vmul.f32 %v8974, %v8780
        %v9039 = vmul.f32 %v8975, %v8782
        %v9040 = vadd.f32 %v8593, %v8976
        %v9041 = vadd.f32 %v8595, %v8977
        %v9042 = vadd.f32 %v8706, %v8978
        %v9043 = vadd.f32 %v8708, %v8979
        %v9044 = vadd.f32 %v8597, %v8980
        %v9045 = vadd.f32 %v8599, %v8981
        %v9046 = vadd.f32 %v8710, %v8982
        %v9047 = vadd.f32 %v8712, %v8983
        %v9048 = vadd.f32 %v8603, %v8984
        %v9049 = vadd.f32 %v8605, %v8985
        %v9050 = vadd.f32 %v8716, %v8986
        %v9051 = vadd.f32 %v8718, %v8987
        %v9052 = vadd.f32 %v8607, %v8988
        %v9053 = vadd.f32 %v8609, %v8989
        %v9054 = vadd.f32 %v8720, %v8990
        %v9055 = vadd.f32 %v8722, %v8991
        %v9056 = vadd.f32 %v8613, %v8992
        %v9057 = vadd.f32 %v8615, %v8993
        %v9058 = vadd.f32 %v8726, %v8994
        %v9059 = vadd.f32 %v8728, %v8995
        %v9060 = vadd.f32 %v8617, %v8996
        %v9061 = vadd.f32 %v8619, %v8997
        %v9062 = vadd.f32 %v8730, %v8998
        %v9063 = vadd.f32 %v8732, %v8999
        %v9064 = vadd.f32 %v8623, %v9000
        %v9065 = vadd.f32 %v8625, %v9001
        %v9066 = vadd.f32 %v8736, %v9002
        %v9067 = vadd.f32 %v8738, %v9003
        %v9068 = vadd.f32 %v8627, %v9004
        %v9069 = vadd.f32 %v8629, %v9005
        %v9070 = vadd.f32 %v8740, %v9006
        %v9071 = vadd.f32 %v8742, %v9007
        %v9072 = vadd.f32 %v8633, %v9008
        %v9073 = vadd.f32 %v8635, %v9009
        %v9074 = vadd.f32 %v8746, %v9010
        %v9075 = vadd.f32 %v8748, %v9011
        %v9076 = vadd.f32 %v8637, %v9012
        %v9077 = vadd.f32 %v8639, %v9013
        %v9078 = vadd.f32 %v8750, %v9014
        %v9079 = vadd.f32 %v8752, %v9015
        %v9080 = vadd.f32 %v8643, %v9016
        %v9081 = vadd.f32 %v8645, %v9017
        %v9082 = vadd.f32 %v8756, %v9018
        %v9083 = vadd.f32 %v8758, %v9019
        %v9084 = vadd.f32 %v8647, %v9020
        %v9085 = vadd.f32 %v8649, %v9021
        %v9086 = vadd.f32 %v8760, %v9022
        %v9087 = vadd.f32 %v8762, %v9023
        %v9088 = vadd.f32 %v8653, %v9024
        %v9089 = vadd.f32 %v8655, %v9025
        %v9090 = vadd.f32 %v8766, %v9026
        %v9091 = vadd.f32 %v8768, %v9027
        %v9092 = vadd.f32 %v8657, %v9028
        %v9093 = vadd.f32 %v8659, %v9029
        %v9094 = vadd.f32 %v8770, %v9030
        %v9095 = vadd.f32 %v8772, %v9031
        %v9096 = vadd.f32 %v8663, %v9032
        %v9097 = vadd.f32 %v8665, %v9033
        %v9098 = vadd.f32 %v8776, %v9034
        %v9099 = vadd.f32 %v8778, %v9035
        %v9100 = vadd.f32 %v8667, %v9036
        %v9101 = vadd.f32 %v8669, %v9037
        %v9102 = vadd.f32 %v8780, %v9038
        %v9103 = vadd.f32 %v8782, %v9039
        %v9104 = vmul.f32 %v9040, 0.7978846
        %v9105 = vmul.f32 %v9041, 0.7978846
        %v9106 = vmul.f32 %v9042, 0.7978846
        %v9107 = vmul.f32 %v9043, 0.7978846
        %v9108 = vmul.f32 %v9044, 0.7978846
        %v9109 = vmul.f32 %v9045, 0.7978846
        %v9110 = vmul.f32 %v9046, 0.7978846
        %v9111 = vmul.f32 %v9047, 0.7978846
        %v9112 = vmul.f32 %v9048, 0.7978846
        %v9113 = vmul.f32 %v9049, 0.7978846
        %v9114 = vmul.f32 %v9050, 0.7978846
        %v9115 = vmul.f32 %v9051, 0.7978846
        %v9116 = vmul.f32 %v9052, 0.7978846
        %v9117 = vmul.f32 %v9053, 0.7978846
        %v9118 = vmul.f32 %v9054, 0.7978846
        %v9119 = vmul.f32 %v9055, 0.7978846
        %v9120 = vmul.f32 %v9056, 0.7978846
        %v9121 = vmul.f32 %v9057, 0.7978846
        %v9122 = vmul.f32 %v9058, 0.7978846
        %v9123 = vmul.f32 %v9059, 0.7978846
        %v9124 = vmul.f32 %v9060, 0.7978846
        %v9125 = vmul.f32 %v9061, 0.7978846
        %v9126 = vmul.f32 %v9062, 0.7978846
        %v9127 = vmul.f32 %v9063, 0.7978846
        %v9128 = vmul.f32 %v9064, 0.7978846
        %v9129 = vmul.f32 %v9065, 0.7978846
        %v9130 = vmul.f32 %v9066, 0.7978846
        %v9131 = vmul.f32 %v9067, 0.7978846
        %v9132 = vmul.f32 %v9068, 0.7978846
        %v9133 = vmul.f32 %v9069, 0.7978846
        %v9134 = vmul.f32 %v9070, 0.7978846
        %v9135 = vmul.f32 %v9071, 0.7978846
        %v9136 = vmul.f32 %v9072, 0.7978846
        %v9137 = vmul.f32 %v9073, 0.7978846
        %v9138 = vmul.f32 %v9074, 0.7978846
        %v9139 = vmul.f32 %v9075, 0.7978846
        %v9140 = vmul.f32 %v9076, 0.7978846
        %v9141 = vmul.f32 %v9077, 0.7978846
        %v9142 = vmul.f32 %v9078, 0.7978846
        %v9143 = vmul.f32 %v9079, 0.7978846
        %v9144 = vmul.f32 %v9080, 0.7978846
        %v9145 = vmul.f32 %v9081, 0.7978846
        %v9146 = vmul.f32 %v9082, 0.7978846
        %v9147 = vmul.f32 %v9083, 0.7978846
        %v9148 = vmul.f32 %v9084, 0.7978846
        %v9149 = vmul.f32 %v9085, 0.7978846
        %v9150 = vmul.f32 %v9086, 0.7978846
        %v9151 = vmul.f32 %v9087, 0.7978846
        %v9152 = vmul.f32 %v9088, 0.7978846
        %v9153 = vmul.f32 %v9089, 0.7978846
        %v9154 = vmul.f32 %v9090, 0.7978846
        %v9155 = vmul.f32 %v9091, 0.7978846
        %v9156 = vmul.f32 %v9092, 0.7978846
        %v9157 = vmul.f32 %v9093, 0.7978846
        %v9158 = vmul.f32 %v9094, 0.7978846
        %v9159 = vmul.f32 %v9095, 0.7978846
        %v9160 = vmul.f32 %v9096, 0.7978846
        %v9161 = vmul.f32 %v9097, 0.7978846
        %v9162 = vmul.f32 %v9098, 0.7978846
        %v9163 = vmul.f32 %v9099, 0.7978846
        %v9164 = vmul.f32 %v9100, 0.7978846
        %v9165 = vmul.f32 %v9101, 0.7978846
        %v9166 = vmul.f32 %v9102, 0.7978846
        %v9167 = vmul.f32 %v9103, 0.7978846
        %v9168 = vtanh.pop %v9104
        %v9169 = vtanh.pop %v9105
        %v9170 = vtanh.pop %v9106
        %v9171 = vtanh.pop %v9107
        %v9172 = vtanh.pop %v9108
        %v9173 = vtanh.pop %v9109
        %v9174 = vtanh.pop %v9110
        %v9175 = vtanh.pop %v9111
        %v9176 = vtanh.pop %v9112
        %v9177 = vtanh.pop %v9113
        %v9178 = vtanh.pop %v9114
        %v9179 = vtanh.pop %v9115
        %v9180 = vtanh.pop %v9116
        %v9181 = vtanh.pop %v9117
        %v9182 = vtanh.pop %v9118
        %v9183 = vtanh.pop %v9119
        %v9184 = vtanh.pop %v9120
        %v9185 = vtanh.pop %v9121
        %v9186 = vtanh.pop %v9122
        %v9187 = vtanh.pop %v9123
        %v9188 = vtanh.pop %v9124
        %v9189 = vtanh.pop %v9125
        %v9190 = vtanh.pop %v9126
        %v9191 = vtanh.pop %v9127
        %v9192 = vtanh.pop %v9128
        %v9193 = vtanh.pop %v9129
        %v9194 = vtanh.pop %v9130
        %v9195 = vtanh.pop %v9131
        %v9196 = vtanh.pop %v9132
        %v9197 = vtanh.pop %v9133
        %v9198 = vtanh.pop %v9134
        %v9199 = vtanh.pop %v9135
        %v9200 = vtanh.pop %v9136
        %v9201 = vtanh.pop %v9137
        %v9202 = vtanh.pop %v9138
        %v9203 = vtanh.pop %v9139
        %v9204 = vtanh.pop %v9140
        %v9205 = vtanh.pop %v9141
        %v9206 = vtanh.pop %v9142
        %v9207 = vtanh.pop %v9143
        %v9208 = vtanh.pop %v9144
        %v9209 = vtanh.pop %v9145
        %v9210 = vtanh.pop %v9146
        %v9211 = vtanh.pop %v9147
        %v9212 = vtanh.pop %v9148
        %v9213 = vtanh.pop %v9149
        %v9214 = vtanh.pop %v9150
        %v9215 = vtanh.pop %v9151
        %v9216 = vtanh.pop %v9152
        %v9217 = vtanh.pop %v9153
        %v9218 = vtanh.pop %v9154
        %v9219 = vtanh.pop %v9155
        %v9220 = vtanh.pop %v9156
        %v9221 = vtanh.pop %v9157
        %v9222 = vtanh.pop %v9158
        %v9223 = vtanh.pop %v9159
        %v9224 = vtanh.pop %v9160
        %v9225 = vtanh.pop %v9161
        %v9226 = vtanh.pop %v9162
        %v9227 = vtanh.pop %v9163
        %v9228 = vtanh.pop %v9164
        %v9229 = vtanh.pop %v9165
        %v9230 = vtanh.pop %v9166
        %v9231 = vtanh.pop %v9167
        %v9232 = vadd.f32 %v9168, 1.0
        %v9233 = vadd.f32 %v9169, 1.0
        %v9234 = vadd.f32 %v9170, 1.0
        %v9235 = vadd.f32 %v9171, 1.0
        %v9236 = vadd.f32 %v9172, 1.0
        %v9237 = vadd.f32 %v9173, 1.0
        %v9238 = vadd.f32 %v9174, 1.0
        %v9239 = vadd.f32 %v9175, 1.0
        %v9240 = vadd.f32 %v9176, 1.0
        %v9241 = vadd.f32 %v9177, 1.0
        %v9242 = vadd.f32 %v9178, 1.0
        %v9243 = vadd.f32 %v9179, 1.0
        %v9244 = vadd.f32 %v9180, 1.0
        %v9245 = vadd.f32 %v9181, 1.0
        %v9246 = vadd.f32 %v9182, 1.0
        %v9247 = vadd.f32 %v9183, 1.0
        %v9248 = vadd.f32 %v9184, 1.0
        %v9249 = vadd.f32 %v9185, 1.0
        %v9250 = vadd.f32 %v9186, 1.0
        %v9251 = vadd.f32 %v9187, 1.0
        %v9252 = vadd.f32 %v9188, 1.0
        %v9253 = vadd.f32 %v9189, 1.0
        %v9254 = vadd.f32 %v9190, 1.0
        %v9255 = vadd.f32 %v9191, 1.0
        %v9256 = vadd.f32 %v9192, 1.0
        %v9257 = vadd.f32 %v9193, 1.0
        %v9258 = vadd.f32 %v9194, 1.0
        %v9259 = vadd.f32 %v9195, 1.0
        %v9260 = vadd.f32 %v9196, 1.0
        %v9261 = vadd.f32 %v9197, 1.0
        %v9262 = vadd.f32 %v9198, 1.0
        %v9263 = vadd.f32 %v9199, 1.0
        %v9264 = vadd.f32 %v9200, 1.0
        %v9265 = vadd.f32 %v9201, 1.0
        %v9266 = vadd.f32 %v9202, 1.0
        %v9267 = vadd.f32 %v9203, 1.0
        %v9268 = vadd.f32 %v9204, 1.0
        %v9269 = vadd.f32 %v9205, 1.0
        %v9270 = vadd.f32 %v9206, 1.0
        %v9271 = vadd.f32 %v9207, 1.0
        %v9272 = vadd.f32 %v9208, 1.0
        %v9273 = vadd.f32 %v9209, 1.0
        %v9274 = vadd.f32 %v9210, 1.0
        %v9275 = vadd.f32 %v9211, 1.0
        %v9276 = vadd.f32 %v9212, 1.0
        %v9277 = vadd.f32 %v9213, 1.0
        %v9278 = vadd.f32 %v9214, 1.0
        %v9279 = vadd.f32 %v9215, 1.0
        %v9280 = vadd.f32 %v9216, 1.0
        %v9281 = vadd.f32 %v9217, 1.0
        %v9282 = vadd.f32 %v9218, 1.0
        %v9283 = vadd.f32 %v9219, 1.0
        %v9284 = vadd.f32 %v9220, 1.0
        %v9285 = vadd.f32 %v9221, 1.0
        %v9286 = vadd.f32 %v9222, 1.0
        %v9287 = vadd.f32 %v9223, 1.0
        %v9288 = vadd.f32 %v9224, 1.0
        %v9289 = vadd.f32 %v9225, 1.0
        %v9290 = vadd.f32 %v9226, 1.0
        %v9291 = vadd.f32 %v9227, 1.0
        %v9292 = vadd.f32 %v9228, 1.0
        %v9293 = vadd.f32 %v9229, 1.0
        %v9294 = vadd.f32 %v9230, 1.0
        %v9295 = vadd.f32 %v9231, 1.0
        %v9296 = vmul.f32 %v8784, %v9232
        %v9297 = vmul.f32 %v8785, %v9233
        %v9298 = vmul.f32 %v8786, %v9234
        %v9299 = vmul.f32 %v8787, %v9235
        %v9300 = vmul.f32 %v8788, %v9236
        %v9301 = vmul.f32 %v8789, %v9237
        %v9302 = vmul.f32 %v8790, %v9238
        %v9303 = vmul.f32 %v8791, %v9239
        %v9304 = vmul.f32 %v8792, %v9240
        %v9305 = vmul.f32 %v8793, %v9241
        %v9306 = vmul.f32 %v8794, %v9242
        %v9307 = vmul.f32 %v8795, %v9243
        %v9308 = vmul.f32 %v8796, %v9244
        %v9309 = vmul.f32 %v8797, %v9245
        %v9310 = vmul.f32 %v8798, %v9246
        %v9311 = vmul.f32 %v8799, %v9247
        %v9312 = vmul.f32 %v8800, %v9248
        %v9313 = vmul.f32 %v8801, %v9249
        %v9314 = vmul.f32 %v8802, %v9250
        %v9315 = vmul.f32 %v8803, %v9251
        %v9316 = vmul.f32 %v8804, %v9252
        %v9317 = vmul.f32 %v8805, %v9253
        %v9318 = vmul.f32 %v8806, %v9254
        %v9319 = vmul.f32 %v8807, %v9255
        %v9320 = vmul.f32 %v8808, %v9256
        %v9321 = vmul.f32 %v8809, %v9257
        %v9322 = vmul.f32 %v8810, %v9258
        %v9323 = vmul.f32 %v8811, %v9259
        %v9324 = vmul.f32 %v8812, %v9260
        %v9325 = vmul.f32 %v8813, %v9261
        %v9326 = vmul.f32 %v8814, %v9262
        %v9327 = vmul.f32 %v8815, %v9263
        %v9328 = vmul.f32 %v8816, %v9264
        %v9329 = vmul.f32 %v8817, %v9265
        %v9330 = vmul.f32 %v8818, %v9266
        %v9331 = vmul.f32 %v8819, %v9267
        %v9332 = vmul.f32 %v8820, %v9268
        %v9333 = vmul.f32 %v8821, %v9269
        %v9334 = vmul.f32 %v8822, %v9270
        %v9335 = vmul.f32 %v8823, %v9271
        %v9336 = vmul.f32 %v8824, %v9272
        %v9337 = vmul.f32 %v8825, %v9273
        %v9338 = vmul.f32 %v8826, %v9274
        %v9339 = vmul.f32 %v8827, %v9275
        %v9340 = vmul.f32 %v8828, %v9276
        %v9341 = vmul.f32 %v8829, %v9277
        %v9342 = vmul.f32 %v8830, %v9278
        %v9343 = vmul.f32 %v8831, %v9279
        %v9344 = vmul.f32 %v8832, %v9280
        %v9345 = vmul.f32 %v8833, %v9281
        %v9346 = vmul.f32 %v8834, %v9282
        %v9347 = vmul.f32 %v8835, %v9283
        %v9348 = vmul.f32 %v8836, %v9284
        %v9349 = vmul.f32 %v8837, %v9285
        %v9350 = vmul.f32 %v8838, %v9286
        %v9351 = vmul.f32 %v8839, %v9287
        %v9352 = vmul.f32 %v8840, %v9288
        %v9353 = vmul.f32 %v8841, %v9289
        %v9354 = vmul.f32 %v8842, %v9290
        %v9355 = vmul.f32 %v8843, %v9291
        %v9356 = vmul.f32 %v8844, %v9292
        %v9357 = vmul.f32 %v8845, %v9293
        %v9358 = vmul.f32 %v8846, %v9294
        %v9359 = vmul.f32 %v8847, %v9295
        %v9360 = vpack.c.bf16 %v9300, %v9296
        %v9361 = vpack.c.bf16 %v9301, %v9297
        %v9362 = vpack.c.bf16 %v9302, %v9298
        %v9363 = vpack.c.bf16 %v9303, %v9299
        %v9364 = vpack.c.bf16 %v9308, %v9304
        %v9365 = vpack.c.bf16 %v9309, %v9305
        %v9366 = vpack.c.bf16 %v9310, %v9306
        %v9367 = vpack.c.bf16 %v9311, %v9307
        %v9368 = vpack.c.bf16 %v9316, %v9312
        %v9369 = vpack.c.bf16 %v9317, %v9313
        %v9370 = vpack.c.bf16 %v9318, %v9314
        %v9371 = vpack.c.bf16 %v9319, %v9315
        %v9372 = vpack.c.bf16 %v9324, %v9320
        %v9373 = vpack.c.bf16 %v9325, %v9321
        %v9374 = vpack.c.bf16 %v9326, %v9322
        %v9375 = vpack.c.bf16 %v9327, %v9323
        %v9376 = vpack.c.bf16 %v9332, %v9328
        %v9377 = vpack.c.bf16 %v9333, %v9329
        %v9378 = vpack.c.bf16 %v9334, %v9330
        %v9379 = vpack.c.bf16 %v9335, %v9331
        %v9380 = vpack.c.bf16 %v9340, %v9336
        %v9381 = vpack.c.bf16 %v9341, %v9337
        %v9382 = vpack.c.bf16 %v9342, %v9338
        %v9383 = vpack.c.bf16 %v9343, %v9339
        %v9384 = vpack.c.bf16 %v9348, %v9344
        %v9385 = vpack.c.bf16 %v9349, %v9345
        %v9386 = vpack.c.bf16 %v9350, %v9346
        %v9387 = vpack.c.bf16 %v9351, %v9347
        %v9388 = vpack.c.bf16 %v9356, %v9352
        %v9389 = vpack.c.bf16 %v9357, %v9353
        %v9390 = vpack.c.bf16 %v9358, %v9354
        %v9391 = vpack.c.bf16 %v9359, %v9355
        %s9392 = scalar_lea.vmem [#allocation12], 256
        %v9393 = vld [vmem:[%s9392] sm:$0xf]
        %v9394 = vld [vmem:[%s9392 + $0x4] sm:$0xf]
        %v9395 = vld [vmem:[%s9392 + $0x8] sm:$0xf]
        %v9396 = vld [vmem:[%s9392 + $0xc] sm:$0xf]
        %v9397 = vld [vmem:[%s9392 + $0x10] sm:$0xf]
        %v9398 = vld [vmem:[%s9392 + $0x14] sm:$0xf]
        %v9399 = vld [vmem:[%s9392 + $0x18] sm:$0xf]
        %v9400 = vld [vmem:[%s9392 + $0x1c] sm:$0xf]
        %v9401 = vld [vmem:[%s9392 + $0x20] sm:$0xf]
        %v9402 = vld [vmem:[%s9392 + $0x24] sm:$0xf]
        %v9403 = vld [vmem:[%s9392 + $0x28] sm:$0xf]
        %v9404 = vld [vmem:[%s9392 + $0x2c] sm:$0xf]
        %v9405 = vld [vmem:[%s9392 + $0x30] sm:$0xf]
        %v9406 = vld [vmem:[%s9392 + $0x34] sm:$0xf]
        %v9407 = vld [vmem:[%s9392 + $0x38] sm:$0xf]
        %v9408 = vld [vmem:[%s9392 + $0x3c] sm:$0xf]
        %v9409 = vld [vmem:[%s9392 + $0x40] sm:$0xf]
        %v9410 = vld [vmem:[%s9392 + $0x44] sm:$0xf]
        %v9411 = vld [vmem:[%s9392 + $0x48] sm:$0xf]
        %v9412 = vld [vmem:[%s9392 + $0x4c] sm:$0xf]
        %v9413 = vld [vmem:[%s9392 + $0x50] sm:$0xf]
        %v9414 = vld [vmem:[%s9392 + $0x54] sm:$0xf]
        %v9415 = vld [vmem:[%s9392 + $0x58] sm:$0xf]
        %v9416 = vld [vmem:[%s9392 + $0x5c] sm:$0xf]
        %v9417 = vld [vmem:[%s9392 + $0x60] sm:$0xf]
        %v9418 = vld [vmem:[%s9392 + $0x64] sm:$0xf]
        %v9419 = vld [vmem:[%s9392 + $0x68] sm:$0xf]
        %v9420 = vld [vmem:[%s9392 + $0x6c] sm:$0xf]
        %v9421 = vld [vmem:[%s9392 + $0x70] sm:$0xf]
        %v9422 = vld [vmem:[%s9392 + $0x74] sm:$0xf]
        %v9423 = vld [vmem:[%s9392 + $0x78] sm:$0xf]
        %v9424 = vld [vmem:[%s9392 + $0x7c] sm:$0xf]
        %v9425 = vld [vmem:[%s9392 + $0x80] sm:$0xf]
        %v9426 = vld [vmem:[%s9392 + $0x84] sm:$0xf]
        %v9427 = vld [vmem:[%s9392 + $0x88] sm:$0xf]
        %v9428 = vld [vmem:[%s9392 + $0x8c] sm:$0xf]
        %v9429 = vld [vmem:[%s9392 + $0x90] sm:$0xf]
        %v9430 = vld [vmem:[%s9392 + $0x94] sm:$0xf]
        %v9431 = vld [vmem:[%s9392 + $0x98] sm:$0xf]
        %v9432 = vld [vmem:[%s9392 + $0x9c] sm:$0xf]
        %v9433 = vld [vmem:[%s9392 + $0xa0] sm:$0xf]
        %v9434 = vld [vmem:[%s9392 + $0xa4] sm:$0xf]
        %v9435 = vld [vmem:[%s9392 + $0xa8] sm:$0xf]
        %v9436 = vld [vmem:[%s9392 + $0xac] sm:$0xf]
        %v9437 = vld [vmem:[%s9392 + $0xb0] sm:$0xf]
        %v9438 = vld [vmem:[%s9392 + $0xb4] sm:$0xf]
        %v9439 = vld [vmem:[%s9392 + $0xb8] sm:$0xf]
        %v9440 = vld [vmem:[%s9392 + $0xbc] sm:$0xf]
        %v9441 = vld [vmem:[%s9392 + $0xc0] sm:$0xf]
        %v9442 = vld [vmem:[%s9392 + $0xc4] sm:$0xf]
        %v9443 = vld [vmem:[%s9392 + $0xc8] sm:$0xf]
        %v9444 = vld [vmem:[%s9392 + $0xcc] sm:$0xf]
        %v9445 = vld [vmem:[%s9392 + $0xd0] sm:$0xf]
        %v9446 = vld [vmem:[%s9392 + $0xd4] sm:$0xf]
        %v9447 = vld [vmem:[%s9392 + $0xd8] sm:$0xf]
        %v9448 = vld [vmem:[%s9392 + $0xdc] sm:$0xf]
        %v9449 = vld [vmem:[%s9392 + $0xe0] sm:$0xf]
        %v9450 = vld [vmem:[%s9392 + $0xe4] sm:$0xf]
        %v9451 = vld [vmem:[%s9392 + $0xe8] sm:$0xf]
        %v9452 = vld [vmem:[%s9392 + $0xec] sm:$0xf]
        %v9453 = vld [vmem:[%s9392 + $0xf0] sm:$0xf]
        %v9454 = vld [vmem:[%s9392 + $0xf4] sm:$0xf]
        %v9455 = vld [vmem:[%s9392 + $0xf8] sm:$0xf]
        %v9456 = vld [vmem:[%s9392 + $0xfc] sm:$0xf]
        %s9457 = scalar_lea.vmem %s12, 1
        %v9458 = vld [vmem:[%s9457] sm:$0x1]
        %v9459 = vunpack.c.l.bf16 %v9458
        %v9460 = vlaneseq
        %v9461 = vshrl.u32 %v9460, 7
        %v9462 = vsub.s32 0, %v9461
        %v9463 = vrot.slane %v9459, %v9462
        %v9528 = vunpack.c.l.b16 %v9393
        %v9529 = vunpack.c.l.b16 %v9394
        %v9530 = vunpack.c.l.b16 %v9395
        %v9531 = vunpack.c.l.b16 %v9396
        %v9532 = vunpack.c.l.b16 %v9397
        %v9533 = vunpack.c.l.b16 %v9398
        %v9534 = vunpack.c.l.b16 %v9399
        %v9535 = vunpack.c.l.b16 %v9400
        %v9536 = vunpack.c.l.b16 %v9401
        %v9537 = vunpack.c.l.b16 %v9402
        %v9538 = vunpack.c.l.b16 %v9403
        %v9539 = vunpack.c.l.b16 %v9404
        %v9540 = vunpack.c.l.b16 %v9405
        %v9541 = vunpack.c.l.b16 %v9406
        %v9542 = vunpack.c.l.b16 %v9407
        %v9543 = vunpack.c.l.b16 %v9408
        %v9544 = vunpack.c.l.b16 %v9409
        %v9545 = vunpack.c.l.b16 %v9410
        %v9546 = vunpack.c.l.b16 %v9411
        %v9547 = vunpack.c.l.b16 %v9412
        %v9548 = vunpack.c.l.b16 %v9413
        %v9549 = vunpack.c.l.b16 %v9414
        %v9550 = vunpack.c.l.b16 %v9415
        %v9551 = vunpack.c.l.b16 %v9416
        %v9552 = vunpack.c.l.b16 %v9417
        %v9553 = vunpack.c.l.b16 %v9418
        %v9554 = vunpack.c.l.b16 %v9419
        %v9555 = vunpack.c.l.b16 %v9420
        %v9556 = vunpack.c.l.b16 %v9421
        %v9557 = vunpack.c.l.b16 %v9422
        %v9558 = vunpack.c.l.b16 %v9423
        %v9559 = vunpack.c.l.b16 %v9424
        %v9560 = vunpack.c.l.b16 %v9425
        %v9561 = vunpack.c.l.b16 %v9426
        %v9562 = vunpack.c.l.b16 %v9427
        %v9563 = vunpack.c.l.b16 %v9428
        %v9564 = vunpack.c.l.b16 %v9429
        %v9565 = vunpack.c.l.b16 %v9430
        %v9566 = vunpack.c.l.b16 %v9431
        %v9567 = vunpack.c.l.b16 %v9432
        %v9568 = vunpack.c.l.b16 %v9433
        %v9569 = vunpack.c.l.b16 %v9434
        %v9570 = vunpack.c.l.b16 %v9435
        %v9571 = vunpack.c.l.b16 %v9436
        %v9572 = vunpack.c.l.b16 %v9437
        %v9573 = vunpack.c.l.b16 %v9438
        %v9574 = vunpack.c.l.b16 %v9439
        %v9575 = vunpack.c.l.b16 %v9440
        %v9576 = vunpack.c.l.b16 %v9441
        %v9577 = vunpack.c.l.b16 %v9442
        %v9578 = vunpack.c.l.b16 %v9443
        %v9579 = vunpack.c.l.b16 %v9444
        %v9580 = vunpack.c.l.b16 %v9445
        %v9581 = vunpack.c.l.b16 %v9446
        %v9582 = vunpack.c.l.b16 %v9447
        %v9583 = vunpack.c.l.b16 %v9448
        %v9584 = vunpack.c.l.b16 %v9449
        %v9585 = vunpack.c.l.b16 %v9450
        %v9586 = vunpack.c.l.b16 %v9451
        %v9587 = vunpack.c.l.b16 %v9452
        %v9588 = vunpack.c.l.b16 %v9453
        %v9589 = vunpack.c.l.b16 %v9454
        %v9590 = vunpack.c.l.b16 %v9455
        %v9591 = vunpack.c.l.b16 %v9456
        %v9592 = vpack.c.b16 %v9529, %v9528
        %v9593 = vpack.c.b16 %v9531, %v9530
        %v9594 = vpack.c.b16 %v9533, %v9532
        %v9595 = vpack.c.b16 %v9535, %v9534
        %v9596 = vpack.c.b16 %v9537, %v9536
        %v9597 = vpack.c.b16 %v9539, %v9538
        %v9598 = vpack.c.b16 %v9541, %v9540
        %v9599 = vpack.c.b16 %v9543, %v9542
        %v9600 = vpack.c.b16 %v9545, %v9544
        %v9601 = vpack.c.b16 %v9547, %v9546
        %v9602 = vpack.c.b16 %v9549, %v9548
        %v9603 = vpack.c.b16 %v9551, %v9550
        %v9604 = vpack.c.b16 %v9553, %v9552
        %v9605 = vpack.c.b16 %v9555, %v9554
        %v9606 = vpack.c.b16 %v9557, %v9556
        %v9607 = vpack.c.b16 %v9559, %v9558
        %v9608 = vpack.c.b16 %v9561, %v9560
        %v9609 = vpack.c.b16 %v9563, %v9562
        %v9610 = vpack.c.b16 %v9565, %v9564
        %v9611 = vpack.c.b16 %v9567, %v9566
        %v9612 = vpack.c.b16 %v9569, %v9568
        %v9613 = vpack.c.b16 %v9571, %v9570
        %v9614 = vpack.c.b16 %v9573, %v9572
        %v9615 = vpack.c.b16 %v9575, %v9574
        %v9616 = vpack.c.b16 %v9577, %v9576
        %v9617 = vpack.c.b16 %v9579, %v9578
        %v9618 = vpack.c.b16 %v9581, %v9580
        %v9619 = vpack.c.b16 %v9583, %v9582
        %v9620 = vpack.c.b16 %v9585, %v9584
        %v9621 = vpack.c.b16 %v9587, %v9586
        %v9622 = vpack.c.b16 %v9589, %v9588
        %v9623 = vpack.c.b16 %v9591, %v9590
        %9656 = vmatprep.subr.bf16.mxu0 0
        %9657 = vmatpush1.bf16.msra.mxu0 %v9592
        %9658 = vmatprep.subr.bf16.mxu0 0
        %9659 = vmatpush1.bf16.msra.mxu0 %v9593
        %9660 = vmatprep.subr.bf16.mxu0 0
        %9661 = vmatpush1.bf16.msra.mxu0 %v9594
        %9662 = vmatprep.subr.bf16.mxu0 0
        %9663 = vmatpush1.bf16.msra.mxu0 %v9595
        %9664 = vmatprep.subr.bf16.mxu0 0
        %9665 = vmatpush1.bf16.msra.mxu0 %v9596
        %9666 = vmatprep.subr.bf16.mxu0 0
        %9667 = vmatpush1.bf16.msra.mxu0 %v9597
        %9668 = vmatprep.subr.bf16.mxu0 0
        %9669 = vmatpush1.bf16.msra.mxu0 %v9598
        %9670 = vmatprep.subr.bf16.mxu0 0
        %9671 = vmatpush1.bf16.msra.mxu0 %v9599
        %9672 = vmatprep.subr.bf16.mxu0 0
        %9673 = vmatpush1.bf16.msra.mxu0 %v9600
        %9674 = vmatprep.subr.bf16.mxu0 0
        %9675 = vmatpush1.bf16.msra.mxu0 %v9601
        %9676 = vmatprep.subr.bf16.mxu0 0
        %9677 = vmatpush1.bf16.msra.mxu0 %v9602
        %9678 = vmatprep.subr.bf16.mxu0 0
        %9679 = vmatpush1.bf16.msra.mxu0 %v9603
        %9680 = vmatprep.subr.bf16.mxu0 0
        %9681 = vmatpush1.bf16.msra.mxu0 %v9604
        %9682 = vmatprep.subr.bf16.mxu0 0
        %9683 = vmatpush1.bf16.msra.mxu0 %v9605
        %9684 = vmatprep.subr.bf16.mxu0 0
        %9685 = vmatpush1.bf16.msra.mxu0 %v9606
        %9686 = vmatprep.subr.bf16.mxu0 0
        %9687 = vmatpush1.bf16.msra.mxu0 %v9607
        %9688 = vmatprep.mubr.bf16.mxu0 %v9361
        %9689 = vmatmul.mubr.bf16.gmra.mrb[0].mxu0 %v9360
        %v9690 = vpop.f32.mrb[0].mxu0
        %v9691 = vadd.f32 %v9463, %v9690
        %v9692 = vpop.f32.mrb[0].mxu0
        %v9693 = vpop.f32.mrb[0].mxu0
        %v9694 = vadd.f32 %v9463, %v9693
        %v9695 = vpop.f32.mrb[0].mxu0
        %9696 = vmatprep.mubr.bf16.mxu0 %v9365
        %9697 = vmatmul.mubr.bf16.gmra.mrb[0].mxu0 %v9364
        %v9698 = vpop.f32.mrb[0].mxu0
        %v9699 = vadd.f32 %v9463, %v9698
        %v9700 = vpop.f32.mrb[0].mxu0
        %v9701 = vpop.f32.mrb[0].mxu0
        %v9702 = vadd.f32 %v9463, %v9701
        %v9703 = vpop.f32.mrb[0].mxu0
        %9704 = vmatprep.mubr.bf16.mxu0 %v9369
        %9705 = vmatmul.mubr.bf16.gmra.mrb[0].mxu0 %v9368
        %v9706 = vpop.f32.mrb[0].mxu0
        %v9707 = vadd.f32 %v9463, %v9706
        %v9708 = vpop.f32.mrb[0].mxu0
        %v9709 = vpop.f32.mrb[0].mxu0
        %v9710 = vadd.f32 %v9463, %v9709
        %v9711 = vpop.f32.mrb[0].mxu0
        %9712 = vmatprep.mubr.bf16.mxu0 %v9373
        %9713 = vmatmul.mubr.bf16.gmra.mrb[0].mxu0 %v9372
        %v9714 = vpop.f32.mrb[0].mxu0
        %v9715 = vadd.f32 %v9463, %v9714
        %v9716 = vpop.f32.mrb[0].mxu0
        %v9717 = vpop.f32.mrb[0].mxu0
        %v9718 = vadd.f32 %v9463, %v9717
        %v9719 = vpop.f32.mrb[0].mxu0
        %9720 = vmatprep.mubr.bf16.mxu0 %v9377
        %9721 = vmatmul.mubr.bf16.gmra.mrb[0].mxu0 %v9376
        %v9722 = vpop.f32.mrb[0].mxu0
        %v9723 = vadd.f32 %v9463, %v9722
        %v9724 = vpop.f32.mrb[0].mxu0
        %v9725 = vpop.f32.mrb[0].mxu0
        %v9726 = vadd.f32 %v9463, %v9725
        %v9727 = vpop.f32.mrb[0].mxu0
        %9728 = vmatprep.mubr.bf16.mxu0 %v9381
        %9729 = vmatmul.mubr.bf16.gmra.mrb[0].mxu0 %v9380
        %v9730 = vpop.f32.mrb[0].mxu0
        %v9731 = vadd.f32 %v9463, %v9730
        %v9732 = vpop.f32.mrb[0].mxu0
        %v9733 = vpop.f32.mrb[0].mxu0
        %v9734 = vadd.f32 %v9463, %v9733
        %v9735 = vpop.f32.mrb[0].mxu0
        %9736 = vmatprep.mubr.bf16.mxu0 %v9385
        %9737 = vmatmul.mubr.bf16.gmra.mrb[0].mxu0 %v9384
        %v9738 = vpop.f32.mrb[0].mxu0
        %v9739 = vadd.f32 %v9463, %v9738
        %v9740 = vpop.f32.mrb[0].mxu0
        %v9741 = vpop.f32.mrb[0].mxu0
        %v9742 = vadd.f32 %v9463, %v9741
        %v9743 = vpop.f32.mrb[0].mxu0
        %9744 = vmatprep.mubr.bf16.mxu0 %v9389
        %9745 = vmatmul.mubr.bf16.gmra.mrb[0].mxu0 %v9388
        %v9746 = vpop.f32.mrb[0].mxu0
        %v9747 = vadd.f32 %v9463, %v9746
        %v9748 = vpop.f32.mrb[0].mxu0
        %v9749 = vpop.f32.mrb[0].mxu0
        %v9750 = vadd.f32 %v9463, %v9749
        %v9751 = vpop.f32.mrb[0].mxu0
        %9752 = vdwg.mxu0
        %9753 = vmatprep.subr.bf16.mxu0 0
        %9754 = vmatpush1.bf16.msra.mxu0 %v9608
        %9755 = vmatprep.subr.bf16.mxu0 0
        %9756 = vmatpush1.bf16.msra.mxu0 %v9609
        %9757 = vmatprep.subr.bf16.mxu0 0
        %9758 = vmatpush1.bf16.msra.mxu0 %v9610
        %9759 = vmatprep.subr.bf16.mxu0 0
        %9760 = vmatpush1.bf16.msra.mxu0 %v9611
        %9761 = vmatprep.subr.bf16.mxu0 0
        %9762 = vmatpush1.bf16.msra.mxu0 %v9612
        %9763 = vmatprep.subr.bf16.mxu0 0
        %9764 = vmatpush1.bf16.msra.mxu0 %v9613
        %9765 = vmatprep.subr.bf16.mxu0 0
        %9766 = vmatpush1.bf16.msra.mxu0 %v9614
        %9767 = vmatprep.subr.bf16.mxu0 0
        %9768 = vmatpush1.bf16.msra.mxu0 %v9615
        %9769 = vmatprep.subr.bf16.mxu0 0
        %9770 = vmatpush1.bf16.msra.mxu0 %v9616
        %9771 = vmatprep.subr.bf16.mxu0 0
        %9772 = vmatpush1.bf16.msra.mxu0 %v9617
        %9773 = vmatprep.subr.bf16.mxu0 0
        %9774 = vmatpush1.bf16.msra.mxu0 %v9618
        %9775 = vmatprep.subr.bf16.mxu0 0
        %9776 = vmatpush1.bf16.msra.mxu0 %v9619
        %9777 = vmatprep.subr.bf16.mxu0 0
        %9778 = vmatpush1.bf16.msra.mxu0 %v9620
        %9779 = vmatprep.subr.bf16.mxu0 0
        %9780 = vmatpush1.bf16.msra.mxu0 %v9621
        %9781 = vmatprep.subr.bf16.mxu0 0
        %9782 = vmatpush1.bf16.msra.mxu0 %v9622
        %9783 = vmatprep.subr.bf16.mxu0 0
        %9784 = vmatpush1.bf16.msra.mxu0 %v9623
        %9785 = vmatprep.mubr.bf16.mxu0 %v9363
        %9786 = vmatmul.mubr.bf16.gmra.mrb[0].mxu0 %v9362
        %v9787 = vpop.f32.mrb[0].mxu0
        %v9788 = vadd.f32 %v9691, %v9787
        %v9789 = vpop.f32.mrb[0].mxu0
        %v9790 = vpop.f32.mrb[0].mxu0
        %v9791 = vadd.f32 %v9694, %v9790
        %v9792 = vpop.f32.mrb[0].mxu0
        %9793 = vmatprep.mubr.bf16.mxu0 %v9367
        %9794 = vmatmul.mubr.bf16.gmra.mrb[0].mxu0 %v9366
        %v9795 = vpop.f32.mrb[0].mxu0
        %v9796 = vadd.f32 %v9699, %v9795
        %v9797 = vpop.f32.mrb[0].mxu0
        %v9798 = vpop.f32.mrb[0].mxu0
        %v9799 = vadd.f32 %v9702, %v9798
        %v9800 = vpop.f32.mrb[0].mxu0
        %9801 = vmatprep.mubr.bf16.mxu0 %v9371
        %9802 = vmatmul.mubr.bf16.gmra.mrb[0].mxu0 %v9370
        %v9803 = vpop.f32.mrb[0].mxu0
        %v9804 = vadd.f32 %v9707, %v9803
        %v9805 = vpop.f32.mrb[0].mxu0
        %v9806 = vpop.f32.mrb[0].mxu0
        %v9807 = vadd.f32 %v9710, %v9806
        %v9808 = vpop.f32.mrb[0].mxu0
        %9809 = vmatprep.mubr.bf16.mxu0 %v9375
        %9810 = vmatmul.mubr.bf16.gmra.mrb[0].mxu0 %v9374
        %v9811 = vpop.f32.mrb[0].mxu0
        %v9812 = vadd.f32 %v9715, %v9811
        %v9813 = vpop.f32.mrb[0].mxu0
        %v9814 = vpop.f32.mrb[0].mxu0
        %v9815 = vadd.f32 %v9718, %v9814
        %v9816 = vpop.f32.mrb[0].mxu0
        %9817 = vmatprep.mubr.bf16.mxu0 %v9379
        %9818 = vmatmul.mubr.bf16.gmra.mrb[0].mxu0 %v9378
        %v9819 = vpop.f32.mrb[0].mxu0
        %v9820 = vadd.f32 %v9723, %v9819
        %v9821 = vpop.f32.mrb[0].mxu0
        %v9822 = vpop.f32.mrb[0].mxu0
        %v9823 = vadd.f32 %v9726, %v9822
        %v9824 = vpop.f32.mrb[0].mxu0
        %9825 = vmatprep.mubr.bf16.mxu0 %v9383
        %9826 = vmatmul.mubr.bf16.gmra.mrb[0].mxu0 %v9382
        %v9827 = vpop.f32.mrb[0].mxu0
        %v9828 = vadd.f32 %v9731, %v9827
        %v9829 = vpop.f32.mrb[0].mxu0
        %v9830 = vpop.f32.mrb[0].mxu0
        %v9831 = vadd.f32 %v9734, %v9830
        %v9832 = vpop.f32.mrb[0].mxu0
        %9833 = vmatprep.mubr.bf16.mxu0 %v9387
        %9834 = vmatmul.mubr.bf16.gmra.mrb[0].mxu0 %v9386
        %v9835 = vpop.f32.mrb[0].mxu0
        %v9836 = vadd.f32 %v9739, %v9835
        %v9837 = vpop.f32.mrb[0].mxu0
        %v9838 = vpop.f32.mrb[0].mxu0
        %v9839 = vadd.f32 %v9742, %v9838
        %v9840 = vpop.f32.mrb[0].mxu0
        %9841 = vmatprep.mubr.bf16.mxu0 %v9391
        %9842 = vmatmul.mubr.bf16.gmra.mrb[0].mxu0 %v9390
        %v9843 = vpop.f32.mrb[0].mxu0
        %v9844 = vadd.f32 %v9747, %v9843
        %v9845 = vpop.f32.mrb[0].mxu0
        %v9846 = vpop.f32.mrb[0].mxu0
        %v9847 = vadd.f32 %v9750, %v9846
        %v9848 = vpop.f32.mrb[0].mxu0
        %9849 = vdwg.mxu0
        %v9850 = vadd.f32 %v9788, %v8301
        %v9851 = vadd.f32 %v9791, %v8302
        %v9852 = vadd.f32 %v9796, %v8303
        %v9853 = vadd.f32 %v9799, %v8304
        %v9854 = vadd.f32 %v9804, %v8305
        %v9855 = vadd.f32 %v9807, %v8306
        %v9856 = vadd.f32 %v9812, %v8307
        %v9857 = vadd.f32 %v9815, %v8308
        %v9858 = vadd.f32 %v9820, %v8309
        %v9859 = vadd.f32 %v9823, %v8310
        %v9860 = vadd.f32 %v9828, %v8311
        %v9861 = vadd.f32 %v9831, %v8312
        %v9862 = vadd.f32 %v9836, %v8313
        %v9863 = vadd.f32 %v9839, %v8314
        %v9864 = vadd.f32 %v9844, %v8315
        %v9865 = vadd.f32 %v9847, %v8316
        %s9866 = scalar_lea.vmem %s13, 1
        %v9867 = vld [vmem:[%s9866] sm:$0x1]
        %v9868 = vunpack.c.l.bf16 %v9867
        %s9869 = scalar_lea.vmem %s14, 1
        %v9870 = vld [vmem:[%s9869] sm:$0x1]
        %v9871 = vunpack.c.l.bf16 %v9870
        %9872 = vadd.xlane.f32.xlu0 %v9850
        %v9873 = vpop.xlane.xlu0 %9872
        %9874 = vadd.xlane.f32.xlu0 %v9851
        %v9875 = vpop.xlane.xlu0 %9874
        %9876 = vadd.xlane.f32.xlu0 %v9852
        %v9877 = vpop.xlane.xlu0 %9876
        %9878 = vadd.xlane.f32.xlu0 %v9853
        %v9879 = vpop.xlane.xlu0 %9878
        %9880 = vadd.xlane.f32.xlu0 %v9854
        %v9881 = vpop.xlane.xlu0 %9880
        %9882 = vadd.xlane.f32.xlu0 %v9855
        %v9883 = vpop.xlane.xlu0 %9882
        %9884 = vadd.xlane.f32.xlu0 %v9856
        %v9885 = vpop.xlane.xlu0 %9884
        %9886 = vadd.xlane.f32.xlu0 %v9857
        %v9887 = vpop.xlane.xlu0 %9886
        %9888 = vadd.xlane.f32.xlu0 %v9858
        %v9889 = vpop.xlane.xlu0 %9888
        %9890 = vadd.xlane.f32.xlu0 %v9859
        %v9891 = vpop.xlane.xlu0 %9890
        %9892 = vadd.xlane.f32.xlu0 %v9860
        %v9893 = vpop.xlane.xlu0 %9892
        %9894 = vadd.xlane.f32.xlu0 %v9861
        %v9895 = vpop.xlane.xlu0 %9894
        %9896 = vadd.xlane.f32.xlu0 %v9862
        %v9897 = vpop.xlane.xlu0 %9896
        %9898 = vadd.xlane.f32.xlu0 %v9863
        %v9899 = vpop.xlane.xlu0 %9898
        %9900 = vadd.xlane.f32.xlu0 %v9864
        %v9901 = vpop.xlane.xlu0 %9900
        %9902 = vadd.xlane.f32.xlu0 %v9865
        %v9903 = vpop.xlane.xlu0 %9902
        %v9904 = vmul.f32 %v9873, %v3582
        %v9905 = vmul.f32 %v9875, %v3582
        %v9906 = vmul.f32 %v9877, %v3582
        %v9907 = vmul.f32 %v9879, %v3582
        %v9908 = vmul.f32 %v9881, %v3582
        %v9909 = vmul.f32 %v9883, %v3582
        %v9910 = vmul.f32 %v9885, %v3582
        %v9911 = vmul.f32 %v9887, %v3582
        %v9912 = vmul.f32 %v9889, %v3582
        %v9913 = vmul.f32 %v9891, %v3582
        %v9914 = vmul.f32 %v9893, %v3582
        %v9915 = vmul.f32 %v9895, %v3582
        %v9916 = vmul.f32 %v9897, %v3582
        %v9917 = vmul.f32 %v9899, %v3582
        %v9918 = vmul.f32 %v9901, %v3582
        %v9919 = vmul.f32 %v9903, %v3582
        %v9920 = vsub.f32 %v9850, %v9904
        %v9921 = vsub.f32 %v9851, %v9905
        %v9922 = vsub.f32 %v9852, %v9906
        %v9923 = vsub.f32 %v9853, %v9907
        %v9924 = vsub.f32 %v9854, %v9908
        %v9925 = vsub.f32 %v9855, %v9909
        %v9926 = vsub.f32 %v9856, %v9910
        %v9927 = vsub.f32 %v9857, %v9911
        %v9928 = vsub.f32 %v9858, %v9912
        %v9929 = vsub.f32 %v9859, %v9913
        %v9930 = vsub.f32 %v9860, %v9914
        %v9931 = vsub.f32 %v9861, %v9915
        %v9932 = vsub.f32 %v9862, %v9916
        %v9933 = vsub.f32 %v9863, %v9917
        %v9934 = vsub.f32 %v9864, %v9918
        %v9935 = vsub.f32 %v9865, %v9919
        %v9936 = vmul.f32 %v9920, %v9920
        %v9937 = vmul.f32 %v9921, %v9921
        %v9938 = vmul.f32 %v9922, %v9922
        %v9939 = vmul.f32 %v9923, %v9923
        %v9940 = vmul.f32 %v9924, %v9924
        %v9941 = vmul.f32 %v9925, %v9925
        %v9942 = vmul.f32 %v9926, %v9926
        %v9943 = vmul.f32 %v9927, %v9927
        %v9944 = vmul.f32 %v9928, %v9928
        %v9945 = vmul.f32 %v9929, %v9929
        %v9946 = vmul.f32 %v9930, %v9930
        %v9947 = vmul.f32 %v9931, %v9931
        %v9948 = vmul.f32 %v9932, %v9932
        %v9949 = vmul.f32 %v9933, %v9933
        %v9950 = vmul.f32 %v9934, %v9934
        %v9951 = vmul.f32 %v9935, %v9935
        %9952 = vadd.xlane.f32.xlu0 %v9936
        %v9953 = vpop.xlane.xlu0 %9952
        %9954 = vadd.xlane.f32.xlu0 %v9937
        %v9955 = vpop.xlane.xlu0 %9954
        %9956 = vadd.xlane.f32.xlu0 %v9938
        %v9957 = vpop.xlane.xlu0 %9956
        %9958 = vadd.xlane.f32.xlu0 %v9939
        %v9959 = vpop.xlane.xlu0 %9958
        %9960 = vadd.xlane.f32.xlu0 %v9940
        %v9961 = vpop.xlane.xlu0 %9960
        %9962 = vadd.xlane.f32.xlu0 %v9941
        %v9963 = vpop.xlane.xlu0 %9962
        %9964 = vadd.xlane.f32.xlu0 %v9942
        %v9965 = vpop.xlane.xlu0 %9964
        %9966 = vadd.xlane.f32.xlu0 %v9943
        %v9967 = vpop.xlane.xlu0 %9966
        %9968 = vadd.xlane.f32.xlu0 %v9944
        %v9969 = vpop.xlane.xlu0 %9968
        %9970 = vadd.xlane.f32.xlu0 %v9945
        %v9971 = vpop.xlane.xlu0 %9970
        %9972 = vadd.xlane.f32.xlu0 %v9946
        %v9973 = vpop.xlane.xlu0 %9972
        %9974 = vadd.xlane.f32.xlu0 %v9947
        %v9975 = vpop.xlane.xlu0 %9974
        %9976 = vadd.xlane.f32.xlu0 %v9948
        %v9977 = vpop.xlane.xlu0 %9976
        %9978 = vadd.xlane.f32.xlu0 %v9949
        %v9979 = vpop.xlane.xlu0 %9978
        %9980 = vadd.xlane.f32.xlu0 %v9950
        %v9981 = vpop.xlane.xlu0 %9980
        %9982 = vadd.xlane.f32.xlu0 %v9951
        %v9983 = vpop.xlane.xlu0 %9982
        %v9984 = vmul.f32 %v9953, %v3582
        %v9985 = vmul.f32 %v9955, %v3582
        %v9986 = vmul.f32 %v9957, %v3582
        %v9987 = vmul.f32 %v9959, %v3582
        %v9988 = vmul.f32 %v9961, %v3582
        %v9989 = vmul.f32 %v9963, %v3582
        %v9990 = vmul.f32 %v9965, %v3582
        %v9991 = vmul.f32 %v9967, %v3582
        %v9992 = vmul.f32 %v9969, %v3582
        %v9993 = vmul.f32 %v9971, %v3582
        %v9994 = vmul.f32 %v9973, %v3582
        %v9995 = vmul.f32 %v9975, %v3582
        %v9996 = vmul.f32 %v9977, %v3582
        %v9997 = vmul.f32 %v9979, %v3582
        %v9998 = vmul.f32 %v9981, %v3582
        %v9999 = vmul.f32 %v9983, %v3582
        %v10000 = vadd.f32 %v9984, 1e-12
        %v10001 = vadd.f32 %v9985, 1e-12
        %v10002 = vadd.f32 %v9986, 1e-12
        %v10003 = vadd.f32 %v9987, 1e-12
        %v10004 = vadd.f32 %v9988, 1e-12
        %v10005 = vadd.f32 %v9989, 1e-12
        %v10006 = vadd.f32 %v9990, 1e-12
        %v10007 = vadd.f32 %v9991, 1e-12
        %v10008 = vadd.f32 %v9992, 1e-12
        %v10009 = vadd.f32 %v9993, 1e-12
        %v10010 = vadd.f32 %v9994, 1e-12
        %v10011 = vadd.f32 %v9995, 1e-12
        %v10012 = vadd.f32 %v9996, 1e-12
        %v10013 = vadd.f32 %v9997, 1e-12
        %v10014 = vadd.f32 %v9998, 1e-12
        %v10015 = vadd.f32 %v9999, 1e-12
        %v10016 = vrsqrt.pop %v10000
        %v10017 = vrsqrt.pop %v10001
        %v10018 = vrsqrt.pop %v10002
        %v10019 = vrsqrt.pop %v10003
        %v10020 = vrsqrt.pop %v10004
        %v10021 = vrsqrt.pop %v10005
        %v10022 = vrsqrt.pop %v10006
        %v10023 = vrsqrt.pop %v10007
        %v10024 = vrsqrt.pop %v10008
        %v10025 = vrsqrt.pop %v10009
        %v10026 = vrsqrt.pop %v10010
        %v10027 = vrsqrt.pop %v10011
        %v10028 = vrsqrt.pop %v10012
        %v10029 = vrsqrt.pop %v10013
        %v10030 = vrsqrt.pop %v10014
        %v10031 = vrsqrt.pop %v10015
        %v10032 = vmul.f32 %v9920, %v10016
        %v10033 = vmul.f32 %v9921, %v10017
        %v10034 = vmul.f32 %v9922, %v10018
        %v10035 = vmul.f32 %v9923, %v10019
        %v10036 = vmul.f32 %v9924, %v10020
        %v10037 = vmul.f32 %v9925, %v10021
        %v10038 = vmul.f32 %v9926, %v10022
        %v10039 = vmul.f32 %v9927, %v10023
        %v10040 = vmul.f32 %v9928, %v10024
        %v10041 = vmul.f32 %v9929, %v10025
        %v10042 = vmul.f32 %v9930, %v10026
        %v10043 = vmul.f32 %v9931, %v10027
        %v10044 = vmul.f32 %v9932, %v10028
        %v10045 = vmul.f32 %v9933, %v10029
        %v10046 = vmul.f32 %v9934, %v10030
        %v10047 = vmul.f32 %v9935, %v10031
        %v10048 = vlaneseq
        %v10049 = vshrl.u32 %v10048, 7
        %v10050 = vsub.s32 0, %v10049
        %v10051 = vrot.slane %v9868, %v10050
        %v10052 = vmul.f32 %v10032, %v10051
        %v10053 = vmul.f32 %v10033, %v10051
        %v10054 = vmul.f32 %v10034, %v10051
        %v10055 = vmul.f32 %v10035, %v10051
        %v10056 = vmul.f32 %v10036, %v10051
        %v10057 = vmul.f32 %v10037, %v10051
        %v10058 = vmul.f32 %v10038, %v10051
        %v10059 = vmul.f32 %v10039, %v10051
        %v10060 = vmul.f32 %v10040, %v10051
        %v10061 = vmul.f32 %v10041, %v10051
        %v10062 = vmul.f32 %v10042, %v10051
        %v10063 = vmul.f32 %v10043, %v10051
        %v10064 = vmul.f32 %v10044, %v10051
        %v10065 = vmul.f32 %v10045, %v10051
        %v10066 = vmul.f32 %v10046, %v10051
        %v10067 = vmul.f32 %v10047, %v10051
        %v10068 = vlaneseq
        %v10069 = vshrl.u32 %v10068, 7
        %v10070 = vsub.s32 0, %v10069
        %v10071 = vrot.slane %v9871, %v10070
        %v10072 = vadd.f32 %v10052, %v10071
        %v10073 = vadd.f32 %v10053, %v10071
        %v10074 = vadd.f32 %v10054, %v10071
        %v10075 = vadd.f32 %v10055, %v10071
        %v10076 = vadd.f32 %v10056, %v10071
        %v10077 = vadd.f32 %v10057, %v10071
        %v10078 = vadd.f32 %v10058, %v10071
        %v10079 = vadd.f32 %v10059, %v10071
        %v10080 = vadd.f32 %v10060, %v10071
        %v10081 = vadd.f32 %v10061, %v10071
        %v10082 = vadd.f32 %v10062, %v10071
        %v10083 = vadd.f32 %v10063, %v10071
        %v10084 = vadd.f32 %v10064, %v10071
        %v10085 = vadd.f32 %v10065, %v10071
        %v10086 = vadd.f32 %v10066, %v10071
        %v10087 = vadd.f32 %v10067, %v10071
        %v10088 = vpack.c.bf16 %v10073, %v10072
        %v10089 = vpack.c.bf16 %v10075, %v10074
        %v10090 = vpack.c.bf16 %v10077, %v10076
        %v10091 = vpack.c.bf16 %v10079, %v10078
        %v10092 = vpack.c.bf16 %v10081, %v10080
        %v10093 = vpack.c.bf16 %v10083, %v10082
        %v10094 = vpack.c.bf16 %v10085, %v10084
        %v10095 = vpack.c.bf16 %v10087, %v10086
        %v10096 = vld [vmem:[#allocation14] sm:$0xff]
        %v10097 = vld [vmem:[#allocation14 + $0x8] sm:$0xff]
        %v10098 = vld [vmem:[#allocation14 + $0x10] sm:$0xff]
        %v10099 = vld [vmem:[#allocation14 + $0x18] sm:$0xff]
        %v10100 = vld [vmem:[#allocation14 + $0x20] sm:$0xff]
        %v10101 = vld [vmem:[#allocation14 + $0x28] sm:$0xff]
        %v10102 = vld [vmem:[#allocation14 + $0x30] sm:$0xff]
        %v10103 = vld [vmem:[#allocation14 + $0x38] sm:$0xff]
        %v10104 = vld [vmem:[#allocation14 + $0x40] sm:$0xff]
        %v10105 = vld [vmem:[#allocation14 + $0x48] sm:$0xff]
        %v10106 = vld [vmem:[#allocation14 + $0x50] sm:$0xff]
        %v10107 = vld [vmem:[#allocation14 + $0x58] sm:$0xff]
        %v10108 = vld [vmem:[#allocation14 + $0x60] sm:$0xff]
        %v10109 = vld [vmem:[#allocation14 + $0x68] sm:$0xff]
        %v10110 = vld [vmem:[#allocation14 + $0x70] sm:$0xff]
        %v10111 = vld [vmem:[#allocation14 + $0x78] sm:$0xff]
        %v10112 = vld [vmem:[%s16] sm:$0x3]
        %v10113 = vunpack.c.l.bf16 %v10112
        %v10115 = vlaneseq
        %v10116 = vshrl.u32 %v10115, 7
        %v10117 = vsub.s32 0, %v10116
        %v10118 = vrot.slane %v10113, %v10117
        %v10119 = vlaneseq
        %v10120 = vshrl.u32 %v10119, 7
        %v10121 = vsub.s32 2, %v10120
        %v10122 = vrot.slane %v10113, %v10121
        %v10125 = vlaneseq
        %v10126 = vshrl.u32 %v10125, 7
        %v10127 = vsub.s32 0, %v10126
        %v10128 = vrot.slane %v10118, %v10127
        %v10129 = vlaneseq
        %v10130 = vshrl.u32 %v10129, 7
        %v10131 = vsub.s32 0, %v10130
        %v10132 = vrot.slane %v10122, %v10131
        %v10149 = vunpack.c.l.b16 %v10096
        %v10150 = vunpack.c.h.b16 %v10096
        %v10151 = vunpack.c.l.b16 %v10097
        %v10152 = vunpack.c.h.b16 %v10097
        %v10153 = vunpack.c.l.b16 %v10098
        %v10154 = vunpack.c.h.b16 %v10098
        %v10155 = vunpack.c.l.b16 %v10099
        %v10156 = vunpack.c.h.b16 %v10099
        %v10157 = vunpack.c.l.b16 %v10100
        %v10158 = vunpack.c.h.b16 %v10100
        %v10159 = vunpack.c.l.b16 %v10101
        %v10160 = vunpack.c.h.b16 %v10101
        %v10161 = vunpack.c.l.b16 %v10102
        %v10162 = vunpack.c.h.b16 %v10102
        %v10163 = vunpack.c.l.b16 %v10103
        %v10164 = vunpack.c.h.b16 %v10103
        %v10165 = vunpack.c.l.b16 %v10104
        %v10166 = vunpack.c.h.b16 %v10104
        %v10167 = vunpack.c.l.b16 %v10105
        %v10168 = vunpack.c.h.b16 %v10105
        %v10169 = vunpack.c.l.b16 %v10106
        %v10170 = vunpack.c.h.b16 %v10106
        %v10171 = vunpack.c.l.b16 %v10107
        %v10172 = vunpack.c.h.b16 %v10107
        %v10173 = vunpack.c.l.b16 %v10108
        %v10174 = vunpack.c.h.b16 %v10108
        %v10175 = vunpack.c.l.b16 %v10109
        %v10176 = vunpack.c.h.b16 %v10109
        %v10177 = vunpack.c.l.b16 %v10110
        %v10178 = vunpack.c.h.b16 %v10110
        %v10179 = vunpack.c.l.b16 %v10111
        %v10180 = vunpack.c.h.b16 %v10111
        %v10181 = vpack.c.b16 %v10151, %v10149
        %v10182 = vpack.c.b16 %v10152, %v10150
        %v10183 = vpack.c.b16 %v10155, %v10153
        %v10184 = vpack.c.b16 %v10156, %v10154
        %v10185 = vpack.c.b16 %v10159, %v10157
        %v10186 = vpack.c.b16 %v10160, %v10158
        %v10187 = vpack.c.b16 %v10163, %v10161
        %v10188 = vpack.c.b16 %v10164, %v10162
        %v10189 = vpack.c.b16 %v10167, %v10165
        %v10190 = vpack.c.b16 %v10168, %v10166
        %v10191 = vpack.c.b16 %v10171, %v10169
        %v10192 = vpack.c.b16 %v10172, %v10170
        %v10193 = vpack.c.b16 %v10175, %v10173
        %v10194 = vpack.c.b16 %v10176, %v10174
        %v10195 = vpack.c.b16 %v10179, %v10177
        %v10196 = vpack.c.b16 %v10180, %v10178
        %10213 = vmatprep.subr.bf16.mxu0 %v10182
        %10214 = vmatpush1.bf16.msra.mxu0 %v10181
        %10215 = vmatprep.subr.bf16.mxu0 %v10184
        %10216 = vmatpush1.bf16.msra.mxu0 %v10183
        %10217 = vmatprep.subr.bf16.mxu0 %v10186
        %10218 = vmatpush1.bf16.msra.mxu0 %v10185
        %10219 = vmatprep.subr.bf16.mxu0 %v10188
        %10220 = vmatpush1.bf16.msra.mxu0 %v10187
        %10221 = vmatprep.subr.bf16.mxu0 %v10190
        %10222 = vmatpush1.bf16.msra.mxu0 %v10189
        %10223 = vmatprep.subr.bf16.mxu0 %v10192
        %10224 = vmatpush1.bf16.msra.mxu0 %v10191
        %10225 = vmatprep.subr.bf16.mxu0 %v10194
        %10226 = vmatpush1.bf16.msra.mxu0 %v10193
        %10227 = vmatprep.subr.bf16.mxu0 %v10196
        %10228 = vmatpush1.bf16.msra.mxu0 %v10195
        %10229 = vmatprep.subr.bf16.mxu0 0
        %10230 = vmatpush1.bf16.msra.mxu0 0
        %10231 = vmatprep.subr.bf16.mxu0 0
        %10232 = vmatpush1.bf16.msra.mxu0 0
        %10233 = vmatprep.subr.bf16.mxu0 0
        %10234 = vmatpush1.bf16.msra.mxu0 0
        %10235 = vmatprep.subr.bf16.mxu0 0
        %10236 = vmatpush1.bf16.msra.mxu0 0
        %10237 = vmatprep.subr.bf16.mxu0 0
        %10238 = vmatpush1.bf16.msra.mxu0 0
        %10239 = vmatprep.subr.bf16.mxu0 0
        %10240 = vmatpush1.bf16.msra.mxu0 0
        %10241 = vmatprep.subr.bf16.mxu0 0
        %10242 = vmatpush1.bf16.msra.mxu0 0
        %10243 = vmatprep.subr.bf16.mxu0 0
        %10244 = vmatpush1.bf16.msra.mxu0 0
        %10245 = vmatprep.mubr.bf16.mxu0 0
        %10246 = vmatmul.mubr.bf16.gmra.mrb[0].mxu0 %v10088
        %v10247 = vpop.f32.mrb[0].mxu0
        %v10248 = vadd.f32 %v10128, %v10247
        %v10249 = vpop.f32.mrb[0].mxu0
        %v10250 = vadd.f32 %v10132, %v10249
        %v10251 = vpop.f32.mrb[0].mxu0
        %v10252 = vadd.f32 %v10128, %v10251
        %v10253 = vpop.f32.mrb[0].mxu0
        %v10254 = vadd.f32 %v10132, %v10253
        %10255 = vmatprep.mubr.bf16.mxu0 0
        %10256 = vmatmul.mubr.bf16.gmra.mrb[0].mxu0 %v10089
        %v10257 = vpop.f32.mrb[0].mxu0
        %v10258 = vadd.f32 %v10128, %v10257
        %v10259 = vpop.f32.mrb[0].mxu0
        %v10260 = vadd.f32 %v10132, %v10259
        %v10261 = vpop.f32.mrb[0].mxu0
        %v10262 = vadd.f32 %v10128, %v10261
        %v10263 = vpop.f32.mrb[0].mxu0
        %v10264 = vadd.f32 %v10132, %v10263
        %10265 = vmatprep.mubr.bf16.mxu0 0
        %10266 = vmatmul.mubr.bf16.gmra.mrb[0].mxu0 %v10090
        %v10267 = vpop.f32.mrb[0].mxu0
        %v10268 = vadd.f32 %v10128, %v10267
        %v10269 = vpop.f32.mrb[0].mxu0
        %v10270 = vadd.f32 %v10132, %v10269
        %v10271 = vpop.f32.mrb[0].mxu0
        %v10272 = vadd.f32 %v10128, %v10271
        %v10273 = vpop.f32.mrb[0].mxu0
        %v10274 = vadd.f32 %v10132, %v10273
        %10275 = vmatprep.mubr.bf16.mxu0 0
        %10276 = vmatmul.mubr.bf16.gmra.mrb[0].mxu0 %v10091
        %v10277 = vpop.f32.mrb[0].mxu0
        %v10278 = vadd.f32 %v10128, %v10277
        %v10279 = vpop.f32.mrb[0].mxu0
        %v10280 = vadd.f32 %v10132, %v10279
        %v10281 = vpop.f32.mrb[0].mxu0
        %v10282 = vadd.f32 %v10128, %v10281
        %v10283 = vpop.f32.mrb[0].mxu0
        %v10284 = vadd.f32 %v10132, %v10283
        %10285 = vmatprep.mubr.bf16.mxu0 0
        %10286 = vmatmul.mubr.bf16.gmra.mrb[0].mxu0 %v10092
        %v10287 = vpop.f32.mrb[0].mxu0
        %v10288 = vadd.f32 %v10128, %v10287
        %v10289 = vpop.f32.mrb[0].mxu0
        %v10290 = vadd.f32 %v10132, %v10289
        %v10291 = vpop.f32.mrb[0].mxu0
        %v10292 = vadd.f32 %v10128, %v10291
        %v10293 = vpop.f32.mrb[0].mxu0
        %v10294 = vadd.f32 %v10132, %v10293
        %10295 = vmatprep.mubr.bf16.mxu0 0
        %10296 = vmatmul.mubr.bf16.gmra.mrb[0].mxu0 %v10093
        %v10297 = vpop.f32.mrb[0].mxu0
        %v10298 = vadd.f32 %v10128, %v10297
        %v10299 = vpop.f32.mrb[0].mxu0
        %v10300 = vadd.f32 %v10132, %v10299
        %v10301 = vpop.f32.mrb[0].mxu0
        %v10302 = vadd.f32 %v10128, %v10301
        %v10303 = vpop.f32.mrb[0].mxu0
        %v10304 = vadd.f32 %v10132, %v10303
        %10305 = vmatprep.mubr.bf16.mxu0 0
        %10306 = vmatmul.mubr.bf16.gmra.mrb[0].mxu0 %v10094
        %v10307 = vpop.f32.mrb[0].mxu0
        %v10308 = vadd.f32 %v10128, %v10307
        %v10309 = vpop.f32.mrb[0].mxu0
        %v10310 = vadd.f32 %v10132, %v10309
        %v10311 = vpop.f32.mrb[0].mxu0
        %v10312 = vadd.f32 %v10128, %v10311
        %v10313 = vpop.f32.mrb[0].mxu0
        %v10314 = vadd.f32 %v10132, %v10313
        %10315 = vmatprep.mubr.bf16.mxu0 0
        %10316 = vmatmul.mubr.bf16.gmra.mrb[0].mxu0 %v10095
        %v10317 = vpop.f32.mrb[0].mxu0
        %v10318 = vadd.f32 %v10128, %v10317
        %v10319 = vpop.f32.mrb[0].mxu0
        %v10320 = vadd.f32 %v10132, %v10319
        %v10321 = vpop.f32.mrb[0].mxu0
        %v10322 = vadd.f32 %v10128, %v10321
        %v10323 = vpop.f32.mrb[0].mxu0
        %v10324 = vadd.f32 %v10132, %v10323
        %10325 = vdwg.mxu0
        %v10326 = vunpack.c.l.bf16 %v656
        %v10327 = vunpack.c.h.bf16 %v656
        %v10328 = vunpack.c.l.bf16 %v657
        %v10329 = vunpack.c.h.bf16 %v657
        %v10330 = vunpack.c.l.bf16 %v658
        %v10331 = vunpack.c.h.bf16 %v658
        %v10332 = vunpack.c.l.bf16 %v659
        %v10333 = vunpack.c.h.bf16 %v659
        %v10334 = vunpack.c.l.bf16 %v660
        %v10335 = vunpack.c.h.bf16 %v660
        %v10336 = vunpack.c.l.bf16 %v661
        %v10337 = vunpack.c.h.bf16 %v661
        %v10338 = vunpack.c.l.bf16 %v662
        %v10339 = vunpack.c.h.bf16 %v662
        %v10340 = vunpack.c.l.bf16 %v663
        %v10341 = vunpack.c.h.bf16 %v663
        %v10342 = vunpack.c.l.bf16 %v664
        %v10343 = vunpack.c.h.bf16 %v664
        %v10344 = vunpack.c.l.bf16 %v665
        %v10345 = vunpack.c.h.bf16 %v665
        %v10346 = vunpack.c.l.bf16 %v666
        %v10347 = vunpack.c.h.bf16 %v666
        %v10348 = vunpack.c.l.bf16 %v667
        %v10349 = vunpack.c.h.bf16 %v667
        %v10350 = vunpack.c.l.bf16 %v668
        %v10351 = vunpack.c.h.bf16 %v668
        %v10352 = vunpack.c.l.bf16 %v669
        %v10353 = vunpack.c.h.bf16 %v669
        %v10354 = vunpack.c.l.bf16 %v670
        %v10355 = vunpack.c.h.bf16 %v670
        %v10356 = vunpack.c.l.bf16 %v671
        %v10357 = vunpack.c.h.bf16 %v671
        %v10358 = vadd.f32 %v10248, %v10326
        %v10359 = vadd.f32 %v10250, %v10327
        %v10360 = vadd.f32 %v10252, %v10328
        %v10361 = vadd.f32 %v10254, %v10329
        %v10362 = vadd.f32 %v10258, %v10330
        %v10363 = vadd.f32 %v10260, %v10331
        %v10364 = vadd.f32 %v10262, %v10332
        %v10365 = vadd.f32 %v10264, %v10333
        %v10366 = vadd.f32 %v10268, %v10334
        %v10367 = vadd.f32 %v10270, %v10335
        %v10368 = vadd.f32 %v10272, %v10336
        %v10369 = vadd.f32 %v10274, %v10337
        %v10370 = vadd.f32 %v10278, %v10338
        %v10371 = vadd.f32 %v10280, %v10339
        %v10372 = vadd.f32 %v10282, %v10340
        %v10373 = vadd.f32 %v10284, %v10341
        %v10374 = vadd.f32 %v10288, %v10342
        %v10375 = vadd.f32 %v10290, %v10343
        %v10376 = vadd.f32 %v10292, %v10344
        %v10377 = vadd.f32 %v10294, %v10345
        %v10378 = vadd.f32 %v10298, %v10346
        %v10379 = vadd.f32 %v10300, %v10347
        %v10380 = vadd.f32 %v10302, %v10348
        %v10381 = vadd.f32 %v10304, %v10349
        %v10382 = vadd.f32 %v10308, %v10350
        %v10383 = vadd.f32 %v10310, %v10351
        %v10384 = vadd.f32 %v10312, %v10352
        %v10385 = vadd.f32 %v10314, %v10353
        %v10386 = vadd.f32 %v10318, %v10354
        %v10387 = vadd.f32 %v10320, %v10355
        %v10388 = vadd.f32 %v10322, %v10356
        %v10389 = vadd.f32 %v10324, %v10357
        %v10390 = vpack.c.bf16 %v10360, %v10358
        %v10391 = vpack.c.bf16 %v10361, %v10359
        %v10392 = vpack.c.bf16 %v10364, %v10362
        %v10393 = vpack.c.bf16 %v10365, %v10363
        %v10394 = vpack.c.bf16 %v10368, %v10366
        %v10395 = vpack.c.bf16 %v10369, %v10367
        %v10396 = vpack.c.bf16 %v10372, %v10370
        %v10397 = vpack.c.bf16 %v10373, %v10371
        %v10398 = vpack.c.bf16 %v10376, %v10374
        %v10399 = vpack.c.bf16 %v10377, %v10375
        %v10400 = vpack.c.bf16 %v10380, %v10378
        %v10401 = vpack.c.bf16 %v10381, %v10379
        %v10402 = vpack.c.bf16 %v10384, %v10382
        %v10403 = vpack.c.bf16 %v10385, %v10383
        %v10404 = vpack.c.bf16 %v10388, %v10386
        %v10405 = vpack.c.bf16 %v10389, %v10387
        %v10422 = vunpack.c.l.b16 %v10390
        %v10423 = vunpack.c.l.b16 %v10391
        %v10424 = vunpack.c.h.b16 %v10390
        %v10425 = vunpack.c.h.b16 %v10391
        %v10426 = vunpack.c.l.b16 %v10392
        %v10427 = vunpack.c.l.b16 %v10393
        %v10428 = vunpack.c.h.b16 %v10392
        %v10429 = vunpack.c.h.b16 %v10393
        %v10430 = vunpack.c.l.b16 %v10394
        %v10431 = vunpack.c.l.b16 %v10395
        %v10432 = vunpack.c.h.b16 %v10394
        %v10433 = vunpack.c.h.b16 %v10395
        %v10434 = vunpack.c.l.b16 %v10396
        %v10435 = vunpack.c.l.b16 %v10397
        %v10436 = vunpack.c.h.b16 %v10396
        %v10437 = vunpack.c.h.b16 %v10397
        %v10438 = vunpack.c.l.b16 %v10398
        %v10439 = vunpack.c.l.b16 %v10399
        %v10440 = vunpack.c.h.b16 %v10398
        %v10441 = vunpack.c.h.b16 %v10399
        %v10442 = vunpack.c.l.b16 %v10400
        %v10443 = vunpack.c.l.b16 %v10401
        %v10444 = vunpack.c.h.b16 %v10400
        %v10445 = vunpack.c.h.b16 %v10401
        %v10446 = vunpack.c.l.b16 %v10402
        %v10447 = vunpack.c.l.b16 %v10403
        %v10448 = vunpack.c.h.b16 %v10402
        %v10449 = vunpack.c.h.b16 %v10403
        %v10450 = vunpack.c.l.b16 %v10404
        %v10451 = vunpack.c.l.b16 %v10405
        %v10452 = vunpack.c.h.b16 %v10404
        %v10453 = vunpack.c.h.b16 %v10405
        %v10454 = vpack.c.b16 %v10423, %v10422
        %v10455 = vpack.c.b16 %v10425, %v10424
        %v10456 = vpack.c.b16 %v10427, %v10426
        %v10457 = vpack.c.b16 %v10429, %v10428
        %v10458 = vpack.c.b16 %v10431, %v10430
        %v10459 = vpack.c.b16 %v10433, %v10432
        %v10460 = vpack.c.b16 %v10435, %v10434
        %v10461 = vpack.c.b16 %v10437, %v10436
        %v10462 = vpack.c.b16 %v10439, %v10438
        %v10463 = vpack.c.b16 %v10441, %v10440
        %v10464 = vpack.c.b16 %v10443, %v10442
        %v10465 = vpack.c.b16 %v10445, %v10444
        %v10466 = vpack.c.b16 %v10447, %v10446
        %v10467 = vpack.c.b16 %v10449, %v10448
        %v10468 = vpack.c.b16 %v10451, %v10450
        %v10469 = vpack.c.b16 %v10453, %v10452
        %10486 = vst [vmem:[%s653] sm:$0xff] %v10454
        %10487 = vst [vmem:[%s653 + $0x8] sm:$0xff] %v10455
        %10488 = vst [vmem:[%s653 + $0x10] sm:$0xff] %v10456
        %10489 = vst [vmem:[%s653 + $0x18] sm:$0xff] %v10457
        %10490 = vst [vmem:[%s653 + $0x20] sm:$0xff] %v10458
        %10491 = vst [vmem:[%s653 + $0x28] sm:$0xff] %v10459
        %10492 = vst [vmem:[%s653 + $0x30] sm:$0xff] %v10460
        %10493 = vst [vmem:[%s653 + $0x38] sm:$0xff] %v10461
        %10494 = vst [vmem:[%s653 + $0x40] sm:$0xff] %v10462
        %10495 = vst [vmem:[%s653 + $0x48] sm:$0xff] %v10463
        %10496 = vst [vmem:[%s653 + $0x50] sm:$0xff] %v10464
        %10497 = vst [vmem:[%s653 + $0x58] sm:$0xff] %v10465
        %10498 = vst [vmem:[%s653 + $0x60] sm:$0xff] %v10466
        %10499 = vst [vmem:[%s653 + $0x68] sm:$0xff] %v10467
        %10500 = vst [vmem:[%s653 + $0x70] sm:$0xff] %v10468
        %10501 = vst [vmem:[%s653 + $0x78] sm:$0xff] %v10469
        %s10502 = sand.u32 %s407, 1
        %s10503 = scalar_lea.sflag [#allocation5], %s10502
        %s10504 = sand.u32 %s407, 1
        %s10505 = smul.addr %s10504, 128
        %s10506 = scalar_lea.vmem [#allocation15], %s10505
        // Predicated region
        $region117: #{adapter_forward.1} parent=87 // pred_check
          %p10507 = pneg %p417
        $region118: #{adapter_forward.1} parent=87 // pred_check_branch
          %10509 = sbr.rel (%p10507) target = $region120
        $region119: #{adapter_forward.1} parent=87 // pred_region
          %s10511 = ssub.s32 2048, 2048
          %10512 = vsyncadd %s10503, %s10511
          %s10513 = smul.addr %s37, 32
          %s10514 = smul.addr %s10513, 64
          %s10515 = scalar_lea.hbm %s17, %s10514
          %s10516 = sshll.u32 %s10506, 4
          %s10517 = int_to_ptr.vmem [resolvable:$true] %s10516
          %10522 = dma.vmem_to_hbm [thread:$0]  %s10517, 2048, %s10515, %s10503, 128, 128, 8
        $region120: #{adapter_forward.1} parent=87 // pred_fallthru
          _
      $region88: #{adapter_forward.1} parent=5 // pred_fallthru
        _
      %p10523 = scmp.le.s32.totalorder 2, %s32
      // Predicated region
      $region121: #{adapter_forward.1} parent=5 // pred_check
        %p10524 = pneg %p10523
      $region122: #{adapter_forward.1} parent=5 // pred_check_branch
        %10526 = sbr.rel (%p10524) target = $region124
      $region123: #{adapter_forward.1} parent=5 // pred_region
        %s10527 = ssub.s32 %s32, 2
        // Predicated region
        $region125: #{adapter_forward.1} parent=123 // pred_check
          %p10528 = pneg %p423
        $region126: #{adapter_forward.1} parent=123 // pred_check_branch
          %10530 = sbr.rel (%p10528) target = $region128
        $region127: #{adapter_forward.1} parent=123 // pred_region
          %s10531 = sand.u32 %s408, 1
          %s10532 = scalar_lea.sflag [#allocation5], %s10531
          %s10533 = sand.u32 %s408, 1
          %s10534 = smul.addr %s10533, 128
          %s10535 = scalar_lea.vmem [#allocation15], %s10534
          %10536 = dma.done %s10532, 2048
        $region128: #{adapter_forward.1} parent=123 // pred_fallthru
          _
      $region124: #{adapter_forward.1} parent=5 // pred_fallthru
        _
    $region6: #{adapter_forward.1} parent=1 // loop_footer
      %s36 = sadd.s32 1, %s32
    $region7: #{adapter_forward.1} parent=1 // loop_footer_branch
      %31 = sbr.rel target = $region3
    $region8: #{adapter_forward.1} parent=1 // loop_exit
      _
    %10537 = vsyncpa [#allocation4], 1
    %s10538 = scalar_lea.sflag [#allocation4], 1
    %10539 = vsyncpa %s10538, 1
    %10540 = vsyncpa [#allocation7], 1
    %10541 = vsyncpa [#allocation10], 1
    %10542 = vsyncpa [#allocation13], 1
    %10543 = vsyncpa [#allocation5], 1
    %s10544 = scalar_lea.sflag [#allocation5], 1
    %10545 = vsyncpa %s10544, 1

</llo_original>
